<compile_context>
chip_gen: v7x
topology: tpu7x:2x2x1
jax: 0.10.0
libtpu: 0.0.40
codegen_flags: <defaults>
</compile_context>

<pallas_src>
import jax
import jax.numpy as jnp
from jax.experimental import pallas as pl
from jax.experimental.pallas import tpu as pltpu


# ----------------------------------------------------------------------------- kernel
def _mismatch_kernel(
    x_ref,                                   # [Bb, N, 1] f32
    w1, b1,                                  # 1    -> 64   (f32, VPU broadcast path)
    w2, b2,                                  # 64   -> 128  (bf16 weights, BN folded in)
    w3, b3,                                  # 128  -> 256
    w4, b4,                                  # 256  -> 512
    w5a, w5b, b5,                            # 1024 -> 256  (split: local / global half)
    w6, b6,                                  # 256  -> 128
    w7, b7,                                  # 128  -> 1    (no BN / ReLU)
    out_ref,                                 # [Bb, N, 1] f32
):
    f32, bf16 = jnp.float32, jnp.bfloat16
    Bb, N, _ = x_ref.shape
    M = Bb * N

    def dense_relu(h, w_ref, b_ref):
        # bf16 MXU inputs, f32 accumulation; bias + ReLU epilogue in f32.
        y = jnp.dot(h.astype(bf16), w_ref[...], preferred_element_type=f32)
        return jnp.maximum(y + b_ref[...], 0.0)

    # Layer 1 (C_in = 1): a K=1 matmul is a degenerate MXU pass -> do it on the VPU.
    x = x_ref[...]                                                        # [Bb, N, 1]
    h = jnp.maximum(x * w1[...] + b1[...], 0.0)                           # [Bb, N, 64]
    h = h.reshape(M, 64)

    h = dense_relu(h, w2, b2)                                             # [M, 128]
    h = dense_relu(h, w3, b3)                                             # [M, 256]
    h4 = dense_relu(h, w4, b4)                                            # [M, 512]
    # dropout: identity at inference

    # Global max-pool over the point axis, per batch element (torch.max(x, 2)).
    g = jnp.max(h4.reshape(Bb, N, 512), axis=1)                           # [Bb, 512]

    # cat([h4, g.expand(N)], channels) @ W5  ==  h4 @ W5a + g @ W5b (broadcast over N)
    y_loc = jnp.dot(h4.astype(bf16), w5a[...], preferred_element_type=f32)   # [M, 256]
    y_glb = jnp.dot(g.astype(bf16), w5b[...], preferred_element_type=f32)    # [Bb, 256]
    h5 = jnp.maximum(y_loc.reshape(Bb, N, 256) + y_glb[:, None, :] + b5[...], 0.0)
    h5 = h5.reshape(M, 256)

    h6 = dense_relu(h5, w6, b6)                                           # [M, 128]

    y = jnp.dot(h6.astype(bf16), w7[...], preferred_element_type=f32) + b7[...]  # [M, 1]
    out_ref[...] = y.reshape(Bb, N, 1)


# ----------------------------------------------------------------------------- params
def init_params(key):
    """Deterministic parameter init with the shapes implied by the module."""
    dims = [(1, 64), (64, 128), (128, 256), (256, 512),
            (1024, 256), (256, 128), (128, 1)]
    params = {}
    for li, (cin, cout) in enumerate(dims):
        key, kw, kb = jax.random.split(key, 3)
        # stored as [C_in, C_out] (transpose of PyTorch's [C_out, C_in, 1])
        params[f"w{li}"] = jax.random.normal(kw, (cin, cout), jnp.float32) * 0.05
        params[f"cb{li}"] = jax.random.normal(kb, (cout,), jnp.float32) * 0.05
    # BatchNorm params for bn1..bn4, seg_bn1, seg_bn2 (conv layers 0..5)
    for li, c in enumerate([64, 128, 256, 512, 256, 128]):
        key, k1, k2, k3, k4 = jax.random.split(key, 5)
        params[f"gamma{li}"] = 1.0 + 0.1 * jax.random.normal(k1, (c,), jnp.float32)
        params[f"beta{li}"] = 0.1 * jax.random.normal(k2, (c,), jnp.float32)
        params[f"mean{li}"] = 0.1 * jax.random.normal(k3, (c,), jnp.float32)
        params[f"var{li}"] = jnp.abs(1.0 + 0.1 * jax.random.normal(k4, (c,), jnp.float32))
    return params


def _fold_layer(params, li, eps=1e-5):
    """Fold eval-mode BatchNorm + conv bias fully into the weight columns and one shift.

    relu(BN(x@W + cb)) == relu(x @ (W*s) + (beta + (cb - mean)*s)),  s = gamma/sqrt(var+eps)
    """
    s = params[f"gamma{li}"] / jnp.sqrt(params[f"var{li}"] + eps)
    w = params[f"w{li}"] * s[None, :]
    b = params[f"beta{li}"] + (params[f"cb{li}"] - params[f"mean{li}"]) * s
    return w, b[None, :].astype(jnp.float32)


def _prepare_operands(params):
    bf16 = jnp.bfloat16
    ops = []
    # layer 0 (1 -> 64): stays f32 (applied as a VPU broadcast multiply in-kernel)
    w1, b1 = _fold_layer(params, 0)
    ops += [w1.astype(jnp.float32), b1]
    # layers 1..3 (conv+BN+ReLU), MXU path -> bf16 weights
    for li in (1, 2, 3):
        w, b = _fold_layer(params, li)
        ops += [w.astype(bf16), b]
    # seg_conv1 (layer 4, 1024 -> 256): split rows into local / global halves
    w5, b5 = _fold_layer(params, 4)
    w5 = w5.astype(bf16)
    ops += [w5[:512, :], w5[512:, :], b5]
    # seg_conv2 (layer 5, 256 -> 128)
    w6, b6 = _fold_layer(params, 5)
    ops += [w6.astype(bf16), b6]
    # seg_conv3 (layer 6, 128 -> 1): plain conv, no BN / ReLU
    ops += [params["w6"].astype(bf16), params["cb6"][None, :].astype(jnp.float32)]
    return ops


# ----------------------------------------------------------------------------- wrapper
def _pick_block_batch(B):
    # Biggest divisor of B that is <= 8 while still leaving >= 2 grid steps
    # (keeps both TensorCores busy on v7x); fall back to 1.
    for bb in (8, 4, 2, 1):
        if B % bb == 0 and B // bb >= 2:
            return bb
    return 1


def _estimate_block_vmem_bytes(bb, n):
    m = bb * n
    acts_f32 = m * (64 + 128 + 256 + 512 + 256 + 256 + 128 + 1) * 4    # live f32 activations (upper bound)
    acts_bf16 = m * (128 + 256 + 512 + 256 + 128) * 2                  # bf16 dot-operand casts
    weights = 2 * 2 * (64 * 128 + 128 * 256 + 256 * 512                # bf16 weights, double-buffered
                       + 1024 * 256 + 256 * 128 + 128)
    io = 2 * 2 * m * 4                                                 # x / out blocks, double-buffered
    return acts_f32 + acts_bf16 + weights + io


def _vmem_budget_bytes():
    try:
        return int(pltpu.get_tpu_info().vmem_capacity_bytes * 0.6)     # generation-aware (64 MiB on v7x)
    except Exception:
        return 48 * 1024 * 1024


@jax.jit
def mismatch_forward(x, *ops):
    """x: [B, N, 1] float32  ->  [B, N] float32 (matches PyTorch forward output)."""
    B, N, one = x.shape
    assert one == 1
    assert N % 8 == 0, "point count must be a multiple of 8 (sublane tiling)"
    bb = _pick_block_batch(B)

    est = _estimate_block_vmem_bytes(bb, N)
    budget = _vmem_budget_bytes()
    if est > budget:
        # TODO(synk): add the N-tiled two-pass path (running-max accumulator) for large N.
        raise ValueError(f"per-block VMEM estimate {est} B exceeds budget {budget} B")

    def const_spec(arr):
        nd = arr.ndim
        return pl.BlockSpec(arr.shape, lambda b: (0,) * nd)

    in_specs = [pl.BlockSpec((bb, N, 1), lambda b: (b, 0, 0))]          # x, Bb batch rows per step
    # NOTE: weight/bias index maps are constant across the grid; pipeline_mode=pl.Buffered(1)
    # would return ~1 MiB of double-buffered VMEM (useful on v7x) but is left at the default
    # here for portability.
    in_specs += [const_spec(o) for o in ops]

    out = pl.pallas_call(
        _mismatch_kernel,
        out_shape=jax.ShapeDtypeStruct((B, N, 1), jnp.float32),
        grid_spec=pltpu.PrefetchScalarGridSpec(
            num_scalar_prefetch=0,
            grid=(B // bb,),
            in_specs=in_specs,
            out_specs=pl.BlockSpec((bb, N, 1), lambda b: (b, 0, 0)),
        ),
        compiler_params=pltpu.CompilerParams(
            dimension_semantics=("parallel",),
            vmem_limit_bytes=max(32 * 1024 * 1024, min(int(est * 2), budget)),
        ),
    )(x, *ops)
    return out[..., 0]                                                  # squeeze(1) equivalent


# ----------------------------------------------------------------------------- reference
def reference_forward(params, x, eps=1e-5):
    """Pure-JAX f32 reference mirroring the PyTorch forward (eval mode, unfolded BN)."""
    def conv_bn_relu(h, li):
        y = h @ params[f"w{li}"] + params[f"cb{li}"]
        y = (y - params[f"mean{li}"]) * (params[f"gamma{li}"]
            / jnp.sqrt(params[f"var{li}"] + eps)) + params[f"beta{li}"]
        return jnp.maximum(y, 0.0)

    h = conv_bn_relu(x, 0)
    h = conv_bn_relu(h, 1)
    h = conv_bn_relu(h, 2)
    h4 = conv_bn_relu(h, 3)
    g = jnp.max(h4, axis=1, keepdims=True)                              # [B, 1, 512]
    hc = jnp.concatenate([h4, jnp.broadcast_to(g, h4.shape)], axis=-1)  # [B, N, 1024]
    h5 = conv_bn_relu(hc, 4)
    h6 = conv_bn_relu(h5, 5)
    return (h6 @ params["w6"] + params["cb6"])[..., 0]


# ----------------------------------------------------------------------------- main
if __name__ == "__main__":
    key = jax.random.PRNGKey(0)
    kx, kp = jax.random.split(key)

    B, N = 4, 256
    x = jax.random.normal(kx, (B, N, 1), jnp.float32)                   # distance per point

    params = init_params(kp)
    ops = _prepare_operands(params)

    out = mismatch_forward(x, *ops)
    out = jax.block_until_ready(out)
    assert out.shape == (B, N), out.shape

    ref = reference_forward(params, x)
    max_err = float(jnp.max(jnp.abs(out - ref)))
    # bf16 MXU inputs (f32 accumulation) vs. pure-f32 reference -> slightly widened tolerance.
    assert jnp.allclose(out, ref, rtol=5e-2, atol=5e-2), max_err

    print("KERNEL_OK")
</pallas_src>

<mosaic_0001>
module attributes {stable_mosaic.version = 11 : i64} {
  func.func @_mismatch_kernel(%arg0: i32, %arg1: memref<2x256x1xf32, #tpu.memory_space<vmem>>, %arg2: memref<1x64xf32, #tpu.memory_space<vmem>>, %arg3: memref<1x64xf32, #tpu.memory_space<vmem>>, %arg4: memref<64x128xbf16, #tpu.memory_space<vmem>>, %arg5: memref<1x128xf32, #tpu.memory_space<vmem>>, %arg6: memref<128x256xbf16, #tpu.memory_space<vmem>>, %arg7: memref<1x256xf32, #tpu.memory_space<vmem>>, %arg8: memref<256x512xbf16, #tpu.memory_space<vmem>>, %arg9: memref<1x512xf32, #tpu.memory_space<vmem>>, %arg10: memref<512x256xbf16, #tpu.memory_space<vmem>>, %arg11: memref<512x256xbf16, #tpu.memory_space<vmem>>, %arg12: memref<1x256xf32, #tpu.memory_space<vmem>>, %arg13: memref<256x128xbf16, #tpu.memory_space<vmem>>, %arg14: memref<1x128xf32, #tpu.memory_space<vmem>>, %arg15: memref<128x1xbf16, #tpu.memory_space<vmem>>, %arg16: memref<1x1xf32, #tpu.memory_space<vmem>>, %arg17: memref<2x256x1xf32, #tpu.memory_space<vmem>>) attributes {dimension_semantics = [#tpu.dimension_semantics<parallel>], iteration_bounds = array<i64: 2>, scalar_prefetch = 0 : i64, scratch_operands = 0 : i64, tpu.core_type = #tpu.core_type<tc>, window_params = [{transform_indices = @transform_0, window_bounds = array<i64: 2, 256, 1>}, {pipeline_mode = #tpu.pipeline_mode<synchronous>, transform_indices = @transform_1, window_bounds = array<i64: 1, 64>}, {pipeline_mode = #tpu.pipeline_mode<synchronous>, transform_indices = @transform_2, window_bounds = array<i64: 1, 64>}, {pipeline_mode = #tpu.pipeline_mode<synchronous>, transform_indices = @transform_3, window_bounds = array<i64: 64, 128>}, {pipeline_mode = #tpu.pipeline_mode<synchronous>, transform_indices = @transform_4, window_bounds = array<i64: 1, 128>}, {pipeline_mode = #tpu.pipeline_mode<synchronous>, transform_indices = @transform_5, window_bounds = array<i64: 128, 256>}, {pipeline_mode = #tpu.pipeline_mode<synchronous>, transform_indices = @transform_6, window_bounds = array<i64: 1, 256>}, {pipeline_mode = #tpu.pipeline_mode<synchronous>, transform_indices = @transform_7, window_bounds = array<i64: 256, 512>}, {pipeline_mode = #tpu.pipeline_mode<synchronous>, transform_indices = @transform_8, window_bounds = array<i64: 1, 512>}, {pipeline_mode = #tpu.pipeline_mode<synchronous>, transform_indices = @transform_9, window_bounds = array<i64: 512, 256>}, {pipeline_mode = #tpu.pipeline_mode<synchronous>, transform_indices = @transform_10, window_bounds = array<i64: 512, 256>}, {pipeline_mode = #tpu.pipeline_mode<synchronous>, transform_indices = @transform_11, window_bounds = array<i64: 1, 256>}, {pipeline_mode = #tpu.pipeline_mode<synchronous>, transform_indices = @transform_12, window_bounds = array<i64: 256, 128>}, {pipeline_mode = #tpu.pipeline_mode<synchronous>, transform_indices = @transform_13, window_bounds = array<i64: 1, 128>}, {pipeline_mode = #tpu.pipeline_mode<synchronous>, transform_indices = @transform_14, window_bounds = array<i64: 128, 1>}, {pipeline_mode = #tpu.pipeline_mode<synchronous>, transform_indices = @transform_15, window_bounds = array<i64: 1, 1>}, {transform_indices = @transform_16, window_bounds = array<i64: 2, 256, 1>}]} {
    %c0 = arith.constant 0 : index
    %c0_0 = arith.constant 0 : index
    %c0_1 = arith.constant 0 : index
    %0 = vector.load %arg1[%c0, %c0_0, %c0_1] : memref<2x256x1xf32, #tpu.memory_space<vmem>>, vector<2x256x1xf32>
    %c0_2 = arith.constant 0 : index
    %c0_3 = arith.constant 0 : index
    %1 = vector.load %arg2[%c0_2, %c0_3] : memref<1x64xf32, #tpu.memory_space<vmem>>, vector<1x64xf32>
    %2 = vector.shape_cast %1 : vector<1x64xf32> to vector<1x1x64xf32>
    %3 = vector.broadcast %0 : vector<2x256x1xf32> to vector<2x256x64xf32>
    %4 = vector.broadcast %2 : vector<1x1x64xf32> to vector<2x256x64xf32>
    %5 = arith.mulf %3, %4 : vector<2x256x64xf32>
    %c0_4 = arith.constant 0 : index
    %c0_5 = arith.constant 0 : index
    %6 = vector.load %arg3[%c0_4, %c0_5] : memref<1x64xf32, #tpu.memory_space<vmem>>, vector<1x64xf32>
    %7 = vector.shape_cast %6 : vector<1x64xf32> to vector<1x1x64xf32>
    %8 = vector.broadcast %7 : vector<1x1x64xf32> to vector<2x256x64xf32>
    %9 = arith.addf %5, %8 : vector<2x256x64xf32>
    %cst = arith.constant 0.000000e+00 : f32
    %10 = vector.broadcast %cst : f32 to vector<2x256x64xf32>
    %11 = arith.maximumf %9, %10 : vector<2x256x64xf32>
    %12 = vector.shape_cast %11 : vector<2x256x64xf32> to vector<512x64xf32>
    %13 = arith.truncf %12 : vector<512x64xf32> to vector<512x64xbf16>
    %c0_6 = arith.constant 0 : index
    %c0_7 = arith.constant 0 : index
    %14 = vector.load %arg4[%c0_6, %c0_7] : memref<64x128xbf16, #tpu.memory_space<vmem>>, vector<64x128xbf16>
    %cst_8 = arith.constant dense<0.000000e+00> : vector<512x128xf32>
    %15 = tpu.matmul %13, %14, %cst_8 {dimension_numbers = #tpu.dot_dimension_numbers<[1], [0], [0], [1], [0, 0, 1, 1], [], []>} : vector<512x64xbf16>, vector<64x128xbf16>, vector<512x128xf32> -> vector<512x128xf32>
    %c0_9 = arith.constant 0 : index
    %c0_10 = arith.constant 0 : index
    %16 = vector.load %arg5[%c0_9, %c0_10] : memref<1x128xf32, #tpu.memory_space<vmem>>, vector<1x128xf32>
    %17 = vector.broadcast %16 : vector<1x128xf32> to vector<512x128xf32>
    %18 = arith.addf %15, %17 : vector<512x128xf32>
    %cst_11 = arith.constant 0.000000e+00 : f32
    %19 = vector.broadcast %cst_11 : f32 to vector<512x128xf32>
    %20 = arith.maximumf %18, %19 : vector<512x128xf32>
    %21 = arith.truncf %20 : vector<512x128xf32> to vector<512x128xbf16>
    %c0_12 = arith.constant 0 : index
    %c0_13 = arith.constant 0 : index
    %22 = vector.load %arg6[%c0_12, %c0_13] : memref<128x256xbf16, #tpu.memory_space<vmem>>, vector<128x256xbf16>
    %cst_14 = arith.constant dense<0.000000e+00> : vector<512x256xf32>
    %23 = tpu.matmul %21, %22, %cst_14 {dimension_numbers = #tpu.dot_dimension_numbers<[1], [0], [0], [1], [0, 0, 1, 1], [], []>} : vector<512x128xbf16>, vector<128x256xbf16>, vector<512x256xf32> -> vector<512x256xf32>
    %c0_15 = arith.constant 0 : index
    %c0_16 = arith.constant 0 : index
    %24 = vector.load %arg7[%c0_15, %c0_16] : memref<1x256xf32, #tpu.memory_space<vmem>>, vector<1x256xf32>
    %25 = vector.broadcast %24 : vector<1x256xf32> to vector<512x256xf32>
    %26 = arith.addf %23, %25 : vector<512x256xf32>
    %cst_17 = arith.constant 0.000000e+00 : f32
    %27 = vector.broadcast %cst_17 : f32 to vector<512x256xf32>
    %28 = arith.maximumf %26, %27 : vector<512x256xf32>
    %29 = arith.truncf %28 : vector<512x256xf32> to vector<512x256xbf16>
    %c0_18 = arith.constant 0 : index
    %c0_19 = arith.constant 0 : index
    %30 = vector.load %arg8[%c0_18, %c0_19] : memref<256x512xbf16, #tpu.memory_space<vmem>>, vector<256x512xbf16>
    %cst_20 = arith.constant dense<0.000000e+00> : vector<512x512xf32>
    %31 = tpu.matmul %29, %30, %cst_20 {dimension_numbers = #tpu.dot_dimension_numbers<[1], [0], [0], [1], [0, 0, 1, 1], [], []>} : vector<512x256xbf16>, vector<256x512xbf16>, vector<512x512xf32> -> vector<512x512xf32>
    %c0_21 = arith.constant 0 : index
    %c0_22 = arith.constant 0 : index
    %32 = vector.load %arg9[%c0_21, %c0_22] : memref<1x512xf32, #tpu.memory_space<vmem>>, vector<1x512xf32>
    %33 = vector.broadcast %32 : vector<1x512xf32> to vector<512x512xf32>
    %34 = arith.addf %31, %33 : vector<512x512xf32>
    %cst_23 = arith.constant 0.000000e+00 : f32
    %35 = vector.broadcast %cst_23 : f32 to vector<512x512xf32>
    %36 = arith.maximumf %34, %35 : vector<512x512xf32>
    %37 = vector.shape_cast %36 : vector<512x512xf32> to vector<2x256x512xf32>
    %cst_24 = arith.constant dense<0xFF800000> : vector<2x512xf32>
    %38 = vector.multi_reduction <maximumf>, %37, %cst_24 [1] : vector<2x256x512xf32> to vector<2x512xf32>
    %39 = arith.truncf %36 : vector<512x512xf32> to vector<512x512xbf16>
    %c0_25 = arith.constant 0 : index
    %c0_26 = arith.constant 0 : index
    %40 = vector.load %arg10[%c0_25, %c0_26] : memref<512x256xbf16, #tpu.memory_space<vmem>>, vector<512x256xbf16>
    %cst_27 = arith.constant dense<0.000000e+00> : vector<512x256xf32>
    %41 = tpu.matmul %39, %40, %cst_27 {dimension_numbers = #tpu.dot_dimension_numbers<[1], [0], [0], [1], [0, 0, 1, 1], [], []>} : vector<512x512xbf16>, vector<512x256xbf16>, vector<512x256xf32> -> vector<512x256xf32>
    %42 = arith.truncf %38 : vector<2x512xf32> to vector<2x512xbf16>
    %c0_28 = arith.constant 0 : index
    %c0_29 = arith.constant 0 : index
    %43 = vector.load %arg11[%c0_28, %c0_29] : memref<512x256xbf16, #tpu.memory_space<vmem>>, vector<512x256xbf16>
    %cst_30 = arith.constant dense<0.000000e+00> : vector<2x256xf32>
    %44 = tpu.matmul %42, %43, %cst_30 {dimension_numbers = #tpu.dot_dimension_numbers<[1], [0], [0], [1], [0, 0, 1, 1], [], []>} : vector<2x512xbf16>, vector<512x256xbf16>, vector<2x256xf32> -> vector<2x256xf32>
    %45 = vector.shape_cast %41 : vector<512x256xf32> to vector<2x256x256xf32>
    %46 = vector.shape_cast %44 : vector<2x256xf32> to vector<2x1x256xf32>
    %47 = vector.broadcast %46 : vector<2x1x256xf32> to vector<2x256x256xf32>
    %48 = arith.addf %45, %47 : vector<2x256x256xf32>
    %c0_31 = arith.constant 0 : index
    %c0_32 = arith.constant 0 : index
    %49 = vector.load %arg12[%c0_31, %c0_32] : memref<1x256xf32, #tpu.memory_space<vmem>>, vector<1x256xf32>
    %50 = vector.shape_cast %49 : vector<1x256xf32> to vector<1x1x256xf32>
    %51 = vector.broadcast %50 : vector<1x1x256xf32> to vector<2x256x256xf32>
    %52 = arith.addf %48, %51 : vector<2x256x256xf32>
    %cst_33 = arith.constant 0.000000e+00 : f32
    %53 = vector.broadcast %cst_33 : f32 to vector<2x256x256xf32>
    %54 = arith.maximumf %52, %53 : vector<2x256x256xf32>
    %55 = vector.shape_cast %54 : vector<2x256x256xf32> to vector<512x256xf32>
    %56 = arith.truncf %55 : vector<512x256xf32> to vector<512x256xbf16>
    %c0_34 = arith.constant 0 : index
    %c0_35 = arith.constant 0 : index
    %57 = vector.load %arg13[%c0_34, %c0_35] : memref<256x128xbf16, #tpu.memory_space<vmem>>, vector<256x128xbf16>
    %cst_36 = arith.constant dense<0.000000e+00> : vector<512x128xf32>
    %58 = tpu.matmul %56, %57, %cst_36 {dimension_numbers = #tpu.dot_dimension_numbers<[1], [0], [0], [1], [0, 0, 1, 1], [], []>} : vector<512x256xbf16>, vector<256x128xbf16>, vector<512x128xf32> -> vector<512x128xf32>
    %c0_37 = arith.constant 0 : index
    %c0_38 = arith.constant 0 : index
    %59 = vector.load %arg14[%c0_37, %c0_38] : memref<1x128xf32, #tpu.memory_space<vmem>>, vector<1x128xf32>
    %60 = vector.broadcast %59 : vector<1x128xf32> to vector<512x128xf32>
    %61 = arith.addf %58, %60 : vector<512x128xf32>
    %cst_39 = arith.constant 0.000000e+00 : f32
    %62 = vector.broadcast %cst_39 : f32 to vector<512x128xf32>
    %63 = arith.maximumf %61, %62 : vector<512x128xf32>
    %64 = arith.truncf %63 : vector<512x128xf32> to vector<512x128xbf16>
    %c0_40 = arith.constant 0 : index
    %c0_41 = arith.constant 0 : index
    %65 = vector.load %arg15[%c0_40, %c0_41] : memref<128x1xbf16, #tpu.memory_space<vmem>>, vector<128x1xbf16>
    %cst_42 = arith.constant dense<0.000000e+00> : vector<512x1xf32>
    %66 = tpu.matmul %64, %65, %cst_42 {dimension_numbers = #tpu.dot_dimension_numbers<[1], [0], [0], [1], [0, 0, 1, 1], [], []>} : vector<512x128xbf16>, vector<128x1xbf16>, vector<512x1xf32> -> vector<512x1xf32>
    %c0_43 = arith.constant 0 : index
    %c0_44 = arith.constant 0 : index
    %67 = vector.load %arg16[%c0_43, %c0_44] : memref<1x1xf32, #tpu.memory_space<vmem>>, vector<1x1xf32>
    %68 = vector.broadcast %67 : vector<1x1xf32> to vector<512x1xf32>
    %69 = arith.addf %66, %68 : vector<512x1xf32>
    %70 = vector.shape_cast %69 : vector<512x1xf32> to vector<2x256x1xf32>
    %c0_45 = arith.constant 0 : index
    %c0_46 = arith.constant 0 : index
    %c0_47 = arith.constant 0 : index
    %71 = vector.load %arg17[%c0_45, %c0_46, %c0_47] : memref<2x256x1xf32, #tpu.memory_space<vmem>>, vector<2x256x1xf32>
    tpu.vector_store %arg17[%c0_45, %c0_46, %c0_47], %70 {strides = array<i32>} : memref<2x256x1xf32, #tpu.memory_space<vmem>>, vector<2x256x1xf32>,
    return
  }
  func.func @transform_0(%arg0: i32) -> (i32, i32, i32) {
    %c0_i32 = arith.constant 0 : i32
    %c0_i32_0 = arith.constant 0 : i32
    %c0_i32_1 = arith.constant 0 : i32
    return %arg0, %c0_i32, %c0_i32_0 : i32, i32, i32
  }
  func.func @transform_1(%arg0: i32) -> (i32, i32) {
    %c0_i32 = arith.constant 0 : i32
    %c0_i32_0 = arith.constant 0 : i32
    %c0_i32_1 = arith.constant 0 : i32
    return %c0_i32, %c0_i32_0 : i32, i32
  }
  func.func @transform_2(%arg0: i32) -> (i32, i32) {
    %c0_i32 = arith.constant 0 : i32
    %c0_i32_0 = arith.constant 0 : i32
    %c0_i32_1 = arith.constant 0 : i32
    return %c0_i32, %c0_i32_0 : i32, i32
  }
  func.func @transform_3(%arg0: i32) -> (i32, i32) {
    %c0_i32 = arith.constant 0 : i32
    %c0_i32_0 = arith.constant 0 : i32
    %c0_i32_1 = arith.constant 0 : i32
    return %c0_i32, %c0_i32_0 : i32, i32
  }
  func.func @transform_4(%arg0: i32) -> (i32, i32) {
    %c0_i32 = arith.constant 0 : i32
    %c0_i32_0 = arith.constant 0 : i32
    %c0_i32_1 = arith.constant 0 : i32
    return %c0_i32, %c0_i32_0 : i32, i32
  }
  func.func @transform_5(%arg0: i32) -> (i32, i32) {
    %c0_i32 = arith.constant 0 : i32
    %c0_i32_0 = arith.constant 0 : i32
    %c0_i32_1 = arith.constant 0 : i32
    return %c0_i32, %c0_i32_0 : i32, i32
  }
  func.func @transform_6(%arg0: i32) -> (i32, i32) {
    %c0_i32 = arith.constant 0 : i32
    %c0_i32_0 = arith.constant 0 : i32
    %c0_i32_1 = arith.constant 0 : i32
    return %c0_i32, %c0_i32_0 : i32, i32
  }
  func.func @transform_7(%arg0: i32) -> (i32, i32) {
    %c0_i32 = arith.constant 0 : i32
    %c0_i32_0 = arith.constant 0 : i32
    %c0_i32_1 = arith.constant 0 : i32
    return %c0_i32, %c0_i32_0 : i32, i32
  }
  func.func @transform_8(%arg0: i32) -> (i32, i32) {
    %c0_i32 = arith.constant 0 : i32
    %c0_i32_0 = arith.constant 0 : i32
    %c0_i32_1 = arith.constant 0 : i32
    return %c0_i32, %c0_i32_0 : i32, i32
  }
  func.func @transform_9(%arg0: i32) -> (i32, i32) {
    %c0_i32 = arith.constant 0 : i32
    %c0_i32_0 = arith.constant 0 : i32
    %c0_i32_1 = arith.constant 0 : i32
    return %c0_i32, %c0_i32_0 : i32, i32
  }
  func.func @transform_10(%arg0: i32) -> (i32, i32) {
    %c0_i32 = arith.constant 0 : i32
    %c0_i32_0 = arith.constant 0 : i32
    %c0_i32_1 = arith.constant 0 : i32
    return %c0_i32, %c0_i32_0 : i32, i32
  }
  func.func @transform_11(%arg0: i32) -> (i32, i32) {
    %c0_i32 = arith.constant 0 : i32
    %c0_i32_0 = arith.constant 0 : i32
    %c0_i32_1 = arith.constant 0 : i32
    return %c0_i32, %c0_i32_0 : i32, i32
  }
  func.func @transform_12(%arg0: i32) -> (i32, i32) {
    %c0_i32 = arith.constant 0 : i32
    %c0_i32_0 = arith.constant 0 : i32
    %c0_i32_1 = arith.constant 0 : i32
    return %c0_i32, %c0_i32_0 : i32, i32
  }
  func.func @transform_13(%arg0: i32) -> (i32, i32) {
    %c0_i32 = arith.constant 0 : i32
    %c0_i32_0 = arith.constant 0 : i32
    %c0_i32_1 = arith.constant 0 : i32
    return %c0_i32, %c0_i32_0 : i32, i32
  }
  func.func @transform_14(%arg0: i32) -> (i32, i32) {
    %c0_i32 = arith.constant 0 : i32
    %c0_i32_0 = arith.constant 0 : i32
    %c0_i32_1 = arith.constant 0 : i32
    return %c0_i32, %c0_i32_0 : i32, i32
  }
  func.func @transform_15(%arg0: i32) -> (i32, i32) {
    %c0_i32 = arith.constant 0 : i32
    %c0_i32_0 = arith.constant 0 : i32
    %c0_i32_1 = arith.constant 0 : i32
    return %c0_i32, %c0_i32_0 : i32, i32
  }
  func.func @transform_16(%arg0: i32) -> (i32, i32, i32) {
    %c0_i32 = arith.constant 0 : i32
    %c0_i32_0 = arith.constant 0 : i32
    %c0_i32_1 = arith.constant 0 : i32
    return %arg0, %c0_i32, %c0_i32_0 : i32, i32, i32
  }
}

</mosaic_0001>

<llo_original>
// kernel: mismatch_forward.1
$region0: #{mismatch_forward.1}
  #allocation0 [shape = 'u32[]', space=smem, size = 0x4, offset = 0x4, fixed_abs, tag = 'smem constant byte address 0x4 - core index']
  #allocation1 [shape = 'u32[144,128]{1,0:T(1,128)}', space=vmem, size = 0x12000, scoped, tag = 'internal scratch']
  #allocation2 [shape = 'f32[1,1]{1,0:T(1,128)S(1)}', space=vmem, size = 0x200, scoped, tag = 'scoped memory for mismatch_forward.1']
  %s0 = inlined_call_operand.vmem [shape: f32[4,256,1], index: 0, kind: input, shape index: {}]
  %s1 = inlined_call_operand.vmem [shape: f32[1,64], index: 1, kind: input, shape index: {}]
  %s2 = inlined_call_operand.vmem [shape: f32[1,64], index: 2, kind: input, shape index: {}]
  %s3 = inlined_call_operand.vmem [shape: bf16[64,128], index: 3, kind: input, shape index: {}]
  %s4 = inlined_call_operand.vmem [shape: f32[1,128], index: 4, kind: input, shape index: {}]
  %s5 = inlined_call_operand.hbm [shape: bf16[128,256], index: 5, kind: input, shape index: {}]
  %s6 = inlined_call_operand.vmem [shape: f32[1,256], index: 6, kind: input, shape index: {}]
  %s7 = inlined_call_operand.vmem [shape: bf16[256,512], index: 7, kind: input, shape index: {}]
  %s8 = inlined_call_operand.vmem [shape: f32[1,512], index: 8, kind: input, shape index: {}]
  %s9 = inlined_call_operand.vmem [shape: bf16[512,256], index: 9, kind: input, shape index: {}]
  %s10 = inlined_call_operand.hbm [shape: bf16[512,256], index: 10, kind: input, shape index: {}]
  %s11 = inlined_call_operand.vmem [shape: f32[1,256], index: 11, kind: input, shape index: {}]
  %s12 = inlined_call_operand.hbm [shape: bf16[256,128], index: 12, kind: input, shape index: {}]
  %s13 = inlined_call_operand.vmem [shape: f32[1,128], index: 13, kind: input, shape index: {}]
  %s14 = inlined_call_operand.vmem [shape: bf16[128,1], index: 14, kind: input, shape index: {}]
  %s15 = inlined_call_operand.<no memory space> [shape: f32[1,1], index: 15, kind: input, shape index: {}]
  %s16 = inlined_call_operand.vmem [shape: f32[4,256,1], index: 16, kind: output, shape index: {}]
  %s17 = sld [smem:[#allocation0]]
  $region109: #{mismatch_forward.1} parent=0
    _
  %s19 = ssub.s32 1, %s17
  %s20 = scalar_select 0, %s19, %s17
  %v21 = vstv %s15
  %22 = vst [vmem:[#allocation2] sm:$0x1] %v21
  $region1: #{mismatch_forward.1} parent=0
    #allocation3 [shape = 'u8[65536]{0}', space=vmem, size = 0x10000, scoped, tag = 'input window, operand 5, single buffered']
    #allocation4 [shape = 's32[2]{0}', space=sflag, size = 0x8, scoped, tag = 'scoped memory for mismatch_forward.1']
    #allocation5 [shape = 'u8[262144]{0}', space=vmem, size = 0x40000, scoped, tag = 'input window, operand 10, single buffered']
    #allocation6 [shape = 's32[1]{0}', space=sflag, size = 0x4, scoped, tag = 'scoped memory for mismatch_forward.1']
    #allocation7 [shape = 'u8[65536]{0}', space=vmem, size = 0x10000, scoped, tag = 'input window, operand 12, single buffered']
    %23 = vsyncpa [#allocation4], 0
    %24 = vsyncpa [#allocation6], 0
    loop: start=0, step=1, limit=4
    $region2: #{mismatch_forward.1} parent=1 // loop_pre_header
      _
    $region3: #{mismatch_forward.1} parent=1 // loop_header
      %s26 = sphi 0, %s30
      %p27 = scmp.ge.s32.totalorder %s26, 4
      %s36 = sphi 0, %s38
      %s39 = sphi 0, %s36
      %s40 = sphi 0, %s39
      %s56 = sphi 0, %s40
      %s60 = sphi 0, %s60
      %s62 = sphi 0, %s60
      %s63 = sphi 0, %s62
      %s77 = sphi 0, %s63
      %s81 = sphi 0, %s81
      %s83 = sphi 0, %s81
      %s84 = sphi 0, %s83
      %s98 = sphi 0, %s84
      %s102 = sphi 0, %s102
      %s104 = sphi 0, %s102
      %s105 = sphi 0, %s104
      %s119 = sphi 0, %s105
      %s123 = sphi 0, %s123
      %s125 = sphi 0, %s123
      %s126 = sphi 0, %s125
      %s140 = sphi 0, %s126
      %s144 = sphi 0, %s144
      %s146 = sphi 0, %s144
      %s147 = sphi 0, %s146
      %s161 = sphi 0, %s147
      %s165 = sphi 0, %s165
      %s167 = sphi 0, %s165
      %s168 = sphi 0, %s167
      %s182 = sphi 0, %s168
      %s186 = sphi 0, %s186
      %s188 = sphi 0, %s186
      %s189 = sphi 0, %s188
      %s203 = sphi 0, %s189
      %s207 = sphi 0, %s207
      %s209 = sphi 0, %s207
      %s210 = sphi 0, %s209
      %s224 = sphi 0, %s210
      %s228 = sphi 0, %s228
      %s230 = sphi 0, %s228
      %s231 = sphi 0, %s230
      %s245 = sphi 0, %s231
      %s249 = sphi 0, %s249
      %s251 = sphi 0, %s249
      %s252 = sphi 0, %s251
      %s266 = sphi 0, %s252
      %s270 = sphi 0, %s270
      %s272 = sphi 0, %s270
      %s273 = sphi 0, %s272
      %s287 = sphi 0, %s273
      %s291 = sphi 0, %s291
      %s293 = sphi 0, %s291
      %s294 = sphi 0, %s293
      %s308 = sphi 0, %s294
      %s312 = sphi 0, %s312
      %s314 = sphi 0, %s312
      %s315 = sphi 0, %s314
      %s329 = sphi 0, %s315
      %s333 = sphi 0, %s333
      %s335 = sphi 0, %s333
      %s336 = sphi 0, %s335
      %s350 = sphi 0, %s336
      %s354 = sphi 0, %s354
      %s356 = sphi 0, %s354
      %s357 = sphi 0, %s356
      %s371 = sphi 0, %s357
      %s377 = sphi 0, %s379
      %s380 = sphi 0, %s377
      %s381 = sphi 0, %s380
      %s397 = sphi 0, %s381
    $region4: #{mismatch_forward.1} parent=1 // loop_header_branch
      %29 = sbr.rel (%p27) target = $region8
    $region5: #{mismatch_forward.1} parent=1 // loop_body
      %s31 = ssub.s32 %s26, 1
      %s32 = ssub.s32 %s26, 2
      %s33 = sadd.s32 %s26, 1
      %s34 = ssub.s32 %s26, %s33
      %p35 = scmp.eq.s32.totalorder %s34, 0
      %s37 = sadd.s32 %s36, 1
      %s38 = scalar_select %p35, %s36, %s37
      %p41 = pneg %p35
      %p42 = scmp.eq.s32.totalorder %s26, 1
      %p43 = por %p41, %p42
      %p44 = scmp.ne.s32.totalorder %s36, %s39
      %p45 = scmp.eq.s32.totalorder %s26, 0
      %p46 = por %p44, %p45
      %p47 = scmp.ne.s32.totalorder %s36, %s39
      %p48 = scmp.eq.s32.totalorder %s31, 1
      %p49 = por %p47, %p48
      %p50 = scmp.ne.s32.totalorder %s39, %s40
      %p51 = scmp.eq.s32.totalorder %s31, 0
      %p52 = por %p50, %p51
      %p53 = scmp.ne.s32.totalorder %s39, %s40
      %p54 = scmp.eq.s32.totalorder %s32, 1
      %p55 = por %p53, %p54
      %p57 = scmp.ne.s32.totalorder %s40, %s56
      %p58 = scmp.eq.s32.totalorder %s32, 0
      %p59 = por %p57, %p58
      %s61 = sadd.s32 %s60, 1
      %p64 = scmp.eq.s32.totalorder %s26, 1
      %p65 = scmp.ne.s32.totalorder %s60, %s62
      %p66 = scmp.eq.s32.totalorder %s26, 0
      %p67 = por %p65, %p66
      %p68 = scmp.ne.s32.totalorder %s60, %s62
      %p69 = scmp.eq.s32.totalorder %s31, 1
      %p70 = por %p68, %p69
      %p71 = scmp.ne.s32.totalorder %s62, %s63
      %p72 = scmp.eq.s32.totalorder %s31, 0
      %p73 = por %p71, %p72
      %p74 = scmp.ne.s32.totalorder %s62, %s63
      %p75 = scmp.eq.s32.totalorder %s32, 1
      %p76 = por %p74, %p75
      %p78 = scmp.ne.s32.totalorder %s63, %s77
      %p79 = scmp.eq.s32.totalorder %s32, 0
      %p80 = por %p78, %p79
      %s82 = sadd.s32 %s81, 1
      %p85 = scmp.eq.s32.totalorder %s26, 1
      %p86 = scmp.ne.s32.totalorder %s81, %s83
      %p87 = scmp.eq.s32.totalorder %s26, 0
      %p88 = por %p86, %p87
      %p89 = scmp.ne.s32.totalorder %s81, %s83
      %p90 = scmp.eq.s32.totalorder %s31, 1
      %p91 = por %p89, %p90
      %p92 = scmp.ne.s32.totalorder %s83, %s84
      %p93 = scmp.eq.s32.totalorder %s31, 0
      %p94 = por %p92, %p93
      %p95 = scmp.ne.s32.totalorder %s83, %s84
      %p96 = scmp.eq.s32.totalorder %s32, 1
      %p97 = por %p95, %p96
      %p99 = scmp.ne.s32.totalorder %s84, %s98
      %p100 = scmp.eq.s32.totalorder %s32, 0
      %p101 = por %p99, %p100
      %s103 = sadd.s32 %s102, 1
      %p106 = scmp.eq.s32.totalorder %s26, 1
      %p107 = scmp.ne.s32.totalorder %s102, %s104
      %p108 = scmp.eq.s32.totalorder %s26, 0
      %p109 = por %p107, %p108
      %p110 = scmp.ne.s32.totalorder %s102, %s104
      %p111 = scmp.eq.s32.totalorder %s31, 1
      %p112 = por %p110, %p111
      %p113 = scmp.ne.s32.totalorder %s104, %s105
      %p114 = scmp.eq.s32.totalorder %s31, 0
      %p115 = por %p113, %p114
      %p116 = scmp.ne.s32.totalorder %s104, %s105
      %p117 = scmp.eq.s32.totalorder %s32, 1
      %p118 = por %p116, %p117
      %p120 = scmp.ne.s32.totalorder %s105, %s119
      %p121 = scmp.eq.s32.totalorder %s32, 0
      %p122 = por %p120, %p121
      %s124 = sadd.s32 %s123, 1
      %p127 = scmp.eq.s32.totalorder %s26, 1
      %p128 = scmp.ne.s32.totalorder %s123, %s125
      %p129 = scmp.eq.s32.totalorder %s26, 0
      %p130 = por %p128, %p129
      %p131 = scmp.ne.s32.totalorder %s123, %s125
      %p132 = scmp.eq.s32.totalorder %s31, 1
      %p133 = por %p131, %p132
      %p134 = scmp.ne.s32.totalorder %s125, %s126
      %p135 = scmp.eq.s32.totalorder %s31, 0
      %p136 = por %p134, %p135
      %p137 = scmp.ne.s32.totalorder %s125, %s126
      %p138 = scmp.eq.s32.totalorder %s32, 1
      %p139 = por %p137, %p138
      %p141 = scmp.ne.s32.totalorder %s126, %s140
      %p142 = scmp.eq.s32.totalorder %s32, 0
      %p143 = por %p141, %p142
      %s145 = sadd.s32 %s144, 1
      %p148 = scmp.eq.s32.totalorder %s26, 1
      %p149 = scmp.ne.s32.totalorder %s144, %s146
      %p150 = scmp.eq.s32.totalorder %s26, 0
      %p151 = por %p149, %p150
      %p152 = scmp.ne.s32.totalorder %s144, %s146
      %p153 = scmp.eq.s32.totalorder %s31, 1
      %p154 = por %p152, %p153
      %p155 = scmp.ne.s32.totalorder %s146, %s147
      %p156 = scmp.eq.s32.totalorder %s31, 0
      %p157 = por %p155, %p156
      %p158 = scmp.ne.s32.totalorder %s146, %s147
      %p159 = scmp.eq.s32.totalorder %s32, 1
      %p160 = por %p158, %p159
      %p162 = scmp.ne.s32.totalorder %s147, %s161
      %p163 = scmp.eq.s32.totalorder %s32, 0
      %p164 = por %p162, %p163
      %s166 = sadd.s32 %s165, 1
      %p169 = scmp.eq.s32.totalorder %s26, 1
      %p170 = scmp.ne.s32.totalorder %s165, %s167
      %p171 = scmp.eq.s32.totalorder %s26, 0
      %p172 = por %p170, %p171
      %p173 = scmp.ne.s32.totalorder %s165, %s167
      %p174 = scmp.eq.s32.totalorder %s31, 1
      %p175 = por %p173, %p174
      %p176 = scmp.ne.s32.totalorder %s167, %s168
      %p177 = scmp.eq.s32.totalorder %s31, 0
      %p178 = por %p176, %p177
      %p179 = scmp.ne.s32.totalorder %s167, %s168
      %p180 = scmp.eq.s32.totalorder %s32, 1
      %p181 = por %p179, %p180
      %p183 = scmp.ne.s32.totalorder %s168, %s182
      %p184 = scmp.eq.s32.totalorder %s32, 0
      %p185 = por %p183, %p184
      %s187 = sadd.s32 %s186, 1
      %p190 = scmp.eq.s32.totalorder %s26, 1
      %p191 = scmp.ne.s32.totalorder %s186, %s188
      %p192 = scmp.eq.s32.totalorder %s26, 0
      %p193 = por %p191, %p192
      %p194 = scmp.ne.s32.totalorder %s186, %s188
      %p195 = scmp.eq.s32.totalorder %s31, 1
      %p196 = por %p194, %p195
      %p197 = scmp.ne.s32.totalorder %s188, %s189
      %p198 = scmp.eq.s32.totalorder %s31, 0
      %p199 = por %p197, %p198
      %p200 = scmp.ne.s32.totalorder %s188, %s189
      %p201 = scmp.eq.s32.totalorder %s32, 1
      %p202 = por %p200, %p201
      %p204 = scmp.ne.s32.totalorder %s189, %s203
      %p205 = scmp.eq.s32.totalorder %s32, 0
      %p206 = por %p204, %p205
      %s208 = sadd.s32 %s207, 1
      %p211 = scmp.eq.s32.totalorder %s26, 1
      %p212 = scmp.ne.s32.totalorder %s207, %s209
      %p213 = scmp.eq.s32.totalorder %s26, 0
      %p214 = por %p212, %p213
      %p215 = scmp.ne.s32.totalorder %s207, %s209
      %p216 = scmp.eq.s32.totalorder %s31, 1
      %p217 = por %p215, %p216
      %p218 = scmp.ne.s32.totalorder %s209, %s210
      %p219 = scmp.eq.s32.totalorder %s31, 0
      %p220 = por %p218, %p219
      %p221 = scmp.ne.s32.totalorder %s209, %s210
      %p222 = scmp.eq.s32.totalorder %s32, 1
      %p223 = por %p221, %p222
      %p225 = scmp.ne.s32.totalorder %s210, %s224
      %p226 = scmp.eq.s32.totalorder %s32, 0
      %p227 = por %p225, %p226
      %s229 = sadd.s32 %s228, 1
      %p232 = scmp.eq.s32.totalorder %s26, 1
      %p233 = scmp.ne.s32.totalorder %s228, %s230
      %p234 = scmp.eq.s32.totalorder %s26, 0
      %p235 = por %p233, %p234
      %p236 = scmp.ne.s32.totalorder %s228, %s230
      %p237 = scmp.eq.s32.totalorder %s31, 1
      %p238 = por %p236, %p237
      %p239 = scmp.ne.s32.totalorder %s230, %s231
      %p240 = scmp.eq.s32.totalorder %s31, 0
      %p241 = por %p239, %p240
      %p242 = scmp.ne.s32.totalorder %s230, %s231
      %p243 = scmp.eq.s32.totalorder %s32, 1
      %p244 = por %p242, %p243
      %p246 = scmp.ne.s32.totalorder %s231, %s245
      %p247 = scmp.eq.s32.totalorder %s32, 0
      %p248 = por %p246, %p247
      %s250 = sadd.s32 %s249, 1
      %p253 = scmp.eq.s32.totalorder %s26, 1
      %p254 = scmp.ne.s32.totalorder %s249, %s251
      %p255 = scmp.eq.s32.totalorder %s26, 0
      %p256 = por %p254, %p255
      %p257 = scmp.ne.s32.totalorder %s249, %s251
      %p258 = scmp.eq.s32.totalorder %s31, 1
      %p259 = por %p257, %p258
      %p260 = scmp.ne.s32.totalorder %s251, %s252
      %p261 = scmp.eq.s32.totalorder %s31, 0
      %p262 = por %p260, %p261
      %p263 = scmp.ne.s32.totalorder %s251, %s252
      %p264 = scmp.eq.s32.totalorder %s32, 1
      %p265 = por %p263, %p264
      %p267 = scmp.ne.s32.totalorder %s252, %s266
      %p268 = scmp.eq.s32.totalorder %s32, 0
      %p269 = por %p267, %p268
      %s271 = sadd.s32 %s270, 1
      %p274 = scmp.eq.s32.totalorder %s26, 1
      %p275 = scmp.ne.s32.totalorder %s270, %s272
      %p276 = scmp.eq.s32.totalorder %s26, 0
      %p277 = por %p275, %p276
      %p278 = scmp.ne.s32.totalorder %s270, %s272
      %p279 = scmp.eq.s32.totalorder %s31, 1
      %p280 = por %p278, %p279
      %p281 = scmp.ne.s32.totalorder %s272, %s273
      %p282 = scmp.eq.s32.totalorder %s31, 0
      %p283 = por %p281, %p282
      %p284 = scmp.ne.s32.totalorder %s272, %s273
      %p285 = scmp.eq.s32.totalorder %s32, 1
      %p286 = por %p284, %p285
      %p288 = scmp.ne.s32.totalorder %s273, %s287
      %p289 = scmp.eq.s32.totalorder %s32, 0
      %p290 = por %p288, %p289
      %s292 = sadd.s32 %s291, 1
      %p295 = scmp.eq.s32.totalorder %s26, 1
      %p296 = scmp.ne.s32.totalorder %s291, %s293
      %p297 = scmp.eq.s32.totalorder %s26, 0
      %p298 = por %p296, %p297
      %p299 = scmp.ne.s32.totalorder %s291, %s293
      %p300 = scmp.eq.s32.totalorder %s31, 1
      %p301 = por %p299, %p300
      %p302 = scmp.ne.s32.totalorder %s293, %s294
      %p303 = scmp.eq.s32.totalorder %s31, 0
      %p304 = por %p302, %p303
      %p305 = scmp.ne.s32.totalorder %s293, %s294
      %p306 = scmp.eq.s32.totalorder %s32, 1
      %p307 = por %p305, %p306
      %p309 = scmp.ne.s32.totalorder %s294, %s308
      %p310 = scmp.eq.s32.totalorder %s32, 0
      %p311 = por %p309, %p310
      %s313 = sadd.s32 %s312, 1
      %p316 = scmp.eq.s32.totalorder %s26, 1
      %p317 = scmp.ne.s32.totalorder %s312, %s314
      %p318 = scmp.eq.s32.totalorder %s26, 0
      %p319 = por %p317, %p318
      %p320 = scmp.ne.s32.totalorder %s312, %s314
      %p321 = scmp.eq.s32.totalorder %s31, 1
      %p322 = por %p320, %p321
      %p323 = scmp.ne.s32.totalorder %s314, %s315
      %p324 = scmp.eq.s32.totalorder %s31, 0
      %p325 = por %p323, %p324
      %p326 = scmp.ne.s32.totalorder %s314, %s315
      %p327 = scmp.eq.s32.totalorder %s32, 1
      %p328 = por %p326, %p327
      %p330 = scmp.ne.s32.totalorder %s315, %s329
      %p331 = scmp.eq.s32.totalorder %s32, 0
      %p332 = por %p330, %p331
      %s334 = sadd.s32 %s333, 1
      %p337 = scmp.eq.s32.totalorder %s26, 1
      %p338 = scmp.ne.s32.totalorder %s333, %s335
      %p339 = scmp.eq.s32.totalorder %s26, 0
      %p340 = por %p338, %p339
      %p341 = scmp.ne.s32.totalorder %s333, %s335
      %p342 = scmp.eq.s32.totalorder %s31, 1
      %p343 = por %p341, %p342
      %p344 = scmp.ne.s32.totalorder %s335, %s336
      %p345 = scmp.eq.s32.totalorder %s31, 0
      %p346 = por %p344, %p345
      %p347 = scmp.ne.s32.totalorder %s335, %s336
      %p348 = scmp.eq.s32.totalorder %s32, 1
      %p349 = por %p347, %p348
      %p351 = scmp.ne.s32.totalorder %s336, %s350
      %p352 = scmp.eq.s32.totalorder %s32, 0
      %p353 = por %p351, %p352
      %s355 = sadd.s32 %s354, 1
      %p358 = scmp.eq.s32.totalorder %s26, 1
      %p359 = scmp.ne.s32.totalorder %s354, %s356
      %p360 = scmp.eq.s32.totalorder %s26, 0
      %p361 = por %p359, %p360
      %p362 = scmp.ne.s32.totalorder %s354, %s356
      %p363 = scmp.eq.s32.totalorder %s31, 1
      %p364 = por %p362, %p363
      %p365 = scmp.ne.s32.totalorder %s356, %s357
      %p366 = scmp.eq.s32.totalorder %s31, 0
      %p367 = por %p365, %p366
      %p368 = scmp.ne.s32.totalorder %s356, %s357
      %p369 = scmp.eq.s32.totalorder %s32, 1
      %p370 = por %p368, %p369
      %p372 = scmp.ne.s32.totalorder %s357, %s371
      %p373 = scmp.eq.s32.totalorder %s32, 0
      %p374 = por %p372, %p373
      %s375 = ssub.s32 %s26, %s33
      %p376 = scmp.eq.s32.totalorder %s375, 0
      %s378 = sadd.s32 %s377, 1
      %s379 = scalar_select %p376, %s377, %s378
      %p382 = pneg %p376
      %p383 = scmp.eq.s32.totalorder %s26, 1
      %p384 = por %p382, %p383
      %p385 = scmp.ne.s32.totalorder %s377, %s380
      %p386 = scmp.eq.s32.totalorder %s26, 0
      %p387 = por %p385, %p386
      %p388 = scmp.ne.s32.totalorder %s377, %s380
      %p389 = scmp.eq.s32.totalorder %s31, 1
      %p390 = por %p388, %p389
      %p391 = scmp.ne.s32.totalorder %s380, %s381
      %p392 = scmp.eq.s32.totalorder %s31, 0
      %p393 = por %p391, %p392
      %p394 = scmp.ne.s32.totalorder %s380, %s381
      %p395 = scmp.eq.s32.totalorder %s32, 1
      %p396 = por %p394, %p395
      %p398 = scmp.ne.s32.totalorder %s381, %s397
      %p399 = scmp.eq.s32.totalorder %s32, 0
      %p400 = por %p398, %p399
      %p401 = scmp.le.s32.totalorder 1, %s26
      %p402 = scmp.lt.s32.totalorder %s26, 3
      %p403 = pnand %p401, %p402
      %p404 = pneg %p403
      // Predicated region
      $region9: #{mismatch_forward.1} parent=5 // pred_check
        _
      $region10: #{mismatch_forward.1} parent=5 // pred_check_branch
        %406 = sbr.rel (%p403) target = $region12
      $region11: #{mismatch_forward.1} parent=5 // pred_region
        %s407 = ssub.s32 %s26, 1
        // Predicated region
        $region13: #{mismatch_forward.1} parent=11 // pred_check
          %p408 = pneg %p73
        $region14: #{mismatch_forward.1} parent=11 // pred_check_branch
          %410 = sbr.rel (%p408) target = $region16
        $region15: #{mismatch_forward.1} parent=11 // pred_region
          _
        $region16: #{mismatch_forward.1} parent=11 // pred_fallthru
          _
        // Predicated region
        $region17: #{mismatch_forward.1} parent=11 // pred_check
          %p411 = pneg %p94
        $region18: #{mismatch_forward.1} parent=11 // pred_check_branch
          %413 = sbr.rel (%p411) target = $region20
        $region19: #{mismatch_forward.1} parent=11 // pred_region
          _
        $region20: #{mismatch_forward.1} parent=11 // pred_fallthru
          _
        // Predicated region
        $region21: #{mismatch_forward.1} parent=11 // pred_check
          %p414 = pneg %p115
        $region22: #{mismatch_forward.1} parent=11 // pred_check_branch
          %416 = sbr.rel (%p414) target = $region24
        $region23: #{mismatch_forward.1} parent=11 // pred_region
          _
        $region24: #{mismatch_forward.1} parent=11 // pred_fallthru
          _
        // Predicated region
        $region25: #{mismatch_forward.1} parent=11 // pred_check
          %p417 = pneg %p136
        $region26: #{mismatch_forward.1} parent=11 // pred_check_branch
          %419 = sbr.rel (%p417) target = $region28
        $region27: #{mismatch_forward.1} parent=11 // pred_region
          _
        $region28: #{mismatch_forward.1} parent=11 // pred_fallthru
          _
        // Predicated region
        $region29: #{mismatch_forward.1} parent=11 // pred_check
          %p420 = pneg %p157
        $region30: #{mismatch_forward.1} parent=11 // pred_check_branch
          %422 = sbr.rel (%p420) target = $region32
        $region31: #{mismatch_forward.1} parent=11 // pred_region
          %s424 = ssub.s32 2048, 2048
          %425 = vsyncadd [#allocation4], %s424
          %s426 = sshll.u32 [#allocation3], 4
          %s427 = int_to_ptr.vmem [resolvable:$true] %s426
          %432 = dma.hbm_to_vmem [thread:$0]  %s5, 2048, %s427, [#allocation4], 128, 128, 8
        $region32: #{mismatch_forward.1} parent=11 // pred_fallthru
          _
        // Predicated region
        $region33: #{mismatch_forward.1} parent=11 // pred_check
          %p433 = pneg %p178
        $region34: #{mismatch_forward.1} parent=11 // pred_check_branch
          %435 = sbr.rel (%p433) target = $region36
        $region35: #{mismatch_forward.1} parent=11 // pred_region
          _
        $region36: #{mismatch_forward.1} parent=11 // pred_fallthru
          _
        // Predicated region
        $region37: #{mismatch_forward.1} parent=11 // pred_check
          %p436 = pneg %p199
        $region38: #{mismatch_forward.1} parent=11 // pred_check_branch
          %438 = sbr.rel (%p436) target = $region40
        $region39: #{mismatch_forward.1} parent=11 // pred_region
          _
        $region40: #{mismatch_forward.1} parent=11 // pred_fallthru
          _
        // Predicated region
        $region41: #{mismatch_forward.1} parent=11 // pred_check
          %p439 = pneg %p220
        $region42: #{mismatch_forward.1} parent=11 // pred_check_branch
          %441 = sbr.rel (%p439) target = $region44
        $region43: #{mismatch_forward.1} parent=11 // pred_region
          _
        $region44: #{mismatch_forward.1} parent=11 // pred_fallthru
          _
        // Predicated region
        $region45: #{mismatch_forward.1} parent=11 // pred_check
          %p442 = pneg %p241
        $region46: #{mismatch_forward.1} parent=11 // pred_check_branch
          %444 = sbr.rel (%p442) target = $region48
        $region47: #{mismatch_forward.1} parent=11 // pred_region
          _
        $region48: #{mismatch_forward.1} parent=11 // pred_fallthru
          _
        // Predicated region
        $region49: #{mismatch_forward.1} parent=11 // pred_check
          %p445 = pneg %p262
        $region50: #{mismatch_forward.1} parent=11 // pred_check_branch
          %447 = sbr.rel (%p445) target = $region52
        $region51: #{mismatch_forward.1} parent=11 // pred_region
          %s449 = ssub.s32 8192, 8192
          %450 = vsyncadd [#allocation6], %s449
          %s451 = sshll.u32 [#allocation5], 4
          %s452 = int_to_ptr.vmem [resolvable:$true] %s451
          %457 = dma.hbm_to_vmem [thread:$0]  %s10, 8192, %s452, [#allocation6], 128, 128, 8
        $region52: #{mismatch_forward.1} parent=11 // pred_fallthru
          _
        // Predicated region
        $region53: #{mismatch_forward.1} parent=11 // pred_check
          %p458 = pneg %p283
        $region54: #{mismatch_forward.1} parent=11 // pred_check_branch
          %460 = sbr.rel (%p458) target = $region56
        $region55: #{mismatch_forward.1} parent=11 // pred_region
          _
        $region56: #{mismatch_forward.1} parent=11 // pred_fallthru
          _
        // Predicated region
        $region57: #{mismatch_forward.1} parent=11 // pred_check
          %p461 = pneg %p304
        $region58: #{mismatch_forward.1} parent=11 // pred_check_branch
          %463 = sbr.rel (%p461) target = $region60
        $region59: #{mismatch_forward.1} parent=11 // pred_region
          %s465 = ssub.s32 2048, 2048
          %466 = vsyncadd [#allocation6], %s465
          %s467 = sshll.u32 [#allocation7], 4
          %s468 = int_to_ptr.vmem [resolvable:$true] %s467
          %473 = dma.hbm_to_vmem [thread:$0]  %s12, 2048, %s468, [#allocation6], 64, 64, 4
        $region60: #{mismatch_forward.1} parent=11 // pred_fallthru
          _
        // Predicated region
        $region61: #{mismatch_forward.1} parent=11 // pred_check
          %p474 = pneg %p325
        $region62: #{mismatch_forward.1} parent=11 // pred_check_branch
          %476 = sbr.rel (%p474) target = $region64
        $region63: #{mismatch_forward.1} parent=11 // pred_region
          _
        $region64: #{mismatch_forward.1} parent=11 // pred_fallthru
          _
        // Predicated region
        $region65: #{mismatch_forward.1} parent=11 // pred_check
          %p477 = pneg %p346
        $region66: #{mismatch_forward.1} parent=11 // pred_check_branch
          %479 = sbr.rel (%p477) target = $region68
        $region67: #{mismatch_forward.1} parent=11 // pred_region
          _
        $region68: #{mismatch_forward.1} parent=11 // pred_fallthru
          _
        // Predicated region
        $region69: #{mismatch_forward.1} parent=11 // pred_check
          %p480 = pneg %p367
        $region70: #{mismatch_forward.1} parent=11 // pred_check_branch
          %482 = sbr.rel (%p480) target = $region72
        $region71: #{mismatch_forward.1} parent=11 // pred_region
          _
        $region72: #{mismatch_forward.1} parent=11 // pred_fallthru
          _
      $region12: #{mismatch_forward.1} parent=5 // pred_fallthru
        _
      %p483 = scmp.lt.s32.totalorder %s26, 2
      // Predicated region
      $region73: #{mismatch_forward.1} parent=5 // pred_check
        %p484 = pneg %p483
      $region74: #{mismatch_forward.1} parent=5 // pred_check_branch
        %486 = sbr.rel (%p484) target = $region76
      $region75: #{mismatch_forward.1} parent=5 // pred_region
        // Predicated region
        $region77: #{mismatch_forward.1} parent=75 // pred_check
          %p487 = pneg %p46
        $region78: #{mismatch_forward.1} parent=75 // pred_check_branch
          %489 = sbr.rel (%p487) target = $region80
        $region79: #{mismatch_forward.1} parent=75 // pred_region
          %s490 = smul.u32 2, %s26
          %p491 = scmp.lt.s32.totalorder %s490, 3
          %s492 = scalar_select %p491, %s490, 3
          %s493 = smul.addr %s492, 32
          %s494 = smul.addr %s493, 8
          %s495 = scalar_lea.vmem %s0, %s494
          %s496 = smul.u32 2, %s26
        $region80: #{mismatch_forward.1} parent=75 // pred_fallthru
          _
      $region76: #{mismatch_forward.1} parent=5 // pred_fallthru
        _
      %p497 = scmp.le.s32.totalorder 1, %s26
      %p498 = scmp.lt.s32.totalorder %s26, 3
      %p499 = pnand %p497, %p498
      %p500 = pneg %p499
      // Predicated region
      $region81: #{mismatch_forward.1} parent=5 // pred_check
        _
      $region82: #{mismatch_forward.1} parent=5 // pred_check_branch
        %502 = sbr.rel (%p499) target = $region84
      $region83: #{mismatch_forward.1} parent=5 // pred_region
        %s503 = ssub.s32 %s26, 1
        // Predicated region
        $region85: #{mismatch_forward.1} parent=83 // pred_check
          %p504 = pneg %p157
        $region86: #{mismatch_forward.1} parent=83 // pred_check_branch
          %506 = sbr.rel (%p504) target = $region88
        $region87: #{mismatch_forward.1} parent=83 // pred_region
          %507 = dma.done [#allocation4], 2048
        $region88: #{mismatch_forward.1} parent=83 // pred_fallthru
          _
        // Predicated region
        $region89: #{mismatch_forward.1} parent=83 // pred_check
          %p508 = pneg %p262
        $region90: #{mismatch_forward.1} parent=83 // pred_check_branch
          %510 = sbr.rel (%p508) target = $region92
        $region91: #{mismatch_forward.1} parent=83 // pred_region
          %511 = dma.done [#allocation6], 8192
        $region92: #{mismatch_forward.1} parent=83 // pred_fallthru
          _
        // Predicated region
        $region93: #{mismatch_forward.1} parent=83 // pred_check
          %p512 = pneg %p304
        $region94: #{mismatch_forward.1} parent=83 // pred_check_branch
          %514 = sbr.rel (%p512) target = $region96
        $region95: #{mismatch_forward.1} parent=83 // pred_region
          %515 = dma.done [#allocation6], 2048
        $region96: #{mismatch_forward.1} parent=83 // pred_fallthru
          _
        %s516 = smul.u32 2, %s31
        %p517 = scmp.lt.s32.totalorder %s516, 3
        %s518 = scalar_select %p517, %s516, 3
        %s519 = smul.addr %s518, 32
        %s520 = smul.addr %s519, 8
        %s521 = scalar_lea.vmem %s0, %s520
        %p522 = pneg %p52
        %p523 = pneg %p49
        %p524 = pneg %p73
        %p525 = pneg %p70
        %p526 = pneg %p94
        %p527 = pneg %p91
        %p528 = pneg %p115
        %p529 = pneg %p112
        %p530 = pneg %p136
        %p531 = pneg %p133
        %p532 = pneg %p157
        %p533 = pneg %p154
        %p534 = pneg %p178
        %p535 = pneg %p175
        %p536 = pneg %p199
        %p537 = pneg %p196
        %p538 = pneg %p220
        %p539 = pneg %p217
        %p540 = pneg %p241
        %p541 = pneg %p238
        %p542 = pneg %p262
        %p543 = pneg %p259
        %p544 = pneg %p283
        %p545 = pneg %p280
        %p546 = pneg %p304
        %p547 = pneg %p301
        %p548 = pneg %p325
        %p549 = pneg %p322
        %p550 = pneg %p346
        %p551 = pneg %p343
        %p552 = pneg %p367
        %p553 = pneg %p364
        %p554 = pneg %p393
        %p555 = pneg %p390
        %s556 = smul.u32 2, %s31
        %p557 = scmp.lt.s32.totalorder %s556, 3
        %s558 = scalar_select %p557, %s556, 3
        %s559 = smul.addr %s558, 32
        %s560 = smul.addr %s559, 8
        %s561 = scalar_lea.vmem %s16, %s560
        %s562 = smul.u32 2, %s31
        %p563 = scmp.lt.s32.totalorder %s562, 3
        %s564 = scalar_select %p563, %s562, 3
        %s565 = smul.addr %s564, 32
        %s566 = smul.addr %s565, 8
        %s567 = scalar_lea.vmem %s0, %s566
        %s568 = smul.u32 2, %s31
        %s569 = smul.u32 2, %s31
        %p570 = scmp.lt.s32.totalorder %s569, 3
        %s571 = scalar_select %p570, %s569, 3
        %s572 = smul.addr %s571, 32
        %s573 = smul.addr %s572, 8
        %s574 = scalar_lea.vmem %s16, %s573
        %s575 = smul.u32 2, %s31
        %v577 = vld [vmem:[%s567] sm:$0xff]
        %v578 = vld [vmem:[%s567 + $0x8] sm:$0xff]
        %v579 = vld [vmem:[%s567 + $0x10] sm:$0xff]
        %v580 = vld [vmem:[%s567 + $0x18] sm:$0xff]
        %v581 = vld [vmem:[%s567 + $0x20] sm:$0xff]
        %v582 = vld [vmem:[%s567 + $0x28] sm:$0xff]
        %v583 = vld [vmem:[%s567 + $0x30] sm:$0xff]
        %v584 = vld [vmem:[%s567 + $0x38] sm:$0xff]
        %v585 = vld [vmem:[%s567 + $0x40] sm:$0xff]
        %v586 = vld [vmem:[%s567 + $0x48] sm:$0xff]
        %v587 = vld [vmem:[%s567 + $0x50] sm:$0xff]
        %v588 = vld [vmem:[%s567 + $0x58] sm:$0xff]
        %v589 = vld [vmem:[%s567 + $0x60] sm:$0xff]
        %v590 = vld [vmem:[%s567 + $0x68] sm:$0xff]
        %v591 = vld [vmem:[%s567 + $0x70] sm:$0xff]
        %v592 = vld [vmem:[%s567 + $0x78] sm:$0xff]
        %v593 = vld [vmem:[%s567 + $0x80] sm:$0xff]
        %v594 = vld [vmem:[%s567 + $0x88] sm:$0xff]
        %v595 = vld [vmem:[%s567 + $0x90] sm:$0xff]
        %v596 = vld [vmem:[%s567 + $0x98] sm:$0xff]
        %v597 = vld [vmem:[%s567 + $0xa0] sm:$0xff]
        %v598 = vld [vmem:[%s567 + $0xa8] sm:$0xff]
        %v599 = vld [vmem:[%s567 + $0xb0] sm:$0xff]
        %v600 = vld [vmem:[%s567 + $0xb8] sm:$0xff]
        %v601 = vld [vmem:[%s567 + $0xc0] sm:$0xff]
        %v602 = vld [vmem:[%s567 + $0xc8] sm:$0xff]
        %v603 = vld [vmem:[%s567 + $0xd0] sm:$0xff]
        %v604 = vld [vmem:[%s567 + $0xd8] sm:$0xff]
        %v605 = vld [vmem:[%s567 + $0xe0] sm:$0xff]
        %v606 = vld [vmem:[%s567 + $0xe8] sm:$0xff]
        %v607 = vld [vmem:[%s567 + $0xf0] sm:$0xff]
        %v608 = vld [vmem:[%s567 + $0xf8] sm:$0xff]
        %v609 = vld [vmem:[%s567 + $0x100] sm:$0xff]
        %v610 = vld [vmem:[%s567 + $0x108] sm:$0xff]
        %v611 = vld [vmem:[%s567 + $0x110] sm:$0xff]
        %v612 = vld [vmem:[%s567 + $0x118] sm:$0xff]
        %v613 = vld [vmem:[%s567 + $0x120] sm:$0xff]
        %v614 = vld [vmem:[%s567 + $0x128] sm:$0xff]
        %v615 = vld [vmem:[%s567 + $0x130] sm:$0xff]
        %v616 = vld [vmem:[%s567 + $0x138] sm:$0xff]
        %v617 = vld [vmem:[%s567 + $0x140] sm:$0xff]
        %v618 = vld [vmem:[%s567 + $0x148] sm:$0xff]
        %v619 = vld [vmem:[%s567 + $0x150] sm:$0xff]
        %v620 = vld [vmem:[%s567 + $0x158] sm:$0xff]
        %v621 = vld [vmem:[%s567 + $0x160] sm:$0xff]
        %v622 = vld [vmem:[%s567 + $0x168] sm:$0xff]
        %v623 = vld [vmem:[%s567 + $0x170] sm:$0xff]
        %v624 = vld [vmem:[%s567 + $0x178] sm:$0xff]
        %v625 = vld [vmem:[%s567 + $0x180] sm:$0xff]
        %v626 = vld [vmem:[%s567 + $0x188] sm:$0xff]
        %v627 = vld [vmem:[%s567 + $0x190] sm:$0xff]
        %v628 = vld [vmem:[%s567 + $0x198] sm:$0xff]
        %v629 = vld [vmem:[%s567 + $0x1a0] sm:$0xff]
        %v630 = vld [vmem:[%s567 + $0x1a8] sm:$0xff]
        %v631 = vld [vmem:[%s567 + $0x1b0] sm:$0xff]
        %v632 = vld [vmem:[%s567 + $0x1b8] sm:$0xff]
        %v633 = vld [vmem:[%s567 + $0x1c0] sm:$0xff]
        %v634 = vld [vmem:[%s567 + $0x1c8] sm:$0xff]
        %v635 = vld [vmem:[%s567 + $0x1d0] sm:$0xff]
        %v636 = vld [vmem:[%s567 + $0x1d8] sm:$0xff]
        %v637 = vld [vmem:[%s567 + $0x1e0] sm:$0xff]
        %v638 = vld [vmem:[%s567 + $0x1e8] sm:$0xff]
        %v639 = vld [vmem:[%s567 + $0x1f0] sm:$0xff]
        %v640 = vld [vmem:[%s567 + $0x1f8] sm:$0xff]
        %v641 = vld [vmem:[%s1] sm:$0x1]
        %643 = vset.pattern.permute.xlu0 0
        %644 = vperm.xlu0 %643, %v577
        %v645 = vpop.permute.xlu0 %644
        %648 = vset.pattern.permute.xlu0 0
        %649 = vperm.xlu0 %648, %v578
        %v650 = vpop.permute.xlu0 %649
        %653 = vset.pattern.permute.xlu0 0
        %654 = vperm.xlu0 %653, %v579
        %v655 = vpop.permute.xlu0 %654
        %658 = vset.pattern.permute.xlu0 0
        %659 = vperm.xlu0 %658, %v580
        %v660 = vpop.permute.xlu0 %659
        %663 = vset.pattern.permute.xlu0 0
        %664 = vperm.xlu0 %663, %v581
        %v665 = vpop.permute.xlu0 %664
        %668 = vset.pattern.permute.xlu0 0
        %669 = vperm.xlu0 %668, %v582
        %v670 = vpop.permute.xlu0 %669
        %673 = vset.pattern.permute.xlu0 0
        %674 = vperm.xlu0 %673, %v583
        %v675 = vpop.permute.xlu0 %674
        %678 = vset.pattern.permute.xlu0 0
        %679 = vperm.xlu0 %678, %v584
        %v680 = vpop.permute.xlu0 %679
        %683 = vset.pattern.permute.xlu0 0
        %684 = vperm.xlu0 %683, %v585
        %v685 = vpop.permute.xlu0 %684
        %688 = vset.pattern.permute.xlu0 0
        %689 = vperm.xlu0 %688, %v586
        %v690 = vpop.permute.xlu0 %689
        %693 = vset.pattern.permute.xlu0 0
        %694 = vperm.xlu0 %693, %v587
        %v695 = vpop.permute.xlu0 %694
        %698 = vset.pattern.permute.xlu0 0
        %699 = vperm.xlu0 %698, %v588
        %v700 = vpop.permute.xlu0 %699
        %703 = vset.pattern.permute.xlu0 0
        %704 = vperm.xlu0 %703, %v589
        %v705 = vpop.permute.xlu0 %704
        %708 = vset.pattern.permute.xlu0 0
        %709 = vperm.xlu0 %708, %v590
        %v710 = vpop.permute.xlu0 %709
        %713 = vset.pattern.permute.xlu0 0
        %714 = vperm.xlu0 %713, %v591
        %v715 = vpop.permute.xlu0 %714
        %718 = vset.pattern.permute.xlu0 0
        %719 = vperm.xlu0 %718, %v592
        %v720 = vpop.permute.xlu0 %719
        %723 = vset.pattern.permute.xlu0 0
        %724 = vperm.xlu0 %723, %v593
        %v725 = vpop.permute.xlu0 %724
        %728 = vset.pattern.permute.xlu0 0
        %729 = vperm.xlu0 %728, %v594
        %v730 = vpop.permute.xlu0 %729
        %733 = vset.pattern.permute.xlu0 0
        %734 = vperm.xlu0 %733, %v595
        %v735 = vpop.permute.xlu0 %734
        %738 = vset.pattern.permute.xlu0 0
        %739 = vperm.xlu0 %738, %v596
        %v740 = vpop.permute.xlu0 %739
        %743 = vset.pattern.permute.xlu0 0
        %744 = vperm.xlu0 %743, %v597
        %v745 = vpop.permute.xlu0 %744
        %748 = vset.pattern.permute.xlu0 0
        %749 = vperm.xlu0 %748, %v598
        %v750 = vpop.permute.xlu0 %749
        %753 = vset.pattern.permute.xlu0 0
        %754 = vperm.xlu0 %753, %v599
        %v755 = vpop.permute.xlu0 %754
        %758 = vset.pattern.permute.xlu0 0
        %759 = vperm.xlu0 %758, %v600
        %v760 = vpop.permute.xlu0 %759
        %763 = vset.pattern.permute.xlu0 0
        %764 = vperm.xlu0 %763, %v601
        %v765 = vpop.permute.xlu0 %764
        %768 = vset.pattern.permute.xlu0 0
        %769 = vperm.xlu0 %768, %v602
        %v770 = vpop.permute.xlu0 %769
        %773 = vset.pattern.permute.xlu0 0
        %774 = vperm.xlu0 %773, %v603
        %v775 = vpop.permute.xlu0 %774
        %778 = vset.pattern.permute.xlu0 0
        %779 = vperm.xlu0 %778, %v604
        %v780 = vpop.permute.xlu0 %779
        %783 = vset.pattern.permute.xlu0 0
        %784 = vperm.xlu0 %783, %v605
        %v785 = vpop.permute.xlu0 %784
        %788 = vset.pattern.permute.xlu0 0
        %789 = vperm.xlu0 %788, %v606
        %v790 = vpop.permute.xlu0 %789
        %793 = vset.pattern.permute.xlu0 0
        %794 = vperm.xlu0 %793, %v607
        %v795 = vpop.permute.xlu0 %794
        %798 = vset.pattern.permute.xlu0 0
        %799 = vperm.xlu0 %798, %v608
        %v800 = vpop.permute.xlu0 %799
        %803 = vset.pattern.permute.xlu0 0
        %804 = vperm.xlu0 %803, %v609
        %v805 = vpop.permute.xlu0 %804
        %808 = vset.pattern.permute.xlu0 0
        %809 = vperm.xlu0 %808, %v610
        %v810 = vpop.permute.xlu0 %809
        %813 = vset.pattern.permute.xlu0 0
        %814 = vperm.xlu0 %813, %v611
        %v815 = vpop.permute.xlu0 %814
        %818 = vset.pattern.permute.xlu0 0
        %819 = vperm.xlu0 %818, %v612
        %v820 = vpop.permute.xlu0 %819
        %823 = vset.pattern.permute.xlu0 0
        %824 = vperm.xlu0 %823, %v613
        %v825 = vpop.permute.xlu0 %824
        %828 = vset.pattern.permute.xlu0 0
        %829 = vperm.xlu0 %828, %v614
        %v830 = vpop.permute.xlu0 %829
        %833 = vset.pattern.permute.xlu0 0
        %834 = vperm.xlu0 %833, %v615
        %v835 = vpop.permute.xlu0 %834
        %838 = vset.pattern.permute.xlu0 0
        %839 = vperm.xlu0 %838, %v616
        %v840 = vpop.permute.xlu0 %839
        %843 = vset.pattern.permute.xlu0 0
        %844 = vperm.xlu0 %843, %v617
        %v845 = vpop.permute.xlu0 %844
        %848 = vset.pattern.permute.xlu0 0
        %849 = vperm.xlu0 %848, %v618
        %v850 = vpop.permute.xlu0 %849
        %853 = vset.pattern.permute.xlu0 0
        %854 = vperm.xlu0 %853, %v619
        %v855 = vpop.permute.xlu0 %854
        %858 = vset.pattern.permute.xlu0 0
        %859 = vperm.xlu0 %858, %v620
        %v860 = vpop.permute.xlu0 %859
        %863 = vset.pattern.permute.xlu0 0
        %864 = vperm.xlu0 %863, %v621
        %v865 = vpop.permute.xlu0 %864
        %868 = vset.pattern.permute.xlu0 0
        %869 = vperm.xlu0 %868, %v622
        %v870 = vpop.permute.xlu0 %869
        %873 = vset.pattern.permute.xlu0 0
        %874 = vperm.xlu0 %873, %v623
        %v875 = vpop.permute.xlu0 %874
        %878 = vset.pattern.permute.xlu0 0
        %879 = vperm.xlu0 %878, %v624
        %v880 = vpop.permute.xlu0 %879
        %883 = vset.pattern.permute.xlu0 0
        %884 = vperm.xlu0 %883, %v625
        %v885 = vpop.permute.xlu0 %884
        %888 = vset.pattern.permute.xlu0 0
        %889 = vperm.xlu0 %888, %v626
        %v890 = vpop.permute.xlu0 %889
        %893 = vset.pattern.permute.xlu0 0
        %894 = vperm.xlu0 %893, %v627
        %v895 = vpop.permute.xlu0 %894
        %898 = vset.pattern.permute.xlu0 0
        %899 = vperm.xlu0 %898, %v628
        %v900 = vpop.permute.xlu0 %899
        %903 = vset.pattern.permute.xlu0 0
        %904 = vperm.xlu0 %903, %v629
        %v905 = vpop.permute.xlu0 %904
        %908 = vset.pattern.permute.xlu0 0
        %909 = vperm.xlu0 %908, %v630
        %v910 = vpop.permute.xlu0 %909
        %913 = vset.pattern.permute.xlu0 0
        %914 = vperm.xlu0 %913, %v631
        %v915 = vpop.permute.xlu0 %914
        %918 = vset.pattern.permute.xlu0 0
        %919 = vperm.xlu0 %918, %v632
        %v920 = vpop.permute.xlu0 %919
        %923 = vset.pattern.permute.xlu0 0
        %924 = vperm.xlu0 %923, %v633
        %v925 = vpop.permute.xlu0 %924
        %928 = vset.pattern.permute.xlu0 0
        %929 = vperm.xlu0 %928, %v634
        %v930 = vpop.permute.xlu0 %929
        %933 = vset.pattern.permute.xlu0 0
        %934 = vperm.xlu0 %933, %v635
        %v935 = vpop.permute.xlu0 %934
        %938 = vset.pattern.permute.xlu0 0
        %939 = vperm.xlu0 %938, %v636
        %v940 = vpop.permute.xlu0 %939
        %943 = vset.pattern.permute.xlu0 0
        %944 = vperm.xlu0 %943, %v637
        %v945 = vpop.permute.xlu0 %944
        %948 = vset.pattern.permute.xlu0 0
        %949 = vperm.xlu0 %948, %v638
        %v950 = vpop.permute.xlu0 %949
        %953 = vset.pattern.permute.xlu0 0
        %954 = vperm.xlu0 %953, %v639
        %v955 = vpop.permute.xlu0 %954
        %958 = vset.pattern.permute.xlu0 0
        %959 = vperm.xlu0 %958, %v640
        %v960 = vpop.permute.xlu0 %959
        %v963 = vlaneseq
        %v964 = vshrl.u32 %v963, 7
        %v965 = vsub.s32 0, %v964
        %v966 = vrot.slane %v641, %v965
        %v968 = vmul.f32 %v645, %v966
        %v969 = vmul.f32 %v650, %v966
        %v970 = vmul.f32 %v655, %v966
        %v971 = vmul.f32 %v660, %v966
        %v972 = vmul.f32 %v665, %v966
        %v973 = vmul.f32 %v670, %v966
        %v974 = vmul.f32 %v675, %v966
        %v975 = vmul.f32 %v680, %v966
        %v976 = vmul.f32 %v685, %v966
        %v977 = vmul.f32 %v690, %v966
        %v978 = vmul.f32 %v695, %v966
        %v979 = vmul.f32 %v700, %v966
        %v980 = vmul.f32 %v705, %v966
        %v981 = vmul.f32 %v710, %v966
        %v982 = vmul.f32 %v715, %v966
        %v983 = vmul.f32 %v720, %v966
        %v984 = vmul.f32 %v725, %v966
        %v985 = vmul.f32 %v730, %v966
        %v986 = vmul.f32 %v735, %v966
        %v987 = vmul.f32 %v740, %v966
        %v988 = vmul.f32 %v745, %v966
        %v989 = vmul.f32 %v750, %v966
        %v990 = vmul.f32 %v755, %v966
        %v991 = vmul.f32 %v760, %v966
        %v992 = vmul.f32 %v765, %v966
        %v993 = vmul.f32 %v770, %v966
        %v994 = vmul.f32 %v775, %v966
        %v995 = vmul.f32 %v780, %v966
        %v996 = vmul.f32 %v785, %v966
        %v997 = vmul.f32 %v790, %v966
        %v998 = vmul.f32 %v795, %v966
        %v999 = vmul.f32 %v800, %v966
        %v1000 = vmul.f32 %v805, %v966
        %v1001 = vmul.f32 %v810, %v966
        %v1002 = vmul.f32 %v815, %v966
        %v1003 = vmul.f32 %v820, %v966
        %v1004 = vmul.f32 %v825, %v966
        %v1005 = vmul.f32 %v830, %v966
        %v1006 = vmul.f32 %v835, %v966
        %v1007 = vmul.f32 %v840, %v966
        %v1008 = vmul.f32 %v845, %v966
        %v1009 = vmul.f32 %v850, %v966
        %v1010 = vmul.f32 %v855, %v966
        %v1011 = vmul.f32 %v860, %v966
        %v1012 = vmul.f32 %v865, %v966
        %v1013 = vmul.f32 %v870, %v966
        %v1014 = vmul.f32 %v875, %v966
        %v1015 = vmul.f32 %v880, %v966
        %v1016 = vmul.f32 %v885, %v966
        %v1017 = vmul.f32 %v890, %v966
        %v1018 = vmul.f32 %v895, %v966
        %v1019 = vmul.f32 %v900, %v966
        %v1020 = vmul.f32 %v905, %v966
        %v1021 = vmul.f32 %v910, %v966
        %v1022 = vmul.f32 %v915, %v966
        %v1023 = vmul.f32 %v920, %v966
        %v1024 = vmul.f32 %v925, %v966
        %v1025 = vmul.f32 %v930, %v966
        %v1026 = vmul.f32 %v935, %v966
        %v1027 = vmul.f32 %v940, %v966
        %v1028 = vmul.f32 %v945, %v966
        %v1029 = vmul.f32 %v950, %v966
        %v1030 = vmul.f32 %v955, %v966
        %v1031 = vmul.f32 %v960, %v966
        %v1032 = vld [vmem:[%s2] sm:$0x1]
        %v1034 = vlaneseq
        %v1035 = vshrl.u32 %v1034, 7
        %v1036 = vsub.s32 0, %v1035
        %v1037 = vrot.slane %v1032, %v1036
        %v1039 = vadd.f32 %v968, %v1037
        %v1040 = vadd.f32 %v969, %v1037
        %v1041 = vadd.f32 %v970, %v1037
        %v1042 = vadd.f32 %v971, %v1037
        %v1043 = vadd.f32 %v972, %v1037
        %v1044 = vadd.f32 %v973, %v1037
        %v1045 = vadd.f32 %v974, %v1037
        %v1046 = vadd.f32 %v975, %v1037
        %v1047 = vadd.f32 %v976, %v1037
        %v1048 = vadd.f32 %v977, %v1037
        %v1049 = vadd.f32 %v978, %v1037
        %v1050 = vadd.f32 %v979, %v1037
        %v1051 = vadd.f32 %v980, %v1037
        %v1052 = vadd.f32 %v981, %v1037
        %v1053 = vadd.f32 %v982, %v1037
        %v1054 = vadd.f32 %v983, %v1037
        %v1055 = vadd.f32 %v984, %v1037
        %v1056 = vadd.f32 %v985, %v1037
        %v1057 = vadd.f32 %v986, %v1037
        %v1058 = vadd.f32 %v987, %v1037
        %v1059 = vadd.f32 %v988, %v1037
        %v1060 = vadd.f32 %v989, %v1037
        %v1061 = vadd.f32 %v990, %v1037
        %v1062 = vadd.f32 %v991, %v1037
        %v1063 = vadd.f32 %v992, %v1037
        %v1064 = vadd.f32 %v993, %v1037
        %v1065 = vadd.f32 %v994, %v1037
        %v1066 = vadd.f32 %v995, %v1037
        %v1067 = vadd.f32 %v996, %v1037
        %v1068 = vadd.f32 %v997, %v1037
        %v1069 = vadd.f32 %v998, %v1037
        %v1070 = vadd.f32 %v999, %v1037
        %v1071 = vadd.f32 %v1000, %v1037
        %v1072 = vadd.f32 %v1001, %v1037
        %v1073 = vadd.f32 %v1002, %v1037
        %v1074 = vadd.f32 %v1003, %v1037
        %v1075 = vadd.f32 %v1004, %v1037
        %v1076 = vadd.f32 %v1005, %v1037
        %v1077 = vadd.f32 %v1006, %v1037
        %v1078 = vadd.f32 %v1007, %v1037
        %v1079 = vadd.f32 %v1008, %v1037
        %v1080 = vadd.f32 %v1009, %v1037
        %v1081 = vadd.f32 %v1010, %v1037
        %v1082 = vadd.f32 %v1011, %v1037
        %v1083 = vadd.f32 %v1012, %v1037
        %v1084 = vadd.f32 %v1013, %v1037
        %v1085 = vadd.f32 %v1014, %v1037
        %v1086 = vadd.f32 %v1015, %v1037
        %v1087 = vadd.f32 %v1016, %v1037
        %v1088 = vadd.f32 %v1017, %v1037
        %v1089 = vadd.f32 %v1018, %v1037
        %v1090 = vadd.f32 %v1019, %v1037
        %v1091 = vadd.f32 %v1020, %v1037
        %v1092 = vadd.f32 %v1021, %v1037
        %v1093 = vadd.f32 %v1022, %v1037
        %v1094 = vadd.f32 %v1023, %v1037
        %v1095 = vadd.f32 %v1024, %v1037
        %v1096 = vadd.f32 %v1025, %v1037
        %v1097 = vadd.f32 %v1026, %v1037
        %v1098 = vadd.f32 %v1027, %v1037
        %v1099 = vadd.f32 %v1028, %v1037
        %v1100 = vadd.f32 %v1029, %v1037
        %v1101 = vadd.f32 %v1030, %v1037
        %v1102 = vadd.f32 %v1031, %v1037
        %v1103 = vmax.f32 %v1039, 0.0
        %v1104 = vmax.f32 %v1040, 0.0
        %v1105 = vmax.f32 %v1041, 0.0
        %v1106 = vmax.f32 %v1042, 0.0
        %v1107 = vmax.f32 %v1043, 0.0
        %v1108 = vmax.f32 %v1044, 0.0
        %v1109 = vmax.f32 %v1045, 0.0
        %v1110 = vmax.f32 %v1046, 0.0
        %v1111 = vmax.f32 %v1047, 0.0
        %v1112 = vmax.f32 %v1048, 0.0
        %v1113 = vmax.f32 %v1049, 0.0
        %v1114 = vmax.f32 %v1050, 0.0
        %v1115 = vmax.f32 %v1051, 0.0
        %v1116 = vmax.f32 %v1052, 0.0
        %v1117 = vmax.f32 %v1053, 0.0
        %v1118 = vmax.f32 %v1054, 0.0
        %v1119 = vmax.f32 %v1055, 0.0
        %v1120 = vmax.f32 %v1056, 0.0
        %v1121 = vmax.f32 %v1057, 0.0
        %v1122 = vmax.f32 %v1058, 0.0
        %v1123 = vmax.f32 %v1059, 0.0
        %v1124 = vmax.f32 %v1060, 0.0
        %v1125 = vmax.f32 %v1061, 0.0
        %v1126 = vmax.f32 %v1062, 0.0
        %v1127 = vmax.f32 %v1063, 0.0
        %v1128 = vmax.f32 %v1064, 0.0
        %v1129 = vmax.f32 %v1065, 0.0
        %v1130 = vmax.f32 %v1066, 0.0
        %v1131 = vmax.f32 %v1067, 0.0
        %v1132 = vmax.f32 %v1068, 0.0
        %v1133 = vmax.f32 %v1069, 0.0
        %v1134 = vmax.f32 %v1070, 0.0
        %v1135 = vmax.f32 %v1071, 0.0
        %v1136 = vmax.f32 %v1072, 0.0
        %v1137 = vmax.f32 %v1073, 0.0
        %v1138 = vmax.f32 %v1074, 0.0
        %v1139 = vmax.f32 %v1075, 0.0
        %v1140 = vmax.f32 %v1076, 0.0
        %v1141 = vmax.f32 %v1077, 0.0
        %v1142 = vmax.f32 %v1078, 0.0
        %v1143 = vmax.f32 %v1079, 0.0
        %v1144 = vmax.f32 %v1080, 0.0
        %v1145 = vmax.f32 %v1081, 0.0
        %v1146 = vmax.f32 %v1082, 0.0
        %v1147 = vmax.f32 %v1083, 0.0
        %v1148 = vmax.f32 %v1084, 0.0
        %v1149 = vmax.f32 %v1085, 0.0
        %v1150 = vmax.f32 %v1086, 0.0
        %v1151 = vmax.f32 %v1087, 0.0
        %v1152 = vmax.f32 %v1088, 0.0
        %v1153 = vmax.f32 %v1089, 0.0
        %v1154 = vmax.f32 %v1090, 0.0
        %v1155 = vmax.f32 %v1091, 0.0
        %v1156 = vmax.f32 %v1092, 0.0
        %v1157 = vmax.f32 %v1093, 0.0
        %v1158 = vmax.f32 %v1094, 0.0
        %v1159 = vmax.f32 %v1095, 0.0
        %v1160 = vmax.f32 %v1096, 0.0
        %v1161 = vmax.f32 %v1097, 0.0
        %v1162 = vmax.f32 %v1098, 0.0
        %v1163 = vmax.f32 %v1099, 0.0
        %v1164 = vmax.f32 %v1100, 0.0
        %v1165 = vmax.f32 %v1101, 0.0
        %v1166 = vmax.f32 %v1102, 0.0
        %v1167 = vpack.c.bf16 %v1104, %v1103
        %v1168 = vpack.c.bf16 %v1106, %v1105
        %v1169 = vpack.c.bf16 %v1108, %v1107
        %v1170 = vpack.c.bf16 %v1110, %v1109
        %v1171 = vpack.c.bf16 %v1112, %v1111
        %v1172 = vpack.c.bf16 %v1114, %v1113
        %v1173 = vpack.c.bf16 %v1116, %v1115
        %v1174 = vpack.c.bf16 %v1118, %v1117
        %v1175 = vpack.c.bf16 %v1120, %v1119
        %v1176 = vpack.c.bf16 %v1122, %v1121
        %v1177 = vpack.c.bf16 %v1124, %v1123
        %v1178 = vpack.c.bf16 %v1126, %v1125
        %v1179 = vpack.c.bf16 %v1128, %v1127
        %v1180 = vpack.c.bf16 %v1130, %v1129
        %v1181 = vpack.c.bf16 %v1132, %v1131
        %v1182 = vpack.c.bf16 %v1134, %v1133
        %v1183 = vpack.c.bf16 %v1136, %v1135
        %v1184 = vpack.c.bf16 %v1138, %v1137
        %v1185 = vpack.c.bf16 %v1140, %v1139
        %v1186 = vpack.c.bf16 %v1142, %v1141
        %v1187 = vpack.c.bf16 %v1144, %v1143
        %v1188 = vpack.c.bf16 %v1146, %v1145
        %v1189 = vpack.c.bf16 %v1148, %v1147
        %v1190 = vpack.c.bf16 %v1150, %v1149
        %v1191 = vpack.c.bf16 %v1152, %v1151
        %v1192 = vpack.c.bf16 %v1154, %v1153
        %v1193 = vpack.c.bf16 %v1156, %v1155
        %v1194 = vpack.c.bf16 %v1158, %v1157
        %v1195 = vpack.c.bf16 %v1160, %v1159
        %v1196 = vpack.c.bf16 %v1162, %v1161
        %v1197 = vpack.c.bf16 %v1164, %v1163
        %v1198 = vpack.c.bf16 %v1166, %v1165
        %v1199 = vld [vmem:[%s3] sm:$0xf]
        %v1200 = vld [vmem:[%s3 + $0x4] sm:$0xf]
        %v1201 = vld [vmem:[%s3 + $0x8] sm:$0xf]
        %v1202 = vld [vmem:[%s3 + $0xc] sm:$0xf]
        %v1203 = vld [vmem:[%s3 + $0x10] sm:$0xf]
        %v1204 = vld [vmem:[%s3 + $0x14] sm:$0xf]
        %v1205 = vld [vmem:[%s3 + $0x18] sm:$0xf]
        %v1206 = vld [vmem:[%s3 + $0x1c] sm:$0xf]
        %v1207 = vld [vmem:[%s4] sm:$0x1]
        %v1209 = vlaneseq
        %v1210 = vshrl.u32 %v1209, 7
        %v1211 = vsub.s32 0, %v1210
        %v1212 = vrot.slane %v1207, %v1211
        %v1222 = vunpack.c.l.b16 %v1199
        %v1223 = vunpack.c.l.b16 %v1200
        %v1224 = vunpack.c.l.b16 %v1201
        %v1225 = vunpack.c.l.b16 %v1202
        %v1226 = vunpack.c.l.b16 %v1203
        %v1227 = vunpack.c.l.b16 %v1204
        %v1228 = vunpack.c.l.b16 %v1205
        %v1229 = vunpack.c.l.b16 %v1206
        %v1230 = vpack.c.b16 %v1223, %v1222
        %v1231 = vpack.c.b16 %v1225, %v1224
        %v1232 = vpack.c.b16 %v1227, %v1226
        %v1233 = vpack.c.b16 %v1229, %v1228
        %vm1238 = vcmask 523264
        %v1240 = vsel %vm1238, %v1167, 0
        %v1243 = vsel %vm1238, %v1168, 0
        %v1246 = vsel %vm1238, %v1169, 0
        %v1249 = vsel %vm1238, %v1170, 0
        %v1252 = vsel %vm1238, %v1171, 0
        %v1255 = vsel %vm1238, %v1172, 0
        %v1258 = vsel %vm1238, %v1173, 0
        %v1261 = vsel %vm1238, %v1174, 0
        %v1264 = vsel %vm1238, %v1175, 0
        %v1267 = vsel %vm1238, %v1176, 0
        %v1270 = vsel %vm1238, %v1177, 0
        %v1273 = vsel %vm1238, %v1178, 0
        %v1276 = vsel %vm1238, %v1179, 0
        %v1279 = vsel %vm1238, %v1180, 0
        %v1282 = vsel %vm1238, %v1181, 0
        %v1285 = vsel %vm1238, %v1182, 0
        %v1288 = vsel %vm1238, %v1183, 0
        %v1291 = vsel %vm1238, %v1184, 0
        %v1294 = vsel %vm1238, %v1185, 0
        %v1297 = vsel %vm1238, %v1186, 0
        %v1300 = vsel %vm1238, %v1187, 0
        %v1303 = vsel %vm1238, %v1188, 0
        %v1306 = vsel %vm1238, %v1189, 0
        %v1309 = vsel %vm1238, %v1190, 0
        %v1312 = vsel %vm1238, %v1191, 0
        %v1315 = vsel %vm1238, %v1192, 0
        %v1318 = vsel %vm1238, %v1193, 0
        %v1321 = vsel %vm1238, %v1194, 0
        %v1324 = vsel %vm1238, %v1195, 0
        %v1327 = vsel %vm1238, %v1196, 0
        %v1330 = vsel %vm1238, %v1197, 0
        %v1333 = vsel %vm1238, %v1198, 0
        %1335 = vmatprep.subr.bf16.mxu0 0
        %1336 = vmatpush1.bf16.msra.mxu0 %v1230
        %1337 = vmatprep.subr.bf16.mxu0 0
        %1338 = vmatpush1.bf16.msra.mxu0 %v1231
        %1339 = vmatprep.subr.bf16.mxu0 0
        %1340 = vmatpush1.bf16.msra.mxu0 %v1232
        %1341 = vmatprep.subr.bf16.mxu0 0
        %1342 = vmatpush1.bf16.msra.mxu0 %v1233
        %1343 = vmatprep.subr.bf16.mxu0 0
        %1344 = vmatpush1.bf16.msra.mxu0 0
        %1345 = vmatprep.subr.bf16.mxu0 0
        %1346 = vmatpush1.bf16.msra.mxu0 0
        %1347 = vmatprep.subr.bf16.mxu0 0
        %1348 = vmatpush1.bf16.msra.mxu0 0
        %1349 = vmatprep.subr.bf16.mxu0 0
        %1350 = vmatpush1.bf16.msra.mxu0 0
        %1351 = vmatprep.subr.bf16.mxu0 0
        %1352 = vmatpush1.bf16.msra.mxu0 0
        %1353 = vmatprep.subr.bf16.mxu0 0
        %1354 = vmatpush1.bf16.msra.mxu0 0
        %1355 = vmatprep.subr.bf16.mxu0 0
        %1356 = vmatpush1.bf16.msra.mxu0 0
        %1357 = vmatprep.subr.bf16.mxu0 0
        %1358 = vmatpush1.bf16.msra.mxu0 0
        %1359 = vmatprep.subr.bf16.mxu0 0
        %1360 = vmatpush1.bf16.msra.mxu0 0
        %1361 = vmatprep.subr.bf16.mxu0 0
        %1362 = vmatpush1.bf16.msra.mxu0 0
        %1363 = vmatprep.subr.bf16.mxu0 0
        %1364 = vmatpush1.bf16.msra.mxu0 0
        %1365 = vmatprep.subr.bf16.mxu0 0
        %1366 = vmatpush1.bf16.msra.mxu0 0
        %1367 = vmatprep.mubr.bf16.mxu0 0
        %1368 = vmatmul.mubr.bf16.gmra.mrb[0].mxu0 %v1240
        %v1369 = vpop.f32.mrb[0].mxu0
        %v1370 = vadd.f32 %v1212, %v1369
        %v1371 = vpop.f32.mrb[0].mxu0
        %v1372 = vpop.f32.mrb[0].mxu0
        %v1373 = vadd.f32 %v1212, %v1372
        %v1374 = vpop.f32.mrb[0].mxu0
        %1375 = vmatprep.mubr.bf16.mxu0 0
        %1376 = vmatmul.mubr.bf16.gmra.mrb[0].mxu0 %v1243
        %v1377 = vpop.f32.mrb[0].mxu0
        %v1378 = vadd.f32 %v1212, %v1377
        %v1379 = vpop.f32.mrb[0].mxu0
        %v1380 = vpop.f32.mrb[0].mxu0
        %v1381 = vadd.f32 %v1212, %v1380
        %v1382 = vpop.f32.mrb[0].mxu0
        %1383 = vmatprep.mubr.bf16.mxu0 0
        %1384 = vmatmul.mubr.bf16.gmra.mrb[0].mxu0 %v1246
        %v1385 = vpop.f32.mrb[0].mxu0
        %v1386 = vadd.f32 %v1212, %v1385
        %v1387 = vpop.f32.mrb[0].mxu0
        %v1388 = vpop.f32.mrb[0].mxu0
        %v1389 = vadd.f32 %v1212, %v1388
        %v1390 = vpop.f32.mrb[0].mxu0
        %1391 = vmatprep.mubr.bf16.mxu0 0
        %1392 = vmatmul.mubr.bf16.gmra.mrb[0].mxu0 %v1249
        %v1393 = vpop.f32.mrb[0].mxu0
        %v1394 = vadd.f32 %v1212, %v1393
        %v1395 = vpop.f32.mrb[0].mxu0
        %v1396 = vpop.f32.mrb[0].mxu0
        %v1397 = vadd.f32 %v1212, %v1396
        %v1398 = vpop.f32.mrb[0].mxu0
        %1399 = vmatprep.mubr.bf16.mxu0 0
        %1400 = vmatmul.mubr.bf16.gmra.mrb[0].mxu0 %v1252
        %v1401 = vpop.f32.mrb[0].mxu0
        %v1402 = vadd.f32 %v1212, %v1401
        %v1403 = vpop.f32.mrb[0].mxu0
        %v1404 = vpop.f32.mrb[0].mxu0
        %v1405 = vadd.f32 %v1212, %v1404
        %v1406 = vpop.f32.mrb[0].mxu0
        %1407 = vmatprep.mubr.bf16.mxu0 0
        %1408 = vmatmul.mubr.bf16.gmra.mrb[0].mxu0 %v1255
        %v1409 = vpop.f32.mrb[0].mxu0
        %v1410 = vadd.f32 %v1212, %v1409
        %v1411 = vpop.f32.mrb[0].mxu0
        %v1412 = vpop.f32.mrb[0].mxu0
        %v1413 = vadd.f32 %v1212, %v1412
        %v1414 = vpop.f32.mrb[0].mxu0
        %1415 = vmatprep.mubr.bf16.mxu0 0
        %1416 = vmatmul.mubr.bf16.gmra.mrb[0].mxu0 %v1258
        %v1417 = vpop.f32.mrb[0].mxu0
        %v1418 = vadd.f32 %v1212, %v1417
        %v1419 = vpop.f32.mrb[0].mxu0
        %v1420 = vpop.f32.mrb[0].mxu0
        %v1421 = vadd.f32 %v1212, %v1420
        %v1422 = vpop.f32.mrb[0].mxu0
        %1423 = vmatprep.mubr.bf16.mxu0 0
        %1424 = vmatmul.mubr.bf16.gmra.mrb[0].mxu0 %v1261
        %v1425 = vpop.f32.mrb[0].mxu0
        %v1426 = vadd.f32 %v1212, %v1425
        %v1427 = vpop.f32.mrb[0].mxu0
        %v1428 = vpop.f32.mrb[0].mxu0
        %v1429 = vadd.f32 %v1212, %v1428
        %v1430 = vpop.f32.mrb[0].mxu0
        %1431 = vmatprep.mubr.bf16.mxu0 0
        %1432 = vmatmul.mubr.bf16.gmra.mrb[0].mxu0 %v1264
        %v1433 = vpop.f32.mrb[0].mxu0
        %v1434 = vadd.f32 %v1212, %v1433
        %v1435 = vpop.f32.mrb[0].mxu0
        %v1436 = vpop.f32.mrb[0].mxu0
        %v1437 = vadd.f32 %v1212, %v1436
        %v1438 = vpop.f32.mrb[0].mxu0
        %1439 = vmatprep.mubr.bf16.mxu0 0
        %1440 = vmatmul.mubr.bf16.gmra.mrb[0].mxu0 %v1267
        %v1441 = vpop.f32.mrb[0].mxu0
        %v1442 = vadd.f32 %v1212, %v1441
        %v1443 = vpop.f32.mrb[0].mxu0
        %v1444 = vpop.f32.mrb[0].mxu0
        %v1445 = vadd.f32 %v1212, %v1444
        %v1446 = vpop.f32.mrb[0].mxu0
        %1447 = vmatprep.mubr.bf16.mxu0 0
        %1448 = vmatmul.mubr.bf16.gmra.mrb[0].mxu0 %v1270
        %v1449 = vpop.f32.mrb[0].mxu0
        %v1450 = vadd.f32 %v1212, %v1449
        %v1451 = vpop.f32.mrb[0].mxu0
        %v1452 = vpop.f32.mrb[0].mxu0
        %v1453 = vadd.f32 %v1212, %v1452
        %v1454 = vpop.f32.mrb[0].mxu0
        %1455 = vmatprep.mubr.bf16.mxu0 0
        %1456 = vmatmul.mubr.bf16.gmra.mrb[0].mxu0 %v1273
        %v1457 = vpop.f32.mrb[0].mxu0
        %v1458 = vadd.f32 %v1212, %v1457
        %v1459 = vpop.f32.mrb[0].mxu0
        %v1460 = vpop.f32.mrb[0].mxu0
        %v1461 = vadd.f32 %v1212, %v1460
        %v1462 = vpop.f32.mrb[0].mxu0
        %1463 = vmatprep.mubr.bf16.mxu0 0
        %1464 = vmatmul.mubr.bf16.gmra.mrb[0].mxu0 %v1276
        %v1465 = vpop.f32.mrb[0].mxu0
        %v1466 = vadd.f32 %v1212, %v1465
        %v1467 = vpop.f32.mrb[0].mxu0
        %v1468 = vpop.f32.mrb[0].mxu0
        %v1469 = vadd.f32 %v1212, %v1468
        %v1470 = vpop.f32.mrb[0].mxu0
        %1471 = vmatprep.mubr.bf16.mxu0 0
        %1472 = vmatmul.mubr.bf16.gmra.mrb[0].mxu0 %v1279
        %v1473 = vpop.f32.mrb[0].mxu0
        %v1474 = vadd.f32 %v1212, %v1473
        %v1475 = vpop.f32.mrb[0].mxu0
        %v1476 = vpop.f32.mrb[0].mxu0
        %v1477 = vadd.f32 %v1212, %v1476
        %v1478 = vpop.f32.mrb[0].mxu0
        %1479 = vmatprep.mubr.bf16.mxu0 0
        %1480 = vmatmul.mubr.bf16.gmra.mrb[0].mxu0 %v1282
        %v1481 = vpop.f32.mrb[0].mxu0
        %v1482 = vadd.f32 %v1212, %v1481
        %v1483 = vpop.f32.mrb[0].mxu0
        %v1484 = vpop.f32.mrb[0].mxu0
        %v1485 = vadd.f32 %v1212, %v1484
        %v1486 = vpop.f32.mrb[0].mxu0
        %1487 = vmatprep.mubr.bf16.mxu0 0
        %1488 = vmatmul.mubr.bf16.gmra.mrb[0].mxu0 %v1285
        %v1489 = vpop.f32.mrb[0].mxu0
        %v1490 = vadd.f32 %v1212, %v1489
        %v1491 = vpop.f32.mrb[0].mxu0
        %v1492 = vpop.f32.mrb[0].mxu0
        %v1493 = vadd.f32 %v1212, %v1492
        %v1494 = vpop.f32.mrb[0].mxu0
        %1495 = vmatprep.mubr.bf16.mxu0 0
        %1496 = vmatmul.mubr.bf16.gmra.mrb[0].mxu0 %v1288
        %v1497 = vpop.f32.mrb[0].mxu0
        %v1498 = vadd.f32 %v1212, %v1497
        %v1499 = vpop.f32.mrb[0].mxu0
        %v1500 = vpop.f32.mrb[0].mxu0
        %v1501 = vadd.f32 %v1212, %v1500
        %v1502 = vpop.f32.mrb[0].mxu0
        %1503 = vmatprep.mubr.bf16.mxu0 0
        %1504 = vmatmul.mubr.bf16.gmra.mrb[0].mxu0 %v1291
        %v1505 = vpop.f32.mrb[0].mxu0
        %v1506 = vadd.f32 %v1212, %v1505
        %v1507 = vpop.f32.mrb[0].mxu0
        %v1508 = vpop.f32.mrb[0].mxu0
        %v1509 = vadd.f32 %v1212, %v1508
        %v1510 = vpop.f32.mrb[0].mxu0
        %1511 = vmatprep.mubr.bf16.mxu0 0
        %1512 = vmatmul.mubr.bf16.gmra.mrb[0].mxu0 %v1294
        %v1513 = vpop.f32.mrb[0].mxu0
        %v1514 = vadd.f32 %v1212, %v1513
        %v1515 = vpop.f32.mrb[0].mxu0
        %v1516 = vpop.f32.mrb[0].mxu0
        %v1517 = vadd.f32 %v1212, %v1516
        %v1518 = vpop.f32.mrb[0].mxu0
        %1519 = vmatprep.mubr.bf16.mxu0 0
        %1520 = vmatmul.mubr.bf16.gmra.mrb[0].mxu0 %v1297
        %v1521 = vpop.f32.mrb[0].mxu0
        %v1522 = vadd.f32 %v1212, %v1521
        %v1523 = vpop.f32.mrb[0].mxu0
        %v1524 = vpop.f32.mrb[0].mxu0
        %v1525 = vadd.f32 %v1212, %v1524
        %v1526 = vpop.f32.mrb[0].mxu0
        %1527 = vmatprep.mubr.bf16.mxu0 0
        %1528 = vmatmul.mubr.bf16.gmra.mrb[0].mxu0 %v1300
        %v1529 = vpop.f32.mrb[0].mxu0
        %v1530 = vadd.f32 %v1212, %v1529
        %v1531 = vpop.f32.mrb[0].mxu0
        %v1532 = vpop.f32.mrb[0].mxu0
        %v1533 = vadd.f32 %v1212, %v1532
        %v1534 = vpop.f32.mrb[0].mxu0
        %1535 = vmatprep.mubr.bf16.mxu0 0
        %1536 = vmatmul.mubr.bf16.gmra.mrb[0].mxu0 %v1303
        %v1537 = vpop.f32.mrb[0].mxu0
        %v1538 = vadd.f32 %v1212, %v1537
        %v1539 = vpop.f32.mrb[0].mxu0
        %v1540 = vpop.f32.mrb[0].mxu0
        %v1541 = vadd.f32 %v1212, %v1540
        %v1542 = vpop.f32.mrb[0].mxu0
        %1543 = vmatprep.mubr.bf16.mxu0 0
        %1544 = vmatmul.mubr.bf16.gmra.mrb[0].mxu0 %v1306
        %v1545 = vpop.f32.mrb[0].mxu0
        %v1546 = vadd.f32 %v1212, %v1545
        %v1547 = vpop.f32.mrb[0].mxu0
        %v1548 = vpop.f32.mrb[0].mxu0
        %v1549 = vadd.f32 %v1212, %v1548
        %v1550 = vpop.f32.mrb[0].mxu0
        %1551 = vmatprep.mubr.bf16.mxu0 0
        %1552 = vmatmul.mubr.bf16.gmra.mrb[0].mxu0 %v1309
        %v1553 = vpop.f32.mrb[0].mxu0
        %v1554 = vadd.f32 %v1212, %v1553
        %v1555 = vpop.f32.mrb[0].mxu0
        %v1556 = vpop.f32.mrb[0].mxu0
        %v1557 = vadd.f32 %v1212, %v1556
        %v1558 = vpop.f32.mrb[0].mxu0
        %1559 = vmatprep.mubr.bf16.mxu0 0
        %1560 = vmatmul.mubr.bf16.gmra.mrb[0].mxu0 %v1312
        %v1561 = vpop.f32.mrb[0].mxu0
        %v1562 = vadd.f32 %v1212, %v1561
        %v1563 = vpop.f32.mrb[0].mxu0
        %v1564 = vpop.f32.mrb[0].mxu0
        %v1565 = vadd.f32 %v1212, %v1564
        %v1566 = vpop.f32.mrb[0].mxu0
        %1567 = vmatprep.mubr.bf16.mxu0 0
        %1568 = vmatmul.mubr.bf16.gmra.mrb[0].mxu0 %v1315
        %v1569 = vpop.f32.mrb[0].mxu0
        %v1570 = vadd.f32 %v1212, %v1569
        %v1571 = vpop.f32.mrb[0].mxu0
        %v1572 = vpop.f32.mrb[0].mxu0
        %v1573 = vadd.f32 %v1212, %v1572
        %v1574 = vpop.f32.mrb[0].mxu0
        %1575 = vmatprep.mubr.bf16.mxu0 0
        %1576 = vmatmul.mubr.bf16.gmra.mrb[0].mxu0 %v1318
        %v1577 = vpop.f32.mrb[0].mxu0
        %v1578 = vadd.f32 %v1212, %v1577
        %v1579 = vpop.f32.mrb[0].mxu0
        %v1580 = vpop.f32.mrb[0].mxu0
        %v1581 = vadd.f32 %v1212, %v1580
        %v1582 = vpop.f32.mrb[0].mxu0
        %1583 = vmatprep.mubr.bf16.mxu0 0
        %1584 = vmatmul.mubr.bf16.gmra.mrb[0].mxu0 %v1321
        %v1585 = vpop.f32.mrb[0].mxu0
        %v1586 = vadd.f32 %v1212, %v1585
        %v1587 = vpop.f32.mrb[0].mxu0
        %v1588 = vpop.f32.mrb[0].mxu0
        %v1589 = vadd.f32 %v1212, %v1588
        %v1590 = vpop.f32.mrb[0].mxu0
        %1591 = vmatprep.mubr.bf16.mxu0 0
        %1592 = vmatmul.mubr.bf16.gmra.mrb[0].mxu0 %v1324
        %v1593 = vpop.f32.mrb[0].mxu0
        %v1594 = vadd.f32 %v1212, %v1593
        %v1595 = vpop.f32.mrb[0].mxu0
        %v1596 = vpop.f32.mrb[0].mxu0
        %v1597 = vadd.f32 %v1212, %v1596
        %v1598 = vpop.f32.mrb[0].mxu0
        %1599 = vmatprep.mubr.bf16.mxu0 0
        %1600 = vmatmul.mubr.bf16.gmra.mrb[0].mxu0 %v1327
        %v1601 = vpop.f32.mrb[0].mxu0
        %v1602 = vadd.f32 %v1212, %v1601
        %v1603 = vpop.f32.mrb[0].mxu0
        %v1604 = vpop.f32.mrb[0].mxu0
        %v1605 = vadd.f32 %v1212, %v1604
        %v1606 = vpop.f32.mrb[0].mxu0
        %1607 = vmatprep.mubr.bf16.mxu0 0
        %1608 = vmatmul.mubr.bf16.gmra.mrb[0].mxu0 %v1330
        %v1609 = vpop.f32.mrb[0].mxu0
        %v1610 = vadd.f32 %v1212, %v1609
        %v1611 = vpop.f32.mrb[0].mxu0
        %v1612 = vpop.f32.mrb[0].mxu0
        %v1613 = vadd.f32 %v1212, %v1612
        %v1614 = vpop.f32.mrb[0].mxu0
        %1615 = vmatprep.mubr.bf16.mxu0 0
        %1616 = vmatmul.mubr.bf16.gmra.mrb[0].mxu0 %v1333
        %v1617 = vpop.f32.mrb[0].mxu0
        %v1618 = vadd.f32 %v1212, %v1617
        %v1619 = vpop.f32.mrb[0].mxu0
        %v1620 = vpop.f32.mrb[0].mxu0
        %v1621 = vadd.f32 %v1212, %v1620
        %v1622 = vpop.f32.mrb[0].mxu0
        %1623 = vdwg.mxu0
        %v1624 = vmax.f32 %v1370, 0.0
        %v1625 = vmax.f32 %v1373, 0.0
        %v1626 = vmax.f32 %v1378, 0.0
        %v1627 = vmax.f32 %v1381, 0.0
        %v1628 = vmax.f32 %v1386, 0.0
        %v1629 = vmax.f32 %v1389, 0.0
        %v1630 = vmax.f32 %v1394, 0.0
        %v1631 = vmax.f32 %v1397, 0.0
        %v1632 = vmax.f32 %v1402, 0.0
        %v1633 = vmax.f32 %v1405, 0.0
        %v1634 = vmax.f32 %v1410, 0.0
        %v1635 = vmax.f32 %v1413, 0.0
        %v1636 = vmax.f32 %v1418, 0.0
        %v1637 = vmax.f32 %v1421, 0.0
        %v1638 = vmax.f32 %v1426, 0.0
        %v1639 = vmax.f32 %v1429, 0.0
        %v1640 = vmax.f32 %v1434, 0.0
        %v1641 = vmax.f32 %v1437, 0.0
        %v1642 = vmax.f32 %v1442, 0.0
        %v1643 = vmax.f32 %v1445, 0.0
        %v1644 = vmax.f32 %v1450, 0.0
        %v1645 = vmax.f32 %v1453, 0.0
        %v1646 = vmax.f32 %v1458, 0.0
        %v1647 = vmax.f32 %v1461, 0.0
        %v1648 = vmax.f32 %v1466, 0.0
        %v1649 = vmax.f32 %v1469, 0.0
        %v1650 = vmax.f32 %v1474, 0.0
        %v1651 = vmax.f32 %v1477, 0.0
        %v1652 = vmax.f32 %v1482, 0.0
        %v1653 = vmax.f32 %v1485, 0.0
        %v1654 = vmax.f32 %v1490, 0.0
        %v1655 = vmax.f32 %v1493, 0.0
        %v1656 = vmax.f32 %v1498, 0.0
        %v1657 = vmax.f32 %v1501, 0.0
        %v1658 = vmax.f32 %v1506, 0.0
        %v1659 = vmax.f32 %v1509, 0.0
        %v1660 = vmax.f32 %v1514, 0.0
        %v1661 = vmax.f32 %v1517, 0.0
        %v1662 = vmax.f32 %v1522, 0.0
        %v1663 = vmax.f32 %v1525, 0.0
        %v1664 = vmax.f32 %v1530, 0.0
        %v1665 = vmax.f32 %v1533, 0.0
        %v1666 = vmax.f32 %v1538, 0.0
        %v1667 = vmax.f32 %v1541, 0.0
        %v1668 = vmax.f32 %v1546, 0.0
        %v1669 = vmax.f32 %v1549, 0.0
        %v1670 = vmax.f32 %v1554, 0.0
        %v1671 = vmax.f32 %v1557, 0.0
        %v1672 = vmax.f32 %v1562, 0.0
        %v1673 = vmax.f32 %v1565, 0.0
        %v1674 = vmax.f32 %v1570, 0.0
        %v1675 = vmax.f32 %v1573, 0.0
        %v1676 = vmax.f32 %v1578, 0.0
        %v1677 = vmax.f32 %v1581, 0.0
        %v1678 = vmax.f32 %v1586, 0.0
        %v1679 = vmax.f32 %v1589, 0.0
        %v1680 = vmax.f32 %v1594, 0.0
        %v1681 = vmax.f32 %v1597, 0.0
        %v1682 = vmax.f32 %v1602, 0.0
        %v1683 = vmax.f32 %v1605, 0.0
        %v1684 = vmax.f32 %v1610, 0.0
        %v1685 = vmax.f32 %v1613, 0.0
        %v1686 = vmax.f32 %v1618, 0.0
        %v1687 = vmax.f32 %v1621, 0.0
        %v1688 = vpack.c.bf16 %v1625, %v1624
        %v1689 = vpack.c.bf16 %v1627, %v1626
        %v1690 = vpack.c.bf16 %v1629, %v1628
        %v1691 = vpack.c.bf16 %v1631, %v1630
        %v1692 = vpack.c.bf16 %v1633, %v1632
        %v1693 = vpack.c.bf16 %v1635, %v1634
        %v1694 = vpack.c.bf16 %v1637, %v1636
        %v1695 = vpack.c.bf16 %v1639, %v1638
        %v1696 = vpack.c.bf16 %v1641, %v1640
        %v1697 = vpack.c.bf16 %v1643, %v1642
        %v1698 = vpack.c.bf16 %v1645, %v1644
        %v1699 = vpack.c.bf16 %v1647, %v1646
        %v1700 = vpack.c.bf16 %v1649, %v1648
        %v1701 = vpack.c.bf16 %v1651, %v1650
        %v1702 = vpack.c.bf16 %v1653, %v1652
        %v1703 = vpack.c.bf16 %v1655, %v1654
        %v1704 = vpack.c.bf16 %v1657, %v1656
        %v1705 = vpack.c.bf16 %v1659, %v1658
        %v1706 = vpack.c.bf16 %v1661, %v1660
        %v1707 = vpack.c.bf16 %v1663, %v1662
        %v1708 = vpack.c.bf16 %v1665, %v1664
        %v1709 = vpack.c.bf16 %v1667, %v1666
        %v1710 = vpack.c.bf16 %v1669, %v1668
        %v1711 = vpack.c.bf16 %v1671, %v1670
        %v1712 = vpack.c.bf16 %v1673, %v1672
        %v1713 = vpack.c.bf16 %v1675, %v1674
        %v1714 = vpack.c.bf16 %v1677, %v1676
        %v1715 = vpack.c.bf16 %v1679, %v1678
        %v1716 = vpack.c.bf16 %v1681, %v1680
        %v1717 = vpack.c.bf16 %v1683, %v1682
        %v1718 = vpack.c.bf16 %v1685, %v1684
        %v1719 = vpack.c.bf16 %v1687, %v1686
        %v1720 = vld [vmem:[#allocation3] sm:$0xff]
        %v1721 = vld [vmem:[#allocation3 + $0x8] sm:$0xff]
        %v1722 = vld [vmem:[#allocation3 + $0x10] sm:$0xff]
        %v1723 = vld [vmem:[#allocation3 + $0x18] sm:$0xff]
        %v1724 = vld [vmem:[#allocation3 + $0x20] sm:$0xff]
        %v1725 = vld [vmem:[#allocation3 + $0x28] sm:$0xff]
        %v1726 = vld [vmem:[#allocation3 + $0x30] sm:$0xff]
        %v1727 = vld [vmem:[#allocation3 + $0x38] sm:$0xff]
        %v1728 = vld [vmem:[#allocation3 + $0x40] sm:$0xff]
        %v1729 = vld [vmem:[#allocation3 + $0x48] sm:$0xff]
        %v1730 = vld [vmem:[#allocation3 + $0x50] sm:$0xff]
        %v1731 = vld [vmem:[#allocation3 + $0x58] sm:$0xff]
        %v1732 = vld [vmem:[#allocation3 + $0x60] sm:$0xff]
        %v1733 = vld [vmem:[#allocation3 + $0x68] sm:$0xff]
        %v1734 = vld [vmem:[#allocation3 + $0x70] sm:$0xff]
        %v1735 = vld [vmem:[#allocation3 + $0x78] sm:$0xff]
        %v1736 = vld [vmem:[%s6] sm:$0x3]
        %v1738 = vlaneseq
        %v1739 = vshrl.u32 %v1738, 7
        %v1740 = vsub.s32 0, %v1739
        %v1741 = vrot.slane %v1736, %v1740
        %v1742 = vlaneseq
        %v1743 = vshrl.u32 %v1742, 7
        %v1744 = vsub.s32 1, %v1743
        %v1745 = vrot.slane %v1736, %v1744
        %v1764 = vunpack.c.l.b16 %v1720
        %v1765 = vunpack.c.h.b16 %v1720
        %v1766 = vunpack.c.l.b16 %v1721
        %v1767 = vunpack.c.h.b16 %v1721
        %v1768 = vunpack.c.l.b16 %v1722
        %v1769 = vunpack.c.h.b16 %v1722
        %v1770 = vunpack.c.l.b16 %v1723
        %v1771 = vunpack.c.h.b16 %v1723
        %v1772 = vunpack.c.l.b16 %v1724
        %v1773 = vunpack.c.h.b16 %v1724
        %v1774 = vunpack.c.l.b16 %v1725
        %v1775 = vunpack.c.h.b16 %v1725
        %v1776 = vunpack.c.l.b16 %v1726
        %v1777 = vunpack.c.h.b16 %v1726
        %v1778 = vunpack.c.l.b16 %v1727
        %v1779 = vunpack.c.h.b16 %v1727
        %v1780 = vunpack.c.l.b16 %v1728
        %v1781 = vunpack.c.h.b16 %v1728
        %v1782 = vunpack.c.l.b16 %v1729
        %v1783 = vunpack.c.h.b16 %v1729
        %v1784 = vunpack.c.l.b16 %v1730
        %v1785 = vunpack.c.h.b16 %v1730
        %v1786 = vunpack.c.l.b16 %v1731
        %v1787 = vunpack.c.h.b16 %v1731
        %v1788 = vunpack.c.l.b16 %v1732
        %v1789 = vunpack.c.h.b16 %v1732
        %v1790 = vunpack.c.l.b16 %v1733
        %v1791 = vunpack.c.h.b16 %v1733
        %v1792 = vunpack.c.l.b16 %v1734
        %v1793 = vunpack.c.h.b16 %v1734
        %v1794 = vunpack.c.l.b16 %v1735
        %v1795 = vunpack.c.h.b16 %v1735
        %v1796 = vpack.c.b16 %v1766, %v1764
        %v1797 = vpack.c.b16 %v1767, %v1765
        %v1798 = vpack.c.b16 %v1770, %v1768
        %v1799 = vpack.c.b16 %v1771, %v1769
        %v1800 = vpack.c.b16 %v1774, %v1772
        %v1801 = vpack.c.b16 %v1775, %v1773
        %v1802 = vpack.c.b16 %v1778, %v1776
        %v1803 = vpack.c.b16 %v1779, %v1777
        %v1804 = vpack.c.b16 %v1782, %v1780
        %v1805 = vpack.c.b16 %v1783, %v1781
        %v1806 = vpack.c.b16 %v1786, %v1784
        %v1807 = vpack.c.b16 %v1787, %v1785
        %v1808 = vpack.c.b16 %v1790, %v1788
        %v1809 = vpack.c.b16 %v1791, %v1789
        %v1810 = vpack.c.b16 %v1794, %v1792
        %v1811 = vpack.c.b16 %v1795, %v1793
        %1828 = vmatprep.subr.bf16.mxu0 %v1797
        %1829 = vmatpush1.bf16.msra.mxu0 %v1796
        %1830 = vmatprep.subr.bf16.mxu0 %v1799
        %1831 = vmatpush1.bf16.msra.mxu0 %v1798
        %1832 = vmatprep.subr.bf16.mxu0 %v1801
        %1833 = vmatpush1.bf16.msra.mxu0 %v1800
        %1834 = vmatprep.subr.bf16.mxu0 %v1803
        %1835 = vmatpush1.bf16.msra.mxu0 %v1802
        %1836 = vmatprep.subr.bf16.mxu0 %v1805
        %1837 = vmatpush1.bf16.msra.mxu0 %v1804
        %1838 = vmatprep.subr.bf16.mxu0 %v1807
        %1839 = vmatpush1.bf16.msra.mxu0 %v1806
        %1840 = vmatprep.subr.bf16.mxu0 %v1809
        %1841 = vmatpush1.bf16.msra.mxu0 %v1808
        %1842 = vmatprep.subr.bf16.mxu0 %v1811
        %1843 = vmatpush1.bf16.msra.mxu0 %v1810
        %1844 = vmatprep.subr.bf16.mxu0 0
        %1845 = vmatpush1.bf16.msra.mxu0 0
        %1846 = vmatprep.subr.bf16.mxu0 0
        %1847 = vmatpush1.bf16.msra.mxu0 0
        %1848 = vmatprep.subr.bf16.mxu0 0
        %1849 = vmatpush1.bf16.msra.mxu0 0
        %1850 = vmatprep.subr.bf16.mxu0 0
        %1851 = vmatpush1.bf16.msra.mxu0 0
        %1852 = vmatprep.subr.bf16.mxu0 0
        %1853 = vmatpush1.bf16.msra.mxu0 0
        %1854 = vmatprep.subr.bf16.mxu0 0
        %1855 = vmatpush1.bf16.msra.mxu0 0
        %1856 = vmatprep.subr.bf16.mxu0 0
        %1857 = vmatpush1.bf16.msra.mxu0 0
        %1858 = vmatprep.subr.bf16.mxu0 0
        %1859 = vmatpush1.bf16.msra.mxu0 0
        %1860 = vmatprep.mubr.bf16.mxu0 0
        %1861 = vmatmul.mubr.bf16.gmra.mrb[0].mxu0 %v1688
        %v1862 = vpop.f32.mrb[0].mxu0
        %v1863 = vadd.f32 %v1741, %v1862
        %v1864 = vpop.f32.mrb[0].mxu0
        %v1865 = vadd.f32 %v1745, %v1864
        %v1866 = vpop.f32.mrb[0].mxu0
        %v1867 = vadd.f32 %v1741, %v1866
        %v1868 = vpop.f32.mrb[0].mxu0
        %v1869 = vadd.f32 %v1745, %v1868
        %1870 = vmatprep.mubr.bf16.mxu0 0
        %1871 = vmatmul.mubr.bf16.gmra.mrb[0].mxu0 %v1689
        %v1872 = vpop.f32.mrb[0].mxu0
        %v1873 = vadd.f32 %v1741, %v1872
        %v1874 = vpop.f32.mrb[0].mxu0
        %v1875 = vadd.f32 %v1745, %v1874
        %v1876 = vpop.f32.mrb[0].mxu0
        %v1877 = vadd.f32 %v1741, %v1876
        %v1878 = vpop.f32.mrb[0].mxu0
        %v1879 = vadd.f32 %v1745, %v1878
        %1880 = vmatprep.mubr.bf16.mxu0 0
        %1881 = vmatmul.mubr.bf16.gmra.mrb[0].mxu0 %v1690
        %v1882 = vpop.f32.mrb[0].mxu0
        %v1883 = vadd.f32 %v1741, %v1882
        %v1884 = vpop.f32.mrb[0].mxu0
        %v1885 = vadd.f32 %v1745, %v1884
        %v1886 = vpop.f32.mrb[0].mxu0
        %v1887 = vadd.f32 %v1741, %v1886
        %v1888 = vpop.f32.mrb[0].mxu0
        %v1889 = vadd.f32 %v1745, %v1888
        %1890 = vmatprep.mubr.bf16.mxu0 0
        %1891 = vmatmul.mubr.bf16.gmra.mrb[0].mxu0 %v1691
        %v1892 = vpop.f32.mrb[0].mxu0
        %v1893 = vadd.f32 %v1741, %v1892
        %v1894 = vpop.f32.mrb[0].mxu0
        %v1895 = vadd.f32 %v1745, %v1894
        %v1896 = vpop.f32.mrb[0].mxu0
        %v1897 = vadd.f32 %v1741, %v1896
        %v1898 = vpop.f32.mrb[0].mxu0
        %v1899 = vadd.f32 %v1745, %v1898
        %1900 = vmatprep.mubr.bf16.mxu0 0
        %1901 = vmatmul.mubr.bf16.gmra.mrb[0].mxu0 %v1692
        %v1902 = vpop.f32.mrb[0].mxu0
        %v1903 = vadd.f32 %v1741, %v1902
        %v1904 = vpop.f32.mrb[0].mxu0
        %v1905 = vadd.f32 %v1745, %v1904
        %v1906 = vpop.f32.mrb[0].mxu0
        %v1907 = vadd.f32 %v1741, %v1906
        %v1908 = vpop.f32.mrb[0].mxu0
        %v1909 = vadd.f32 %v1745, %v1908
        %1910 = vmatprep.mubr.bf16.mxu0 0
        %1911 = vmatmul.mubr.bf16.gmra.mrb[0].mxu0 %v1693
        %v1912 = vpop.f32.mrb[0].mxu0
        %v1913 = vadd.f32 %v1741, %v1912
        %v1914 = vpop.f32.mrb[0].mxu0
        %v1915 = vadd.f32 %v1745, %v1914
        %v1916 = vpop.f32.mrb[0].mxu0
        %v1917 = vadd.f32 %v1741, %v1916
        %v1918 = vpop.f32.mrb[0].mxu0
        %v1919 = vadd.f32 %v1745, %v1918
        %1920 = vmatprep.mubr.bf16.mxu0 0
        %1921 = vmatmul.mubr.bf16.gmra.mrb[0].mxu0 %v1694
        %v1922 = vpop.f32.mrb[0].mxu0
        %v1923 = vadd.f32 %v1741, %v1922
        %v1924 = vpop.f32.mrb[0].mxu0
        %v1925 = vadd.f32 %v1745, %v1924
        %v1926 = vpop.f32.mrb[0].mxu0
        %v1927 = vadd.f32 %v1741, %v1926
        %v1928 = vpop.f32.mrb[0].mxu0
        %v1929 = vadd.f32 %v1745, %v1928
        %1930 = vmatprep.mubr.bf16.mxu0 0
        %1931 = vmatmul.mubr.bf16.gmra.mrb[0].mxu0 %v1695
        %v1932 = vpop.f32.mrb[0].mxu0
        %v1933 = vadd.f32 %v1741, %v1932
        %v1934 = vpop.f32.mrb[0].mxu0
        %v1935 = vadd.f32 %v1745, %v1934
        %v1936 = vpop.f32.mrb[0].mxu0
        %v1937 = vadd.f32 %v1741, %v1936
        %v1938 = vpop.f32.mrb[0].mxu0
        %v1939 = vadd.f32 %v1745, %v1938
        %1940 = vmatprep.mubr.bf16.mxu0 0
        %1941 = vmatmul.mubr.bf16.gmra.mrb[0].mxu0 %v1696
        %v1942 = vpop.f32.mrb[0].mxu0
        %v1943 = vadd.f32 %v1741, %v1942
        %v1944 = vpop.f32.mrb[0].mxu0
        %v1945 = vadd.f32 %v1745, %v1944
        %v1946 = vpop.f32.mrb[0].mxu0
        %v1947 = vadd.f32 %v1741, %v1946
        %v1948 = vpop.f32.mrb[0].mxu0
        %v1949 = vadd.f32 %v1745, %v1948
        %1950 = vmatprep.mubr.bf16.mxu0 0
        %1951 = vmatmul.mubr.bf16.gmra.mrb[0].mxu0 %v1697
        %v1952 = vpop.f32.mrb[0].mxu0
        %v1953 = vadd.f32 %v1741, %v1952
        %v1954 = vpop.f32.mrb[0].mxu0
        %v1955 = vadd.f32 %v1745, %v1954
        %v1956 = vpop.f32.mrb[0].mxu0
        %v1957 = vadd.f32 %v1741, %v1956
        %v1958 = vpop.f32.mrb[0].mxu0
        %v1959 = vadd.f32 %v1745, %v1958
        %1960 = vmatprep.mubr.bf16.mxu0 0
        %1961 = vmatmul.mubr.bf16.gmra.mrb[0].mxu0 %v1698
        %v1962 = vpop.f32.mrb[0].mxu0
        %v1963 = vadd.f32 %v1741, %v1962
        %v1964 = vpop.f32.mrb[0].mxu0
        %v1965 = vadd.f32 %v1745, %v1964
        %v1966 = vpop.f32.mrb[0].mxu0
        %v1967 = vadd.f32 %v1741, %v1966
        %v1968 = vpop.f32.mrb[0].mxu0
        %v1969 = vadd.f32 %v1745, %v1968
        %1970 = vmatprep.mubr.bf16.mxu0 0
        %1971 = vmatmul.mubr.bf16.gmra.mrb[0].mxu0 %v1699
        %v1972 = vpop.f32.mrb[0].mxu0
        %v1973 = vadd.f32 %v1741, %v1972
        %v1974 = vpop.f32.mrb[0].mxu0
        %v1975 = vadd.f32 %v1745, %v1974
        %v1976 = vpop.f32.mrb[0].mxu0
        %v1977 = vadd.f32 %v1741, %v1976
        %v1978 = vpop.f32.mrb[0].mxu0
        %v1979 = vadd.f32 %v1745, %v1978
        %1980 = vmatprep.mubr.bf16.mxu0 0
        %1981 = vmatmul.mubr.bf16.gmra.mrb[0].mxu0 %v1700
        %v1982 = vpop.f32.mrb[0].mxu0
        %v1983 = vadd.f32 %v1741, %v1982
        %v1984 = vpop.f32.mrb[0].mxu0
        %v1985 = vadd.f32 %v1745, %v1984
        %v1986 = vpop.f32.mrb[0].mxu0
        %v1987 = vadd.f32 %v1741, %v1986
        %v1988 = vpop.f32.mrb[0].mxu0
        %v1989 = vadd.f32 %v1745, %v1988
        %1990 = vmatprep.mubr.bf16.mxu0 0
        %1991 = vmatmul.mubr.bf16.gmra.mrb[0].mxu0 %v1701
        %v1992 = vpop.f32.mrb[0].mxu0
        %v1993 = vadd.f32 %v1741, %v1992
        %v1994 = vpop.f32.mrb[0].mxu0
        %v1995 = vadd.f32 %v1745, %v1994
        %v1996 = vpop.f32.mrb[0].mxu0
        %v1997 = vadd.f32 %v1741, %v1996
        %v1998 = vpop.f32.mrb[0].mxu0
        %v1999 = vadd.f32 %v1745, %v1998
        %2000 = vmatprep.mubr.bf16.mxu0 0
        %2001 = vmatmul.mubr.bf16.gmra.mrb[0].mxu0 %v1702
        %v2002 = vpop.f32.mrb[0].mxu0
        %v2003 = vadd.f32 %v1741, %v2002
        %v2004 = vpop.f32.mrb[0].mxu0
        %v2005 = vadd.f32 %v1745, %v2004
        %v2006 = vpop.f32.mrb[0].mxu0
        %v2007 = vadd.f32 %v1741, %v2006
        %v2008 = vpop.f32.mrb[0].mxu0
        %v2009 = vadd.f32 %v1745, %v2008
        %2010 = vmatprep.mubr.bf16.mxu0 0
        %2011 = vmatmul.mubr.bf16.gmra.mrb[0].mxu0 %v1703
        %v2012 = vpop.f32.mrb[0].mxu0
        %v2013 = vadd.f32 %v1741, %v2012
        %v2014 = vpop.f32.mrb[0].mxu0
        %v2015 = vadd.f32 %v1745, %v2014
        %v2016 = vpop.f32.mrb[0].mxu0
        %v2017 = vadd.f32 %v1741, %v2016
        %v2018 = vpop.f32.mrb[0].mxu0
        %v2019 = vadd.f32 %v1745, %v2018
        %2020 = vmatprep.mubr.bf16.mxu0 0
        %2021 = vmatmul.mubr.bf16.gmra.mrb[0].mxu0 %v1704
        %v2022 = vpop.f32.mrb[0].mxu0
        %v2023 = vadd.f32 %v1741, %v2022
        %v2024 = vpop.f32.mrb[0].mxu0
        %v2025 = vadd.f32 %v1745, %v2024
        %v2026 = vpop.f32.mrb[0].mxu0
        %v2027 = vadd.f32 %v1741, %v2026
        %v2028 = vpop.f32.mrb[0].mxu0
        %v2029 = vadd.f32 %v1745, %v2028
        %2030 = vmatprep.mubr.bf16.mxu0 0
        %2031 = vmatmul.mubr.bf16.gmra.mrb[0].mxu0 %v1705
        %v2032 = vpop.f32.mrb[0].mxu0
        %v2033 = vadd.f32 %v1741, %v2032
        %v2034 = vpop.f32.mrb[0].mxu0
        %v2035 = vadd.f32 %v1745, %v2034
        %v2036 = vpop.f32.mrb[0].mxu0
        %v2037 = vadd.f32 %v1741, %v2036
        %v2038 = vpop.f32.mrb[0].mxu0
        %v2039 = vadd.f32 %v1745, %v2038
        %2040 = vmatprep.mubr.bf16.mxu0 0
        %2041 = vmatmul.mubr.bf16.gmra.mrb[0].mxu0 %v1706
        %v2042 = vpop.f32.mrb[0].mxu0
        %v2043 = vadd.f32 %v1741, %v2042
        %v2044 = vpop.f32.mrb[0].mxu0
        %v2045 = vadd.f32 %v1745, %v2044
        %v2046 = vpop.f32.mrb[0].mxu0
        %v2047 = vadd.f32 %v1741, %v2046
        %v2048 = vpop.f32.mrb[0].mxu0
        %v2049 = vadd.f32 %v1745, %v2048
        %2050 = vmatprep.mubr.bf16.mxu0 0
        %2051 = vmatmul.mubr.bf16.gmra.mrb[0].mxu0 %v1707
        %v2052 = vpop.f32.mrb[0].mxu0
        %v2053 = vadd.f32 %v1741, %v2052
        %v2054 = vpop.f32.mrb[0].mxu0
        %v2055 = vadd.f32 %v1745, %v2054
        %v2056 = vpop.f32.mrb[0].mxu0
        %v2057 = vadd.f32 %v1741, %v2056
        %v2058 = vpop.f32.mrb[0].mxu0
        %v2059 = vadd.f32 %v1745, %v2058
        %2060 = vmatprep.mubr.bf16.mxu0 0
        %2061 = vmatmul.mubr.bf16.gmra.mrb[0].mxu0 %v1708
        %v2062 = vpop.f32.mrb[0].mxu0
        %v2063 = vadd.f32 %v1741, %v2062
        %v2064 = vpop.f32.mrb[0].mxu0
        %v2065 = vadd.f32 %v1745, %v2064
        %v2066 = vpop.f32.mrb[0].mxu0
        %v2067 = vadd.f32 %v1741, %v2066
        %v2068 = vpop.f32.mrb[0].mxu0
        %v2069 = vadd.f32 %v1745, %v2068
        %2070 = vmatprep.mubr.bf16.mxu0 0
        %2071 = vmatmul.mubr.bf16.gmra.mrb[0].mxu0 %v1709
        %v2072 = vpop.f32.mrb[0].mxu0
        %v2073 = vadd.f32 %v1741, %v2072
        %v2074 = vpop.f32.mrb[0].mxu0
        %v2075 = vadd.f32 %v1745, %v2074
        %v2076 = vpop.f32.mrb[0].mxu0
        %v2077 = vadd.f32 %v1741, %v2076
        %v2078 = vpop.f32.mrb[0].mxu0
        %v2079 = vadd.f32 %v1745, %v2078
        %2080 = vmatprep.mubr.bf16.mxu0 0
        %2081 = vmatmul.mubr.bf16.gmra.mrb[0].mxu0 %v1710
        %v2082 = vpop.f32.mrb[0].mxu0
        %v2083 = vadd.f32 %v1741, %v2082
        %v2084 = vpop.f32.mrb[0].mxu0
        %v2085 = vadd.f32 %v1745, %v2084
        %v2086 = vpop.f32.mrb[0].mxu0
        %v2087 = vadd.f32 %v1741, %v2086
        %v2088 = vpop.f32.mrb[0].mxu0
        %v2089 = vadd.f32 %v1745, %v2088
        %2090 = vmatprep.mubr.bf16.mxu0 0
        %2091 = vmatmul.mubr.bf16.gmra.mrb[0].mxu0 %v1711
        %v2092 = vpop.f32.mrb[0].mxu0
        %v2093 = vadd.f32 %v1741, %v2092
        %v2094 = vpop.f32.mrb[0].mxu0
        %v2095 = vadd.f32 %v1745, %v2094
        %v2096 = vpop.f32.mrb[0].mxu0
        %v2097 = vadd.f32 %v1741, %v2096
        %v2098 = vpop.f32.mrb[0].mxu0
        %v2099 = vadd.f32 %v1745, %v2098
        %2100 = vmatprep.mubr.bf16.mxu0 0
        %2101 = vmatmul.mubr.bf16.gmra.mrb[0].mxu0 %v1712
        %v2102 = vpop.f32.mrb[0].mxu0
        %v2103 = vadd.f32 %v1741, %v2102
        %v2104 = vpop.f32.mrb[0].mxu0
        %v2105 = vadd.f32 %v1745, %v2104
        %v2106 = vpop.f32.mrb[0].mxu0
        %v2107 = vadd.f32 %v1741, %v2106
        %v2108 = vpop.f32.mrb[0].mxu0
        %v2109 = vadd.f32 %v1745, %v2108
        %2110 = vmatprep.mubr.bf16.mxu0 0
        %2111 = vmatmul.mubr.bf16.gmra.mrb[0].mxu0 %v1713
        %v2112 = vpop.f32.mrb[0].mxu0
        %v2113 = vadd.f32 %v1741, %v2112
        %v2114 = vpop.f32.mrb[0].mxu0
        %v2115 = vadd.f32 %v1745, %v2114
        %v2116 = vpop.f32.mrb[0].mxu0
        %v2117 = vadd.f32 %v1741, %v2116
        %v2118 = vpop.f32.mrb[0].mxu0
        %v2119 = vadd.f32 %v1745, %v2118
        %2120 = vmatprep.mubr.bf16.mxu0 0
        %2121 = vmatmul.mubr.bf16.gmra.mrb[0].mxu0 %v1714
        %v2122 = vpop.f32.mrb[0].mxu0
        %v2123 = vadd.f32 %v1741, %v2122
        %v2124 = vpop.f32.mrb[0].mxu0
        %v2125 = vadd.f32 %v1745, %v2124
        %v2126 = vpop.f32.mrb[0].mxu0
        %v2127 = vadd.f32 %v1741, %v2126
        %v2128 = vpop.f32.mrb[0].mxu0
        %v2129 = vadd.f32 %v1745, %v2128
        %2130 = vmatprep.mubr.bf16.mxu0 0
        %2131 = vmatmul.mubr.bf16.gmra.mrb[0].mxu0 %v1715
        %v2132 = vpop.f32.mrb[0].mxu0
        %v2133 = vadd.f32 %v1741, %v2132
        %v2134 = vpop.f32.mrb[0].mxu0
        %v2135 = vadd.f32 %v1745, %v2134
        %v2136 = vpop.f32.mrb[0].mxu0
        %v2137 = vadd.f32 %v1741, %v2136
        %v2138 = vpop.f32.mrb[0].mxu0
        %v2139 = vadd.f32 %v1745, %v2138
        %2140 = vmatprep.mubr.bf16.mxu0 0
        %2141 = vmatmul.mubr.bf16.gmra.mrb[0].mxu0 %v1716
        %v2142 = vpop.f32.mrb[0].mxu0
        %v2143 = vadd.f32 %v1741, %v2142
        %v2144 = vpop.f32.mrb[0].mxu0
        %v2145 = vadd.f32 %v1745, %v2144
        %v2146 = vpop.f32.mrb[0].mxu0
        %v2147 = vadd.f32 %v1741, %v2146
        %v2148 = vpop.f32.mrb[0].mxu0
        %v2149 = vadd.f32 %v1745, %v2148
        %2150 = vmatprep.mubr.bf16.mxu0 0
        %2151 = vmatmul.mubr.bf16.gmra.mrb[0].mxu0 %v1717
        %v2152 = vpop.f32.mrb[0].mxu0
        %v2153 = vadd.f32 %v1741, %v2152
        %v2154 = vpop.f32.mrb[0].mxu0
        %v2155 = vadd.f32 %v1745, %v2154
        %v2156 = vpop.f32.mrb[0].mxu0
        %v2157 = vadd.f32 %v1741, %v2156
        %v2158 = vpop.f32.mrb[0].mxu0
        %v2159 = vadd.f32 %v1745, %v2158
        %2160 = vmatprep.mubr.bf16.mxu0 0
        %2161 = vmatmul.mubr.bf16.gmra.mrb[0].mxu0 %v1718
        %v2162 = vpop.f32.mrb[0].mxu0
        %v2163 = vadd.f32 %v1741, %v2162
        %v2164 = vpop.f32.mrb[0].mxu0
        %v2165 = vadd.f32 %v1745, %v2164
        %v2166 = vpop.f32.mrb[0].mxu0
        %v2167 = vadd.f32 %v1741, %v2166
        %v2168 = vpop.f32.mrb[0].mxu0
        %v2169 = vadd.f32 %v1745, %v2168
        %2170 = vmatprep.mubr.bf16.mxu0 0
        %2171 = vmatmul.mubr.bf16.gmra.mrb[0].mxu0 %v1719
        %v2172 = vpop.f32.mrb[0].mxu0
        %v2173 = vadd.f32 %v1741, %v2172
        %v2174 = vpop.f32.mrb[0].mxu0
        %v2175 = vadd.f32 %v1745, %v2174
        %v2176 = vpop.f32.mrb[0].mxu0
        %v2177 = vadd.f32 %v1741, %v2176
        %v2178 = vpop.f32.mrb[0].mxu0
        %v2179 = vadd.f32 %v1745, %v2178
        %2180 = vdwg.mxu0
        %v2181 = vmax.f32 %v1863, 0.0
        %v2182 = vmax.f32 %v1865, 0.0
        %v2183 = vmax.f32 %v1867, 0.0
        %v2184 = vmax.f32 %v1869, 0.0
        %v2185 = vmax.f32 %v1873, 0.0
        %v2186 = vmax.f32 %v1875, 0.0
        %v2187 = vmax.f32 %v1877, 0.0
        %v2188 = vmax.f32 %v1879, 0.0
        %v2189 = vmax.f32 %v1883, 0.0
        %v2190 = vmax.f32 %v1885, 0.0
        %v2191 = vmax.f32 %v1887, 0.0
        %v2192 = vmax.f32 %v1889, 0.0
        %v2193 = vmax.f32 %v1893, 0.0
        %v2194 = vmax.f32 %v1895, 0.0
        %v2195 = vmax.f32 %v1897, 0.0
        %v2196 = vmax.f32 %v1899, 0.0
        %v2197 = vmax.f32 %v1903, 0.0
        %v2198 = vmax.f32 %v1905, 0.0
        %v2199 = vmax.f32 %v1907, 0.0
        %v2200 = vmax.f32 %v1909, 0.0
        %v2201 = vmax.f32 %v1913, 0.0
        %v2202 = vmax.f32 %v1915, 0.0
        %v2203 = vmax.f32 %v1917, 0.0
        %v2204 = vmax.f32 %v1919, 0.0
        %v2205 = vmax.f32 %v1923, 0.0
        %v2206 = vmax.f32 %v1925, 0.0
        %v2207 = vmax.f32 %v1927, 0.0
        %v2208 = vmax.f32 %v1929, 0.0
        %v2209 = vmax.f32 %v1933, 0.0
        %v2210 = vmax.f32 %v1935, 0.0
        %v2211 = vmax.f32 %v1937, 0.0
        %v2212 = vmax.f32 %v1939, 0.0
        %v2213 = vmax.f32 %v1943, 0.0
        %v2214 = vmax.f32 %v1945, 0.0
        %v2215 = vmax.f32 %v1947, 0.0
        %v2216 = vmax.f32 %v1949, 0.0
        %v2217 = vmax.f32 %v1953, 0.0
        %v2218 = vmax.f32 %v1955, 0.0
        %v2219 = vmax.f32 %v1957, 0.0
        %v2220 = vmax.f32 %v1959, 0.0
        %v2221 = vmax.f32 %v1963, 0.0
        %v2222 = vmax.f32 %v1965, 0.0
        %v2223 = vmax.f32 %v1967, 0.0
        %v2224 = vmax.f32 %v1969, 0.0
        %v2225 = vmax.f32 %v1973, 0.0
        %v2226 = vmax.f32 %v1975, 0.0
        %v2227 = vmax.f32 %v1977, 0.0
        %v2228 = vmax.f32 %v1979, 0.0
        %v2229 = vmax.f32 %v1983, 0.0
        %v2230 = vmax.f32 %v1985, 0.0
        %v2231 = vmax.f32 %v1987, 0.0
        %v2232 = vmax.f32 %v1989, 0.0
        %v2233 = vmax.f32 %v1993, 0.0
        %v2234 = vmax.f32 %v1995, 0.0
        %v2235 = vmax.f32 %v1997, 0.0
        %v2236 = vmax.f32 %v1999, 0.0
        %v2237 = vmax.f32 %v2003, 0.0
        %v2238 = vmax.f32 %v2005, 0.0
        %v2239 = vmax.f32 %v2007, 0.0
        %v2240 = vmax.f32 %v2009, 0.0
        %v2241 = vmax.f32 %v2013, 0.0
        %v2242 = vmax.f32 %v2015, 0.0
        %v2243 = vmax.f32 %v2017, 0.0
        %v2244 = vmax.f32 %v2019, 0.0
        %v2245 = vmax.f32 %v2023, 0.0
        %v2246 = vmax.f32 %v2025, 0.0
        %v2247 = vmax.f32 %v2027, 0.0
        %v2248 = vmax.f32 %v2029, 0.0
        %v2249 = vmax.f32 %v2033, 0.0
        %v2250 = vmax.f32 %v2035, 0.0
        %v2251 = vmax.f32 %v2037, 0.0
        %v2252 = vmax.f32 %v2039, 0.0
        %v2253 = vmax.f32 %v2043, 0.0
        %v2254 = vmax.f32 %v2045, 0.0
        %v2255 = vmax.f32 %v2047, 0.0
        %v2256 = vmax.f32 %v2049, 0.0
        %v2257 = vmax.f32 %v2053, 0.0
        %v2258 = vmax.f32 %v2055, 0.0
        %v2259 = vmax.f32 %v2057, 0.0
        %v2260 = vmax.f32 %v2059, 0.0
        %v2261 = vmax.f32 %v2063, 0.0
        %v2262 = vmax.f32 %v2065, 0.0
        %v2263 = vmax.f32 %v2067, 0.0
        %v2264 = vmax.f32 %v2069, 0.0
        %v2265 = vmax.f32 %v2073, 0.0
        %v2266 = vmax.f32 %v2075, 0.0
        %v2267 = vmax.f32 %v2077, 0.0
        %v2268 = vmax.f32 %v2079, 0.0
        %v2269 = vmax.f32 %v2083, 0.0
        %v2270 = vmax.f32 %v2085, 0.0
        %v2271 = vmax.f32 %v2087, 0.0
        %v2272 = vmax.f32 %v2089, 0.0
        %v2273 = vmax.f32 %v2093, 0.0
        %v2274 = vmax.f32 %v2095, 0.0
        %v2275 = vmax.f32 %v2097, 0.0
        %v2276 = vmax.f32 %v2099, 0.0
        %v2277 = vmax.f32 %v2103, 0.0
        %v2278 = vmax.f32 %v2105, 0.0
        %v2279 = vmax.f32 %v2107, 0.0
        %v2280 = vmax.f32 %v2109, 0.0
        %v2281 = vmax.f32 %v2113, 0.0
        %v2282 = vmax.f32 %v2115, 0.0
        %v2283 = vmax.f32 %v2117, 0.0
        %v2284 = vmax.f32 %v2119, 0.0
        %v2285 = vmax.f32 %v2123, 0.0
        %v2286 = vmax.f32 %v2125, 0.0
        %v2287 = vmax.f32 %v2127, 0.0
        %v2288 = vmax.f32 %v2129, 0.0
        %v2289 = vmax.f32 %v2133, 0.0
        %v2290 = vmax.f32 %v2135, 0.0
        %v2291 = vmax.f32 %v2137, 0.0
        %v2292 = vmax.f32 %v2139, 0.0
        %v2293 = vmax.f32 %v2143, 0.0
        %v2294 = vmax.f32 %v2145, 0.0
        %v2295 = vmax.f32 %v2147, 0.0
        %v2296 = vmax.f32 %v2149, 0.0
        %v2297 = vmax.f32 %v2153, 0.0
        %v2298 = vmax.f32 %v2155, 0.0
        %v2299 = vmax.f32 %v2157, 0.0
        %v2300 = vmax.f32 %v2159, 0.0
        %v2301 = vmax.f32 %v2163, 0.0
        %v2302 = vmax.f32 %v2165, 0.0
        %v2303 = vmax.f32 %v2167, 0.0
        %v2304 = vmax.f32 %v2169, 0.0
        %v2305 = vmax.f32 %v2173, 0.0
        %v2306 = vmax.f32 %v2175, 0.0
        %v2307 = vmax.f32 %v2177, 0.0
        %v2308 = vmax.f32 %v2179, 0.0
        %v2309 = vpack.c.bf16 %v2183, %v2181
        %v2310 = vpack.c.bf16 %v2184, %v2182
        %v2311 = vpack.c.bf16 %v2187, %v2185
        %v2312 = vpack.c.bf16 %v2188, %v2186
        %v2313 = vpack.c.bf16 %v2191, %v2189
        %v2314 = vpack.c.bf16 %v2192, %v2190
        %v2315 = vpack.c.bf16 %v2195, %v2193
        %v2316 = vpack.c.bf16 %v2196, %v2194
        %v2317 = vpack.c.bf16 %v2199, %v2197
        %v2318 = vpack.c.bf16 %v2200, %v2198
        %v2319 = vpack.c.bf16 %v2203, %v2201
        %v2320 = vpack.c.bf16 %v2204, %v2202
        %v2321 = vpack.c.bf16 %v2207, %v2205
        %v2322 = vpack.c.bf16 %v2208, %v2206
        %v2323 = vpack.c.bf16 %v2211, %v2209
        %v2324 = vpack.c.bf16 %v2212, %v2210
        %v2325 = vpack.c.bf16 %v2215, %v2213
        %v2326 = vpack.c.bf16 %v2216, %v2214
        %v2327 = vpack.c.bf16 %v2219, %v2217
        %v2328 = vpack.c.bf16 %v2220, %v2218
        %v2329 = vpack.c.bf16 %v2223, %v2221
        %v2330 = vpack.c.bf16 %v2224, %v2222
        %v2331 = vpack.c.bf16 %v2227, %v2225
        %v2332 = vpack.c.bf16 %v2228, %v2226
        %v2333 = vpack.c.bf16 %v2231, %v2229
        %v2334 = vpack.c.bf16 %v2232, %v2230
        %v2335 = vpack.c.bf16 %v2235, %v2233
        %v2336 = vpack.c.bf16 %v2236, %v2234
        %v2337 = vpack.c.bf16 %v2239, %v2237
        %v2338 = vpack.c.bf16 %v2240, %v2238
        %v2339 = vpack.c.bf16 %v2243, %v2241
        %v2340 = vpack.c.bf16 %v2244, %v2242
        %v2341 = vpack.c.bf16 %v2247, %v2245
        %v2342 = vpack.c.bf16 %v2248, %v2246
        %v2343 = vpack.c.bf16 %v2251, %v2249
        %v2344 = vpack.c.bf16 %v2252, %v2250
        %v2345 = vpack.c.bf16 %v2255, %v2253
        %v2346 = vpack.c.bf16 %v2256, %v2254
        %v2347 = vpack.c.bf16 %v2259, %v2257
        %v2348 = vpack.c.bf16 %v2260, %v2258
        %v2349 = vpack.c.bf16 %v2263, %v2261
        %v2350 = vpack.c.bf16 %v2264, %v2262
        %v2351 = vpack.c.bf16 %v2267, %v2265
        %v2352 = vpack.c.bf16 %v2268, %v2266
        %v2353 = vpack.c.bf16 %v2271, %v2269
        %v2354 = vpack.c.bf16 %v2272, %v2270
        %v2355 = vpack.c.bf16 %v2275, %v2273
        %v2356 = vpack.c.bf16 %v2276, %v2274
        %v2357 = vpack.c.bf16 %v2279, %v2277
        %v2358 = vpack.c.bf16 %v2280, %v2278
        %v2359 = vpack.c.bf16 %v2283, %v2281
        %v2360 = vpack.c.bf16 %v2284, %v2282
        %v2361 = vpack.c.bf16 %v2287, %v2285
        %v2362 = vpack.c.bf16 %v2288, %v2286
        %v2363 = vpack.c.bf16 %v2291, %v2289
        %v2364 = vpack.c.bf16 %v2292, %v2290
        %v2365 = vpack.c.bf16 %v2295, %v2293
        %v2366 = vpack.c.bf16 %v2296, %v2294
        %v2367 = vpack.c.bf16 %v2299, %v2297
        %v2368 = vpack.c.bf16 %v2300, %v2298
        %v2369 = vpack.c.bf16 %v2303, %v2301
        %v2370 = vpack.c.bf16 %v2304, %v2302
        %v2371 = vpack.c.bf16 %v2307, %v2305
        %v2372 = vpack.c.bf16 %v2308, %v2306
        %v2373 = vld [vmem:[%s7] sm:$0xff]
        %v2374 = vld [vmem:[%s7 + $0x8] sm:$0xff]
        %v2375 = vld [vmem:[%s7 + $0x10] sm:$0xff]
        %v2376 = vld [vmem:[%s7 + $0x18] sm:$0xff]
        %v2377 = vld [vmem:[%s7 + $0x20] sm:$0xff]
        %v2378 = vld [vmem:[%s7 + $0x28] sm:$0xff]
        %v2379 = vld [vmem:[%s7 + $0x30] sm:$0xff]
        %v2380 = vld [vmem:[%s7 + $0x38] sm:$0xff]
        %v2381 = vld [vmem:[%s7 + $0x40] sm:$0xff]
        %v2382 = vld [vmem:[%s7 + $0x48] sm:$0xff]
        %v2383 = vld [vmem:[%s7 + $0x50] sm:$0xff]
        %v2384 = vld [vmem:[%s7 + $0x58] sm:$0xff]
        %v2385 = vld [vmem:[%s7 + $0x60] sm:$0xff]
        %v2386 = vld [vmem:[%s7 + $0x68] sm:$0xff]
        %v2387 = vld [vmem:[%s7 + $0x70] sm:$0xff]
        %v2388 = vld [vmem:[%s7 + $0x78] sm:$0xff]
        %v2389 = vld [vmem:[%s7 + $0x80] sm:$0xff]
        %v2390 = vld [vmem:[%s7 + $0x88] sm:$0xff]
        %v2391 = vld [vmem:[%s7 + $0x90] sm:$0xff]
        %v2392 = vld [vmem:[%s7 + $0x98] sm:$0xff]
        %v2393 = vld [vmem:[%s7 + $0xa0] sm:$0xff]
        %v2394 = vld [vmem:[%s7 + $0xa8] sm:$0xff]
        %v2395 = vld [vmem:[%s7 + $0xb0] sm:$0xff]
        %v2396 = vld [vmem:[%s7 + $0xb8] sm:$0xff]
        %v2397 = vld [vmem:[%s7 + $0xc0] sm:$0xff]
        %v2398 = vld [vmem:[%s7 + $0xc8] sm:$0xff]
        %v2399 = vld [vmem:[%s7 + $0xd0] sm:$0xff]
        %v2400 = vld [vmem:[%s7 + $0xd8] sm:$0xff]
        %v2401 = vld [vmem:[%s7 + $0xe0] sm:$0xff]
        %v2402 = vld [vmem:[%s7 + $0xe8] sm:$0xff]
        %v2403 = vld [vmem:[%s7 + $0xf0] sm:$0xff]
        %v2404 = vld [vmem:[%s7 + $0xf8] sm:$0xff]
        %v2405 = vld [vmem:[%s7 + $0x100] sm:$0xff]
        %v2406 = vld [vmem:[%s7 + $0x108] sm:$0xff]
        %v2407 = vld [vmem:[%s7 + $0x110] sm:$0xff]
        %v2408 = vld [vmem:[%s7 + $0x118] sm:$0xff]
        %v2409 = vld [vmem:[%s7 + $0x120] sm:$0xff]
        %v2410 = vld [vmem:[%s7 + $0x128] sm:$0xff]
        %v2411 = vld [vmem:[%s7 + $0x130] sm:$0xff]
        %v2412 = vld [vmem:[%s7 + $0x138] sm:$0xff]
        %v2413 = vld [vmem:[%s7 + $0x140] sm:$0xff]
        %v2414 = vld [vmem:[%s7 + $0x148] sm:$0xff]
        %v2415 = vld [vmem:[%s7 + $0x150] sm:$0xff]
        %v2416 = vld [vmem:[%s7 + $0x158] sm:$0xff]
        %v2417 = vld [vmem:[%s7 + $0x160] sm:$0xff]
        %v2418 = vld [vmem:[%s7 + $0x168] sm:$0xff]
        %v2419 = vld [vmem:[%s7 + $0x170] sm:$0xff]
        %v2420 = vld [vmem:[%s7 + $0x178] sm:$0xff]
        %v2421 = vld [vmem:[%s7 + $0x180] sm:$0xff]
        %v2422 = vld [vmem:[%s7 + $0x188] sm:$0xff]
        %v2423 = vld [vmem:[%s7 + $0x190] sm:$0xff]
        %v2424 = vld [vmem:[%s7 + $0x198] sm:$0xff]
        %v2425 = vld [vmem:[%s7 + $0x1a0] sm:$0xff]
        %v2426 = vld [vmem:[%s7 + $0x1a8] sm:$0xff]
        %v2427 = vld [vmem:[%s7 + $0x1b0] sm:$0xff]
        %v2428 = vld [vmem:[%s7 + $0x1b8] sm:$0xff]
        %v2429 = vld [vmem:[%s7 + $0x1c0] sm:$0xff]
        %v2430 = vld [vmem:[%s7 + $0x1c8] sm:$0xff]
        %v2431 = vld [vmem:[%s7 + $0x1d0] sm:$0xff]
        %v2432 = vld [vmem:[%s7 + $0x1d8] sm:$0xff]
        %v2433 = vld [vmem:[%s7 + $0x1e0] sm:$0xff]
        %v2434 = vld [vmem:[%s7 + $0x1e8] sm:$0xff]
        %v2435 = vld [vmem:[%s7 + $0x1f0] sm:$0xff]
        %v2436 = vld [vmem:[%s7 + $0x1f8] sm:$0xff]
        %v2437 = vld [vmem:[%s8] sm:$0xf]
        %v2439 = vlaneseq
        %v2440 = vshrl.u32 %v2439, 7
        %v2441 = vsub.s32 0, %v2440
        %v2442 = vrot.slane %v2437, %v2441
        %v2443 = vlaneseq
        %v2444 = vshrl.u32 %v2443, 7
        %v2445 = vsub.s32 1, %v2444
        %v2446 = vrot.slane %v2437, %v2445
        %v2447 = vlaneseq
        %v2448 = vshrl.u32 %v2447, 7
        %v2449 = vsub.s32 2, %v2448
        %v2450 = vrot.slane %v2437, %v2449
        %v2451 = vlaneseq
        %v2452 = vshrl.u32 %v2451, 7
        %v2453 = vsub.s32 3, %v2452
        %v2454 = vrot.slane %v2437, %v2453
        %v2523 = vunpack.c.l.b16 %v2373
        %v2524 = vunpack.c.h.b16 %v2373
        %v2525 = vunpack.c.l.b16 %v2374
        %v2526 = vunpack.c.h.b16 %v2374
        %v2527 = vunpack.c.l.b16 %v2375
        %v2528 = vunpack.c.h.b16 %v2375
        %v2529 = vunpack.c.l.b16 %v2376
        %v2530 = vunpack.c.h.b16 %v2376
        %v2531 = vunpack.c.l.b16 %v2377
        %v2532 = vunpack.c.h.b16 %v2377
        %v2533 = vunpack.c.l.b16 %v2378
        %v2534 = vunpack.c.h.b16 %v2378
        %v2535 = vunpack.c.l.b16 %v2379
        %v2536 = vunpack.c.h.b16 %v2379
        %v2537 = vunpack.c.l.b16 %v2380
        %v2538 = vunpack.c.h.b16 %v2380
        %v2539 = vunpack.c.l.b16 %v2381
        %v2540 = vunpack.c.h.b16 %v2381
        %v2541 = vunpack.c.l.b16 %v2382
        %v2542 = vunpack.c.h.b16 %v2382
        %v2543 = vunpack.c.l.b16 %v2383
        %v2544 = vunpack.c.h.b16 %v2383
        %v2545 = vunpack.c.l.b16 %v2384
        %v2546 = vunpack.c.h.b16 %v2384
        %v2547 = vunpack.c.l.b16 %v2385
        %v2548 = vunpack.c.h.b16 %v2385
        %v2549 = vunpack.c.l.b16 %v2386
        %v2550 = vunpack.c.h.b16 %v2386
        %v2551 = vunpack.c.l.b16 %v2387
        %v2552 = vunpack.c.h.b16 %v2387
        %v2553 = vunpack.c.l.b16 %v2388
        %v2554 = vunpack.c.h.b16 %v2388
        %v2555 = vunpack.c.l.b16 %v2389
        %v2556 = vunpack.c.h.b16 %v2389
        %v2557 = vunpack.c.l.b16 %v2390
        %v2558 = vunpack.c.h.b16 %v2390
        %v2559 = vunpack.c.l.b16 %v2391
        %v2560 = vunpack.c.h.b16 %v2391
        %v2561 = vunpack.c.l.b16 %v2392
        %v2562 = vunpack.c.h.b16 %v2392
        %v2563 = vunpack.c.l.b16 %v2393
        %v2564 = vunpack.c.h.b16 %v2393
        %v2565 = vunpack.c.l.b16 %v2394
        %v2566 = vunpack.c.h.b16 %v2394
        %v2567 = vunpack.c.l.b16 %v2395
        %v2568 = vunpack.c.h.b16 %v2395
        %v2569 = vunpack.c.l.b16 %v2396
        %v2570 = vunpack.c.h.b16 %v2396
        %v2571 = vunpack.c.l.b16 %v2397
        %v2572 = vunpack.c.h.b16 %v2397
        %v2573 = vunpack.c.l.b16 %v2398
        %v2574 = vunpack.c.h.b16 %v2398
        %v2575 = vunpack.c.l.b16 %v2399
        %v2576 = vunpack.c.h.b16 %v2399
        %v2577 = vunpack.c.l.b16 %v2400
        %v2578 = vunpack.c.h.b16 %v2400
        %v2579 = vunpack.c.l.b16 %v2401
        %v2580 = vunpack.c.h.b16 %v2401
        %v2581 = vunpack.c.l.b16 %v2402
        %v2582 = vunpack.c.h.b16 %v2402
        %v2583 = vunpack.c.l.b16 %v2403
        %v2584 = vunpack.c.h.b16 %v2403
        %v2585 = vunpack.c.l.b16 %v2404
        %v2586 = vunpack.c.h.b16 %v2404
        %v2587 = vunpack.c.l.b16 %v2405
        %v2588 = vunpack.c.h.b16 %v2405
        %v2589 = vunpack.c.l.b16 %v2406
        %v2590 = vunpack.c.h.b16 %v2406
        %v2591 = vunpack.c.l.b16 %v2407
        %v2592 = vunpack.c.h.b16 %v2407
        %v2593 = vunpack.c.l.b16 %v2408
        %v2594 = vunpack.c.h.b16 %v2408
        %v2595 = vunpack.c.l.b16 %v2409
        %v2596 = vunpack.c.h.b16 %v2409
        %v2597 = vunpack.c.l.b16 %v2410
        %v2598 = vunpack.c.h.b16 %v2410
        %v2599 = vunpack.c.l.b16 %v2411
        %v2600 = vunpack.c.h.b16 %v2411
        %v2601 = vunpack.c.l.b16 %v2412
        %v2602 = vunpack.c.h.b16 %v2412
        %v2603 = vunpack.c.l.b16 %v2413
        %v2604 = vunpack.c.h.b16 %v2413
        %v2605 = vunpack.c.l.b16 %v2414
        %v2606 = vunpack.c.h.b16 %v2414
        %v2607 = vunpack.c.l.b16 %v2415
        %v2608 = vunpack.c.h.b16 %v2415
        %v2609 = vunpack.c.l.b16 %v2416
        %v2610 = vunpack.c.h.b16 %v2416
        %v2611 = vunpack.c.l.b16 %v2417
        %v2612 = vunpack.c.h.b16 %v2417
        %v2613 = vunpack.c.l.b16 %v2418
        %v2614 = vunpack.c.h.b16 %v2418
        %v2615 = vunpack.c.l.b16 %v2419
        %v2616 = vunpack.c.h.b16 %v2419
        %v2617 = vunpack.c.l.b16 %v2420
        %v2618 = vunpack.c.h.b16 %v2420
        %v2619 = vunpack.c.l.b16 %v2421
        %v2620 = vunpack.c.h.b16 %v2421
        %v2621 = vunpack.c.l.b16 %v2422
        %v2622 = vunpack.c.h.b16 %v2422
        %v2623 = vunpack.c.l.b16 %v2423
        %v2624 = vunpack.c.h.b16 %v2423
        %v2625 = vunpack.c.l.b16 %v2424
        %v2626 = vunpack.c.h.b16 %v2424
        %v2627 = vunpack.c.l.b16 %v2425
        %v2628 = vunpack.c.h.b16 %v2425
        %v2629 = vunpack.c.l.b16 %v2426
        %v2630 = vunpack.c.h.b16 %v2426
        %v2631 = vunpack.c.l.b16 %v2427
        %v2632 = vunpack.c.h.b16 %v2427
        %v2633 = vunpack.c.l.b16 %v2428
        %v2634 = vunpack.c.h.b16 %v2428
        %v2635 = vunpack.c.l.b16 %v2429
        %v2636 = vunpack.c.h.b16 %v2429
        %v2637 = vunpack.c.l.b16 %v2430
        %v2638 = vunpack.c.h.b16 %v2430
        %v2639 = vunpack.c.l.b16 %v2431
        %v2640 = vunpack.c.h.b16 %v2431
        %v2641 = vunpack.c.l.b16 %v2432
        %v2642 = vunpack.c.h.b16 %v2432
        %v2643 = vunpack.c.l.b16 %v2433
        %v2644 = vunpack.c.h.b16 %v2433
        %v2645 = vunpack.c.l.b16 %v2434
        %v2646 = vunpack.c.h.b16 %v2434
        %v2647 = vunpack.c.l.b16 %v2435
        %v2648 = vunpack.c.h.b16 %v2435
        %v2649 = vunpack.c.l.b16 %v2436
        %v2650 = vunpack.c.h.b16 %v2436
        %v2651 = vpack.c.b16 %v2527, %v2523
        %v2652 = vpack.c.b16 %v2528, %v2524
        %v2653 = vpack.c.b16 %v2529, %v2525
        %v2654 = vpack.c.b16 %v2530, %v2526
        %v2655 = vpack.c.b16 %v2535, %v2531
        %v2656 = vpack.c.b16 %v2536, %v2532
        %v2657 = vpack.c.b16 %v2537, %v2533
        %v2658 = vpack.c.b16 %v2538, %v2534
        %v2659 = vpack.c.b16 %v2543, %v2539
        %v2660 = vpack.c.b16 %v2544, %v2540
        %v2661 = vpack.c.b16 %v2545, %v2541
        %v2662 = vpack.c.b16 %v2546, %v2542
        %v2663 = vpack.c.b16 %v2551, %v2547
        %v2664 = vpack.c.b16 %v2552, %v2548
        %v2665 = vpack.c.b16 %v2553, %v2549
        %v2666 = vpack.c.b16 %v2554, %v2550
        %v2667 = vpack.c.b16 %v2559, %v2555
        %v2668 = vpack.c.b16 %v2560, %v2556
        %v2669 = vpack.c.b16 %v2561, %v2557
        %v2670 = vpack.c.b16 %v2562, %v2558
        %v2671 = vpack.c.b16 %v2567, %v2563
        %v2672 = vpack.c.b16 %v2568, %v2564
        %v2673 = vpack.c.b16 %v2569, %v2565
        %v2674 = vpack.c.b16 %v2570, %v2566
        %v2675 = vpack.c.b16 %v2575, %v2571
        %v2676 = vpack.c.b16 %v2576, %v2572
        %v2677 = vpack.c.b16 %v2577, %v2573
        %v2678 = vpack.c.b16 %v2578, %v2574
        %v2679 = vpack.c.b16 %v2583, %v2579
        %v2680 = vpack.c.b16 %v2584, %v2580
        %v2681 = vpack.c.b16 %v2585, %v2581
        %v2682 = vpack.c.b16 %v2586, %v2582
        %v2683 = vpack.c.b16 %v2591, %v2587
        %v2684 = vpack.c.b16 %v2592, %v2588
        %v2685 = vpack.c.b16 %v2593, %v2589
        %v2686 = vpack.c.b16 %v2594, %v2590
        %v2687 = vpack.c.b16 %v2599, %v2595
        %v2688 = vpack.c.b16 %v2600, %v2596
        %v2689 = vpack.c.b16 %v2601, %v2597
        %v2690 = vpack.c.b16 %v2602, %v2598
        %v2691 = vpack.c.b16 %v2607, %v2603
        %v2692 = vpack.c.b16 %v2608, %v2604
        %v2693 = vpack.c.b16 %v2609, %v2605
        %v2694 = vpack.c.b16 %v2610, %v2606
        %v2695 = vpack.c.b16 %v2615, %v2611
        %v2696 = vpack.c.b16 %v2616, %v2612
        %v2697 = vpack.c.b16 %v2617, %v2613
        %v2698 = vpack.c.b16 %v2618, %v2614
        %v2699 = vpack.c.b16 %v2623, %v2619
        %v2700 = vpack.c.b16 %v2624, %v2620
        %v2701 = vpack.c.b16 %v2625, %v2621
        %v2702 = vpack.c.b16 %v2626, %v2622
        %v2703 = vpack.c.b16 %v2631, %v2627
        %v2704 = vpack.c.b16 %v2632, %v2628
        %v2705 = vpack.c.b16 %v2633, %v2629
        %v2706 = vpack.c.b16 %v2634, %v2630
        %v2707 = vpack.c.b16 %v2639, %v2635
        %v2708 = vpack.c.b16 %v2640, %v2636
        %v2709 = vpack.c.b16 %v2641, %v2637
        %v2710 = vpack.c.b16 %v2642, %v2638
        %v2711 = vpack.c.b16 %v2647, %v2643
        %v2712 = vpack.c.b16 %v2648, %v2644
        %v2713 = vpack.c.b16 %v2649, %v2645
        %v2714 = vpack.c.b16 %v2650, %v2646
        %2779 = vmatprep.subr.bf16.mxu0 %v2652
        %2780 = vmatpush1.bf16.msra.mxu0 %v2651
        %2781 = vmatprep.subr.bf16.mxu0 %v2656
        %2782 = vmatpush1.bf16.msra.mxu0 %v2655
        %2783 = vmatprep.subr.bf16.mxu0 %v2660
        %2784 = vmatpush1.bf16.msra.mxu0 %v2659
        %2785 = vmatprep.subr.bf16.mxu0 %v2664
        %2786 = vmatpush1.bf16.msra.mxu0 %v2663
        %2787 = vmatprep.subr.bf16.mxu0 %v2668
        %2788 = vmatpush1.bf16.msra.mxu0 %v2667
        %2789 = vmatprep.subr.bf16.mxu0 %v2672
        %2790 = vmatpush1.bf16.msra.mxu0 %v2671
        %2791 = vmatprep.subr.bf16.mxu0 %v2676
        %2792 = vmatpush1.bf16.msra.mxu0 %v2675
        %2793 = vmatprep.subr.bf16.mxu0 %v2680
        %2794 = vmatpush1.bf16.msra.mxu0 %v2679
        %2795 = vmatprep.subr.bf16.mxu0 %v2684
        %2796 = vmatpush1.bf16.msra.mxu0 %v2683
        %2797 = vmatprep.subr.bf16.mxu0 %v2688
        %2798 = vmatpush1.bf16.msra.mxu0 %v2687
        %2799 = vmatprep.subr.bf16.mxu0 %v2692
        %2800 = vmatpush1.bf16.msra.mxu0 %v2691
        %2801 = vmatprep.subr.bf16.mxu0 %v2696
        %2802 = vmatpush1.bf16.msra.mxu0 %v2695
        %2803 = vmatprep.subr.bf16.mxu0 %v2700
        %2804 = vmatpush1.bf16.msra.mxu0 %v2699
        %2805 = vmatprep.subr.bf16.mxu0 %v2704
        %2806 = vmatpush1.bf16.msra.mxu0 %v2703
        %2807 = vmatprep.subr.bf16.mxu0 %v2708
        %2808 = vmatpush1.bf16.msra.mxu0 %v2707
        %2809 = vmatprep.subr.bf16.mxu0 %v2712
        %2810 = vmatpush1.bf16.msra.mxu0 %v2711
        %2811 = vmatprep.mubr.bf16.mxu0 %v2310
        %2812 = vmatmul.mubr.bf16.gmra.mrb[0].mxu0 %v2309
        %v2813 = vpop.f32.mrb[0].mxu0
        %v2814 = vadd.f32 %v2442, %v2813
        %v2815 = vpop.f32.mrb[0].mxu0
        %v2816 = vadd.f32 %v2446, %v2815
        %v2817 = vpop.f32.mrb[0].mxu0
        %v2818 = vadd.f32 %v2442, %v2817
        %v2819 = vpop.f32.mrb[0].mxu0
        %v2820 = vadd.f32 %v2446, %v2819
        %2821 = vmatprep.mubr.bf16.mxu0 %v2312
        %2822 = vmatmul.mubr.bf16.gmra.mrb[0].mxu0 %v2311
        %v2823 = vpop.f32.mrb[0].mxu0
        %v2824 = vadd.f32 %v2442, %v2823
        %v2825 = vpop.f32.mrb[0].mxu0
        %v2826 = vadd.f32 %v2446, %v2825
        %v2827 = vpop.f32.mrb[0].mxu0
        %v2828 = vadd.f32 %v2442, %v2827
        %v2829 = vpop.f32.mrb[0].mxu0
        %v2830 = vadd.f32 %v2446, %v2829
        %2831 = vmatprep.mubr.bf16.mxu0 %v2314
        %2832 = vmatmul.mubr.bf16.gmra.mrb[0].mxu0 %v2313
        %v2833 = vpop.f32.mrb[0].mxu0
        %v2834 = vadd.f32 %v2442, %v2833
        %v2835 = vpop.f32.mrb[0].mxu0
        %v2836 = vadd.f32 %v2446, %v2835
        %v2837 = vpop.f32.mrb[0].mxu0
        %v2838 = vadd.f32 %v2442, %v2837
        %v2839 = vpop.f32.mrb[0].mxu0
        %v2840 = vadd.f32 %v2446, %v2839
        %2841 = vmatprep.mubr.bf16.mxu0 %v2316
        %2842 = vmatmul.mubr.bf16.gmra.mrb[0].mxu0 %v2315
        %v2843 = vpop.f32.mrb[0].mxu0
        %v2844 = vadd.f32 %v2442, %v2843
        %v2845 = vpop.f32.mrb[0].mxu0
        %v2846 = vadd.f32 %v2446, %v2845
        %v2847 = vpop.f32.mrb[0].mxu0
        %v2848 = vadd.f32 %v2442, %v2847
        %v2849 = vpop.f32.mrb[0].mxu0
        %v2850 = vadd.f32 %v2446, %v2849
        %2851 = vmatprep.mubr.bf16.mxu0 %v2318
        %2852 = vmatmul.mubr.bf16.gmra.mrb[0].mxu0 %v2317
        %v2853 = vpop.f32.mrb[0].mxu0
        %v2854 = vadd.f32 %v2442, %v2853
        %v2855 = vpop.f32.mrb[0].mxu0
        %v2856 = vadd.f32 %v2446, %v2855
        %v2857 = vpop.f32.mrb[0].mxu0
        %v2858 = vadd.f32 %v2442, %v2857
        %v2859 = vpop.f32.mrb[0].mxu0
        %v2860 = vadd.f32 %v2446, %v2859
        %2861 = vmatprep.mubr.bf16.mxu0 %v2320
        %2862 = vmatmul.mubr.bf16.gmra.mrb[0].mxu0 %v2319
        %v2863 = vpop.f32.mrb[0].mxu0
        %v2864 = vadd.f32 %v2442, %v2863
        %v2865 = vpop.f32.mrb[0].mxu0
        %v2866 = vadd.f32 %v2446, %v2865
        %v2867 = vpop.f32.mrb[0].mxu0
        %v2868 = vadd.f32 %v2442, %v2867
        %v2869 = vpop.f32.mrb[0].mxu0
        %v2870 = vadd.f32 %v2446, %v2869
        %2871 = vmatprep.mubr.bf16.mxu0 %v2322
        %2872 = vmatmul.mubr.bf16.gmra.mrb[0].mxu0 %v2321
        %v2873 = vpop.f32.mrb[0].mxu0
        %v2874 = vadd.f32 %v2442, %v2873
        %v2875 = vpop.f32.mrb[0].mxu0
        %v2876 = vadd.f32 %v2446, %v2875
        %v2877 = vpop.f32.mrb[0].mxu0
        %v2878 = vadd.f32 %v2442, %v2877
        %v2879 = vpop.f32.mrb[0].mxu0
        %v2880 = vadd.f32 %v2446, %v2879
        %2881 = vmatprep.mubr.bf16.mxu0 %v2324
        %2882 = vmatmul.mubr.bf16.gmra.mrb[0].mxu0 %v2323
        %v2883 = vpop.f32.mrb[0].mxu0
        %v2884 = vadd.f32 %v2442, %v2883
        %v2885 = vpop.f32.mrb[0].mxu0
        %v2886 = vadd.f32 %v2446, %v2885
        %v2887 = vpop.f32.mrb[0].mxu0
        %v2888 = vadd.f32 %v2442, %v2887
        %v2889 = vpop.f32.mrb[0].mxu0
        %v2890 = vadd.f32 %v2446, %v2889
        %2891 = vmatprep.mubr.bf16.mxu0 %v2326
        %2892 = vmatmul.mubr.bf16.gmra.mrb[0].mxu0 %v2325
        %v2893 = vpop.f32.mrb[0].mxu0
        %v2894 = vadd.f32 %v2442, %v2893
        %v2895 = vpop.f32.mrb[0].mxu0
        %v2896 = vadd.f32 %v2446, %v2895
        %v2897 = vpop.f32.mrb[0].mxu0
        %v2898 = vadd.f32 %v2442, %v2897
        %v2899 = vpop.f32.mrb[0].mxu0
        %v2900 = vadd.f32 %v2446, %v2899
        %2901 = vmatprep.mubr.bf16.mxu0 %v2328
        %2902 = vmatmul.mubr.bf16.gmra.mrb[0].mxu0 %v2327
        %v2903 = vpop.f32.mrb[0].mxu0
        %v2904 = vadd.f32 %v2442, %v2903
        %v2905 = vpop.f32.mrb[0].mxu0
        %v2906 = vadd.f32 %v2446, %v2905
        %v2907 = vpop.f32.mrb[0].mxu0
        %v2908 = vadd.f32 %v2442, %v2907
        %v2909 = vpop.f32.mrb[0].mxu0
        %v2910 = vadd.f32 %v2446, %v2909
        %2911 = vmatprep.mubr.bf16.mxu0 %v2330
        %2912 = vmatmul.mubr.bf16.gmra.mrb[0].mxu0 %v2329
        %v2913 = vpop.f32.mrb[0].mxu0
        %v2914 = vadd.f32 %v2442, %v2913
        %v2915 = vpop.f32.mrb[0].mxu0
        %v2916 = vadd.f32 %v2446, %v2915
        %v2917 = vpop.f32.mrb[0].mxu0
        %v2918 = vadd.f32 %v2442, %v2917
        %v2919 = vpop.f32.mrb[0].mxu0
        %v2920 = vadd.f32 %v2446, %v2919
        %2921 = vmatprep.mubr.bf16.mxu0 %v2332
        %2922 = vmatmul.mubr.bf16.gmra.mrb[0].mxu0 %v2331
        %v2923 = vpop.f32.mrb[0].mxu0
        %v2924 = vadd.f32 %v2442, %v2923
        %v2925 = vpop.f32.mrb[0].mxu0
        %v2926 = vadd.f32 %v2446, %v2925
        %v2927 = vpop.f32.mrb[0].mxu0
        %v2928 = vadd.f32 %v2442, %v2927
        %v2929 = vpop.f32.mrb[0].mxu0
        %v2930 = vadd.f32 %v2446, %v2929
        %2931 = vmatprep.mubr.bf16.mxu0 %v2334
        %2932 = vmatmul.mubr.bf16.gmra.mrb[0].mxu0 %v2333
        %v2933 = vpop.f32.mrb[0].mxu0
        %v2934 = vadd.f32 %v2442, %v2933
        %v2935 = vpop.f32.mrb[0].mxu0
        %v2936 = vadd.f32 %v2446, %v2935
        %v2937 = vpop.f32.mrb[0].mxu0
        %v2938 = vadd.f32 %v2442, %v2937
        %v2939 = vpop.f32.mrb[0].mxu0
        %v2940 = vadd.f32 %v2446, %v2939
        %2941 = vmatprep.mubr.bf16.mxu0 %v2336
        %2942 = vmatmul.mubr.bf16.gmra.mrb[0].mxu0 %v2335
        %v2943 = vpop.f32.mrb[0].mxu0
        %v2944 = vadd.f32 %v2442, %v2943
        %v2945 = vpop.f32.mrb[0].mxu0
        %v2946 = vadd.f32 %v2446, %v2945
        %v2947 = vpop.f32.mrb[0].mxu0
        %v2948 = vadd.f32 %v2442, %v2947
        %v2949 = vpop.f32.mrb[0].mxu0
        %v2950 = vadd.f32 %v2446, %v2949
        %2951 = vmatprep.mubr.bf16.mxu0 %v2338
        %2952 = vmatmul.mubr.bf16.gmra.mrb[0].mxu0 %v2337
        %v2953 = vpop.f32.mrb[0].mxu0
        %v2954 = vadd.f32 %v2442, %v2953
        %v2955 = vpop.f32.mrb[0].mxu0
        %v2956 = vadd.f32 %v2446, %v2955
        %v2957 = vpop.f32.mrb[0].mxu0
        %v2958 = vadd.f32 %v2442, %v2957
        %v2959 = vpop.f32.mrb[0].mxu0
        %v2960 = vadd.f32 %v2446, %v2959
        %2961 = vmatprep.mubr.bf16.mxu0 %v2340
        %2962 = vmatmul.mubr.bf16.gmra.mrb[0].mxu0 %v2339
        %v2963 = vpop.f32.mrb[0].mxu0
        %v2964 = vadd.f32 %v2442, %v2963
        %v2965 = vpop.f32.mrb[0].mxu0
        %v2966 = vadd.f32 %v2446, %v2965
        %v2967 = vpop.f32.mrb[0].mxu0
        %v2968 = vadd.f32 %v2442, %v2967
        %v2969 = vpop.f32.mrb[0].mxu0
        %v2970 = vadd.f32 %v2446, %v2969
        %2971 = vmatprep.mubr.bf16.mxu0 %v2342
        %2972 = vmatmul.mubr.bf16.gmra.mrb[0].mxu0 %v2341
        %v2973 = vpop.f32.mrb[0].mxu0
        %v2974 = vadd.f32 %v2442, %v2973
        %v2975 = vpop.f32.mrb[0].mxu0
        %v2976 = vadd.f32 %v2446, %v2975
        %v2977 = vpop.f32.mrb[0].mxu0
        %v2978 = vadd.f32 %v2442, %v2977
        %v2979 = vpop.f32.mrb[0].mxu0
        %v2980 = vadd.f32 %v2446, %v2979
        %2981 = vmatprep.mubr.bf16.mxu0 %v2344
        %2982 = vmatmul.mubr.bf16.gmra.mrb[0].mxu0 %v2343
        %v2983 = vpop.f32.mrb[0].mxu0
        %v2984 = vadd.f32 %v2442, %v2983
        %v2985 = vpop.f32.mrb[0].mxu0
        %v2986 = vadd.f32 %v2446, %v2985
        %v2987 = vpop.f32.mrb[0].mxu0
        %v2988 = vadd.f32 %v2442, %v2987
        %v2989 = vpop.f32.mrb[0].mxu0
        %v2990 = vadd.f32 %v2446, %v2989
        %2991 = vmatprep.mubr.bf16.mxu0 %v2346
        %2992 = vmatmul.mubr.bf16.gmra.mrb[0].mxu0 %v2345
        %v2993 = vpop.f32.mrb[0].mxu0
        %v2994 = vadd.f32 %v2442, %v2993
        %v2995 = vpop.f32.mrb[0].mxu0
        %v2996 = vadd.f32 %v2446, %v2995
        %v2997 = vpop.f32.mrb[0].mxu0
        %v2998 = vadd.f32 %v2442, %v2997
        %v2999 = vpop.f32.mrb[0].mxu0
        %v3000 = vadd.f32 %v2446, %v2999
        %3001 = vmatprep.mubr.bf16.mxu0 %v2348
        %3002 = vmatmul.mubr.bf16.gmra.mrb[0].mxu0 %v2347
        %v3003 = vpop.f32.mrb[0].mxu0
        %v3004 = vadd.f32 %v2442, %v3003
        %v3005 = vpop.f32.mrb[0].mxu0
        %v3006 = vadd.f32 %v2446, %v3005
        %v3007 = vpop.f32.mrb[0].mxu0
        %v3008 = vadd.f32 %v2442, %v3007
        %v3009 = vpop.f32.mrb[0].mxu0
        %v3010 = vadd.f32 %v2446, %v3009
        %3011 = vmatprep.mubr.bf16.mxu0 %v2350
        %3012 = vmatmul.mubr.bf16.gmra.mrb[0].mxu0 %v2349
        %v3013 = vpop.f32.mrb[0].mxu0
        %v3014 = vadd.f32 %v2442, %v3013
        %v3015 = vpop.f32.mrb[0].mxu0
        %v3016 = vadd.f32 %v2446, %v3015
        %v3017 = vpop.f32.mrb[0].mxu0
        %v3018 = vadd.f32 %v2442, %v3017
        %v3019 = vpop.f32.mrb[0].mxu0
        %v3020 = vadd.f32 %v2446, %v3019
        %3021 = vmatprep.mubr.bf16.mxu0 %v2352
        %3022 = vmatmul.mubr.bf16.gmra.mrb[0].mxu0 %v2351
        %v3023 = vpop.f32.mrb[0].mxu0
        %v3024 = vadd.f32 %v2442, %v3023
        %v3025 = vpop.f32.mrb[0].mxu0
        %v3026 = vadd.f32 %v2446, %v3025
        %v3027 = vpop.f32.mrb[0].mxu0
        %v3028 = vadd.f32 %v2442, %v3027
        %v3029 = vpop.f32.mrb[0].mxu0
        %v3030 = vadd.f32 %v2446, %v3029
        %3031 = vmatprep.mubr.bf16.mxu0 %v2354
        %3032 = vmatmul.mubr.bf16.gmra.mrb[0].mxu0 %v2353
        %v3033 = vpop.f32.mrb[0].mxu0
        %v3034 = vadd.f32 %v2442, %v3033
        %v3035 = vpop.f32.mrb[0].mxu0
        %v3036 = vadd.f32 %v2446, %v3035
        %v3037 = vpop.f32.mrb[0].mxu0
        %v3038 = vadd.f32 %v2442, %v3037
        %v3039 = vpop.f32.mrb[0].mxu0
        %v3040 = vadd.f32 %v2446, %v3039
        %3041 = vmatprep.mubr.bf16.mxu0 %v2356
        %3042 = vmatmul.mubr.bf16.gmra.mrb[0].mxu0 %v2355
        %v3043 = vpop.f32.mrb[0].mxu0
        %v3044 = vadd.f32 %v2442, %v3043
        %v3045 = vpop.f32.mrb[0].mxu0
        %v3046 = vadd.f32 %v2446, %v3045
        %v3047 = vpop.f32.mrb[0].mxu0
        %v3048 = vadd.f32 %v2442, %v3047
        %v3049 = vpop.f32.mrb[0].mxu0
        %v3050 = vadd.f32 %v2446, %v3049
        %3051 = vmatprep.mubr.bf16.mxu0 %v2358
        %3052 = vmatmul.mubr.bf16.gmra.mrb[0].mxu0 %v2357
        %v3053 = vpop.f32.mrb[0].mxu0
        %v3054 = vadd.f32 %v2442, %v3053
        %v3055 = vpop.f32.mrb[0].mxu0
        %v3056 = vadd.f32 %v2446, %v3055
        %v3057 = vpop.f32.mrb[0].mxu0
        %v3058 = vadd.f32 %v2442, %v3057
        %v3059 = vpop.f32.mrb[0].mxu0
        %v3060 = vadd.f32 %v2446, %v3059
        %3061 = vmatprep.mubr.bf16.mxu0 %v2360
        %3062 = vmatmul.mubr.bf16.gmra.mrb[0].mxu0 %v2359
        %v3063 = vpop.f32.mrb[0].mxu0
        %v3064 = vadd.f32 %v2442, %v3063
        %v3065 = vpop.f32.mrb[0].mxu0
        %v3066 = vadd.f32 %v2446, %v3065
        %v3067 = vpop.f32.mrb[0].mxu0
        %v3068 = vadd.f32 %v2442, %v3067
        %v3069 = vpop.f32.mrb[0].mxu0
        %v3070 = vadd.f32 %v2446, %v3069
        %3071 = vmatprep.mubr.bf16.mxu0 %v2362
        %3072 = vmatmul.mubr.bf16.gmra.mrb[0].mxu0 %v2361
        %v3073 = vpop.f32.mrb[0].mxu0
        %v3074 = vadd.f32 %v2442, %v3073
        %v3075 = vpop.f32.mrb[0].mxu0
        %v3076 = vadd.f32 %v2446, %v3075
        %v3077 = vpop.f32.mrb[0].mxu0
        %v3078 = vadd.f32 %v2442, %v3077
        %v3079 = vpop.f32.mrb[0].mxu0
        %v3080 = vadd.f32 %v2446, %v3079
        %3081 = vmatprep.mubr.bf16.mxu0 %v2364
        %3082 = vmatmul.mubr.bf16.gmra.mrb[0].mxu0 %v2363
        %v3083 = vpop.f32.mrb[0].mxu0
        %v3084 = vadd.f32 %v2442, %v3083
        %v3085 = vpop.f32.mrb[0].mxu0
        %v3086 = vadd.f32 %v2446, %v3085
        %v3087 = vpop.f32.mrb[0].mxu0
        %v3088 = vadd.f32 %v2442, %v3087
        %v3089 = vpop.f32.mrb[0].mxu0
        %v3090 = vadd.f32 %v2446, %v3089
        %3091 = vmatprep.mubr.bf16.mxu0 %v2366
        %3092 = vmatmul.mubr.bf16.gmra.mrb[0].mxu0 %v2365
        %v3093 = vpop.f32.mrb[0].mxu0
        %v3094 = vadd.f32 %v2442, %v3093
        %v3095 = vpop.f32.mrb[0].mxu0
        %v3096 = vadd.f32 %v2446, %v3095
        %v3097 = vpop.f32.mrb[0].mxu0
        %v3098 = vadd.f32 %v2442, %v3097
        %v3099 = vpop.f32.mrb[0].mxu0
        %v3100 = vadd.f32 %v2446, %v3099
        %3101 = vmatprep.mubr.bf16.mxu0 %v2368
        %3102 = vmatmul.mubr.bf16.gmra.mrb[0].mxu0 %v2367
        %v3103 = vpop.f32.mrb[0].mxu0
        %v3104 = vadd.f32 %v2442, %v3103
        %v3105 = vpop.f32.mrb[0].mxu0
        %v3106 = vadd.f32 %v2446, %v3105
        %v3107 = vpop.f32.mrb[0].mxu0
        %v3108 = vadd.f32 %v2442, %v3107
        %v3109 = vpop.f32.mrb[0].mxu0
        %v3110 = vadd.f32 %v2446, %v3109
        %3111 = vmatprep.mubr.bf16.mxu0 %v2370
        %3112 = vmatmul.mubr.bf16.gmra.mrb[0].mxu0 %v2369
        %v3113 = vpop.f32.mrb[0].mxu0
        %v3114 = vadd.f32 %v2442, %v3113
        %v3115 = vpop.f32.mrb[0].mxu0
        %v3116 = vadd.f32 %v2446, %v3115
        %v3117 = vpop.f32.mrb[0].mxu0
        %v3118 = vadd.f32 %v2442, %v3117
        %v3119 = vpop.f32.mrb[0].mxu0
        %v3120 = vadd.f32 %v2446, %v3119
        %3121 = vmatprep.mubr.bf16.mxu0 %v2372
        %3122 = vmatmul.mubr.bf16.gmra.mrb[0].mxu0 %v2371
        %v3123 = vpop.f32.mrb[0].mxu0
        %v3124 = vadd.f32 %v2442, %v3123
        %v3125 = vpop.f32.mrb[0].mxu0
        %v3126 = vadd.f32 %v2446, %v3125
        %v3127 = vpop.f32.mrb[0].mxu0
        %v3128 = vadd.f32 %v2442, %v3127
        %v3129 = vpop.f32.mrb[0].mxu0
        %v3130 = vadd.f32 %v2446, %v3129
        %3131 = vdwg.mxu0
        %3132 = vmatprep.subr.bf16.mxu0 %v2654
        %3133 = vmatpush1.bf16.msra.mxu0 %v2653
        %3134 = vmatprep.subr.bf16.mxu0 %v2658
        %3135 = vmatpush1.bf16.msra.mxu0 %v2657
        %3136 = vmatprep.subr.bf16.mxu0 %v2662
        %3137 = vmatpush1.bf16.msra.mxu0 %v2661
        %3138 = vmatprep.subr.bf16.mxu0 %v2666
        %3139 = vmatpush1.bf16.msra.mxu0 %v2665
        %3140 = vmatprep.subr.bf16.mxu0 %v2670
        %3141 = vmatpush1.bf16.msra.mxu0 %v2669
        %3142 = vmatprep.subr.bf16.mxu0 %v2674
        %3143 = vmatpush1.bf16.msra.mxu0 %v2673
        %3144 = vmatprep.subr.bf16.mxu0 %v2678
        %3145 = vmatpush1.bf16.msra.mxu0 %v2677
        %3146 = vmatprep.subr.bf16.mxu0 %v2682
        %3147 = vmatpush1.bf16.msra.mxu0 %v2681
        %3148 = vmatprep.subr.bf16.mxu0 %v2686
        %3149 = vmatpush1.bf16.msra.mxu0 %v2685
        %3150 = vmatprep.subr.bf16.mxu0 %v2690
        %3151 = vmatpush1.bf16.msra.mxu0 %v2689
        %3152 = vmatprep.subr.bf16.mxu0 %v2694
        %3153 = vmatpush1.bf16.msra.mxu0 %v2693
        %3154 = vmatprep.subr.bf16.mxu0 %v2698
        %3155 = vmatpush1.bf16.msra.mxu0 %v2697
        %3156 = vmatprep.subr.bf16.mxu0 %v2702
        %3157 = vmatpush1.bf16.msra.mxu0 %v2701
        %3158 = vmatprep.subr.bf16.mxu0 %v2706
        %3159 = vmatpush1.bf16.msra.mxu0 %v2705
        %3160 = vmatprep.subr.bf16.mxu0 %v2710
        %3161 = vmatpush1.bf16.msra.mxu0 %v2709
        %3162 = vmatprep.subr.bf16.mxu0 %v2714
        %3163 = vmatpush1.bf16.msra.mxu0 %v2713
        %3164 = vmatprep.mubr.bf16.mxu0 %v2310
        %3165 = vmatmul.mubr.bf16.gmra.mrb[0].mxu0 %v2309
        %v3166 = vpop.f32.mrb[0].mxu0
        %v3167 = vadd.f32 %v2450, %v3166
        %v3168 = vpop.f32.mrb[0].mxu0
        %v3169 = vadd.f32 %v2454, %v3168
        %v3170 = vpop.f32.mrb[0].mxu0
        %v3171 = vadd.f32 %v2450, %v3170
        %v3172 = vpop.f32.mrb[0].mxu0
        %v3173 = vadd.f32 %v2454, %v3172
        %3174 = vmatprep.mubr.bf16.mxu0 %v2312
        %3175 = vmatmul.mubr.bf16.gmra.mrb[0].mxu0 %v2311
        %v3176 = vpop.f32.mrb[0].mxu0
        %v3177 = vadd.f32 %v2450, %v3176
        %v3178 = vpop.f32.mrb[0].mxu0
        %v3179 = vadd.f32 %v2454, %v3178
        %v3180 = vpop.f32.mrb[0].mxu0
        %v3181 = vadd.f32 %v2450, %v3180
        %v3182 = vpop.f32.mrb[0].mxu0
        %v3183 = vadd.f32 %v2454, %v3182
        %3184 = vmatprep.mubr.bf16.mxu0 %v2314
        %3185 = vmatmul.mubr.bf16.gmra.mrb[0].mxu0 %v2313
        %v3186 = vpop.f32.mrb[0].mxu0
        %v3187 = vadd.f32 %v2450, %v3186
        %v3188 = vpop.f32.mrb[0].mxu0
        %v3189 = vadd.f32 %v2454, %v3188
        %v3190 = vpop.f32.mrb[0].mxu0
        %v3191 = vadd.f32 %v2450, %v3190
        %v3192 = vpop.f32.mrb[0].mxu0
        %v3193 = vadd.f32 %v2454, %v3192
        %3194 = vmatprep.mubr.bf16.mxu0 %v2316
        %3195 = vmatmul.mubr.bf16.gmra.mrb[0].mxu0 %v2315
        %v3196 = vpop.f32.mrb[0].mxu0
        %v3197 = vadd.f32 %v2450, %v3196
        %v3198 = vpop.f32.mrb[0].mxu0
        %v3199 = vadd.f32 %v2454, %v3198
        %v3200 = vpop.f32.mrb[0].mxu0
        %v3201 = vadd.f32 %v2450, %v3200
        %v3202 = vpop.f32.mrb[0].mxu0
        %v3203 = vadd.f32 %v2454, %v3202
        %3204 = vmatprep.mubr.bf16.mxu0 %v2318
        %3205 = vmatmul.mubr.bf16.gmra.mrb[0].mxu0 %v2317
        %v3206 = vpop.f32.mrb[0].mxu0
        %v3207 = vadd.f32 %v2450, %v3206
        %v3208 = vpop.f32.mrb[0].mxu0
        %v3209 = vadd.f32 %v2454, %v3208
        %v3210 = vpop.f32.mrb[0].mxu0
        %v3211 = vadd.f32 %v2450, %v3210
        %v3212 = vpop.f32.mrb[0].mxu0
        %v3213 = vadd.f32 %v2454, %v3212
        %3214 = vmatprep.mubr.bf16.mxu0 %v2320
        %3215 = vmatmul.mubr.bf16.gmra.mrb[0].mxu0 %v2319
        %v3216 = vpop.f32.mrb[0].mxu0
        %v3217 = vadd.f32 %v2450, %v3216
        %v3218 = vpop.f32.mrb[0].mxu0
        %v3219 = vadd.f32 %v2454, %v3218
        %v3220 = vpop.f32.mrb[0].mxu0
        %v3221 = vadd.f32 %v2450, %v3220
        %v3222 = vpop.f32.mrb[0].mxu0
        %v3223 = vadd.f32 %v2454, %v3222
        %3224 = vmatprep.mubr.bf16.mxu0 %v2322
        %3225 = vmatmul.mubr.bf16.gmra.mrb[0].mxu0 %v2321
        %v3226 = vpop.f32.mrb[0].mxu0
        %v3227 = vadd.f32 %v2450, %v3226
        %v3228 = vpop.f32.mrb[0].mxu0
        %v3229 = vadd.f32 %v2454, %v3228
        %v3230 = vpop.f32.mrb[0].mxu0
        %v3231 = vadd.f32 %v2450, %v3230
        %v3232 = vpop.f32.mrb[0].mxu0
        %v3233 = vadd.f32 %v2454, %v3232
        %3234 = vmatprep.mubr.bf16.mxu0 %v2324
        %3235 = vmatmul.mubr.bf16.gmra.mrb[0].mxu0 %v2323
        %v3236 = vpop.f32.mrb[0].mxu0
        %v3237 = vadd.f32 %v2450, %v3236
        %v3238 = vpop.f32.mrb[0].mxu0
        %v3239 = vadd.f32 %v2454, %v3238
        %v3240 = vpop.f32.mrb[0].mxu0
        %v3241 = vadd.f32 %v2450, %v3240
        %v3242 = vpop.f32.mrb[0].mxu0
        %v3243 = vadd.f32 %v2454, %v3242
        %3244 = vmatprep.mubr.bf16.mxu0 %v2326
        %3245 = vmatmul.mubr.bf16.gmra.mrb[0].mxu0 %v2325
        %v3246 = vpop.f32.mrb[0].mxu0
        %v3247 = vadd.f32 %v2450, %v3246
        %v3248 = vpop.f32.mrb[0].mxu0
        %v3249 = vadd.f32 %v2454, %v3248
        %v3250 = vpop.f32.mrb[0].mxu0
        %v3251 = vadd.f32 %v2450, %v3250
        %v3252 = vpop.f32.mrb[0].mxu0
        %v3253 = vadd.f32 %v2454, %v3252
        %3254 = vmatprep.mubr.bf16.mxu0 %v2328
        %3255 = vmatmul.mubr.bf16.gmra.mrb[0].mxu0 %v2327
        %v3256 = vpop.f32.mrb[0].mxu0
        %v3257 = vadd.f32 %v2450, %v3256
        %v3258 = vpop.f32.mrb[0].mxu0
        %v3259 = vadd.f32 %v2454, %v3258
        %v3260 = vpop.f32.mrb[0].mxu0
        %v3261 = vadd.f32 %v2450, %v3260
        %v3262 = vpop.f32.mrb[0].mxu0
        %v3263 = vadd.f32 %v2454, %v3262
        %3264 = vmatprep.mubr.bf16.mxu0 %v2330
        %3265 = vmatmul.mubr.bf16.gmra.mrb[0].mxu0 %v2329
        %v3266 = vpop.f32.mrb[0].mxu0
        %v3267 = vadd.f32 %v2450, %v3266
        %v3268 = vpop.f32.mrb[0].mxu0
        %v3269 = vadd.f32 %v2454, %v3268
        %v3270 = vpop.f32.mrb[0].mxu0
        %v3271 = vadd.f32 %v2450, %v3270
        %v3272 = vpop.f32.mrb[0].mxu0
        %v3273 = vadd.f32 %v2454, %v3272
        %3274 = vmatprep.mubr.bf16.mxu0 %v2332
        %3275 = vmatmul.mubr.bf16.gmra.mrb[0].mxu0 %v2331
        %v3276 = vpop.f32.mrb[0].mxu0
        %v3277 = vadd.f32 %v2450, %v3276
        %v3278 = vpop.f32.mrb[0].mxu0
        %v3279 = vadd.f32 %v2454, %v3278
        %v3280 = vpop.f32.mrb[0].mxu0
        %v3281 = vadd.f32 %v2450, %v3280
        %v3282 = vpop.f32.mrb[0].mxu0
        %v3283 = vadd.f32 %v2454, %v3282
        %3284 = vmatprep.mubr.bf16.mxu0 %v2334
        %3285 = vmatmul.mubr.bf16.gmra.mrb[0].mxu0 %v2333
        %v3286 = vpop.f32.mrb[0].mxu0
        %v3287 = vadd.f32 %v2450, %v3286
        %v3288 = vpop.f32.mrb[0].mxu0
        %v3289 = vadd.f32 %v2454, %v3288
        %v3290 = vpop.f32.mrb[0].mxu0
        %v3291 = vadd.f32 %v2450, %v3290
        %v3292 = vpop.f32.mrb[0].mxu0
        %v3293 = vadd.f32 %v2454, %v3292
        %3294 = vmatprep.mubr.bf16.mxu0 %v2336
        %3295 = vmatmul.mubr.bf16.gmra.mrb[0].mxu0 %v2335
        %v3296 = vpop.f32.mrb[0].mxu0
        %v3297 = vadd.f32 %v2450, %v3296
        %v3298 = vpop.f32.mrb[0].mxu0
        %v3299 = vadd.f32 %v2454, %v3298
        %v3300 = vpop.f32.mrb[0].mxu0
        %v3301 = vadd.f32 %v2450, %v3300
        %v3302 = vpop.f32.mrb[0].mxu0
        %v3303 = vadd.f32 %v2454, %v3302
        %3304 = vmatprep.mubr.bf16.mxu0 %v2338
        %3305 = vmatmul.mubr.bf16.gmra.mrb[0].mxu0 %v2337
        %v3306 = vpop.f32.mrb[0].mxu0
        %v3307 = vadd.f32 %v2450, %v3306
        %v3308 = vpop.f32.mrb[0].mxu0
        %v3309 = vadd.f32 %v2454, %v3308
        %v3310 = vpop.f32.mrb[0].mxu0
        %v3311 = vadd.f32 %v2450, %v3310
        %v3312 = vpop.f32.mrb[0].mxu0
        %v3313 = vadd.f32 %v2454, %v3312
        %3314 = vmatprep.mubr.bf16.mxu0 %v2340
        %3315 = vmatmul.mubr.bf16.gmra.mrb[0].mxu0 %v2339
        %v3316 = vpop.f32.mrb[0].mxu0
        %v3317 = vadd.f32 %v2450, %v3316
        %v3318 = vpop.f32.mrb[0].mxu0
        %v3319 = vadd.f32 %v2454, %v3318
        %v3320 = vpop.f32.mrb[0].mxu0
        %v3321 = vadd.f32 %v2450, %v3320
        %v3322 = vpop.f32.mrb[0].mxu0
        %v3323 = vadd.f32 %v2454, %v3322
        %3324 = vmatprep.mubr.bf16.mxu0 %v2342
        %3325 = vmatmul.mubr.bf16.gmra.mrb[0].mxu0 %v2341
        %v3326 = vpop.f32.mrb[0].mxu0
        %v3327 = vadd.f32 %v2450, %v3326
        %v3328 = vpop.f32.mrb[0].mxu0
        %v3329 = vadd.f32 %v2454, %v3328
        %v3330 = vpop.f32.mrb[0].mxu0
        %v3331 = vadd.f32 %v2450, %v3330
        %v3332 = vpop.f32.mrb[0].mxu0
        %v3333 = vadd.f32 %v2454, %v3332
        %3334 = vmatprep.mubr.bf16.mxu0 %v2344
        %3335 = vmatmul.mubr.bf16.gmra.mrb[0].mxu0 %v2343
        %v3336 = vpop.f32.mrb[0].mxu0
        %v3337 = vadd.f32 %v2450, %v3336
        %v3338 = vpop.f32.mrb[0].mxu0
        %v3339 = vadd.f32 %v2454, %v3338
        %v3340 = vpop.f32.mrb[0].mxu0
        %v3341 = vadd.f32 %v2450, %v3340
        %v3342 = vpop.f32.mrb[0].mxu0
        %v3343 = vadd.f32 %v2454, %v3342
        %3344 = vmatprep.mubr.bf16.mxu0 %v2346
        %3345 = vmatmul.mubr.bf16.gmra.mrb[0].mxu0 %v2345
        %v3346 = vpop.f32.mrb[0].mxu0
        %v3347 = vadd.f32 %v2450, %v3346
        %v3348 = vpop.f32.mrb[0].mxu0
        %v3349 = vadd.f32 %v2454, %v3348
        %v3350 = vpop.f32.mrb[0].mxu0
        %v3351 = vadd.f32 %v2450, %v3350
        %v3352 = vpop.f32.mrb[0].mxu0
        %v3353 = vadd.f32 %v2454, %v3352
        %3354 = vmatprep.mubr.bf16.mxu0 %v2348
        %3355 = vmatmul.mubr.bf16.gmra.mrb[0].mxu0 %v2347
        %v3356 = vpop.f32.mrb[0].mxu0
        %v3357 = vadd.f32 %v2450, %v3356
        %v3358 = vpop.f32.mrb[0].mxu0
        %v3359 = vadd.f32 %v2454, %v3358
        %v3360 = vpop.f32.mrb[0].mxu0
        %v3361 = vadd.f32 %v2450, %v3360
        %v3362 = vpop.f32.mrb[0].mxu0
        %v3363 = vadd.f32 %v2454, %v3362
        %3364 = vmatprep.mubr.bf16.mxu0 %v2350
        %3365 = vmatmul.mubr.bf16.gmra.mrb[0].mxu0 %v2349
        %v3366 = vpop.f32.mrb[0].mxu0
        %v3367 = vadd.f32 %v2450, %v3366
        %v3368 = vpop.f32.mrb[0].mxu0
        %v3369 = vadd.f32 %v2454, %v3368
        %v3370 = vpop.f32.mrb[0].mxu0
        %v3371 = vadd.f32 %v2450, %v3370
        %v3372 = vpop.f32.mrb[0].mxu0
        %v3373 = vadd.f32 %v2454, %v3372
        %3374 = vmatprep.mubr.bf16.mxu0 %v2352
        %3375 = vmatmul.mubr.bf16.gmra.mrb[0].mxu0 %v2351
        %v3376 = vpop.f32.mrb[0].mxu0
        %v3377 = vadd.f32 %v2450, %v3376
        %v3378 = vpop.f32.mrb[0].mxu0
        %v3379 = vadd.f32 %v2454, %v3378
        %v3380 = vpop.f32.mrb[0].mxu0
        %v3381 = vadd.f32 %v2450, %v3380
        %v3382 = vpop.f32.mrb[0].mxu0
        %v3383 = vadd.f32 %v2454, %v3382
        %3384 = vmatprep.mubr.bf16.mxu0 %v2354
        %3385 = vmatmul.mubr.bf16.gmra.mrb[0].mxu0 %v2353
        %v3386 = vpop.f32.mrb[0].mxu0
        %v3387 = vadd.f32 %v2450, %v3386
        %v3388 = vpop.f32.mrb[0].mxu0
        %v3389 = vadd.f32 %v2454, %v3388
        %v3390 = vpop.f32.mrb[0].mxu0
        %v3391 = vadd.f32 %v2450, %v3390
        %v3392 = vpop.f32.mrb[0].mxu0
        %v3393 = vadd.f32 %v2454, %v3392
        %3394 = vmatprep.mubr.bf16.mxu0 %v2356
        %3395 = vmatmul.mubr.bf16.gmra.mrb[0].mxu0 %v2355
        %v3396 = vpop.f32.mrb[0].mxu0
        %v3397 = vadd.f32 %v2450, %v3396
        %v3398 = vpop.f32.mrb[0].mxu0
        %v3399 = vadd.f32 %v2454, %v3398
        %v3400 = vpop.f32.mrb[0].mxu0
        %v3401 = vadd.f32 %v2450, %v3400
        %v3402 = vpop.f32.mrb[0].mxu0
        %v3403 = vadd.f32 %v2454, %v3402
        %3404 = vmatprep.mubr.bf16.mxu0 %v2358
        %3405 = vmatmul.mubr.bf16.gmra.mrb[0].mxu0 %v2357
        %v3406 = vpop.f32.mrb[0].mxu0
        %v3407 = vadd.f32 %v2450, %v3406
        %v3408 = vpop.f32.mrb[0].mxu0
        %v3409 = vadd.f32 %v2454, %v3408
        %v3410 = vpop.f32.mrb[0].mxu0
        %v3411 = vadd.f32 %v2450, %v3410
        %v3412 = vpop.f32.mrb[0].mxu0
        %v3413 = vadd.f32 %v2454, %v3412
        %3414 = vmatprep.mubr.bf16.mxu0 %v2360
        %3415 = vmatmul.mubr.bf16.gmra.mrb[0].mxu0 %v2359
        %v3416 = vpop.f32.mrb[0].mxu0
        %v3417 = vadd.f32 %v2450, %v3416
        %v3418 = vpop.f32.mrb[0].mxu0
        %v3419 = vadd.f32 %v2454, %v3418
        %v3420 = vpop.f32.mrb[0].mxu0
        %v3421 = vadd.f32 %v2450, %v3420
        %v3422 = vpop.f32.mrb[0].mxu0
        %v3423 = vadd.f32 %v2454, %v3422
        %3424 = vmatprep.mubr.bf16.mxu0 %v2362
        %3425 = vmatmul.mubr.bf16.gmra.mrb[0].mxu0 %v2361
        %v3426 = vpop.f32.mrb[0].mxu0
        %v3427 = vadd.f32 %v2450, %v3426
        %v3428 = vpop.f32.mrb[0].mxu0
        %v3429 = vadd.f32 %v2454, %v3428
        %v3430 = vpop.f32.mrb[0].mxu0
        %v3431 = vadd.f32 %v2450, %v3430
        %v3432 = vpop.f32.mrb[0].mxu0
        %v3433 = vadd.f32 %v2454, %v3432
        %3434 = vmatprep.mubr.bf16.mxu0 %v2364
        %3435 = vmatmul.mubr.bf16.gmra.mrb[0].mxu0 %v2363
        %v3436 = vpop.f32.mrb[0].mxu0
        %v3437 = vadd.f32 %v2450, %v3436
        %v3438 = vpop.f32.mrb[0].mxu0
        %v3439 = vadd.f32 %v2454, %v3438
        %v3440 = vpop.f32.mrb[0].mxu0
        %v3441 = vadd.f32 %v2450, %v3440
        %v3442 = vpop.f32.mrb[0].mxu0
        %v3443 = vadd.f32 %v2454, %v3442
        %3444 = vmatprep.mubr.bf16.mxu0 %v2366
        %3445 = vmatmul.mubr.bf16.gmra.mrb[0].mxu0 %v2365
        %v3446 = vpop.f32.mrb[0].mxu0
        %v3447 = vadd.f32 %v2450, %v3446
        %v3448 = vpop.f32.mrb[0].mxu0
        %v3449 = vadd.f32 %v2454, %v3448
        %v3450 = vpop.f32.mrb[0].mxu0
        %v3451 = vadd.f32 %v2450, %v3450
        %v3452 = vpop.f32.mrb[0].mxu0
        %v3453 = vadd.f32 %v2454, %v3452
        %3454 = vmatprep.mubr.bf16.mxu0 %v2368
        %3455 = vmatmul.mubr.bf16.gmra.mrb[0].mxu0 %v2367
        %v3456 = vpop.f32.mrb[0].mxu0
        %v3457 = vadd.f32 %v2450, %v3456
        %v3458 = vpop.f32.mrb[0].mxu0
        %v3459 = vadd.f32 %v2454, %v3458
        %v3460 = vpop.f32.mrb[0].mxu0
        %v3461 = vadd.f32 %v2450, %v3460
        %v3462 = vpop.f32.mrb[0].mxu0
        %v3463 = vadd.f32 %v2454, %v3462
        %3464 = vmatprep.mubr.bf16.mxu0 %v2370
        %3465 = vmatmul.mubr.bf16.gmra.mrb[0].mxu0 %v2369
        %v3466 = vpop.f32.mrb[0].mxu0
        %v3467 = vadd.f32 %v2450, %v3466
        %v3468 = vpop.f32.mrb[0].mxu0
        %v3469 = vadd.f32 %v2454, %v3468
        %v3470 = vpop.f32.mrb[0].mxu0
        %v3471 = vadd.f32 %v2450, %v3470
        %v3472 = vpop.f32.mrb[0].mxu0
        %v3473 = vadd.f32 %v2454, %v3472
        %3474 = vmatprep.mubr.bf16.mxu0 %v2372
        %3475 = vmatmul.mubr.bf16.gmra.mrb[0].mxu0 %v2371
        %v3476 = vpop.f32.mrb[0].mxu0
        %v3477 = vadd.f32 %v2450, %v3476
        %v3478 = vpop.f32.mrb[0].mxu0
        %v3479 = vadd.f32 %v2454, %v3478
        %v3480 = vpop.f32.mrb[0].mxu0
        %v3481 = vadd.f32 %v2450, %v3480
        %v3482 = vpop.f32.mrb[0].mxu0
        %v3483 = vadd.f32 %v2454, %v3482
        %3484 = vdwg.mxu0
        %v3485 = vmax.f32 %v2814, 0.0
        %v3486 = vmax.f32 %v2816, 0.0
        %v3487 = vmax.f32 %v3167, 0.0
        %v3488 = vmax.f32 %v3169, 0.0
        %v3489 = vmax.f32 %v2818, 0.0
        %v3490 = vmax.f32 %v2820, 0.0
        %v3491 = vmax.f32 %v3171, 0.0
        %v3492 = vmax.f32 %v3173, 0.0
        %v3493 = vmax.f32 %v2824, 0.0
        %v3494 = vmax.f32 %v2826, 0.0
        %v3495 = vmax.f32 %v3177, 0.0
        %v3496 = vmax.f32 %v3179, 0.0
        %v3497 = vmax.f32 %v2828, 0.0
        %v3498 = vmax.f32 %v2830, 0.0
        %v3499 = vmax.f32 %v3181, 0.0
        %v3500 = vmax.f32 %v3183, 0.0
        %v3501 = vmax.f32 %v2834, 0.0
        %v3502 = vmax.f32 %v2836, 0.0
        %v3503 = vmax.f32 %v3187, 0.0
        %v3504 = vmax.f32 %v3189, 0.0
        %v3505 = vmax.f32 %v2838, 0.0
        %v3506 = vmax.f32 %v2840, 0.0
        %v3507 = vmax.f32 %v3191, 0.0
        %v3508 = vmax.f32 %v3193, 0.0
        %v3509 = vmax.f32 %v2844, 0.0
        %v3510 = vmax.f32 %v2846, 0.0
        %v3511 = vmax.f32 %v3197, 0.0
        %v3512 = vmax.f32 %v3199, 0.0
        %v3513 = vmax.f32 %v2848, 0.0
        %v3514 = vmax.f32 %v2850, 0.0
        %v3515 = vmax.f32 %v3201, 0.0
        %v3516 = vmax.f32 %v3203, 0.0
        %v3517 = vmax.f32 %v2854, 0.0
        %v3518 = vmax.f32 %v2856, 0.0
        %v3519 = vmax.f32 %v3207, 0.0
        %v3520 = vmax.f32 %v3209, 0.0
        %v3521 = vmax.f32 %v2858, 0.0
        %v3522 = vmax.f32 %v2860, 0.0
        %v3523 = vmax.f32 %v3211, 0.0
        %v3524 = vmax.f32 %v3213, 0.0
        %v3525 = vmax.f32 %v2864, 0.0
        %v3526 = vmax.f32 %v2866, 0.0
        %v3527 = vmax.f32 %v3217, 0.0
        %v3528 = vmax.f32 %v3219, 0.0
        %v3529 = vmax.f32 %v2868, 0.0
        %v3530 = vmax.f32 %v2870, 0.0
        %v3531 = vmax.f32 %v3221, 0.0
        %v3532 = vmax.f32 %v3223, 0.0
        %v3533 = vmax.f32 %v2874, 0.0
        %v3534 = vmax.f32 %v2876, 0.0
        %v3535 = vmax.f32 %v3227, 0.0
        %v3536 = vmax.f32 %v3229, 0.0
        %v3537 = vmax.f32 %v2878, 0.0
        %v3538 = vmax.f32 %v2880, 0.0
        %v3539 = vmax.f32 %v3231, 0.0
        %v3540 = vmax.f32 %v3233, 0.0
        %v3541 = vmax.f32 %v2884, 0.0
        %v3542 = vmax.f32 %v2886, 0.0
        %v3543 = vmax.f32 %v3237, 0.0
        %v3544 = vmax.f32 %v3239, 0.0
        %v3545 = vmax.f32 %v2888, 0.0
        %v3546 = vmax.f32 %v2890, 0.0
        %v3547 = vmax.f32 %v3241, 0.0
        %v3548 = vmax.f32 %v3243, 0.0
        %v3549 = vmax.f32 %v2894, 0.0
        %v3550 = vmax.f32 %v2896, 0.0
        %v3551 = vmax.f32 %v3247, 0.0
        %v3552 = vmax.f32 %v3249, 0.0
        %v3553 = vmax.f32 %v2898, 0.0
        %v3554 = vmax.f32 %v2900, 0.0
        %v3555 = vmax.f32 %v3251, 0.0
        %v3556 = vmax.f32 %v3253, 0.0
        %v3557 = vmax.f32 %v2904, 0.0
        %v3558 = vmax.f32 %v2906, 0.0
        %v3559 = vmax.f32 %v3257, 0.0
        %v3560 = vmax.f32 %v3259, 0.0
        %v3561 = vmax.f32 %v2908, 0.0
        %v3562 = vmax.f32 %v2910, 0.0
        %v3563 = vmax.f32 %v3261, 0.0
        %v3564 = vmax.f32 %v3263, 0.0
        %v3565 = vmax.f32 %v2914, 0.0
        %v3566 = vmax.f32 %v2916, 0.0
        %v3567 = vmax.f32 %v3267, 0.0
        %v3568 = vmax.f32 %v3269, 0.0
        %v3569 = vmax.f32 %v2918, 0.0
        %v3570 = vmax.f32 %v2920, 0.0
        %v3571 = vmax.f32 %v3271, 0.0
        %v3572 = vmax.f32 %v3273, 0.0
        %v3573 = vmax.f32 %v2924, 0.0
        %v3574 = vmax.f32 %v2926, 0.0
        %v3575 = vmax.f32 %v3277, 0.0
        %v3576 = vmax.f32 %v3279, 0.0
        %v3577 = vmax.f32 %v2928, 0.0
        %v3578 = vmax.f32 %v2930, 0.0
        %v3579 = vmax.f32 %v3281, 0.0
        %v3580 = vmax.f32 %v3283, 0.0
        %v3581 = vmax.f32 %v2934, 0.0
        %v3582 = vmax.f32 %v2936, 0.0
        %v3583 = vmax.f32 %v3287, 0.0
        %v3584 = vmax.f32 %v3289, 0.0
        %v3585 = vmax.f32 %v2938, 0.0
        %v3586 = vmax.f32 %v2940, 0.0
        %v3587 = vmax.f32 %v3291, 0.0
        %v3588 = vmax.f32 %v3293, 0.0
        %v3589 = vmax.f32 %v2944, 0.0
        %v3590 = vmax.f32 %v2946, 0.0
        %v3591 = vmax.f32 %v3297, 0.0
        %v3592 = vmax.f32 %v3299, 0.0
        %v3593 = vmax.f32 %v2948, 0.0
        %v3594 = vmax.f32 %v2950, 0.0
        %v3595 = vmax.f32 %v3301, 0.0
        %v3596 = vmax.f32 %v3303, 0.0
        %v3597 = vmax.f32 %v2954, 0.0
        %v3598 = vmax.f32 %v2956, 0.0
        %v3599 = vmax.f32 %v3307, 0.0
        %v3600 = vmax.f32 %v3309, 0.0
        %v3601 = vmax.f32 %v2958, 0.0
        %v3602 = vmax.f32 %v2960, 0.0
        %v3603 = vmax.f32 %v3311, 0.0
        %v3604 = vmax.f32 %v3313, 0.0
        %v3605 = vmax.f32 %v2964, 0.0
        %v3606 = vmax.f32 %v2966, 0.0
        %v3607 = vmax.f32 %v3317, 0.0
        %v3608 = vmax.f32 %v3319, 0.0
        %v3609 = vmax.f32 %v2968, 0.0
        %v3610 = vmax.f32 %v2970, 0.0
        %v3611 = vmax.f32 %v3321, 0.0
        %v3612 = vmax.f32 %v3323, 0.0
        %v3613 = vmax.f32 %v2974, 0.0
        %v3614 = vmax.f32 %v2976, 0.0
        %v3615 = vmax.f32 %v3327, 0.0
        %v3616 = vmax.f32 %v3329, 0.0
        %v3617 = vmax.f32 %v2978, 0.0
        %v3618 = vmax.f32 %v2980, 0.0
        %v3619 = vmax.f32 %v3331, 0.0
        %v3620 = vmax.f32 %v3333, 0.0
        %v3621 = vmax.f32 %v2984, 0.0
        %v3622 = vmax.f32 %v2986, 0.0
        %v3623 = vmax.f32 %v3337, 0.0
        %v3624 = vmax.f32 %v3339, 0.0
        %v3625 = vmax.f32 %v2988, 0.0
        %v3626 = vmax.f32 %v2990, 0.0
        %v3627 = vmax.f32 %v3341, 0.0
        %v3628 = vmax.f32 %v3343, 0.0
        %v3629 = vmax.f32 %v2994, 0.0
        %v3630 = vmax.f32 %v2996, 0.0
        %v3631 = vmax.f32 %v3347, 0.0
        %v3632 = vmax.f32 %v3349, 0.0
        %v3633 = vmax.f32 %v2998, 0.0
        %v3634 = vmax.f32 %v3000, 0.0
        %v3635 = vmax.f32 %v3351, 0.0
        %v3636 = vmax.f32 %v3353, 0.0
        %v3637 = vmax.f32 %v3004, 0.0
        %v3638 = vmax.f32 %v3006, 0.0
        %v3639 = vmax.f32 %v3357, 0.0
        %v3640 = vmax.f32 %v3359, 0.0
        %v3641 = vmax.f32 %v3008, 0.0
        %v3642 = vmax.f32 %v3010, 0.0
        %v3643 = vmax.f32 %v3361, 0.0
        %v3644 = vmax.f32 %v3363, 0.0
        %v3645 = vmax.f32 %v3014, 0.0
        %v3646 = vmax.f32 %v3016, 0.0
        %v3647 = vmax.f32 %v3367, 0.0
        %v3648 = vmax.f32 %v3369, 0.0
        %v3649 = vmax.f32 %v3018, 0.0
        %v3650 = vmax.f32 %v3020, 0.0
        %v3651 = vmax.f32 %v3371, 0.0
        %v3652 = vmax.f32 %v3373, 0.0
        %v3653 = vmax.f32 %v3024, 0.0
        %v3654 = vmax.f32 %v3026, 0.0
        %v3655 = vmax.f32 %v3377, 0.0
        %v3656 = vmax.f32 %v3379, 0.0
        %v3657 = vmax.f32 %v3028, 0.0
        %v3658 = vmax.f32 %v3030, 0.0
        %v3659 = vmax.f32 %v3381, 0.0
        %v3660 = vmax.f32 %v3383, 0.0
        %v3661 = vmax.f32 %v3034, 0.0
        %v3662 = vmax.f32 %v3036, 0.0
        %v3663 = vmax.f32 %v3387, 0.0
        %v3664 = vmax.f32 %v3389, 0.0
        %v3665 = vmax.f32 %v3038, 0.0
        %v3666 = vmax.f32 %v3040, 0.0
        %v3667 = vmax.f32 %v3391, 0.0
        %v3668 = vmax.f32 %v3393, 0.0
        %v3669 = vmax.f32 %v3044, 0.0
        %v3670 = vmax.f32 %v3046, 0.0
        %v3671 = vmax.f32 %v3397, 0.0
        %v3672 = vmax.f32 %v3399, 0.0
        %v3673 = vmax.f32 %v3048, 0.0
        %v3674 = vmax.f32 %v3050, 0.0
        %v3675 = vmax.f32 %v3401, 0.0
        %v3676 = vmax.f32 %v3403, 0.0
        %v3677 = vmax.f32 %v3054, 0.0
        %v3678 = vmax.f32 %v3056, 0.0
        %v3679 = vmax.f32 %v3407, 0.0
        %v3680 = vmax.f32 %v3409, 0.0
        %v3681 = vmax.f32 %v3058, 0.0
        %v3682 = vmax.f32 %v3060, 0.0
        %v3683 = vmax.f32 %v3411, 0.0
        %v3684 = vmax.f32 %v3413, 0.0
        %v3685 = vmax.f32 %v3064, 0.0
        %v3686 = vmax.f32 %v3066, 0.0
        %v3687 = vmax.f32 %v3417, 0.0
        %v3688 = vmax.f32 %v3419, 0.0
        %v3689 = vmax.f32 %v3068, 0.0
        %v3690 = vmax.f32 %v3070, 0.0
        %v3691 = vmax.f32 %v3421, 0.0
        %v3692 = vmax.f32 %v3423, 0.0
        %v3693 = vmax.f32 %v3074, 0.0
        %v3694 = vmax.f32 %v3076, 0.0
        %v3695 = vmax.f32 %v3427, 0.0
        %v3696 = vmax.f32 %v3429, 0.0
        %v3697 = vmax.f32 %v3078, 0.0
        %v3698 = vmax.f32 %v3080, 0.0
        %v3699 = vmax.f32 %v3431, 0.0
        %v3700 = vmax.f32 %v3433, 0.0
        %v3701 = vmax.f32 %v3084, 0.0
        %v3702 = vmax.f32 %v3086, 0.0
        %v3703 = vmax.f32 %v3437, 0.0
        %v3704 = vmax.f32 %v3439, 0.0
        %v3705 = vmax.f32 %v3088, 0.0
        %v3706 = vmax.f32 %v3090, 0.0
        %v3707 = vmax.f32 %v3441, 0.0
        %v3708 = vmax.f32 %v3443, 0.0
        %v3709 = vmax.f32 %v3094, 0.0
        %v3710 = vmax.f32 %v3096, 0.0
        %v3711 = vmax.f32 %v3447, 0.0
        %v3712 = vmax.f32 %v3449, 0.0
        %v3713 = vmax.f32 %v3098, 0.0
        %v3714 = vmax.f32 %v3100, 0.0
        %v3715 = vmax.f32 %v3451, 0.0
        %v3716 = vmax.f32 %v3453, 0.0
        %v3717 = vmax.f32 %v3104, 0.0
        %v3718 = vmax.f32 %v3106, 0.0
        %v3719 = vmax.f32 %v3457, 0.0
        %v3720 = vmax.f32 %v3459, 0.0
        %v3721 = vmax.f32 %v3108, 0.0
        %v3722 = vmax.f32 %v3110, 0.0
        %v3723 = vmax.f32 %v3461, 0.0
        %v3724 = vmax.f32 %v3463, 0.0
        %v3725 = vmax.f32 %v3114, 0.0
        %v3726 = vmax.f32 %v3116, 0.0
        %v3727 = vmax.f32 %v3467, 0.0
        %v3728 = vmax.f32 %v3469, 0.0
        %v3729 = vmax.f32 %v3118, 0.0
        %v3730 = vmax.f32 %v3120, 0.0
        %v3731 = vmax.f32 %v3471, 0.0
        %v3732 = vmax.f32 %v3473, 0.0
        %v3733 = vmax.f32 %v3124, 0.0
        %v3734 = vmax.f32 %v3126, 0.0
        %v3735 = vmax.f32 %v3477, 0.0
        %v3736 = vmax.f32 %v3479, 0.0
        %v3737 = vmax.f32 %v3128, 0.0
        %v3738 = vmax.f32 %v3130, 0.0
        %v3739 = vmax.f32 %v3481, 0.0
        %v3740 = vmax.f32 %v3483, 0.0
        %v3741 = vmax.f32 %v3485, %v3489
        %v3742 = vmax.f32 %v3741, %v3493
        %v3743 = vmax.f32 %v3742, %v3497
        %v3744 = vmax.f32 %v3743, %v3501
        %v3745 = vmax.f32 %v3744, %v3505
        %v3746 = vmax.f32 %v3745, %v3509
        %v3747 = vmax.f32 %v3746, %v3513
        %v3748 = vmax.f32 %v3747, %v3517
        %v3749 = vmax.f32 %v3748, %v3521
        %v3750 = vmax.f32 %v3749, %v3525
        %v3751 = vmax.f32 %v3750, %v3529
        %v3752 = vmax.f32 %v3751, %v3533
        %v3753 = vmax.f32 %v3752, %v3537
        %v3754 = vmax.f32 %v3753, %v3541
        %v3755 = vmax.f32 %v3754, %v3545
        %v3756 = vmax.f32 %v3755, %v3549
        %v3757 = vmax.f32 %v3756, %v3553
        %v3758 = vmax.f32 %v3757, %v3557
        %v3759 = vmax.f32 %v3758, %v3561
        %v3760 = vmax.f32 %v3759, %v3565
        %v3761 = vmax.f32 %v3760, %v3569
        %v3762 = vmax.f32 %v3761, %v3573
        %v3763 = vmax.f32 %v3762, %v3577
        %v3764 = vmax.f32 %v3763, %v3581
        %v3765 = vmax.f32 %v3764, %v3585
        %v3766 = vmax.f32 %v3765, %v3589
        %v3767 = vmax.f32 %v3766, %v3593
        %v3768 = vmax.f32 %v3767, %v3597
        %v3769 = vmax.f32 %v3768, %v3601
        %v3770 = vmax.f32 %v3769, %v3605
        %v3771 = vmax.f32 %v3770, %v3609
        %v3772 = vrot.slane %v3771, 4
        %v3773 = vmax.f32 %v3771, %v3772
        %v3774 = vrot.slane %v3773, 2
        %v3775 = vmax.f32 %v3773, %v3774
        %v3776 = vrot.slane %v3775, 1
        %v3777 = vmax.f32 %v3775, %v3776
        %v3778 = vmax.f32 %v3486, %v3490
        %v3779 = vmax.f32 %v3778, %v3494
        %v3780 = vmax.f32 %v3779, %v3498
        %v3781 = vmax.f32 %v3780, %v3502
        %v3782 = vmax.f32 %v3781, %v3506
        %v3783 = vmax.f32 %v3782, %v3510
        %v3784 = vmax.f32 %v3783, %v3514
        %v3785 = vmax.f32 %v3784, %v3518
        %v3786 = vmax.f32 %v3785, %v3522
        %v3787 = vmax.f32 %v3786, %v3526
        %v3788 = vmax.f32 %v3787, %v3530
        %v3789 = vmax.f32 %v3788, %v3534
        %v3790 = vmax.f32 %v3789, %v3538
        %v3791 = vmax.f32 %v3790, %v3542
        %v3792 = vmax.f32 %v3791, %v3546
        %v3793 = vmax.f32 %v3792, %v3550
        %v3794 = vmax.f32 %v3793, %v3554
        %v3795 = vmax.f32 %v3794, %v3558
        %v3796 = vmax.f32 %v3795, %v3562
        %v3797 = vmax.f32 %v3796, %v3566
        %v3798 = vmax.f32 %v3797, %v3570
        %v3799 = vmax.f32 %v3798, %v3574
        %v3800 = vmax.f32 %v3799, %v3578
        %v3801 = vmax.f32 %v3800, %v3582
        %v3802 = vmax.f32 %v3801, %v3586
        %v3803 = vmax.f32 %v3802, %v3590
        %v3804 = vmax.f32 %v3803, %v3594
        %v3805 = vmax.f32 %v3804, %v3598
        %v3806 = vmax.f32 %v3805, %v3602
        %v3807 = vmax.f32 %v3806, %v3606
        %v3808 = vmax.f32 %v3807, %v3610
        %v3809 = vrot.slane %v3808, 4
        %v3810 = vmax.f32 %v3808, %v3809
        %v3811 = vrot.slane %v3810, 2
        %v3812 = vmax.f32 %v3810, %v3811
        %v3813 = vrot.slane %v3812, 1
        %v3814 = vmax.f32 %v3812, %v3813
        %v3815 = vmax.f32 %v3487, %v3491
        %v3816 = vmax.f32 %v3815, %v3495
        %v3817 = vmax.f32 %v3816, %v3499
        %v3818 = vmax.f32 %v3817, %v3503
        %v3819 = vmax.f32 %v3818, %v3507
        %v3820 = vmax.f32 %v3819, %v3511
        %v3821 = vmax.f32 %v3820, %v3515
        %v3822 = vmax.f32 %v3821, %v3519
        %v3823 = vmax.f32 %v3822, %v3523
        %v3824 = vmax.f32 %v3823, %v3527
        %v3825 = vmax.f32 %v3824, %v3531
        %v3826 = vmax.f32 %v3825, %v3535
        %v3827 = vmax.f32 %v3826, %v3539
        %v3828 = vmax.f32 %v3827, %v3543
        %v3829 = vmax.f32 %v3828, %v3547
        %v3830 = vmax.f32 %v3829, %v3551
        %v3831 = vmax.f32 %v3830, %v3555
        %v3832 = vmax.f32 %v3831, %v3559
        %v3833 = vmax.f32 %v3832, %v3563
        %v3834 = vmax.f32 %v3833, %v3567
        %v3835 = vmax.f32 %v3834, %v3571
        %v3836 = vmax.f32 %v3835, %v3575
        %v3837 = vmax.f32 %v3836, %v3579
        %v3838 = vmax.f32 %v3837, %v3583
        %v3839 = vmax.f32 %v3838, %v3587
        %v3840 = vmax.f32 %v3839, %v3591
        %v3841 = vmax.f32 %v3840, %v3595
        %v3842 = vmax.f32 %v3841, %v3599
        %v3843 = vmax.f32 %v3842, %v3603
        %v3844 = vmax.f32 %v3843, %v3607
        %v3845 = vmax.f32 %v3844, %v3611
        %v3846 = vrot.slane %v3845, 4
        %v3847 = vmax.f32 %v3845, %v3846
        %v3848 = vrot.slane %v3847, 2
        %v3849 = vmax.f32 %v3847, %v3848
        %v3850 = vrot.slane %v3849, 1
        %v3851 = vmax.f32 %v3849, %v3850
        %v3852 = vmax.f32 %v3488, %v3492
        %v3853 = vmax.f32 %v3852, %v3496
        %v3854 = vmax.f32 %v3853, %v3500
        %v3855 = vmax.f32 %v3854, %v3504
        %v3856 = vmax.f32 %v3855, %v3508
        %v3857 = vmax.f32 %v3856, %v3512
        %v3858 = vmax.f32 %v3857, %v3516
        %v3859 = vmax.f32 %v3858, %v3520
        %v3860 = vmax.f32 %v3859, %v3524
        %v3861 = vmax.f32 %v3860, %v3528
        %v3862 = vmax.f32 %v3861, %v3532
        %v3863 = vmax.f32 %v3862, %v3536
        %v3864 = vmax.f32 %v3863, %v3540
        %v3865 = vmax.f32 %v3864, %v3544
        %v3866 = vmax.f32 %v3865, %v3548
        %v3867 = vmax.f32 %v3866, %v3552
        %v3868 = vmax.f32 %v3867, %v3556
        %v3869 = vmax.f32 %v3868, %v3560
        %v3870 = vmax.f32 %v3869, %v3564
        %v3871 = vmax.f32 %v3870, %v3568
        %v3872 = vmax.f32 %v3871, %v3572
        %v3873 = vmax.f32 %v3872, %v3576
        %v3874 = vmax.f32 %v3873, %v3580
        %v3875 = vmax.f32 %v3874, %v3584
        %v3876 = vmax.f32 %v3875, %v3588
        %v3877 = vmax.f32 %v3876, %v3592
        %v3878 = vmax.f32 %v3877, %v3596
        %v3879 = vmax.f32 %v3878, %v3600
        %v3880 = vmax.f32 %v3879, %v3604
        %v3881 = vmax.f32 %v3880, %v3608
        %v3882 = vmax.f32 %v3881, %v3612
        %v3883 = vrot.slane %v3882, 4
        %v3884 = vmax.f32 %v3882, %v3883
        %v3885 = vrot.slane %v3884, 2
        %v3886 = vmax.f32 %v3884, %v3885
        %v3887 = vrot.slane %v3886, 1
        %v3888 = vmax.f32 %v3886, %v3887
        %v3889 = vmax.f32 %v3613, %v3617
        %v3890 = vmax.f32 %v3889, %v3621
        %v3891 = vmax.f32 %v3890, %v3625
        %v3892 = vmax.f32 %v3891, %v3629
        %v3893 = vmax.f32 %v3892, %v3633
        %v3894 = vmax.f32 %v3893, %v3637
        %v3895 = vmax.f32 %v3894, %v3641
        %v3896 = vmax.f32 %v3895, %v3645
        %v3897 = vmax.f32 %v3896, %v3649
        %v3898 = vmax.f32 %v3897, %v3653
        %v3899 = vmax.f32 %v3898, %v3657
        %v3900 = vmax.f32 %v3899, %v3661
        %v3901 = vmax.f32 %v3900, %v3665
        %v3902 = vmax.f32 %v3901, %v3669
        %v3903 = vmax.f32 %v3902, %v3673
        %v3904 = vmax.f32 %v3903, %v3677
        %v3905 = vmax.f32 %v3904, %v3681
        %v3906 = vmax.f32 %v3905, %v3685
        %v3907 = vmax.f32 %v3906, %v3689
        %v3908 = vmax.f32 %v3907, %v3693
        %v3909 = vmax.f32 %v3908, %v3697
        %v3910 = vmax.f32 %v3909, %v3701
        %v3911 = vmax.f32 %v3910, %v3705
        %v3912 = vmax.f32 %v3911, %v3709
        %v3913 = vmax.f32 %v3912, %v3713
        %v3914 = vmax.f32 %v3913, %v3717
        %v3915 = vmax.f32 %v3914, %v3721
        %v3916 = vmax.f32 %v3915, %v3725
        %v3917 = vmax.f32 %v3916, %v3729
        %v3918 = vmax.f32 %v3917, %v3733
        %v3919 = vmax.f32 %v3918, %v3737
        %v3920 = vrot.slane %v3919, 4
        %v3921 = vmax.f32 %v3919, %v3920
        %v3922 = vrot.slane %v3921, 2
        %v3923 = vmax.f32 %v3921, %v3922
        %v3924 = vrot.slane %v3923, 1
        %v3925 = vmax.f32 %v3923, %v3924
        %v3926 = vmax.f32 %v3614, %v3618
        %v3927 = vmax.f32 %v3926, %v3622
        %v3928 = vmax.f32 %v3927, %v3626
        %v3929 = vmax.f32 %v3928, %v3630
        %v3930 = vmax.f32 %v3929, %v3634
        %v3931 = vmax.f32 %v3930, %v3638
        %v3932 = vmax.f32 %v3931, %v3642
        %v3933 = vmax.f32 %v3932, %v3646
        %v3934 = vmax.f32 %v3933, %v3650
        %v3935 = vmax.f32 %v3934, %v3654
        %v3936 = vmax.f32 %v3935, %v3658
        %v3937 = vmax.f32 %v3936, %v3662
        %v3938 = vmax.f32 %v3937, %v3666
        %v3939 = vmax.f32 %v3938, %v3670
        %v3940 = vmax.f32 %v3939, %v3674
        %v3941 = vmax.f32 %v3940, %v3678
        %v3942 = vmax.f32 %v3941, %v3682
        %v3943 = vmax.f32 %v3942, %v3686
        %v3944 = vmax.f32 %v3943, %v3690
        %v3945 = vmax.f32 %v3944, %v3694
        %v3946 = vmax.f32 %v3945, %v3698
        %v3947 = vmax.f32 %v3946, %v3702
        %v3948 = vmax.f32 %v3947, %v3706
        %v3949 = vmax.f32 %v3948, %v3710
        %v3950 = vmax.f32 %v3949, %v3714
        %v3951 = vmax.f32 %v3950, %v3718
        %v3952 = vmax.f32 %v3951, %v3722
        %v3953 = vmax.f32 %v3952, %v3726
        %v3954 = vmax.f32 %v3953, %v3730
        %v3955 = vmax.f32 %v3954, %v3734
        %v3956 = vmax.f32 %v3955, %v3738
        %v3957 = vrot.slane %v3956, 4
        %v3958 = vmax.f32 %v3956, %v3957
        %v3959 = vrot.slane %v3958, 2
        %v3960 = vmax.f32 %v3958, %v3959
        %v3961 = vrot.slane %v3960, 1
        %v3962 = vmax.f32 %v3960, %v3961
        %v3963 = vmax.f32 %v3615, %v3619
        %v3964 = vmax.f32 %v3963, %v3623
        %v3965 = vmax.f32 %v3964, %v3627
        %v3966 = vmax.f32 %v3965, %v3631
        %v3967 = vmax.f32 %v3966, %v3635
        %v3968 = vmax.f32 %v3967, %v3639
        %v3969 = vmax.f32 %v3968, %v3643
        %v3970 = vmax.f32 %v3969, %v3647
        %v3971 = vmax.f32 %v3970, %v3651
        %v3972 = vmax.f32 %v3971, %v3655
        %v3973 = vmax.f32 %v3972, %v3659
        %v3974 = vmax.f32 %v3973, %v3663
        %v3975 = vmax.f32 %v3974, %v3667
        %v3976 = vmax.f32 %v3975, %v3671
        %v3977 = vmax.f32 %v3976, %v3675
        %v3978 = vmax.f32 %v3977, %v3679
        %v3979 = vmax.f32 %v3978, %v3683
        %v3980 = vmax.f32 %v3979, %v3687
        %v3981 = vmax.f32 %v3980, %v3691
        %v3982 = vmax.f32 %v3981, %v3695
        %v3983 = vmax.f32 %v3982, %v3699
        %v3984 = vmax.f32 %v3983, %v3703
        %v3985 = vmax.f32 %v3984, %v3707
        %v3986 = vmax.f32 %v3985, %v3711
        %v3987 = vmax.f32 %v3986, %v3715
        %v3988 = vmax.f32 %v3987, %v3719
        %v3989 = vmax.f32 %v3988, %v3723
        %v3990 = vmax.f32 %v3989, %v3727
        %v3991 = vmax.f32 %v3990, %v3731
        %v3992 = vmax.f32 %v3991, %v3735
        %v3993 = vmax.f32 %v3992, %v3739
        %v3994 = vrot.slane %v3993, 4
        %v3995 = vmax.f32 %v3993, %v3994
        %v3996 = vrot.slane %v3995, 2
        %v3997 = vmax.f32 %v3995, %v3996
        %v3998 = vrot.slane %v3997, 1
        %v3999 = vmax.f32 %v3997, %v3998
        %v4000 = vmax.f32 %v3616, %v3620
        %v4001 = vmax.f32 %v4000, %v3624
        %v4002 = vmax.f32 %v4001, %v3628
        %v4003 = vmax.f32 %v4002, %v3632
        %v4004 = vmax.f32 %v4003, %v3636
        %v4005 = vmax.f32 %v4004, %v3640
        %v4006 = vmax.f32 %v4005, %v3644
        %v4007 = vmax.f32 %v4006, %v3648
        %v4008 = vmax.f32 %v4007, %v3652
        %v4009 = vmax.f32 %v4008, %v3656
        %v4010 = vmax.f32 %v4009, %v3660
        %v4011 = vmax.f32 %v4010, %v3664
        %v4012 = vmax.f32 %v4011, %v3668
        %v4013 = vmax.f32 %v4012, %v3672
        %v4014 = vmax.f32 %v4013, %v3676
        %v4015 = vmax.f32 %v4014, %v3680
        %v4016 = vmax.f32 %v4015, %v3684
        %v4017 = vmax.f32 %v4016, %v3688
        %v4018 = vmax.f32 %v4017, %v3692
        %v4019 = vmax.f32 %v4018, %v3696
        %v4020 = vmax.f32 %v4019, %v3700
        %v4021 = vmax.f32 %v4020, %v3704
        %v4022 = vmax.f32 %v4021, %v3708
        %v4023 = vmax.f32 %v4022, %v3712
        %v4024 = vmax.f32 %v4023, %v3716
        %v4025 = vmax.f32 %v4024, %v3720
        %v4026 = vmax.f32 %v4025, %v3724
        %v4027 = vmax.f32 %v4026, %v3728
        %v4028 = vmax.f32 %v4027, %v3732
        %v4029 = vmax.f32 %v4028, %v3736
        %v4030 = vmax.f32 %v4029, %v3740
        %v4031 = vrot.slane %v4030, 4
        %v4032 = vmax.f32 %v4030, %v4031
        %v4033 = vrot.slane %v4032, 2
        %v4034 = vmax.f32 %v4032, %v4033
        %v4035 = vrot.slane %v4034, 1
        %v4036 = vmax.f32 %v4034, %v4035
        %v4037 = vpack.c.bf16 %v3489, %v3485
        %v4038 = vpack.c.bf16 %v3490, %v3486
        %v4039 = vpack.c.bf16 %v3491, %v3487
        %v4040 = vpack.c.bf16 %v3492, %v3488
        %v4041 = vpack.c.bf16 %v3497, %v3493
        %v4042 = vpack.c.bf16 %v3498, %v3494
        %v4043 = vpack.c.bf16 %v3499, %v3495
        %v4044 = vpack.c.bf16 %v3500, %v3496
        %v4045 = vpack.c.bf16 %v3505, %v3501
        %v4046 = vpack.c.bf16 %v3506, %v3502
        %v4047 = vpack.c.bf16 %v3507, %v3503
        %v4048 = vpack.c.bf16 %v3508, %v3504
        %v4049 = vpack.c.bf16 %v3513, %v3509
        %v4050 = vpack.c.bf16 %v3514, %v3510
        %v4051 = vpack.c.bf16 %v3515, %v3511
        %v4052 = vpack.c.bf16 %v3516, %v3512
        %v4053 = vpack.c.bf16 %v3521, %v3517
        %v4054 = vpack.c.bf16 %v3522, %v3518
        %v4055 = vpack.c.bf16 %v3523, %v3519
        %v4056 = vpack.c.bf16 %v3524, %v3520
        %v4057 = vpack.c.bf16 %v3529, %v3525
        %v4058 = vpack.c.bf16 %v3530, %v3526
        %v4059 = vpack.c.bf16 %v3531, %v3527
        %v4060 = vpack.c.bf16 %v3532, %v3528
        %v4061 = vpack.c.bf16 %v3537, %v3533
        %v4062 = vpack.c.bf16 %v3538, %v3534
        %v4063 = vpack.c.bf16 %v3539, %v3535
        %v4064 = vpack.c.bf16 %v3540, %v3536
        %v4065 = vpack.c.bf16 %v3545, %v3541
        %v4066 = vpack.c.bf16 %v3546, %v3542
        %v4067 = vpack.c.bf16 %v3547, %v3543
        %v4068 = vpack.c.bf16 %v3548, %v3544
        %v4069 = vpack.c.bf16 %v3553, %v3549
        %v4070 = vpack.c.bf16 %v3554, %v3550
        %v4071 = vpack.c.bf16 %v3555, %v3551
        %v4072 = vpack.c.bf16 %v3556, %v3552
        %v4073 = vpack.c.bf16 %v3561, %v3557
        %v4074 = vpack.c.bf16 %v3562, %v3558
        %v4075 = vpack.c.bf16 %v3563, %v3559
        %v4076 = vpack.c.bf16 %v3564, %v3560
        %v4077 = vpack.c.bf16 %v3569, %v3565
        %v4078 = vpack.c.bf16 %v3570, %v3566
        %v4079 = vpack.c.bf16 %v3571, %v3567
        %v4080 = vpack.c.bf16 %v3572, %v3568
        %v4081 = vpack.c.bf16 %v3577, %v3573
        %v4082 = vpack.c.bf16 %v3578, %v3574
        %v4083 = vpack.c.bf16 %v3579, %v3575
        %v4084 = vpack.c.bf16 %v3580, %v3576
        %v4085 = vpack.c.bf16 %v3585, %v3581
        %v4086 = vpack.c.bf16 %v3586, %v3582
        %v4087 = vpack.c.bf16 %v3587, %v3583
        %v4088 = vpack.c.bf16 %v3588, %v3584
        %v4089 = vpack.c.bf16 %v3593, %v3589
        %v4090 = vpack.c.bf16 %v3594, %v3590
        %v4091 = vpack.c.bf16 %v3595, %v3591
        %v4092 = vpack.c.bf16 %v3596, %v3592
        %v4093 = vpack.c.bf16 %v3601, %v3597
        %v4094 = vpack.c.bf16 %v3602, %v3598
        %v4095 = vpack.c.bf16 %v3603, %v3599
        %v4096 = vpack.c.bf16 %v3604, %v3600
        %v4097 = vpack.c.bf16 %v3609, %v3605
        %v4098 = vpack.c.bf16 %v3610, %v3606
        %v4099 = vpack.c.bf16 %v3611, %v3607
        %v4100 = vpack.c.bf16 %v3612, %v3608
        %v4101 = vpack.c.bf16 %v3617, %v3613
        %v4102 = vpack.c.bf16 %v3618, %v3614
        %v4103 = vpack.c.bf16 %v3619, %v3615
        %v4104 = vpack.c.bf16 %v3620, %v3616
        %v4105 = vpack.c.bf16 %v3625, %v3621
        %v4106 = vpack.c.bf16 %v3626, %v3622
        %v4107 = vpack.c.bf16 %v3627, %v3623
        %v4108 = vpack.c.bf16 %v3628, %v3624
        %v4109 = vpack.c.bf16 %v3633, %v3629
        %v4110 = vpack.c.bf16 %v3634, %v3630
        %v4111 = vpack.c.bf16 %v3635, %v3631
        %v4112 = vpack.c.bf16 %v3636, %v3632
        %v4113 = vpack.c.bf16 %v3641, %v3637
        %v4114 = vpack.c.bf16 %v3642, %v3638
        %v4115 = vpack.c.bf16 %v3643, %v3639
        %v4116 = vpack.c.bf16 %v3644, %v3640
        %v4117 = vpack.c.bf16 %v3649, %v3645
        %v4118 = vpack.c.bf16 %v3650, %v3646
        %v4119 = vpack.c.bf16 %v3651, %v3647
        %v4120 = vpack.c.bf16 %v3652, %v3648
        %v4121 = vpack.c.bf16 %v3657, %v3653
        %v4122 = vpack.c.bf16 %v3658, %v3654
        %v4123 = vpack.c.bf16 %v3659, %v3655
        %v4124 = vpack.c.bf16 %v3660, %v3656
        %v4125 = vpack.c.bf16 %v3665, %v3661
        %v4126 = vpack.c.bf16 %v3666, %v3662
        %v4127 = vpack.c.bf16 %v3667, %v3663
        %v4128 = vpack.c.bf16 %v3668, %v3664
        %v4129 = vpack.c.bf16 %v3673, %v3669
        %v4130 = vpack.c.bf16 %v3674, %v3670
        %v4131 = vpack.c.bf16 %v3675, %v3671
        %v4132 = vpack.c.bf16 %v3676, %v3672
        %v4133 = vpack.c.bf16 %v3681, %v3677
        %v4134 = vpack.c.bf16 %v3682, %v3678
        %v4135 = vpack.c.bf16 %v3683, %v3679
        %v4136 = vpack.c.bf16 %v3684, %v3680
        %v4137 = vpack.c.bf16 %v3689, %v3685
        %v4138 = vpack.c.bf16 %v3690, %v3686
        %v4139 = vpack.c.bf16 %v3691, %v3687
        %v4140 = vpack.c.bf16 %v3692, %v3688
        %v4141 = vpack.c.bf16 %v3697, %v3693
        %v4142 = vpack.c.bf16 %v3698, %v3694
        %v4143 = vpack.c.bf16 %v3699, %v3695
        %v4144 = vpack.c.bf16 %v3700, %v3696
        %v4145 = vpack.c.bf16 %v3705, %v3701
        %v4146 = vpack.c.bf16 %v3706, %v3702
        %v4147 = vpack.c.bf16 %v3707, %v3703
        %v4148 = vpack.c.bf16 %v3708, %v3704
        %v4149 = vpack.c.bf16 %v3713, %v3709
        %v4150 = vpack.c.bf16 %v3714, %v3710
        %v4151 = vpack.c.bf16 %v3715, %v3711
        %v4152 = vpack.c.bf16 %v3716, %v3712
        %v4153 = vpack.c.bf16 %v3721, %v3717
        %v4154 = vpack.c.bf16 %v3722, %v3718
        %v4155 = vpack.c.bf16 %v3723, %v3719
        %v4156 = vpack.c.bf16 %v3724, %v3720
        %v4157 = vpack.c.bf16 %v3729, %v3725
        %v4158 = vpack.c.bf16 %v3730, %v3726
        %v4159 = vpack.c.bf16 %v3731, %v3727
        %v4160 = vpack.c.bf16 %v3732, %v3728
        %v4161 = vpack.c.bf16 %v3737, %v3733
        %v4162 = vpack.c.bf16 %v3738, %v3734
        %v4163 = vpack.c.bf16 %v3739, %v3735
        %v4164 = vpack.c.bf16 %v3740, %v3736
        %v4165 = vld [vmem:[%s9] sm:$0xff]
        %v4166 = vld [vmem:[%s9 + $0x8] sm:$0xff]
        %v4167 = vld [vmem:[%s9 + $0x10] sm:$0xff]
        %v4168 = vld [vmem:[%s9 + $0x18] sm:$0xff]
        %v4169 = vld [vmem:[%s9 + $0x20] sm:$0xff]
        %v4170 = vld [vmem:[%s9 + $0x28] sm:$0xff]
        %v4171 = vld [vmem:[%s9 + $0x30] sm:$0xff]
        %v4172 = vld [vmem:[%s9 + $0x38] sm:$0xff]
        %v4173 = vld [vmem:[%s9 + $0x40] sm:$0xff]
        %v4174 = vld [vmem:[%s9 + $0x48] sm:$0xff]
        %v4175 = vld [vmem:[%s9 + $0x50] sm:$0xff]
        %v4176 = vld [vmem:[%s9 + $0x58] sm:$0xff]
        %v4177 = vld [vmem:[%s9 + $0x60] sm:$0xff]
        %v4178 = vld [vmem:[%s9 + $0x68] sm:$0xff]
        %v4179 = vld [vmem:[%s9 + $0x70] sm:$0xff]
        %v4180 = vld [vmem:[%s9 + $0x78] sm:$0xff]
        %v4181 = vld [vmem:[%s9 + $0x80] sm:$0xff]
        %v4182 = vld [vmem:[%s9 + $0x88] sm:$0xff]
        %v4183 = vld [vmem:[%s9 + $0x90] sm:$0xff]
        %v4184 = vld [vmem:[%s9 + $0x98] sm:$0xff]
        %v4185 = vld [vmem:[%s9 + $0xa0] sm:$0xff]
        %v4186 = vld [vmem:[%s9 + $0xa8] sm:$0xff]
        %v4187 = vld [vmem:[%s9 + $0xb0] sm:$0xff]
        %v4188 = vld [vmem:[%s9 + $0xb8] sm:$0xff]
        %v4189 = vld [vmem:[%s9 + $0xc0] sm:$0xff]
        %v4190 = vld [vmem:[%s9 + $0xc8] sm:$0xff]
        %v4191 = vld [vmem:[%s9 + $0xd0] sm:$0xff]
        %v4192 = vld [vmem:[%s9 + $0xd8] sm:$0xff]
        %v4193 = vld [vmem:[%s9 + $0xe0] sm:$0xff]
        %v4194 = vld [vmem:[%s9 + $0xe8] sm:$0xff]
        %v4195 = vld [vmem:[%s9 + $0xf0] sm:$0xff]
        %v4196 = vld [vmem:[%s9 + $0xf8] sm:$0xff]
        %v4197 = vld [vmem:[%s9 + $0x100] sm:$0xff]
        %v4198 = vld [vmem:[%s9 + $0x108] sm:$0xff]
        %v4199 = vld [vmem:[%s9 + $0x110] sm:$0xff]
        %v4200 = vld [vmem:[%s9 + $0x118] sm:$0xff]
        %v4201 = vld [vmem:[%s9 + $0x120] sm:$0xff]
        %v4202 = vld [vmem:[%s9 + $0x128] sm:$0xff]
        %v4203 = vld [vmem:[%s9 + $0x130] sm:$0xff]
        %v4204 = vld [vmem:[%s9 + $0x138] sm:$0xff]
        %v4205 = vld [vmem:[%s9 + $0x140] sm:$0xff]
        %v4206 = vld [vmem:[%s9 + $0x148] sm:$0xff]
        %v4207 = vld [vmem:[%s9 + $0x150] sm:$0xff]
        %v4208 = vld [vmem:[%s9 + $0x158] sm:$0xff]
        %v4209 = vld [vmem:[%s9 + $0x160] sm:$0xff]
        %v4210 = vld [vmem:[%s9 + $0x168] sm:$0xff]
        %v4211 = vld [vmem:[%s9 + $0x170] sm:$0xff]
        %v4212 = vld [vmem:[%s9 + $0x178] sm:$0xff]
        %v4213 = vld [vmem:[%s9 + $0x180] sm:$0xff]
        %v4214 = vld [vmem:[%s9 + $0x188] sm:$0xff]
        %v4215 = vld [vmem:[%s9 + $0x190] sm:$0xff]
        %v4216 = vld [vmem:[%s9 + $0x198] sm:$0xff]
        %v4217 = vld [vmem:[%s9 + $0x1a0] sm:$0xff]
        %v4218 = vld [vmem:[%s9 + $0x1a8] sm:$0xff]
        %v4219 = vld [vmem:[%s9 + $0x1b0] sm:$0xff]
        %v4220 = vld [vmem:[%s9 + $0x1b8] sm:$0xff]
        %v4221 = vld [vmem:[%s9 + $0x1c0] sm:$0xff]
        %v4222 = vld [vmem:[%s9 + $0x1c8] sm:$0xff]
        %v4223 = vld [vmem:[%s9 + $0x1d0] sm:$0xff]
        %v4224 = vld [vmem:[%s9 + $0x1d8] sm:$0xff]
        %v4225 = vld [vmem:[%s9 + $0x1e0] sm:$0xff]
        %v4226 = vld [vmem:[%s9 + $0x1e8] sm:$0xff]
        %v4227 = vld [vmem:[%s9 + $0x1f0] sm:$0xff]
        %v4228 = vld [vmem:[%s9 + $0x1f8] sm:$0xff]
        %v4293 = vunpack.c.l.b16 %v4165
        %v4294 = vunpack.c.h.b16 %v4165
        %v4295 = vunpack.c.l.b16 %v4166
        %v4296 = vunpack.c.h.b16 %v4166
        %v4297 = vunpack.c.l.b16 %v4167
        %v4298 = vunpack.c.h.b16 %v4167
        %v4299 = vunpack.c.l.b16 %v4168
        %v4300 = vunpack.c.h.b16 %v4168
        %v4301 = vunpack.c.l.b16 %v4169
        %v4302 = vunpack.c.h.b16 %v4169
        %v4303 = vunpack.c.l.b16 %v4170
        %v4304 = vunpack.c.h.b16 %v4170
        %v4305 = vunpack.c.l.b16 %v4171
        %v4306 = vunpack.c.h.b16 %v4171
        %v4307 = vunpack.c.l.b16 %v4172
        %v4308 = vunpack.c.h.b16 %v4172
        %v4309 = vunpack.c.l.b16 %v4173
        %v4310 = vunpack.c.h.b16 %v4173
        %v4311 = vunpack.c.l.b16 %v4174
        %v4312 = vunpack.c.h.b16 %v4174
        %v4313 = vunpack.c.l.b16 %v4175
        %v4314 = vunpack.c.h.b16 %v4175
        %v4315 = vunpack.c.l.b16 %v4176
        %v4316 = vunpack.c.h.b16 %v4176
        %v4317 = vunpack.c.l.b16 %v4177
        %v4318 = vunpack.c.h.b16 %v4177
        %v4319 = vunpack.c.l.b16 %v4178
        %v4320 = vunpack.c.h.b16 %v4178
        %v4321 = vunpack.c.l.b16 %v4179
        %v4322 = vunpack.c.h.b16 %v4179
        %v4323 = vunpack.c.l.b16 %v4180
        %v4324 = vunpack.c.h.b16 %v4180
        %v4325 = vunpack.c.l.b16 %v4181
        %v4326 = vunpack.c.h.b16 %v4181
        %v4327 = vunpack.c.l.b16 %v4182
        %v4328 = vunpack.c.h.b16 %v4182
        %v4329 = vunpack.c.l.b16 %v4183
        %v4330 = vunpack.c.h.b16 %v4183
        %v4331 = vunpack.c.l.b16 %v4184
        %v4332 = vunpack.c.h.b16 %v4184
        %v4333 = vunpack.c.l.b16 %v4185
        %v4334 = vunpack.c.h.b16 %v4185
        %v4335 = vunpack.c.l.b16 %v4186
        %v4336 = vunpack.c.h.b16 %v4186
        %v4337 = vunpack.c.l.b16 %v4187
        %v4338 = vunpack.c.h.b16 %v4187
        %v4339 = vunpack.c.l.b16 %v4188
        %v4340 = vunpack.c.h.b16 %v4188
        %v4341 = vunpack.c.l.b16 %v4189
        %v4342 = vunpack.c.h.b16 %v4189
        %v4343 = vunpack.c.l.b16 %v4190
        %v4344 = vunpack.c.h.b16 %v4190
        %v4345 = vunpack.c.l.b16 %v4191
        %v4346 = vunpack.c.h.b16 %v4191
        %v4347 = vunpack.c.l.b16 %v4192
        %v4348 = vunpack.c.h.b16 %v4192
        %v4349 = vunpack.c.l.b16 %v4193
        %v4350 = vunpack.c.h.b16 %v4193
        %v4351 = vunpack.c.l.b16 %v4194
        %v4352 = vunpack.c.h.b16 %v4194
        %v4353 = vunpack.c.l.b16 %v4195
        %v4354 = vunpack.c.h.b16 %v4195
        %v4355 = vunpack.c.l.b16 %v4196
        %v4356 = vunpack.c.h.b16 %v4196
        %v4357 = vunpack.c.l.b16 %v4197
        %v4358 = vunpack.c.h.b16 %v4197
        %v4359 = vunpack.c.l.b16 %v4198
        %v4360 = vunpack.c.h.b16 %v4198
        %v4361 = vunpack.c.l.b16 %v4199
        %v4362 = vunpack.c.h.b16 %v4199
        %v4363 = vunpack.c.l.b16 %v4200
        %v4364 = vunpack.c.h.b16 %v4200
        %v4365 = vunpack.c.l.b16 %v4201
        %v4366 = vunpack.c.h.b16 %v4201
        %v4367 = vunpack.c.l.b16 %v4202
        %v4368 = vunpack.c.h.b16 %v4202
        %v4369 = vunpack.c.l.b16 %v4203
        %v4370 = vunpack.c.h.b16 %v4203
        %v4371 = vunpack.c.l.b16 %v4204
        %v4372 = vunpack.c.h.b16 %v4204
        %v4373 = vunpack.c.l.b16 %v4205
        %v4374 = vunpack.c.h.b16 %v4205
        %v4375 = vunpack.c.l.b16 %v4206
        %v4376 = vunpack.c.h.b16 %v4206
        %v4377 = vunpack.c.l.b16 %v4207
        %v4378 = vunpack.c.h.b16 %v4207
        %v4379 = vunpack.c.l.b16 %v4208
        %v4380 = vunpack.c.h.b16 %v4208
        %v4381 = vunpack.c.l.b16 %v4209
        %v4382 = vunpack.c.h.b16 %v4209
        %v4383 = vunpack.c.l.b16 %v4210
        %v4384 = vunpack.c.h.b16 %v4210
        %v4385 = vunpack.c.l.b16 %v4211
        %v4386 = vunpack.c.h.b16 %v4211
        %v4387 = vunpack.c.l.b16 %v4212
        %v4388 = vunpack.c.h.b16 %v4212
        %v4389 = vunpack.c.l.b16 %v4213
        %v4390 = vunpack.c.h.b16 %v4213
        %v4391 = vunpack.c.l.b16 %v4214
        %v4392 = vunpack.c.h.b16 %v4214
        %v4393 = vunpack.c.l.b16 %v4215
        %v4394 = vunpack.c.h.b16 %v4215
        %v4395 = vunpack.c.l.b16 %v4216
        %v4396 = vunpack.c.h.b16 %v4216
        %v4397 = vunpack.c.l.b16 %v4217
        %v4398 = vunpack.c.h.b16 %v4217
        %v4399 = vunpack.c.l.b16 %v4218
        %v4400 = vunpack.c.h.b16 %v4218
        %v4401 = vunpack.c.l.b16 %v4219
        %v4402 = vunpack.c.h.b16 %v4219
        %v4403 = vunpack.c.l.b16 %v4220
        %v4404 = vunpack.c.h.b16 %v4220
        %v4405 = vunpack.c.l.b16 %v4221
        %v4406 = vunpack.c.h.b16 %v4221
        %v4407 = vunpack.c.l.b16 %v4222
        %v4408 = vunpack.c.h.b16 %v4222
        %v4409 = vunpack.c.l.b16 %v4223
        %v4410 = vunpack.c.h.b16 %v4223
        %v4411 = vunpack.c.l.b16 %v4224
        %v4412 = vunpack.c.h.b16 %v4224
        %v4413 = vunpack.c.l.b16 %v4225
        %v4414 = vunpack.c.h.b16 %v4225
        %v4415 = vunpack.c.l.b16 %v4226
        %v4416 = vunpack.c.h.b16 %v4226
        %v4417 = vunpack.c.l.b16 %v4227
        %v4418 = vunpack.c.h.b16 %v4227
        %v4419 = vunpack.c.l.b16 %v4228
        %v4420 = vunpack.c.h.b16 %v4228
        %v4421 = vpack.c.b16 %v4295, %v4293
        %v4422 = vpack.c.b16 %v4296, %v4294
        %v4423 = vpack.c.b16 %v4299, %v4297
        %v4424 = vpack.c.b16 %v4300, %v4298
        %v4425 = vpack.c.b16 %v4303, %v4301
        %v4426 = vpack.c.b16 %v4304, %v4302
        %v4427 = vpack.c.b16 %v4307, %v4305
        %v4428 = vpack.c.b16 %v4308, %v4306
        %v4429 = vpack.c.b16 %v4311, %v4309
        %v4430 = vpack.c.b16 %v4312, %v4310
        %v4431 = vpack.c.b16 %v4315, %v4313
        %v4432 = vpack.c.b16 %v4316, %v4314
        %v4433 = vpack.c.b16 %v4319, %v4317
        %v4434 = vpack.c.b16 %v4320, %v4318
        %v4435 = vpack.c.b16 %v4323, %v4321
        %v4436 = vpack.c.b16 %v4324, %v4322
        %v4437 = vpack.c.b16 %v4327, %v4325
        %v4438 = vpack.c.b16 %v4328, %v4326
        %v4439 = vpack.c.b16 %v4331, %v4329
        %v4440 = vpack.c.b16 %v4332, %v4330
        %v4441 = vpack.c.b16 %v4335, %v4333
        %v4442 = vpack.c.b16 %v4336, %v4334
        %v4443 = vpack.c.b16 %v4339, %v4337
        %v4444 = vpack.c.b16 %v4340, %v4338
        %v4445 = vpack.c.b16 %v4343, %v4341
        %v4446 = vpack.c.b16 %v4344, %v4342
        %v4447 = vpack.c.b16 %v4347, %v4345
        %v4448 = vpack.c.b16 %v4348, %v4346
        %v4449 = vpack.c.b16 %v4351, %v4349
        %v4450 = vpack.c.b16 %v4352, %v4350
        %v4451 = vpack.c.b16 %v4355, %v4353
        %v4452 = vpack.c.b16 %v4356, %v4354
        %v4453 = vpack.c.b16 %v4359, %v4357
        %v4454 = vpack.c.b16 %v4360, %v4358
        %v4455 = vpack.c.b16 %v4363, %v4361
        %v4456 = vpack.c.b16 %v4364, %v4362
        %v4457 = vpack.c.b16 %v4367, %v4365
        %v4458 = vpack.c.b16 %v4368, %v4366
        %v4459 = vpack.c.b16 %v4371, %v4369
        %v4460 = vpack.c.b16 %v4372, %v4370
        %v4461 = vpack.c.b16 %v4375, %v4373
        %v4462 = vpack.c.b16 %v4376, %v4374
        %v4463 = vpack.c.b16 %v4379, %v4377
        %v4464 = vpack.c.b16 %v4380, %v4378
        %v4465 = vpack.c.b16 %v4383, %v4381
        %v4466 = vpack.c.b16 %v4384, %v4382
        %v4467 = vpack.c.b16 %v4387, %v4385
        %v4468 = vpack.c.b16 %v4388, %v4386
        %v4469 = vpack.c.b16 %v4391, %v4389
        %v4470 = vpack.c.b16 %v4392, %v4390
        %v4471 = vpack.c.b16 %v4395, %v4393
        %v4472 = vpack.c.b16 %v4396, %v4394
        %v4473 = vpack.c.b16 %v4399, %v4397
        %v4474 = vpack.c.b16 %v4400, %v4398
        %v4475 = vpack.c.b16 %v4403, %v4401
        %v4476 = vpack.c.b16 %v4404, %v4402
        %v4477 = vpack.c.b16 %v4407, %v4405
        %v4478 = vpack.c.b16 %v4408, %v4406
        %v4479 = vpack.c.b16 %v4411, %v4409
        %v4480 = vpack.c.b16 %v4412, %v4410
        %v4481 = vpack.c.b16 %v4415, %v4413
        %v4482 = vpack.c.b16 %v4416, %v4414
        %v4483 = vpack.c.b16 %v4419, %v4417
        %v4484 = vpack.c.b16 %v4420, %v4418
        %4549 = vmatprep.subr.bf16.mxu0 %v4422
        %4550 = vmatpush1.bf16.msra.mxu0 %v4421
        %4551 = vmatprep.subr.bf16.mxu0 %v4424
        %4552 = vmatpush1.bf16.msra.mxu0 %v4423
        %4553 = vmatprep.subr.bf16.mxu0 %v4426
        %4554 = vmatpush1.bf16.msra.mxu0 %v4425
        %4555 = vmatprep.subr.bf16.mxu0 %v4428
        %4556 = vmatpush1.bf16.msra.mxu0 %v4427
        %4557 = vmatprep.subr.bf16.mxu0 %v4430
        %4558 = vmatpush1.bf16.msra.mxu0 %v4429
        %4559 = vmatprep.subr.bf16.mxu0 %v4432
        %4560 = vmatpush1.bf16.msra.mxu0 %v4431
        %4561 = vmatprep.subr.bf16.mxu0 %v4434
        %4562 = vmatpush1.bf16.msra.mxu0 %v4433
        %4563 = vmatprep.subr.bf16.mxu0 %v4436
        %4564 = vmatpush1.bf16.msra.mxu0 %v4435
        %4565 = vmatprep.subr.bf16.mxu0 %v4438
        %4566 = vmatpush1.bf16.msra.mxu0 %v4437
        %4567 = vmatprep.subr.bf16.mxu0 %v4440
        %4568 = vmatpush1.bf16.msra.mxu0 %v4439
        %4569 = vmatprep.subr.bf16.mxu0 %v4442
        %4570 = vmatpush1.bf16.msra.mxu0 %v4441
        %4571 = vmatprep.subr.bf16.mxu0 %v4444
        %4572 = vmatpush1.bf16.msra.mxu0 %v4443
        %4573 = vmatprep.subr.bf16.mxu0 %v4446
        %4574 = vmatpush1.bf16.msra.mxu0 %v4445
        %4575 = vmatprep.subr.bf16.mxu0 %v4448
        %4576 = vmatpush1.bf16.msra.mxu0 %v4447
        %4577 = vmatprep.subr.bf16.mxu0 %v4450
        %4578 = vmatpush1.bf16.msra.mxu0 %v4449
        %4579 = vmatprep.subr.bf16.mxu0 %v4452
        %4580 = vmatpush1.bf16.msra.mxu0 %v4451
        %4581 = vmatprep.mubr.bf16.mxu0 %v4038
        %4582 = vmatmul.mubr.bf16.gmra.mrb[0].mxu0 %v4037
        %v4583 = vpop.f32.mrb[0].mxu0
        %v4584 = vadd.f32 0.0, %v4583
        %v4585 = vpop.f32.mrb[0].mxu0
        %v4586 = vadd.f32 0.0, %v4585
        %v4587 = vpop.f32.mrb[0].mxu0
        %v4588 = vadd.f32 0.0, %v4587
        %v4589 = vpop.f32.mrb[0].mxu0
        %v4590 = vadd.f32 0.0, %v4589
        %4591 = vmatprep.mubr.bf16.mxu0 %v4042
        %4592 = vmatmul.mubr.bf16.gmra.mrb[0].mxu0 %v4041
        %v4593 = vpop.f32.mrb[0].mxu0
        %v4594 = vadd.f32 0.0, %v4593
        %v4595 = vpop.f32.mrb[0].mxu0
        %v4596 = vadd.f32 0.0, %v4595
        %v4597 = vpop.f32.mrb[0].mxu0
        %v4598 = vadd.f32 0.0, %v4597
        %v4599 = vpop.f32.mrb[0].mxu0
        %v4600 = vadd.f32 0.0, %v4599
        %4601 = vmatprep.mubr.bf16.mxu0 %v4046
        %4602 = vmatmul.mubr.bf16.gmra.mrb[0].mxu0 %v4045
        %v4603 = vpop.f32.mrb[0].mxu0
        %v4604 = vadd.f32 0.0, %v4603
        %v4605 = vpop.f32.mrb[0].mxu0
        %v4606 = vadd.f32 0.0, %v4605
        %v4607 = vpop.f32.mrb[0].mxu0
        %v4608 = vadd.f32 0.0, %v4607
        %v4609 = vpop.f32.mrb[0].mxu0
        %v4610 = vadd.f32 0.0, %v4609
        %4611 = vmatprep.mubr.bf16.mxu0 %v4050
        %4612 = vmatmul.mubr.bf16.gmra.mrb[0].mxu0 %v4049
        %v4613 = vpop.f32.mrb[0].mxu0
        %v4614 = vadd.f32 0.0, %v4613
        %v4615 = vpop.f32.mrb[0].mxu0
        %v4616 = vadd.f32 0.0, %v4615
        %v4617 = vpop.f32.mrb[0].mxu0
        %v4618 = vadd.f32 0.0, %v4617
        %v4619 = vpop.f32.mrb[0].mxu0
        %v4620 = vadd.f32 0.0, %v4619
        %4621 = vmatprep.mubr.bf16.mxu0 %v4054
        %4622 = vmatmul.mubr.bf16.gmra.mrb[0].mxu0 %v4053
        %v4623 = vpop.f32.mrb[0].mxu0
        %v4624 = vadd.f32 0.0, %v4623
        %v4625 = vpop.f32.mrb[0].mxu0
        %v4626 = vadd.f32 0.0, %v4625
        %v4627 = vpop.f32.mrb[0].mxu0
        %v4628 = vadd.f32 0.0, %v4627
        %v4629 = vpop.f32.mrb[0].mxu0
        %v4630 = vadd.f32 0.0, %v4629
        %4631 = vmatprep.mubr.bf16.mxu0 %v4058
        %4632 = vmatmul.mubr.bf16.gmra.mrb[0].mxu0 %v4057
        %v4633 = vpop.f32.mrb[0].mxu0
        %v4634 = vadd.f32 0.0, %v4633
        %v4635 = vpop.f32.mrb[0].mxu0
        %v4636 = vadd.f32 0.0, %v4635
        %v4637 = vpop.f32.mrb[0].mxu0
        %v4638 = vadd.f32 0.0, %v4637
        %v4639 = vpop.f32.mrb[0].mxu0
        %v4640 = vadd.f32 0.0, %v4639
        %4641 = vmatprep.mubr.bf16.mxu0 %v4062
        %4642 = vmatmul.mubr.bf16.gmra.mrb[0].mxu0 %v4061
        %v4643 = vpop.f32.mrb[0].mxu0
        %v4644 = vadd.f32 0.0, %v4643
        %v4645 = vpop.f32.mrb[0].mxu0
        %v4646 = vadd.f32 0.0, %v4645
        %v4647 = vpop.f32.mrb[0].mxu0
        %v4648 = vadd.f32 0.0, %v4647
        %v4649 = vpop.f32.mrb[0].mxu0
        %v4650 = vadd.f32 0.0, %v4649
        %4651 = vmatprep.mubr.bf16.mxu0 %v4066
        %4652 = vmatmul.mubr.bf16.gmra.mrb[0].mxu0 %v4065
        %v4653 = vpop.f32.mrb[0].mxu0
        %v4654 = vadd.f32 0.0, %v4653
        %v4655 = vpop.f32.mrb[0].mxu0
        %v4656 = vadd.f32 0.0, %v4655
        %v4657 = vpop.f32.mrb[0].mxu0
        %v4658 = vadd.f32 0.0, %v4657
        %v4659 = vpop.f32.mrb[0].mxu0
        %v4660 = vadd.f32 0.0, %v4659
        %4661 = vmatprep.mubr.bf16.mxu0 %v4070
        %4662 = vmatmul.mubr.bf16.gmra.mrb[0].mxu0 %v4069
        %v4663 = vpop.f32.mrb[0].mxu0
        %v4664 = vadd.f32 0.0, %v4663
        %v4665 = vpop.f32.mrb[0].mxu0
        %v4666 = vadd.f32 0.0, %v4665
        %v4667 = vpop.f32.mrb[0].mxu0
        %v4668 = vadd.f32 0.0, %v4667
        %v4669 = vpop.f32.mrb[0].mxu0
        %v4670 = vadd.f32 0.0, %v4669
        %4671 = vmatprep.mubr.bf16.mxu0 %v4074
        %4672 = vmatmul.mubr.bf16.gmra.mrb[0].mxu0 %v4073
        %v4673 = vpop.f32.mrb[0].mxu0
        %v4674 = vadd.f32 0.0, %v4673
        %v4675 = vpop.f32.mrb[0].mxu0
        %v4676 = vadd.f32 0.0, %v4675
        %v4677 = vpop.f32.mrb[0].mxu0
        %v4678 = vadd.f32 0.0, %v4677
        %v4679 = vpop.f32.mrb[0].mxu0
        %v4680 = vadd.f32 0.0, %v4679
        %4681 = vmatprep.mubr.bf16.mxu0 %v4078
        %4682 = vmatmul.mubr.bf16.gmra.mrb[0].mxu0 %v4077
        %v4683 = vpop.f32.mrb[0].mxu0
        %v4684 = vadd.f32 0.0, %v4683
        %v4685 = vpop.f32.mrb[0].mxu0
        %v4686 = vadd.f32 0.0, %v4685
        %v4687 = vpop.f32.mrb[0].mxu0
        %v4688 = vadd.f32 0.0, %v4687
        %v4689 = vpop.f32.mrb[0].mxu0
        %v4690 = vadd.f32 0.0, %v4689
        %4691 = vmatprep.mubr.bf16.mxu0 %v4082
        %4692 = vmatmul.mubr.bf16.gmra.mrb[0].mxu0 %v4081
        %v4693 = vpop.f32.mrb[0].mxu0
        %v4694 = vadd.f32 0.0, %v4693
        %v4695 = vpop.f32.mrb[0].mxu0
        %v4696 = vadd.f32 0.0, %v4695
        %v4697 = vpop.f32.mrb[0].mxu0
        %v4698 = vadd.f32 0.0, %v4697
        %v4699 = vpop.f32.mrb[0].mxu0
        %v4700 = vadd.f32 0.0, %v4699
        %4701 = vmatprep.mubr.bf16.mxu0 %v4086
        %4702 = vmatmul.mubr.bf16.gmra.mrb[0].mxu0 %v4085
        %v4703 = vpop.f32.mrb[0].mxu0
        %v4704 = vadd.f32 0.0, %v4703
        %v4705 = vpop.f32.mrb[0].mxu0
        %v4706 = vadd.f32 0.0, %v4705
        %v4707 = vpop.f32.mrb[0].mxu0
        %v4708 = vadd.f32 0.0, %v4707
        %v4709 = vpop.f32.mrb[0].mxu0
        %v4710 = vadd.f32 0.0, %v4709
        %4711 = vmatprep.mubr.bf16.mxu0 %v4090
        %4712 = vmatmul.mubr.bf16.gmra.mrb[0].mxu0 %v4089
        %v4713 = vpop.f32.mrb[0].mxu0
        %v4714 = vadd.f32 0.0, %v4713
        %v4715 = vpop.f32.mrb[0].mxu0
        %v4716 = vadd.f32 0.0, %v4715
        %v4717 = vpop.f32.mrb[0].mxu0
        %v4718 = vadd.f32 0.0, %v4717
        %v4719 = vpop.f32.mrb[0].mxu0
        %v4720 = vadd.f32 0.0, %v4719
        %4721 = vmatprep.mubr.bf16.mxu0 %v4094
        %4722 = vmatmul.mubr.bf16.gmra.mrb[0].mxu0 %v4093
        %v4723 = vpop.f32.mrb[0].mxu0
        %v4724 = vadd.f32 0.0, %v4723
        %v4725 = vpop.f32.mrb[0].mxu0
        %v4726 = vadd.f32 0.0, %v4725
        %v4727 = vpop.f32.mrb[0].mxu0
        %v4728 = vadd.f32 0.0, %v4727
        %v4729 = vpop.f32.mrb[0].mxu0
        %v4730 = vadd.f32 0.0, %v4729
        %4731 = vmatprep.mubr.bf16.mxu0 %v4098
        %4732 = vmatmul.mubr.bf16.gmra.mrb[0].mxu0 %v4097
        %v4733 = vpop.f32.mrb[0].mxu0
        %v4734 = vadd.f32 0.0, %v4733
        %v4735 = vpop.f32.mrb[0].mxu0
        %v4736 = vadd.f32 0.0, %v4735
        %v4737 = vpop.f32.mrb[0].mxu0
        %v4738 = vadd.f32 0.0, %v4737
        %v4739 = vpop.f32.mrb[0].mxu0
        %v4740 = vadd.f32 0.0, %v4739
        %4741 = vmatprep.mubr.bf16.mxu0 %v4102
        %4742 = vmatmul.mubr.bf16.gmra.mrb[0].mxu0 %v4101
        %v4743 = vpop.f32.mrb[0].mxu0
        %v4744 = vadd.f32 0.0, %v4743
        %v4745 = vpop.f32.mrb[0].mxu0
        %v4746 = vadd.f32 0.0, %v4745
        %v4747 = vpop.f32.mrb[0].mxu0
        %v4748 = vadd.f32 0.0, %v4747
        %v4749 = vpop.f32.mrb[0].mxu0
        %v4750 = vadd.f32 0.0, %v4749
        %4751 = vmatprep.mubr.bf16.mxu0 %v4106
        %4752 = vmatmul.mubr.bf16.gmra.mrb[0].mxu0 %v4105
        %v4753 = vpop.f32.mrb[0].mxu0
        %v4754 = vadd.f32 0.0, %v4753
        %v4755 = vpop.f32.mrb[0].mxu0
        %v4756 = vadd.f32 0.0, %v4755
        %v4757 = vpop.f32.mrb[0].mxu0
        %v4758 = vadd.f32 0.0, %v4757
        %v4759 = vpop.f32.mrb[0].mxu0
        %v4760 = vadd.f32 0.0, %v4759
        %4761 = vmatprep.mubr.bf16.mxu0 %v4110
        %4762 = vmatmul.mubr.bf16.gmra.mrb[0].mxu0 %v4109
        %v4763 = vpop.f32.mrb[0].mxu0
        %v4764 = vadd.f32 0.0, %v4763
        %v4765 = vpop.f32.mrb[0].mxu0
        %v4766 = vadd.f32 0.0, %v4765
        %v4767 = vpop.f32.mrb[0].mxu0
        %v4768 = vadd.f32 0.0, %v4767
        %v4769 = vpop.f32.mrb[0].mxu0
        %v4770 = vadd.f32 0.0, %v4769
        %4771 = vmatprep.mubr.bf16.mxu0 %v4114
        %4772 = vmatmul.mubr.bf16.gmra.mrb[0].mxu0 %v4113
        %v4773 = vpop.f32.mrb[0].mxu0
        %v4774 = vadd.f32 0.0, %v4773
        %v4775 = vpop.f32.mrb[0].mxu0
        %v4776 = vadd.f32 0.0, %v4775
        %v4777 = vpop.f32.mrb[0].mxu0
        %v4778 = vadd.f32 0.0, %v4777
        %v4779 = vpop.f32.mrb[0].mxu0
        %v4780 = vadd.f32 0.0, %v4779
        %4781 = vmatprep.mubr.bf16.mxu0 %v4118
        %4782 = vmatmul.mubr.bf16.gmra.mrb[0].mxu0 %v4117
        %v4783 = vpop.f32.mrb[0].mxu0
        %v4784 = vadd.f32 0.0, %v4783
        %v4785 = vpop.f32.mrb[0].mxu0
        %v4786 = vadd.f32 0.0, %v4785
        %v4787 = vpop.f32.mrb[0].mxu0
        %v4788 = vadd.f32 0.0, %v4787
        %v4789 = vpop.f32.mrb[0].mxu0
        %v4790 = vadd.f32 0.0, %v4789
        %4791 = vmatprep.mubr.bf16.mxu0 %v4122
        %4792 = vmatmul.mubr.bf16.gmra.mrb[0].mxu0 %v4121
        %v4793 = vpop.f32.mrb[0].mxu0
        %v4794 = vadd.f32 0.0, %v4793
        %v4795 = vpop.f32.mrb[0].mxu0
        %v4796 = vadd.f32 0.0, %v4795
        %v4797 = vpop.f32.mrb[0].mxu0
        %v4798 = vadd.f32 0.0, %v4797
        %v4799 = vpop.f32.mrb[0].mxu0
        %v4800 = vadd.f32 0.0, %v4799
        %4801 = vmatprep.mubr.bf16.mxu0 %v4126
        %4802 = vmatmul.mubr.bf16.gmra.mrb[0].mxu0 %v4125
        %v4803 = vpop.f32.mrb[0].mxu0
        %v4804 = vadd.f32 0.0, %v4803
        %v4805 = vpop.f32.mrb[0].mxu0
        %v4806 = vadd.f32 0.0, %v4805
        %v4807 = vpop.f32.mrb[0].mxu0
        %v4808 = vadd.f32 0.0, %v4807
        %v4809 = vpop.f32.mrb[0].mxu0
        %v4810 = vadd.f32 0.0, %v4809
        %4811 = vmatprep.mubr.bf16.mxu0 %v4130
        %4812 = vmatmul.mubr.bf16.gmra.mrb[0].mxu0 %v4129
        %v4813 = vpop.f32.mrb[0].mxu0
        %v4814 = vadd.f32 0.0, %v4813
        %v4815 = vpop.f32.mrb[0].mxu0
        %v4816 = vadd.f32 0.0, %v4815
        %v4817 = vpop.f32.mrb[0].mxu0
        %v4818 = vadd.f32 0.0, %v4817
        %v4819 = vpop.f32.mrb[0].mxu0
        %v4820 = vadd.f32 0.0, %v4819
        %4821 = vmatprep.mubr.bf16.mxu0 %v4134
        %4822 = vmatmul.mubr.bf16.gmra.mrb[0].mxu0 %v4133
        %v4823 = vpop.f32.mrb[0].mxu0
        %v4824 = vadd.f32 0.0, %v4823
        %v4825 = vpop.f32.mrb[0].mxu0
        %v4826 = vadd.f32 0.0, %v4825
        %v4827 = vpop.f32.mrb[0].mxu0
        %v4828 = vadd.f32 0.0, %v4827
        %v4829 = vpop.f32.mrb[0].mxu0
        %v4830 = vadd.f32 0.0, %v4829
        %4831 = vmatprep.mubr.bf16.mxu0 %v4138
        %4832 = vmatmul.mubr.bf16.gmra.mrb[0].mxu0 %v4137
        %v4833 = vpop.f32.mrb[0].mxu0
        %v4834 = vadd.f32 0.0, %v4833
        %v4835 = vpop.f32.mrb[0].mxu0
        %v4836 = vadd.f32 0.0, %v4835
        %v4837 = vpop.f32.mrb[0].mxu0
        %v4838 = vadd.f32 0.0, %v4837
        %v4839 = vpop.f32.mrb[0].mxu0
        %v4840 = vadd.f32 0.0, %v4839
        %4841 = vmatprep.mubr.bf16.mxu0 %v4142
        %4842 = vmatmul.mubr.bf16.gmra.mrb[0].mxu0 %v4141
        %v4843 = vpop.f32.mrb[0].mxu0
        %v4844 = vadd.f32 0.0, %v4843
        %v4845 = vpop.f32.mrb[0].mxu0
        %v4846 = vadd.f32 0.0, %v4845
        %v4847 = vpop.f32.mrb[0].mxu0
        %v4848 = vadd.f32 0.0, %v4847
        %v4849 = vpop.f32.mrb[0].mxu0
        %v4850 = vadd.f32 0.0, %v4849
        %4851 = vmatprep.mubr.bf16.mxu0 %v4146
        %4852 = vmatmul.mubr.bf16.gmra.mrb[0].mxu0 %v4145
        %v4853 = vpop.f32.mrb[0].mxu0
        %v4854 = vadd.f32 0.0, %v4853
        %v4855 = vpop.f32.mrb[0].mxu0
        %v4856 = vadd.f32 0.0, %v4855
        %v4857 = vpop.f32.mrb[0].mxu0
        %v4858 = vadd.f32 0.0, %v4857
        %v4859 = vpop.f32.mrb[0].mxu0
        %v4860 = vadd.f32 0.0, %v4859
        %4861 = vmatprep.mubr.bf16.mxu0 %v4150
        %4862 = vmatmul.mubr.bf16.gmra.mrb[0].mxu0 %v4149
        %v4863 = vpop.f32.mrb[0].mxu0
        %v4864 = vadd.f32 0.0, %v4863
        %v4865 = vpop.f32.mrb[0].mxu0
        %v4866 = vadd.f32 0.0, %v4865
        %v4867 = vpop.f32.mrb[0].mxu0
        %v4868 = vadd.f32 0.0, %v4867
        %v4869 = vpop.f32.mrb[0].mxu0
        %v4870 = vadd.f32 0.0, %v4869
        %4871 = vmatprep.mubr.bf16.mxu0 %v4154
        %4872 = vmatmul.mubr.bf16.gmra.mrb[0].mxu0 %v4153
        %v4873 = vpop.f32.mrb[0].mxu0
        %v4874 = vadd.f32 0.0, %v4873
        %v4875 = vpop.f32.mrb[0].mxu0
        %v4876 = vadd.f32 0.0, %v4875
        %v4877 = vpop.f32.mrb[0].mxu0
        %v4878 = vadd.f32 0.0, %v4877
        %v4879 = vpop.f32.mrb[0].mxu0
        %v4880 = vadd.f32 0.0, %v4879
        %4881 = vmatprep.mubr.bf16.mxu0 %v4158
        %4882 = vmatmul.mubr.bf16.gmra.mrb[0].mxu0 %v4157
        %v4883 = vpop.f32.mrb[0].mxu0
        %v4884 = vadd.f32 0.0, %v4883
        %v4885 = vpop.f32.mrb[0].mxu0
        %v4886 = vadd.f32 0.0, %v4885
        %v4887 = vpop.f32.mrb[0].mxu0
        %v4888 = vadd.f32 0.0, %v4887
        %v4889 = vpop.f32.mrb[0].mxu0
        %v4890 = vadd.f32 0.0, %v4889
        %4891 = vmatprep.mubr.bf16.mxu0 %v4162
        %4892 = vmatmul.mubr.bf16.gmra.mrb[0].mxu0 %v4161
        %v4893 = vpop.f32.mrb[0].mxu0
        %v4894 = vadd.f32 0.0, %v4893
        %v4895 = vpop.f32.mrb[0].mxu0
        %v4896 = vadd.f32 0.0, %v4895
        %v4897 = vpop.f32.mrb[0].mxu0
        %v4898 = vadd.f32 0.0, %v4897
        %v4899 = vpop.f32.mrb[0].mxu0
        %v4900 = vadd.f32 0.0, %v4899
        %4901 = vdwg.mxu0
        %4902 = vmatprep.subr.bf16.mxu0 %v4454
        %4903 = vmatpush1.bf16.msra.mxu0 %v4453
        %4904 = vmatprep.subr.bf16.mxu0 %v4456
        %4905 = vmatpush1.bf16.msra.mxu0 %v4455
        %4906 = vmatprep.subr.bf16.mxu0 %v4458
        %4907 = vmatpush1.bf16.msra.mxu0 %v4457
        %4908 = vmatprep.subr.bf16.mxu0 %v4460
        %4909 = vmatpush1.bf16.msra.mxu0 %v4459
        %4910 = vmatprep.subr.bf16.mxu0 %v4462
        %4911 = vmatpush1.bf16.msra.mxu0 %v4461
        %4912 = vmatprep.subr.bf16.mxu0 %v4464
        %4913 = vmatpush1.bf16.msra.mxu0 %v4463
        %4914 = vmatprep.subr.bf16.mxu0 %v4466
        %4915 = vmatpush1.bf16.msra.mxu0 %v4465
        %4916 = vmatprep.subr.bf16.mxu0 %v4468
        %4917 = vmatpush1.bf16.msra.mxu0 %v4467
        %4918 = vmatprep.subr.bf16.mxu0 %v4470
        %4919 = vmatpush1.bf16.msra.mxu0 %v4469
        %4920 = vmatprep.subr.bf16.mxu0 %v4472
        %4921 = vmatpush1.bf16.msra.mxu0 %v4471
        %4922 = vmatprep.subr.bf16.mxu0 %v4474
        %4923 = vmatpush1.bf16.msra.mxu0 %v4473
        %4924 = vmatprep.subr.bf16.mxu0 %v4476
        %4925 = vmatpush1.bf16.msra.mxu0 %v4475
        %4926 = vmatprep.subr.bf16.mxu0 %v4478
        %4927 = vmatpush1.bf16.msra.mxu0 %v4477
        %4928 = vmatprep.subr.bf16.mxu0 %v4480
        %4929 = vmatpush1.bf16.msra.mxu0 %v4479
        %4930 = vmatprep.subr.bf16.mxu0 %v4482
        %4931 = vmatpush1.bf16.msra.mxu0 %v4481
        %4932 = vmatprep.subr.bf16.mxu0 %v4484
        %4933 = vmatpush1.bf16.msra.mxu0 %v4483
        %4934 = vmatprep.mubr.bf16.mxu0 %v4040
        %4935 = vmatmul.mubr.bf16.gmra.mrb[0].mxu0 %v4039
        %v4936 = vpop.f32.mrb[0].mxu0
        %v4937 = vadd.f32 %v4584, %v4936
        %v4938 = vpop.f32.mrb[0].mxu0
        %v4939 = vadd.f32 %v4586, %v4938
        %v4940 = vpop.f32.mrb[0].mxu0
        %v4941 = vadd.f32 %v4588, %v4940
        %v4942 = vpop.f32.mrb[0].mxu0
        %v4943 = vadd.f32 %v4590, %v4942
        %4944 = vmatprep.mubr.bf16.mxu0 %v4044
        %4945 = vmatmul.mubr.bf16.gmra.mrb[0].mxu0 %v4043
        %v4946 = vpop.f32.mrb[0].mxu0
        %v4947 = vadd.f32 %v4594, %v4946
        %v4948 = vpop.f32.mrb[0].mxu0
        %v4949 = vadd.f32 %v4596, %v4948
        %v4950 = vpop.f32.mrb[0].mxu0
        %v4951 = vadd.f32 %v4598, %v4950
        %v4952 = vpop.f32.mrb[0].mxu0
        %v4953 = vadd.f32 %v4600, %v4952
        %4954 = vmatprep.mubr.bf16.mxu0 %v4048
        %4955 = vmatmul.mubr.bf16.gmra.mrb[0].mxu0 %v4047
        %v4956 = vpop.f32.mrb[0].mxu0
        %v4957 = vadd.f32 %v4604, %v4956
        %v4958 = vpop.f32.mrb[0].mxu0
        %v4959 = vadd.f32 %v4606, %v4958
        %v4960 = vpop.f32.mrb[0].mxu0
        %v4961 = vadd.f32 %v4608, %v4960
        %v4962 = vpop.f32.mrb[0].mxu0
        %v4963 = vadd.f32 %v4610, %v4962
        %4964 = vmatprep.mubr.bf16.mxu0 %v4052
        %4965 = vmatmul.mubr.bf16.gmra.mrb[0].mxu0 %v4051
        %v4966 = vpop.f32.mrb[0].mxu0
        %v4967 = vadd.f32 %v4614, %v4966
        %v4968 = vpop.f32.mrb[0].mxu0
        %v4969 = vadd.f32 %v4616, %v4968
        %v4970 = vpop.f32.mrb[0].mxu0
        %v4971 = vadd.f32 %v4618, %v4970
        %v4972 = vpop.f32.mrb[0].mxu0
        %v4973 = vadd.f32 %v4620, %v4972
        %4974 = vmatprep.mubr.bf16.mxu0 %v4056
        %4975 = vmatmul.mubr.bf16.gmra.mrb[0].mxu0 %v4055
        %v4976 = vpop.f32.mrb[0].mxu0
        %v4977 = vadd.f32 %v4624, %v4976
        %v4978 = vpop.f32.mrb[0].mxu0
        %v4979 = vadd.f32 %v4626, %v4978
        %v4980 = vpop.f32.mrb[0].mxu0
        %v4981 = vadd.f32 %v4628, %v4980
        %v4982 = vpop.f32.mrb[0].mxu0
        %v4983 = vadd.f32 %v4630, %v4982
        %4984 = vmatprep.mubr.bf16.mxu0 %v4060
        %4985 = vmatmul.mubr.bf16.gmra.mrb[0].mxu0 %v4059
        %v4986 = vpop.f32.mrb[0].mxu0
        %v4987 = vadd.f32 %v4634, %v4986
        %v4988 = vpop.f32.mrb[0].mxu0
        %v4989 = vadd.f32 %v4636, %v4988
        %v4990 = vpop.f32.mrb[0].mxu0
        %v4991 = vadd.f32 %v4638, %v4990
        %v4992 = vpop.f32.mrb[0].mxu0
        %v4993 = vadd.f32 %v4640, %v4992
        %4994 = vmatprep.mubr.bf16.mxu0 %v4064
        %4995 = vmatmul.mubr.bf16.gmra.mrb[0].mxu0 %v4063
        %v4996 = vpop.f32.mrb[0].mxu0
        %v4997 = vadd.f32 %v4644, %v4996
        %v4998 = vpop.f32.mrb[0].mxu0
        %v4999 = vadd.f32 %v4646, %v4998
        %v5000 = vpop.f32.mrb[0].mxu0
        %v5001 = vadd.f32 %v4648, %v5000
        %v5002 = vpop.f32.mrb[0].mxu0
        %v5003 = vadd.f32 %v4650, %v5002
        %5004 = vmatprep.mubr.bf16.mxu0 %v4068
        %5005 = vmatmul.mubr.bf16.gmra.mrb[0].mxu0 %v4067
        %v5006 = vpop.f32.mrb[0].mxu0
        %v5007 = vadd.f32 %v4654, %v5006
        %v5008 = vpop.f32.mrb[0].mxu0
        %v5009 = vadd.f32 %v4656, %v5008
        %v5010 = vpop.f32.mrb[0].mxu0
        %v5011 = vadd.f32 %v4658, %v5010
        %v5012 = vpop.f32.mrb[0].mxu0
        %v5013 = vadd.f32 %v4660, %v5012
        %5014 = vmatprep.mubr.bf16.mxu0 %v4072
        %5015 = vmatmul.mubr.bf16.gmra.mrb[0].mxu0 %v4071
        %v5016 = vpop.f32.mrb[0].mxu0
        %v5017 = vadd.f32 %v4664, %v5016
        %v5018 = vpop.f32.mrb[0].mxu0
        %v5019 = vadd.f32 %v4666, %v5018
        %v5020 = vpop.f32.mrb[0].mxu0
        %v5021 = vadd.f32 %v4668, %v5020
        %v5022 = vpop.f32.mrb[0].mxu0
        %v5023 = vadd.f32 %v4670, %v5022
        %5024 = vmatprep.mubr.bf16.mxu0 %v4076
        %5025 = vmatmul.mubr.bf16.gmra.mrb[0].mxu0 %v4075
        %v5026 = vpop.f32.mrb[0].mxu0
        %v5027 = vadd.f32 %v4674, %v5026
        %v5028 = vpop.f32.mrb[0].mxu0
        %v5029 = vadd.f32 %v4676, %v5028
        %v5030 = vpop.f32.mrb[0].mxu0
        %v5031 = vadd.f32 %v4678, %v5030
        %v5032 = vpop.f32.mrb[0].mxu0
        %v5033 = vadd.f32 %v4680, %v5032
        %5034 = vmatprep.mubr.bf16.mxu0 %v4080
        %5035 = vmatmul.mubr.bf16.gmra.mrb[0].mxu0 %v4079
        %v5036 = vpop.f32.mrb[0].mxu0
        %v5037 = vadd.f32 %v4684, %v5036
        %v5038 = vpop.f32.mrb[0].mxu0
        %v5039 = vadd.f32 %v4686, %v5038
        %v5040 = vpop.f32.mrb[0].mxu0
        %v5041 = vadd.f32 %v4688, %v5040
        %v5042 = vpop.f32.mrb[0].mxu0
        %v5043 = vadd.f32 %v4690, %v5042
        %5044 = vmatprep.mubr.bf16.mxu0 %v4084
        %5045 = vmatmul.mubr.bf16.gmra.mrb[0].mxu0 %v4083
        %v5046 = vpop.f32.mrb[0].mxu0
        %v5047 = vadd.f32 %v4694, %v5046
        %v5048 = vpop.f32.mrb[0].mxu0
        %v5049 = vadd.f32 %v4696, %v5048
        %v5050 = vpop.f32.mrb[0].mxu0
        %v5051 = vadd.f32 %v4698, %v5050
        %v5052 = vpop.f32.mrb[0].mxu0
        %v5053 = vadd.f32 %v4700, %v5052
        %5054 = vmatprep.mubr.bf16.mxu0 %v4088
        %5055 = vmatmul.mubr.bf16.gmra.mrb[0].mxu0 %v4087
        %v5056 = vpop.f32.mrb[0].mxu0
        %v5057 = vadd.f32 %v4704, %v5056
        %v5058 = vpop.f32.mrb[0].mxu0
        %v5059 = vadd.f32 %v4706, %v5058
        %v5060 = vpop.f32.mrb[0].mxu0
        %v5061 = vadd.f32 %v4708, %v5060
        %v5062 = vpop.f32.mrb[0].mxu0
        %v5063 = vadd.f32 %v4710, %v5062
        %5064 = vmatprep.mubr.bf16.mxu0 %v4092
        %5065 = vmatmul.mubr.bf16.gmra.mrb[0].mxu0 %v4091
        %v5066 = vpop.f32.mrb[0].mxu0
        %v5067 = vadd.f32 %v4714, %v5066
        %v5068 = vpop.f32.mrb[0].mxu0
        %v5069 = vadd.f32 %v4716, %v5068
        %v5070 = vpop.f32.mrb[0].mxu0
        %v5071 = vadd.f32 %v4718, %v5070
        %v5072 = vpop.f32.mrb[0].mxu0
        %v5073 = vadd.f32 %v4720, %v5072
        %5074 = vmatprep.mubr.bf16.mxu0 %v4096
        %5075 = vmatmul.mubr.bf16.gmra.mrb[0].mxu0 %v4095
        %v5076 = vpop.f32.mrb[0].mxu0
        %v5077 = vadd.f32 %v4724, %v5076
        %v5078 = vpop.f32.mrb[0].mxu0
        %v5079 = vadd.f32 %v4726, %v5078
        %v5080 = vpop.f32.mrb[0].mxu0
        %v5081 = vadd.f32 %v4728, %v5080
        %v5082 = vpop.f32.mrb[0].mxu0
        %v5083 = vadd.f32 %v4730, %v5082
        %5084 = vmatprep.mubr.bf16.mxu0 %v4100
        %5085 = vmatmul.mubr.bf16.gmra.mrb[0].mxu0 %v4099
        %v5086 = vpop.f32.mrb[0].mxu0
        %v5087 = vadd.f32 %v4734, %v5086
        %v5088 = vpop.f32.mrb[0].mxu0
        %v5089 = vadd.f32 %v4736, %v5088
        %v5090 = vpop.f32.mrb[0].mxu0
        %v5091 = vadd.f32 %v4738, %v5090
        %v5092 = vpop.f32.mrb[0].mxu0
        %v5093 = vadd.f32 %v4740, %v5092
        %5094 = vmatprep.mubr.bf16.mxu0 %v4104
        %5095 = vmatmul.mubr.bf16.gmra.mrb[0].mxu0 %v4103
        %v5096 = vpop.f32.mrb[0].mxu0
        %v5097 = vadd.f32 %v4744, %v5096
        %v5098 = vpop.f32.mrb[0].mxu0
        %v5099 = vadd.f32 %v4746, %v5098
        %v5100 = vpop.f32.mrb[0].mxu0
        %v5101 = vadd.f32 %v4748, %v5100
        %v5102 = vpop.f32.mrb[0].mxu0
        %v5103 = vadd.f32 %v4750, %v5102
        %5104 = vmatprep.mubr.bf16.mxu0 %v4108
        %5105 = vmatmul.mubr.bf16.gmra.mrb[0].mxu0 %v4107
        %v5106 = vpop.f32.mrb[0].mxu0
        %v5107 = vadd.f32 %v4754, %v5106
        %v5108 = vpop.f32.mrb[0].mxu0
        %v5109 = vadd.f32 %v4756, %v5108
        %v5110 = vpop.f32.mrb[0].mxu0
        %v5111 = vadd.f32 %v4758, %v5110
        %v5112 = vpop.f32.mrb[0].mxu0
        %v5113 = vadd.f32 %v4760, %v5112
        %5114 = vmatprep.mubr.bf16.mxu0 %v4112
        %5115 = vmatmul.mubr.bf16.gmra.mrb[0].mxu0 %v4111
        %v5116 = vpop.f32.mrb[0].mxu0
        %v5117 = vadd.f32 %v4764, %v5116
        %v5118 = vpop.f32.mrb[0].mxu0
        %v5119 = vadd.f32 %v4766, %v5118
        %v5120 = vpop.f32.mrb[0].mxu0
        %v5121 = vadd.f32 %v4768, %v5120
        %v5122 = vpop.f32.mrb[0].mxu0
        %v5123 = vadd.f32 %v4770, %v5122
        %5124 = vmatprep.mubr.bf16.mxu0 %v4116
        %5125 = vmatmul.mubr.bf16.gmra.mrb[0].mxu0 %v4115
        %v5126 = vpop.f32.mrb[0].mxu0
        %v5127 = vadd.f32 %v4774, %v5126
        %v5128 = vpop.f32.mrb[0].mxu0
        %v5129 = vadd.f32 %v4776, %v5128
        %v5130 = vpop.f32.mrb[0].mxu0
        %v5131 = vadd.f32 %v4778, %v5130
        %v5132 = vpop.f32.mrb[0].mxu0
        %v5133 = vadd.f32 %v4780, %v5132
        %5134 = vmatprep.mubr.bf16.mxu0 %v4120
        %5135 = vmatmul.mubr.bf16.gmra.mrb[0].mxu0 %v4119
        %v5136 = vpop.f32.mrb[0].mxu0
        %v5137 = vadd.f32 %v4784, %v5136
        %v5138 = vpop.f32.mrb[0].mxu0
        %v5139 = vadd.f32 %v4786, %v5138
        %v5140 = vpop.f32.mrb[0].mxu0
        %v5141 = vadd.f32 %v4788, %v5140
        %v5142 = vpop.f32.mrb[0].mxu0
        %v5143 = vadd.f32 %v4790, %v5142
        %5144 = vmatprep.mubr.bf16.mxu0 %v4124
        %5145 = vmatmul.mubr.bf16.gmra.mrb[0].mxu0 %v4123
        %v5146 = vpop.f32.mrb[0].mxu0
        %v5147 = vadd.f32 %v4794, %v5146
        %v5148 = vpop.f32.mrb[0].mxu0
        %v5149 = vadd.f32 %v4796, %v5148
        %v5150 = vpop.f32.mrb[0].mxu0
        %v5151 = vadd.f32 %v4798, %v5150
        %v5152 = vpop.f32.mrb[0].mxu0
        %v5153 = vadd.f32 %v4800, %v5152
        %5154 = vmatprep.mubr.bf16.mxu0 %v4128
        %5155 = vmatmul.mubr.bf16.gmra.mrb[0].mxu0 %v4127
        %v5156 = vpop.f32.mrb[0].mxu0
        %v5157 = vadd.f32 %v4804, %v5156
        %v5158 = vpop.f32.mrb[0].mxu0
        %v5159 = vadd.f32 %v4806, %v5158
        %v5160 = vpop.f32.mrb[0].mxu0
        %v5161 = vadd.f32 %v4808, %v5160
        %v5162 = vpop.f32.mrb[0].mxu0
        %v5163 = vadd.f32 %v4810, %v5162
        %5164 = vmatprep.mubr.bf16.mxu0 %v4132
        %5165 = vmatmul.mubr.bf16.gmra.mrb[0].mxu0 %v4131
        %v5166 = vpop.f32.mrb[0].mxu0
        %v5167 = vadd.f32 %v4814, %v5166
        %v5168 = vpop.f32.mrb[0].mxu0
        %v5169 = vadd.f32 %v4816, %v5168
        %v5170 = vpop.f32.mrb[0].mxu0
        %v5171 = vadd.f32 %v4818, %v5170
        %v5172 = vpop.f32.mrb[0].mxu0
        %v5173 = vadd.f32 %v4820, %v5172
        %5174 = vmatprep.mubr.bf16.mxu0 %v4136
        %5175 = vmatmul.mubr.bf16.gmra.mrb[0].mxu0 %v4135
        %v5176 = vpop.f32.mrb[0].mxu0
        %v5177 = vadd.f32 %v4824, %v5176
        %v5178 = vpop.f32.mrb[0].mxu0
        %v5179 = vadd.f32 %v4826, %v5178
        %v5180 = vpop.f32.mrb[0].mxu0
        %v5181 = vadd.f32 %v4828, %v5180
        %v5182 = vpop.f32.mrb[0].mxu0
        %v5183 = vadd.f32 %v4830, %v5182
        %5184 = vmatprep.mubr.bf16.mxu0 %v4140
        %5185 = vmatmul.mubr.bf16.gmra.mrb[0].mxu0 %v4139
        %v5186 = vpop.f32.mrb[0].mxu0
        %v5187 = vadd.f32 %v4834, %v5186
        %v5188 = vpop.f32.mrb[0].mxu0
        %v5189 = vadd.f32 %v4836, %v5188
        %v5190 = vpop.f32.mrb[0].mxu0
        %v5191 = vadd.f32 %v4838, %v5190
        %v5192 = vpop.f32.mrb[0].mxu0
        %v5193 = vadd.f32 %v4840, %v5192
        %5194 = vmatprep.mubr.bf16.mxu0 %v4144
        %5195 = vmatmul.mubr.bf16.gmra.mrb[0].mxu0 %v4143
        %v5196 = vpop.f32.mrb[0].mxu0
        %v5197 = vadd.f32 %v4844, %v5196
        %v5198 = vpop.f32.mrb[0].mxu0
        %v5199 = vadd.f32 %v4846, %v5198
        %v5200 = vpop.f32.mrb[0].mxu0
        %v5201 = vadd.f32 %v4848, %v5200
        %v5202 = vpop.f32.mrb[0].mxu0
        %v5203 = vadd.f32 %v4850, %v5202
        %5204 = vmatprep.mubr.bf16.mxu0 %v4148
        %5205 = vmatmul.mubr.bf16.gmra.mrb[0].mxu0 %v4147
        %v5206 = vpop.f32.mrb[0].mxu0
        %v5207 = vadd.f32 %v4854, %v5206
        %v5208 = vpop.f32.mrb[0].mxu0
        %v5209 = vadd.f32 %v4856, %v5208
        %v5210 = vpop.f32.mrb[0].mxu0
        %v5211 = vadd.f32 %v4858, %v5210
        %v5212 = vpop.f32.mrb[0].mxu0
        %v5213 = vadd.f32 %v4860, %v5212
        %5214 = vmatprep.mubr.bf16.mxu0 %v4152
        %5215 = vmatmul.mubr.bf16.gmra.mrb[0].mxu0 %v4151
        %v5216 = vpop.f32.mrb[0].mxu0
        %v5217 = vadd.f32 %v4864, %v5216
        %v5218 = vpop.f32.mrb[0].mxu0
        %v5219 = vadd.f32 %v4866, %v5218
        %v5220 = vpop.f32.mrb[0].mxu0
        %v5221 = vadd.f32 %v4868, %v5220
        %v5222 = vpop.f32.mrb[0].mxu0
        %v5223 = vadd.f32 %v4870, %v5222
        %5224 = vmatprep.mubr.bf16.mxu0 %v4156
        %5225 = vmatmul.mubr.bf16.gmra.mrb[0].mxu0 %v4155
        %v5226 = vpop.f32.mrb[0].mxu0
        %v5227 = vadd.f32 %v4874, %v5226
        %v5228 = vpop.f32.mrb[0].mxu0
        %v5229 = vadd.f32 %v4876, %v5228
        %v5230 = vpop.f32.mrb[0].mxu0
        %v5231 = vadd.f32 %v4878, %v5230
        %v5232 = vpop.f32.mrb[0].mxu0
        %v5233 = vadd.f32 %v4880, %v5232
        %5234 = vmatprep.mubr.bf16.mxu0 %v4160
        %5235 = vmatmul.mubr.bf16.gmra.mrb[0].mxu0 %v4159
        %v5236 = vpop.f32.mrb[0].mxu0
        %v5237 = vadd.f32 %v4884, %v5236
        %v5238 = vpop.f32.mrb[0].mxu0
        %v5239 = vadd.f32 %v4886, %v5238
        %v5240 = vpop.f32.mrb[0].mxu0
        %v5241 = vadd.f32 %v4888, %v5240
        %v5242 = vpop.f32.mrb[0].mxu0
        %v5243 = vadd.f32 %v4890, %v5242
        %5244 = vmatprep.mubr.bf16.mxu0 %v4164
        %5245 = vmatmul.mubr.bf16.gmra.mrb[0].mxu0 %v4163
        %v5246 = vpop.f32.mrb[0].mxu0
        %v5247 = vadd.f32 %v4894, %v5246
        %v5248 = vpop.f32.mrb[0].mxu0
        %v5249 = vadd.f32 %v4896, %v5248
        %v5250 = vpop.f32.mrb[0].mxu0
        %v5251 = vadd.f32 %v4898, %v5250
        %v5252 = vpop.f32.mrb[0].mxu0
        %v5253 = vadd.f32 %v4900, %v5252
        %5254 = vdwg.mxu0
        %v5255 = vpack.c.bf16 %v3777, %v3777
        %v5256 = vpack.c.bf16 %v3814, %v3814
        %v5257 = vpack.c.bf16 %v3851, %v3851
        %v5258 = vpack.c.bf16 %v3888, %v3888
        %v5259 = vpack.c.bf16 %v3925, %v3925
        %v5260 = vpack.c.bf16 %v3962, %v3962
        %v5261 = vpack.c.bf16 %v3999, %v3999
        %v5262 = vpack.c.bf16 %v4036, %v4036
        %v5263 = vld [vmem:[#allocation5] sm:$0xff]
        %v5264 = vld [vmem:[#allocation5 + $0x8] sm:$0xff]
        %v5265 = vld [vmem:[#allocation5 + $0x10] sm:$0xff]
        %v5266 = vld [vmem:[#allocation5 + $0x18] sm:$0xff]
        %v5267 = vld [vmem:[#allocation5 + $0x20] sm:$0xff]
        %v5268 = vld [vmem:[#allocation5 + $0x28] sm:$0xff]
        %v5269 = vld [vmem:[#allocation5 + $0x30] sm:$0xff]
        %v5270 = vld [vmem:[#allocation5 + $0x38] sm:$0xff]
        %v5271 = vld [vmem:[#allocation5 + $0x40] sm:$0xff]
        %v5272 = vld [vmem:[#allocation5 + $0x48] sm:$0xff]
        %v5273 = vld [vmem:[#allocation5 + $0x50] sm:$0xff]
        %v5274 = vld [vmem:[#allocation5 + $0x58] sm:$0xff]
        %v5275 = vld [vmem:[#allocation5 + $0x60] sm:$0xff]
        %v5276 = vld [vmem:[#allocation5 + $0x68] sm:$0xff]
        %v5277 = vld [vmem:[#allocation5 + $0x70] sm:$0xff]
        %v5278 = vld [vmem:[#allocation5 + $0x78] sm:$0xff]
        %v5279 = vld [vmem:[#allocation5 + $0x80] sm:$0xff]
        %v5280 = vld [vmem:[#allocation5 + $0x88] sm:$0xff]
        %v5281 = vld [vmem:[#allocation5 + $0x90] sm:$0xff]
        %v5282 = vld [vmem:[#allocation5 + $0x98] sm:$0xff]
        %v5283 = vld [vmem:[#allocation5 + $0xa0] sm:$0xff]
        %v5284 = vld [vmem:[#allocation5 + $0xa8] sm:$0xff]
        %v5285 = vld [vmem:[#allocation5 + $0xb0] sm:$0xff]
        %v5286 = vld [vmem:[#allocation5 + $0xb8] sm:$0xff]
        %v5287 = vld [vmem:[#allocation5 + $0xc0] sm:$0xff]
        %v5288 = vld [vmem:[#allocation5 + $0xc8] sm:$0xff]
        %v5289 = vld [vmem:[#allocation5 + $0xd0] sm:$0xff]
        %v5290 = vld [vmem:[#allocation5 + $0xd8] sm:$0xff]
        %v5291 = vld [vmem:[#allocation5 + $0xe0] sm:$0xff]
        %v5292 = vld [vmem:[#allocation5 + $0xe8] sm:$0xff]
        %v5293 = vld [vmem:[#allocation5 + $0xf0] sm:$0xff]
        %v5294 = vld [vmem:[#allocation5 + $0xf8] sm:$0xff]
        %v5295 = vld [vmem:[#allocation5 + $0x100] sm:$0xff]
        %v5296 = vld [vmem:[#allocation5 + $0x108] sm:$0xff]
        %v5297 = vld [vmem:[#allocation5 + $0x110] sm:$0xff]
        %v5298 = vld [vmem:[#allocation5 + $0x118] sm:$0xff]
        %v5299 = vld [vmem:[#allocation5 + $0x120] sm:$0xff]
        %v5300 = vld [vmem:[#allocation5 + $0x128] sm:$0xff]
        %v5301 = vld [vmem:[#allocation5 + $0x130] sm:$0xff]
        %v5302 = vld [vmem:[#allocation5 + $0x138] sm:$0xff]
        %v5303 = vld [vmem:[#allocation5 + $0x140] sm:$0xff]
        %v5304 = vld [vmem:[#allocation5 + $0x148] sm:$0xff]
        %v5305 = vld [vmem:[#allocation5 + $0x150] sm:$0xff]
        %v5306 = vld [vmem:[#allocation5 + $0x158] sm:$0xff]
        %v5307 = vld [vmem:[#allocation5 + $0x160] sm:$0xff]
        %v5308 = vld [vmem:[#allocation5 + $0x168] sm:$0xff]
        %v5309 = vld [vmem:[#allocation5 + $0x170] sm:$0xff]
        %v5310 = vld [vmem:[#allocation5 + $0x178] sm:$0xff]
        %v5311 = vld [vmem:[#allocation5 + $0x180] sm:$0xff]
        %v5312 = vld [vmem:[#allocation5 + $0x188] sm:$0xff]
        %v5313 = vld [vmem:[#allocation5 + $0x190] sm:$0xff]
        %v5314 = vld [vmem:[#allocation5 + $0x198] sm:$0xff]
        %v5315 = vld [vmem:[#allocation5 + $0x1a0] sm:$0xff]
        %v5316 = vld [vmem:[#allocation5 + $0x1a8] sm:$0xff]
        %v5317 = vld [vmem:[#allocation5 + $0x1b0] sm:$0xff]
        %v5318 = vld [vmem:[#allocation5 + $0x1b8] sm:$0xff]
        %v5319 = vld [vmem:[#allocation5 + $0x1c0] sm:$0xff]
        %v5320 = vld [vmem:[#allocation5 + $0x1c8] sm:$0xff]
        %v5321 = vld [vmem:[#allocation5 + $0x1d0] sm:$0xff]
        %v5322 = vld [vmem:[#allocation5 + $0x1d8] sm:$0xff]
        %v5323 = vld [vmem:[#allocation5 + $0x1e0] sm:$0xff]
        %v5324 = vld [vmem:[#allocation5 + $0x1e8] sm:$0xff]
        %v5325 = vld [vmem:[#allocation5 + $0x1f0] sm:$0xff]
        %v5326 = vld [vmem:[#allocation5 + $0x1f8] sm:$0xff]
        %v5335 = vunpack.c.l.b16 %v5255
        %v5336 = vunpack.c.l.b16 %v5256
        %v5337 = vunpack.c.l.b16 %v5257
        %v5338 = vunpack.c.l.b16 %v5258
        %v5339 = vunpack.c.l.b16 %v5259
        %v5340 = vunpack.c.l.b16 %v5260
        %v5341 = vunpack.c.l.b16 %v5261
        %v5342 = vunpack.c.l.b16 %v5262
        %vm5343 = vcmask 1041409
        %v5344 = vsel %vm5343, %v5339, %v5335
        %v5345 = vsel %vm5343, %v5340, %v5336
        %v5346 = vsel %vm5343, %v5341, %v5337
        %v5347 = vsel %vm5343, %v5342, %v5338
        %v5348 = vpack.c.b16 %v5344, %v5344
        %v5349 = vpack.c.b16 %v5345, %v5345
        %v5350 = vpack.c.b16 %v5346, %v5346
        %v5351 = vpack.c.b16 %v5347, %v5347
        %v5420 = vunpack.c.l.b16 %v5263
        %v5421 = vunpack.c.h.b16 %v5263
        %v5422 = vunpack.c.l.b16 %v5264
        %v5423 = vunpack.c.h.b16 %v5264
        %v5424 = vunpack.c.l.b16 %v5265
        %v5425 = vunpack.c.h.b16 %v5265
        %v5426 = vunpack.c.l.b16 %v5266
        %v5427 = vunpack.c.h.b16 %v5266
        %v5428 = vunpack.c.l.b16 %v5267
        %v5429 = vunpack.c.h.b16 %v5267
        %v5430 = vunpack.c.l.b16 %v5268
        %v5431 = vunpack.c.h.b16 %v5268
        %v5432 = vunpack.c.l.b16 %v5269
        %v5433 = vunpack.c.h.b16 %v5269
        %v5434 = vunpack.c.l.b16 %v5270
        %v5435 = vunpack.c.h.b16 %v5270
        %v5436 = vunpack.c.l.b16 %v5271
        %v5437 = vunpack.c.h.b16 %v5271
        %v5438 = vunpack.c.l.b16 %v5272
        %v5439 = vunpack.c.h.b16 %v5272
        %v5440 = vunpack.c.l.b16 %v5273
        %v5441 = vunpack.c.h.b16 %v5273
        %v5442 = vunpack.c.l.b16 %v5274
        %v5443 = vunpack.c.h.b16 %v5274
        %v5444 = vunpack.c.l.b16 %v5275
        %v5445 = vunpack.c.h.b16 %v5275
        %v5446 = vunpack.c.l.b16 %v5276
        %v5447 = vunpack.c.h.b16 %v5276
        %v5448 = vunpack.c.l.b16 %v5277
        %v5449 = vunpack.c.h.b16 %v5277
        %v5450 = vunpack.c.l.b16 %v5278
        %v5451 = vunpack.c.h.b16 %v5278
        %v5452 = vunpack.c.l.b16 %v5279
        %v5453 = vunpack.c.h.b16 %v5279
        %v5454 = vunpack.c.l.b16 %v5280
        %v5455 = vunpack.c.h.b16 %v5280
        %v5456 = vunpack.c.l.b16 %v5281
        %v5457 = vunpack.c.h.b16 %v5281
        %v5458 = vunpack.c.l.b16 %v5282
        %v5459 = vunpack.c.h.b16 %v5282
        %v5460 = vunpack.c.l.b16 %v5283
        %v5461 = vunpack.c.h.b16 %v5283
        %v5462 = vunpack.c.l.b16 %v5284
        %v5463 = vunpack.c.h.b16 %v5284
        %v5464 = vunpack.c.l.b16 %v5285
        %v5465 = vunpack.c.h.b16 %v5285
        %v5466 = vunpack.c.l.b16 %v5286
        %v5467 = vunpack.c.h.b16 %v5286
        %v5468 = vunpack.c.l.b16 %v5287
        %v5469 = vunpack.c.h.b16 %v5287
        %v5470 = vunpack.c.l.b16 %v5288
        %v5471 = vunpack.c.h.b16 %v5288
        %v5472 = vunpack.c.l.b16 %v5289
        %v5473 = vunpack.c.h.b16 %v5289
        %v5474 = vunpack.c.l.b16 %v5290
        %v5475 = vunpack.c.h.b16 %v5290
        %v5476 = vunpack.c.l.b16 %v5291
        %v5477 = vunpack.c.h.b16 %v5291
        %v5478 = vunpack.c.l.b16 %v5292
        %v5479 = vunpack.c.h.b16 %v5292
        %v5480 = vunpack.c.l.b16 %v5293
        %v5481 = vunpack.c.h.b16 %v5293
        %v5482 = vunpack.c.l.b16 %v5294
        %v5483 = vunpack.c.h.b16 %v5294
        %v5484 = vunpack.c.l.b16 %v5295
        %v5485 = vunpack.c.h.b16 %v5295
        %v5486 = vunpack.c.l.b16 %v5296
        %v5487 = vunpack.c.h.b16 %v5296
        %v5488 = vunpack.c.l.b16 %v5297
        %v5489 = vunpack.c.h.b16 %v5297
        %v5490 = vunpack.c.l.b16 %v5298
        %v5491 = vunpack.c.h.b16 %v5298
        %v5492 = vunpack.c.l.b16 %v5299
        %v5493 = vunpack.c.h.b16 %v5299
        %v5494 = vunpack.c.l.b16 %v5300
        %v5495 = vunpack.c.h.b16 %v5300
        %v5496 = vunpack.c.l.b16 %v5301
        %v5497 = vunpack.c.h.b16 %v5301
        %v5498 = vunpack.c.l.b16 %v5302
        %v5499 = vunpack.c.h.b16 %v5302
        %v5500 = vunpack.c.l.b16 %v5303
        %v5501 = vunpack.c.h.b16 %v5303
        %v5502 = vunpack.c.l.b16 %v5304
        %v5503 = vunpack.c.h.b16 %v5304
        %v5504 = vunpack.c.l.b16 %v5305
        %v5505 = vunpack.c.h.b16 %v5305
        %v5506 = vunpack.c.l.b16 %v5306
        %v5507 = vunpack.c.h.b16 %v5306
        %v5508 = vunpack.c.l.b16 %v5307
        %v5509 = vunpack.c.h.b16 %v5307
        %v5510 = vunpack.c.l.b16 %v5308
        %v5511 = vunpack.c.h.b16 %v5308
        %v5512 = vunpack.c.l.b16 %v5309
        %v5513 = vunpack.c.h.b16 %v5309
        %v5514 = vunpack.c.l.b16 %v5310
        %v5515 = vunpack.c.h.b16 %v5310
        %v5516 = vunpack.c.l.b16 %v5311
        %v5517 = vunpack.c.h.b16 %v5311
        %v5518 = vunpack.c.l.b16 %v5312
        %v5519 = vunpack.c.h.b16 %v5312
        %v5520 = vunpack.c.l.b16 %v5313
        %v5521 = vunpack.c.h.b16 %v5313
        %v5522 = vunpack.c.l.b16 %v5314
        %v5523 = vunpack.c.h.b16 %v5314
        %v5524 = vunpack.c.l.b16 %v5315
        %v5525 = vunpack.c.h.b16 %v5315
        %v5526 = vunpack.c.l.b16 %v5316
        %v5527 = vunpack.c.h.b16 %v5316
        %v5528 = vunpack.c.l.b16 %v5317
        %v5529 = vunpack.c.h.b16 %v5317
        %v5530 = vunpack.c.l.b16 %v5318
        %v5531 = vunpack.c.h.b16 %v5318
        %v5532 = vunpack.c.l.b16 %v5319
        %v5533 = vunpack.c.h.b16 %v5319
        %v5534 = vunpack.c.l.b16 %v5320
        %v5535 = vunpack.c.h.b16 %v5320
        %v5536 = vunpack.c.l.b16 %v5321
        %v5537 = vunpack.c.h.b16 %v5321
        %v5538 = vunpack.c.l.b16 %v5322
        %v5539 = vunpack.c.h.b16 %v5322
        %v5540 = vunpack.c.l.b16 %v5323
        %v5541 = vunpack.c.h.b16 %v5323
        %v5542 = vunpack.c.l.b16 %v5324
        %v5543 = vunpack.c.h.b16 %v5324
        %v5544 = vunpack.c.l.b16 %v5325
        %v5545 = vunpack.c.h.b16 %v5325
        %v5546 = vunpack.c.l.b16 %v5326
        %v5547 = vunpack.c.h.b16 %v5326
        %v5548 = vpack.c.b16 %v5422, %v5420
        %v5549 = vpack.c.b16 %v5423, %v5421
        %v5550 = vpack.c.b16 %v5426, %v5424
        %v5551 = vpack.c.b16 %v5427, %v5425
        %v5552 = vpack.c.b16 %v5430, %v5428
        %v5553 = vpack.c.b16 %v5431, %v5429
        %v5554 = vpack.c.b16 %v5434, %v5432
        %v5555 = vpack.c.b16 %v5435, %v5433
        %v5556 = vpack.c.b16 %v5438, %v5436
        %v5557 = vpack.c.b16 %v5439, %v5437
        %v5558 = vpack.c.b16 %v5442, %v5440
        %v5559 = vpack.c.b16 %v5443, %v5441
        %v5560 = vpack.c.b16 %v5446, %v5444
        %v5561 = vpack.c.b16 %v5447, %v5445
        %v5562 = vpack.c.b16 %v5450, %v5448
        %v5563 = vpack.c.b16 %v5451, %v5449
        %v5564 = vpack.c.b16 %v5454, %v5452
        %v5565 = vpack.c.b16 %v5455, %v5453
        %v5566 = vpack.c.b16 %v5458, %v5456
        %v5567 = vpack.c.b16 %v5459, %v5457
        %v5568 = vpack.c.b16 %v5462, %v5460
        %v5569 = vpack.c.b16 %v5463, %v5461
        %v5570 = vpack.c.b16 %v5466, %v5464
        %v5571 = vpack.c.b16 %v5467, %v5465
        %v5572 = vpack.c.b16 %v5470, %v5468
        %v5573 = vpack.c.b16 %v5471, %v5469
        %v5574 = vpack.c.b16 %v5474, %v5472
        %v5575 = vpack.c.b16 %v5475, %v5473
        %v5576 = vpack.c.b16 %v5478, %v5476
        %v5577 = vpack.c.b16 %v5479, %v5477
        %v5578 = vpack.c.b16 %v5482, %v5480
        %v5579 = vpack.c.b16 %v5483, %v5481
        %v5580 = vpack.c.b16 %v5486, %v5484
        %v5581 = vpack.c.b16 %v5487, %v5485
        %v5582 = vpack.c.b16 %v5490, %v5488
        %v5583 = vpack.c.b16 %v5491, %v5489
        %v5584 = vpack.c.b16 %v5494, %v5492
        %v5585 = vpack.c.b16 %v5495, %v5493
        %v5586 = vpack.c.b16 %v5498, %v5496
        %v5587 = vpack.c.b16 %v5499, %v5497
        %v5588 = vpack.c.b16 %v5502, %v5500
        %v5589 = vpack.c.b16 %v5503, %v5501
        %v5590 = vpack.c.b16 %v5506, %v5504
        %v5591 = vpack.c.b16 %v5507, %v5505
        %v5592 = vpack.c.b16 %v5510, %v5508
        %v5593 = vpack.c.b16 %v5511, %v5509
        %v5594 = vpack.c.b16 %v5514, %v5512
        %v5595 = vpack.c.b16 %v5515, %v5513
        %v5596 = vpack.c.b16 %v5518, %v5516
        %v5597 = vpack.c.b16 %v5519, %v5517
        %v5598 = vpack.c.b16 %v5522, %v5520
        %v5599 = vpack.c.b16 %v5523, %v5521
        %v5600 = vpack.c.b16 %v5526, %v5524
        %v5601 = vpack.c.b16 %v5527, %v5525
        %v5602 = vpack.c.b16 %v5530, %v5528
        %v5603 = vpack.c.b16 %v5531, %v5529
        %v5604 = vpack.c.b16 %v5534, %v5532
        %v5605 = vpack.c.b16 %v5535, %v5533
        %v5606 = vpack.c.b16 %v5538, %v5536
        %v5607 = vpack.c.b16 %v5539, %v5537
        %v5608 = vpack.c.b16 %v5542, %v5540
        %v5609 = vpack.c.b16 %v5543, %v5541
        %v5610 = vpack.c.b16 %v5546, %v5544
        %v5611 = vpack.c.b16 %v5547, %v5545
        %5676 = vmatprep.subr.bf16.mxu0 %v5549
        %5677 = vmatpush1.bf16.msra.mxu0 %v5548
        %5678 = vmatprep.subr.bf16.mxu0 %v5551
        %5679 = vmatpush1.bf16.msra.mxu0 %v5550
        %5680 = vmatprep.subr.bf16.mxu0 %v5553
        %5681 = vmatpush1.bf16.msra.mxu0 %v5552
        %5682 = vmatprep.subr.bf16.mxu0 %v5555
        %5683 = vmatpush1.bf16.msra.mxu0 %v5554
        %5684 = vmatprep.subr.bf16.mxu0 %v5557
        %5685 = vmatpush1.bf16.msra.mxu0 %v5556
        %5686 = vmatprep.subr.bf16.mxu0 %v5559
        %5687 = vmatpush1.bf16.msra.mxu0 %v5558
        %5688 = vmatprep.subr.bf16.mxu0 %v5561
        %5689 = vmatpush1.bf16.msra.mxu0 %v5560
        %5690 = vmatprep.subr.bf16.mxu0 %v5563
        %5691 = vmatpush1.bf16.msra.mxu0 %v5562
        %5692 = vmatprep.subr.bf16.mxu0 %v5565
        %5693 = vmatpush1.bf16.msra.mxu0 %v5564
        %5694 = vmatprep.subr.bf16.mxu0 %v5567
        %5695 = vmatpush1.bf16.msra.mxu0 %v5566
        %5696 = vmatprep.subr.bf16.mxu0 %v5569
        %5697 = vmatpush1.bf16.msra.mxu0 %v5568
        %5698 = vmatprep.subr.bf16.mxu0 %v5571
        %5699 = vmatpush1.bf16.msra.mxu0 %v5570
        %5700 = vmatprep.subr.bf16.mxu0 %v5573
        %5701 = vmatpush1.bf16.msra.mxu0 %v5572
        %5702 = vmatprep.subr.bf16.mxu0 %v5575
        %5703 = vmatpush1.bf16.msra.mxu0 %v5574
        %5704 = vmatprep.subr.bf16.mxu0 %v5577
        %5705 = vmatpush1.bf16.msra.mxu0 %v5576
        %5706 = vmatprep.subr.bf16.mxu0 %v5579
        %5707 = vmatpush1.bf16.msra.mxu0 %v5578
        %5708 = vmatprep.mubr.bf16.mxu0 %v5349
        %5709 = vmatmul.mubr.bf16.gmra.mrb[0].mxu0 %v5348
        %v5710 = vpop.f32.mrb[0].mxu0
        %v5711 = vadd.f32 0.0, %v5710
        %v5712 = vpop.f32.mrb[0].mxu0
        %v5713 = vadd.f32 0.0, %v5712
        %v5714 = vpop.f32.mrb[0].mxu0
        %v5715 = vpop.f32.mrb[0].mxu0
        %5716 = vdwg.mxu0
        %5717 = vmatprep.subr.bf16.mxu0 %v5581
        %5718 = vmatpush1.bf16.msra.mxu0 %v5580
        %5719 = vmatprep.subr.bf16.mxu0 %v5583
        %5720 = vmatpush1.bf16.msra.mxu0 %v5582
        %5721 = vmatprep.subr.bf16.mxu0 %v5585
        %5722 = vmatpush1.bf16.msra.mxu0 %v5584
        %5723 = vmatprep.subr.bf16.mxu0 %v5587
        %5724 = vmatpush1.bf16.msra.mxu0 %v5586
        %5725 = vmatprep.subr.bf16.mxu0 %v5589
        %5726 = vmatpush1.bf16.msra.mxu0 %v5588
        %5727 = vmatprep.subr.bf16.mxu0 %v5591
        %5728 = vmatpush1.bf16.msra.mxu0 %v5590
        %5729 = vmatprep.subr.bf16.mxu0 %v5593
        %5730 = vmatpush1.bf16.msra.mxu0 %v5592
        %5731 = vmatprep.subr.bf16.mxu0 %v5595
        %5732 = vmatpush1.bf16.msra.mxu0 %v5594
        %5733 = vmatprep.subr.bf16.mxu0 %v5597
        %5734 = vmatpush1.bf16.msra.mxu0 %v5596
        %5735 = vmatprep.subr.bf16.mxu0 %v5599
        %5736 = vmatpush1.bf16.msra.mxu0 %v5598
        %5737 = vmatprep.subr.bf16.mxu0 %v5601
        %5738 = vmatpush1.bf16.msra.mxu0 %v5600
        %5739 = vmatprep.subr.bf16.mxu0 %v5603
        %5740 = vmatpush1.bf16.msra.mxu0 %v5602
        %5741 = vmatprep.subr.bf16.mxu0 %v5605
        %5742 = vmatpush1.bf16.msra.mxu0 %v5604
        %5743 = vmatprep.subr.bf16.mxu0 %v5607
        %5744 = vmatpush1.bf16.msra.mxu0 %v5606
        %5745 = vmatprep.subr.bf16.mxu0 %v5609
        %5746 = vmatpush1.bf16.msra.mxu0 %v5608
        %5747 = vmatprep.subr.bf16.mxu0 %v5611
        %5748 = vmatpush1.bf16.msra.mxu0 %v5610
        %5749 = vmatprep.mubr.bf16.mxu0 %v5351
        %5750 = vmatmul.mubr.bf16.gmra.mrb[0].mxu0 %v5350
        %v5751 = vpop.f32.mrb[0].mxu0
        %v5752 = vadd.f32 %v5711, %v5751
        %v5753 = vpop.f32.mrb[0].mxu0
        %v5754 = vadd.f32 %v5713, %v5753
        %v5755 = vpop.f32.mrb[0].mxu0
        %v5756 = vpop.f32.mrb[0].mxu0
        %5757 = vdwg.mxu0
        %v5760 = vcombine.low %v5752, %v5754
        %v5762 = vunpack.c.l.s4 1966171168
        %v5763 = vunpack.c.0.s8 %v5762
        %v5764 = vlaneseq
        %v5765 = vshrl.u32 %v5764, 7
        %v5766 = vsub.s32 %v5763, %v5765
        %v5767 = vrot.slane %v5760, %v5766
        %v5768 = vcombine.high %v5767, %v5767
        %v5770 = vunpack.c.l.s4 1966171168
        %v5771 = vunpack.c.0.s8 %v5770
        %v5772 = vlaneseq
        %v5773 = vshrl.u32 %v5772, 7
        %v5774 = vsub.s32 %v5771, %v5773
        %v5775 = vrot.slane %v5767, %v5774
        %v5777 = vunpack.c.l.s4 1966171168
        %v5778 = vunpack.c.0.s8 %v5777
        %v5779 = vlaneseq
        %v5780 = vshrl.u32 %v5779, 7
        %v5781 = vsub.s32 %v5778, %v5780
        %v5782 = vrot.slane %v5768, %v5781
        %v5783 = vlaneseq
        %v5784 = vshrl.u32 %v5783, 7
        %v5785 = vsub.s32 0, %v5784
        %v5786 = vrot.slane %v5775, %v5785
        %v5787 = vlaneseq
        %v5788 = vshrl.u32 %v5787, 7
        %v5789 = vsub.s32 1, %v5788
        %v5790 = vrot.slane %v5775, %v5789
        %v5791 = vlaneseq
        %v5792 = vshrl.u32 %v5791, 7
        %v5793 = vsub.s32 0, %v5792
        %v5794 = vrot.slane %v5782, %v5793
        %v5795 = vlaneseq
        %v5796 = vshrl.u32 %v5795, 7
        %v5797 = vsub.s32 1, %v5796
        %v5798 = vrot.slane %v5782, %v5797
        %v5803 = vadd.f32 %v4937, %v5786
        %v5804 = vadd.f32 %v4939, %v5790
        %v5805 = vadd.f32 %v4941, %v5786
        %v5806 = vadd.f32 %v4943, %v5790
        %v5807 = vadd.f32 %v4947, %v5786
        %v5808 = vadd.f32 %v4949, %v5790
        %v5809 = vadd.f32 %v4951, %v5786
        %v5810 = vadd.f32 %v4953, %v5790
        %v5811 = vadd.f32 %v4957, %v5786
        %v5812 = vadd.f32 %v4959, %v5790
        %v5813 = vadd.f32 %v4961, %v5786
        %v5814 = vadd.f32 %v4963, %v5790
        %v5815 = vadd.f32 %v4967, %v5786
        %v5816 = vadd.f32 %v4969, %v5790
        %v5817 = vadd.f32 %v4971, %v5786
        %v5818 = vadd.f32 %v4973, %v5790
        %v5819 = vadd.f32 %v4977, %v5786
        %v5820 = vadd.f32 %v4979, %v5790
        %v5821 = vadd.f32 %v4981, %v5786
        %v5822 = vadd.f32 %v4983, %v5790
        %v5823 = vadd.f32 %v4987, %v5786
        %v5824 = vadd.f32 %v4989, %v5790
        %v5825 = vadd.f32 %v4991, %v5786
        %v5826 = vadd.f32 %v4993, %v5790
        %v5827 = vadd.f32 %v4997, %v5786
        %v5828 = vadd.f32 %v4999, %v5790
        %v5829 = vadd.f32 %v5001, %v5786
        %v5830 = vadd.f32 %v5003, %v5790
        %v5831 = vadd.f32 %v5007, %v5786
        %v5832 = vadd.f32 %v5009, %v5790
        %v5833 = vadd.f32 %v5011, %v5786
        %v5834 = vadd.f32 %v5013, %v5790
        %v5835 = vadd.f32 %v5017, %v5786
        %v5836 = vadd.f32 %v5019, %v5790
        %v5837 = vadd.f32 %v5021, %v5786
        %v5838 = vadd.f32 %v5023, %v5790
        %v5839 = vadd.f32 %v5027, %v5786
        %v5840 = vadd.f32 %v5029, %v5790
        %v5841 = vadd.f32 %v5031, %v5786
        %v5842 = vadd.f32 %v5033, %v5790
        %v5843 = vadd.f32 %v5037, %v5786
        %v5844 = vadd.f32 %v5039, %v5790
        %v5845 = vadd.f32 %v5041, %v5786
        %v5846 = vadd.f32 %v5043, %v5790
        %v5847 = vadd.f32 %v5047, %v5786
        %v5848 = vadd.f32 %v5049, %v5790
        %v5849 = vadd.f32 %v5051, %v5786
        %v5850 = vadd.f32 %v5053, %v5790
        %v5851 = vadd.f32 %v5057, %v5786
        %v5852 = vadd.f32 %v5059, %v5790
        %v5853 = vadd.f32 %v5061, %v5786
        %v5854 = vadd.f32 %v5063, %v5790
        %v5855 = vadd.f32 %v5067, %v5786
        %v5856 = vadd.f32 %v5069, %v5790
        %v5857 = vadd.f32 %v5071, %v5786
        %v5858 = vadd.f32 %v5073, %v5790
        %v5859 = vadd.f32 %v5077, %v5786
        %v5860 = vadd.f32 %v5079, %v5790
        %v5861 = vadd.f32 %v5081, %v5786
        %v5862 = vadd.f32 %v5083, %v5790
        %v5863 = vadd.f32 %v5087, %v5786
        %v5864 = vadd.f32 %v5089, %v5790
        %v5865 = vadd.f32 %v5091, %v5786
        %v5866 = vadd.f32 %v5093, %v5790
        %v5867 = vadd.f32 %v5097, %v5794
        %v5868 = vadd.f32 %v5099, %v5798
        %v5869 = vadd.f32 %v5101, %v5794
        %v5870 = vadd.f32 %v5103, %v5798
        %v5871 = vadd.f32 %v5107, %v5794
        %v5872 = vadd.f32 %v5109, %v5798
        %v5873 = vadd.f32 %v5111, %v5794
        %v5874 = vadd.f32 %v5113, %v5798
        %v5875 = vadd.f32 %v5117, %v5794
        %v5876 = vadd.f32 %v5119, %v5798
        %v5877 = vadd.f32 %v5121, %v5794
        %v5878 = vadd.f32 %v5123, %v5798
        %v5879 = vadd.f32 %v5127, %v5794
        %v5880 = vadd.f32 %v5129, %v5798
        %v5881 = vadd.f32 %v5131, %v5794
        %v5882 = vadd.f32 %v5133, %v5798
        %v5883 = vadd.f32 %v5137, %v5794
        %v5884 = vadd.f32 %v5139, %v5798
        %v5885 = vadd.f32 %v5141, %v5794
        %v5886 = vadd.f32 %v5143, %v5798
        %v5887 = vadd.f32 %v5147, %v5794
        %v5888 = vadd.f32 %v5149, %v5798
        %v5889 = vadd.f32 %v5151, %v5794
        %v5890 = vadd.f32 %v5153, %v5798
        %v5891 = vadd.f32 %v5157, %v5794
        %v5892 = vadd.f32 %v5159, %v5798
        %v5893 = vadd.f32 %v5161, %v5794
        %v5894 = vadd.f32 %v5163, %v5798
        %v5895 = vadd.f32 %v5167, %v5794
        %v5896 = vadd.f32 %v5169, %v5798
        %v5897 = vadd.f32 %v5171, %v5794
        %v5898 = vadd.f32 %v5173, %v5798
        %v5899 = vadd.f32 %v5177, %v5794
        %v5900 = vadd.f32 %v5179, %v5798
        %v5901 = vadd.f32 %v5181, %v5794
        %v5902 = vadd.f32 %v5183, %v5798
        %v5903 = vadd.f32 %v5187, %v5794
        %v5904 = vadd.f32 %v5189, %v5798
        %v5905 = vadd.f32 %v5191, %v5794
        %v5906 = vadd.f32 %v5193, %v5798
        %v5907 = vadd.f32 %v5197, %v5794
        %v5908 = vadd.f32 %v5199, %v5798
        %v5909 = vadd.f32 %v5201, %v5794
        %v5910 = vadd.f32 %v5203, %v5798
        %v5911 = vadd.f32 %v5207, %v5794
        %v5912 = vadd.f32 %v5209, %v5798
        %v5913 = vadd.f32 %v5211, %v5794
        %v5914 = vadd.f32 %v5213, %v5798
        %v5915 = vadd.f32 %v5217, %v5794
        %v5916 = vadd.f32 %v5219, %v5798
        %v5917 = vadd.f32 %v5221, %v5794
        %v5918 = vadd.f32 %v5223, %v5798
        %v5919 = vadd.f32 %v5227, %v5794
        %v5920 = vadd.f32 %v5229, %v5798
        %v5921 = vadd.f32 %v5231, %v5794
        %v5922 = vadd.f32 %v5233, %v5798
        %v5923 = vadd.f32 %v5237, %v5794
        %v5924 = vadd.f32 %v5239, %v5798
        %v5925 = vadd.f32 %v5241, %v5794
        %v5926 = vadd.f32 %v5243, %v5798
        %v5927 = vadd.f32 %v5247, %v5794
        %v5928 = vadd.f32 %v5249, %v5798
        %v5929 = vadd.f32 %v5251, %v5794
        %v5930 = vadd.f32 %v5253, %v5798
        %v5931 = vld [vmem:[%s11] sm:$0x3]
        %v5933 = vlaneseq
        %v5934 = vshrl.u32 %v5933, 7
        %v5935 = vsub.s32 0, %v5934
        %v5936 = vrot.slane %v5931, %v5935
        %v5937 = vlaneseq
        %v5938 = vshrl.u32 %v5937, 7
        %v5939 = vsub.s32 1, %v5938
        %v5940 = vrot.slane %v5931, %v5939
        %v5943 = vadd.f32 %v5803, %v5936
        %v5944 = vadd.f32 %v5804, %v5940
        %v5945 = vadd.f32 %v5805, %v5936
        %v5946 = vadd.f32 %v5806, %v5940
        %v5947 = vadd.f32 %v5807, %v5936
        %v5948 = vadd.f32 %v5808, %v5940
        %v5949 = vadd.f32 %v5809, %v5936
        %v5950 = vadd.f32 %v5810, %v5940
        %v5951 = vadd.f32 %v5811, %v5936
        %v5952 = vadd.f32 %v5812, %v5940
        %v5953 = vadd.f32 %v5813, %v5936
        %v5954 = vadd.f32 %v5814, %v5940
        %v5955 = vadd.f32 %v5815, %v5936
        %v5956 = vadd.f32 %v5816, %v5940
        %v5957 = vadd.f32 %v5817, %v5936
        %v5958 = vadd.f32 %v5818, %v5940
        %v5959 = vadd.f32 %v5819, %v5936
        %v5960 = vadd.f32 %v5820, %v5940
        %v5961 = vadd.f32 %v5821, %v5936
        %v5962 = vadd.f32 %v5822, %v5940
        %v5963 = vadd.f32 %v5823, %v5936
        %v5964 = vadd.f32 %v5824, %v5940
        %v5965 = vadd.f32 %v5825, %v5936
        %v5966 = vadd.f32 %v5826, %v5940
        %v5967 = vadd.f32 %v5827, %v5936
        %v5968 = vadd.f32 %v5828, %v5940
        %v5969 = vadd.f32 %v5829, %v5936
        %v5970 = vadd.f32 %v5830, %v5940
        %v5971 = vadd.f32 %v5831, %v5936
        %v5972 = vadd.f32 %v5832, %v5940
        %v5973 = vadd.f32 %v5833, %v5936
        %v5974 = vadd.f32 %v5834, %v5940
        %v5975 = vadd.f32 %v5835, %v5936
        %v5976 = vadd.f32 %v5836, %v5940
        %v5977 = vadd.f32 %v5837, %v5936
        %v5978 = vadd.f32 %v5838, %v5940
        %v5979 = vadd.f32 %v5839, %v5936
        %v5980 = vadd.f32 %v5840, %v5940
        %v5981 = vadd.f32 %v5841, %v5936
        %v5982 = vadd.f32 %v5842, %v5940
        %v5983 = vadd.f32 %v5843, %v5936
        %v5984 = vadd.f32 %v5844, %v5940
        %v5985 = vadd.f32 %v5845, %v5936
        %v5986 = vadd.f32 %v5846, %v5940
        %v5987 = vadd.f32 %v5847, %v5936
        %v5988 = vadd.f32 %v5848, %v5940
        %v5989 = vadd.f32 %v5849, %v5936
        %v5990 = vadd.f32 %v5850, %v5940
        %v5991 = vadd.f32 %v5851, %v5936
        %v5992 = vadd.f32 %v5852, %v5940
        %v5993 = vadd.f32 %v5853, %v5936
        %v5994 = vadd.f32 %v5854, %v5940
        %v5995 = vadd.f32 %v5855, %v5936
        %v5996 = vadd.f32 %v5856, %v5940
        %v5997 = vadd.f32 %v5857, %v5936
        %v5998 = vadd.f32 %v5858, %v5940
        %v5999 = vadd.f32 %v5859, %v5936
        %v6000 = vadd.f32 %v5860, %v5940
        %v6001 = vadd.f32 %v5861, %v5936
        %v6002 = vadd.f32 %v5862, %v5940
        %v6003 = vadd.f32 %v5863, %v5936
        %v6004 = vadd.f32 %v5864, %v5940
        %v6005 = vadd.f32 %v5865, %v5936
        %v6006 = vadd.f32 %v5866, %v5940
        %v6007 = vadd.f32 %v5867, %v5936
        %v6008 = vadd.f32 %v5868, %v5940
        %v6009 = vadd.f32 %v5869, %v5936
        %v6010 = vadd.f32 %v5870, %v5940
        %v6011 = vadd.f32 %v5871, %v5936
        %v6012 = vadd.f32 %v5872, %v5940
        %v6013 = vadd.f32 %v5873, %v5936
        %v6014 = vadd.f32 %v5874, %v5940
        %v6015 = vadd.f32 %v5875, %v5936
        %v6016 = vadd.f32 %v5876, %v5940
        %v6017 = vadd.f32 %v5877, %v5936
        %v6018 = vadd.f32 %v5878, %v5940
        %v6019 = vadd.f32 %v5879, %v5936
        %v6020 = vadd.f32 %v5880, %v5940
        %v6021 = vadd.f32 %v5881, %v5936
        %v6022 = vadd.f32 %v5882, %v5940
        %v6023 = vadd.f32 %v5883, %v5936
        %v6024 = vadd.f32 %v5884, %v5940
        %v6025 = vadd.f32 %v5885, %v5936
        %v6026 = vadd.f32 %v5886, %v5940
        %v6027 = vadd.f32 %v5887, %v5936
        %v6028 = vadd.f32 %v5888, %v5940
        %v6029 = vadd.f32 %v5889, %v5936
        %v6030 = vadd.f32 %v5890, %v5940
        %v6031 = vadd.f32 %v5891, %v5936
        %v6032 = vadd.f32 %v5892, %v5940
        %v6033 = vadd.f32 %v5893, %v5936
        %v6034 = vadd.f32 %v5894, %v5940
        %v6035 = vadd.f32 %v5895, %v5936
        %v6036 = vadd.f32 %v5896, %v5940
        %v6037 = vadd.f32 %v5897, %v5936
        %v6038 = vadd.f32 %v5898, %v5940
        %v6039 = vadd.f32 %v5899, %v5936
        %v6040 = vadd.f32 %v5900, %v5940
        %v6041 = vadd.f32 %v5901, %v5936
        %v6042 = vadd.f32 %v5902, %v5940
        %v6043 = vadd.f32 %v5903, %v5936
        %v6044 = vadd.f32 %v5904, %v5940
        %v6045 = vadd.f32 %v5905, %v5936
        %v6046 = vadd.f32 %v5906, %v5940
        %v6047 = vadd.f32 %v5907, %v5936
        %v6048 = vadd.f32 %v5908, %v5940
        %v6049 = vadd.f32 %v5909, %v5936
        %v6050 = vadd.f32 %v5910, %v5940
        %v6051 = vadd.f32 %v5911, %v5936
        %v6052 = vadd.f32 %v5912, %v5940
        %v6053 = vadd.f32 %v5913, %v5936
        %v6054 = vadd.f32 %v5914, %v5940
        %v6055 = vadd.f32 %v5915, %v5936
        %v6056 = vadd.f32 %v5916, %v5940
        %v6057 = vadd.f32 %v5917, %v5936
        %v6058 = vadd.f32 %v5918, %v5940
        %v6059 = vadd.f32 %v5919, %v5936
        %v6060 = vadd.f32 %v5920, %v5940
        %v6061 = vadd.f32 %v5921, %v5936
        %v6062 = vadd.f32 %v5922, %v5940
        %v6063 = vadd.f32 %v5923, %v5936
        %v6064 = vadd.f32 %v5924, %v5940
        %v6065 = vadd.f32 %v5925, %v5936
        %v6066 = vadd.f32 %v5926, %v5940
        %v6067 = vadd.f32 %v5927, %v5936
        %v6068 = vadd.f32 %v5928, %v5940
        %v6069 = vadd.f32 %v5929, %v5936
        %v6070 = vadd.f32 %v5930, %v5940
        %v6071 = vmax.f32 %v5943, 0.0
        %v6072 = vmax.f32 %v5944, 0.0
        %v6073 = vmax.f32 %v5945, 0.0
        %v6074 = vmax.f32 %v5946, 0.0
        %v6075 = vmax.f32 %v5947, 0.0
        %v6076 = vmax.f32 %v5948, 0.0
        %v6077 = vmax.f32 %v5949, 0.0
        %v6078 = vmax.f32 %v5950, 0.0
        %v6079 = vmax.f32 %v5951, 0.0
        %v6080 = vmax.f32 %v5952, 0.0
        %v6081 = vmax.f32 %v5953, 0.0
        %v6082 = vmax.f32 %v5954, 0.0
        %v6083 = vmax.f32 %v5955, 0.0
        %v6084 = vmax.f32 %v5956, 0.0
        %v6085 = vmax.f32 %v5957, 0.0
        %v6086 = vmax.f32 %v5958, 0.0
        %v6087 = vmax.f32 %v5959, 0.0
        %v6088 = vmax.f32 %v5960, 0.0
        %v6089 = vmax.f32 %v5961, 0.0
        %v6090 = vmax.f32 %v5962, 0.0
        %v6091 = vmax.f32 %v5963, 0.0
        %v6092 = vmax.f32 %v5964, 0.0
        %v6093 = vmax.f32 %v5965, 0.0
        %v6094 = vmax.f32 %v5966, 0.0
        %v6095 = vmax.f32 %v5967, 0.0
        %v6096 = vmax.f32 %v5968, 0.0
        %v6097 = vmax.f32 %v5969, 0.0
        %v6098 = vmax.f32 %v5970, 0.0
        %v6099 = vmax.f32 %v5971, 0.0
        %v6100 = vmax.f32 %v5972, 0.0
        %v6101 = vmax.f32 %v5973, 0.0
        %v6102 = vmax.f32 %v5974, 0.0
        %v6103 = vmax.f32 %v5975, 0.0
        %v6104 = vmax.f32 %v5976, 0.0
        %v6105 = vmax.f32 %v5977, 0.0
        %v6106 = vmax.f32 %v5978, 0.0
        %v6107 = vmax.f32 %v5979, 0.0
        %v6108 = vmax.f32 %v5980, 0.0
        %v6109 = vmax.f32 %v5981, 0.0
        %v6110 = vmax.f32 %v5982, 0.0
        %v6111 = vmax.f32 %v5983, 0.0
        %v6112 = vmax.f32 %v5984, 0.0
        %v6113 = vmax.f32 %v5985, 0.0
        %v6114 = vmax.f32 %v5986, 0.0
        %v6115 = vmax.f32 %v5987, 0.0
        %v6116 = vmax.f32 %v5988, 0.0
        %v6117 = vmax.f32 %v5989, 0.0
        %v6118 = vmax.f32 %v5990, 0.0
        %v6119 = vmax.f32 %v5991, 0.0
        %v6120 = vmax.f32 %v5992, 0.0
        %v6121 = vmax.f32 %v5993, 0.0
        %v6122 = vmax.f32 %v5994, 0.0
        %v6123 = vmax.f32 %v5995, 0.0
        %v6124 = vmax.f32 %v5996, 0.0
        %v6125 = vmax.f32 %v5997, 0.0
        %v6126 = vmax.f32 %v5998, 0.0
        %v6127 = vmax.f32 %v5999, 0.0
        %v6128 = vmax.f32 %v6000, 0.0
        %v6129 = vmax.f32 %v6001, 0.0
        %v6130 = vmax.f32 %v6002, 0.0
        %v6131 = vmax.f32 %v6003, 0.0
        %v6132 = vmax.f32 %v6004, 0.0
        %v6133 = vmax.f32 %v6005, 0.0
        %v6134 = vmax.f32 %v6006, 0.0
        %v6135 = vmax.f32 %v6007, 0.0
        %v6136 = vmax.f32 %v6008, 0.0
        %v6137 = vmax.f32 %v6009, 0.0
        %v6138 = vmax.f32 %v6010, 0.0
        %v6139 = vmax.f32 %v6011, 0.0
        %v6140 = vmax.f32 %v6012, 0.0
        %v6141 = vmax.f32 %v6013, 0.0
        %v6142 = vmax.f32 %v6014, 0.0
        %v6143 = vmax.f32 %v6015, 0.0
        %v6144 = vmax.f32 %v6016, 0.0
        %v6145 = vmax.f32 %v6017, 0.0
        %v6146 = vmax.f32 %v6018, 0.0
        %v6147 = vmax.f32 %v6019, 0.0
        %v6148 = vmax.f32 %v6020, 0.0
        %v6149 = vmax.f32 %v6021, 0.0
        %v6150 = vmax.f32 %v6022, 0.0
        %v6151 = vmax.f32 %v6023, 0.0
        %v6152 = vmax.f32 %v6024, 0.0
        %v6153 = vmax.f32 %v6025, 0.0
        %v6154 = vmax.f32 %v6026, 0.0
        %v6155 = vmax.f32 %v6027, 0.0
        %v6156 = vmax.f32 %v6028, 0.0
        %v6157 = vmax.f32 %v6029, 0.0
        %v6158 = vmax.f32 %v6030, 0.0
        %v6159 = vmax.f32 %v6031, 0.0
        %v6160 = vmax.f32 %v6032, 0.0
        %v6161 = vmax.f32 %v6033, 0.0
        %v6162 = vmax.f32 %v6034, 0.0
        %v6163 = vmax.f32 %v6035, 0.0
        %v6164 = vmax.f32 %v6036, 0.0
        %v6165 = vmax.f32 %v6037, 0.0
        %v6166 = vmax.f32 %v6038, 0.0
        %v6167 = vmax.f32 %v6039, 0.0
        %v6168 = vmax.f32 %v6040, 0.0
        %v6169 = vmax.f32 %v6041, 0.0
        %v6170 = vmax.f32 %v6042, 0.0
        %v6171 = vmax.f32 %v6043, 0.0
        %v6172 = vmax.f32 %v6044, 0.0
        %v6173 = vmax.f32 %v6045, 0.0
        %v6174 = vmax.f32 %v6046, 0.0
        %v6175 = vmax.f32 %v6047, 0.0
        %v6176 = vmax.f32 %v6048, 0.0
        %v6177 = vmax.f32 %v6049, 0.0
        %v6178 = vmax.f32 %v6050, 0.0
        %v6179 = vmax.f32 %v6051, 0.0
        %v6180 = vmax.f32 %v6052, 0.0
        %v6181 = vmax.f32 %v6053, 0.0
        %v6182 = vmax.f32 %v6054, 0.0
        %v6183 = vmax.f32 %v6055, 0.0
        %v6184 = vmax.f32 %v6056, 0.0
        %v6185 = vmax.f32 %v6057, 0.0
        %v6186 = vmax.f32 %v6058, 0.0
        %v6187 = vmax.f32 %v6059, 0.0
        %v6188 = vmax.f32 %v6060, 0.0
        %v6189 = vmax.f32 %v6061, 0.0
        %v6190 = vmax.f32 %v6062, 0.0
        %v6191 = vmax.f32 %v6063, 0.0
        %v6192 = vmax.f32 %v6064, 0.0
        %v6193 = vmax.f32 %v6065, 0.0
        %v6194 = vmax.f32 %v6066, 0.0
        %v6195 = vmax.f32 %v6067, 0.0
        %v6196 = vmax.f32 %v6068, 0.0
        %v6197 = vmax.f32 %v6069, 0.0
        %v6198 = vmax.f32 %v6070, 0.0
        %v6199 = vpack.c.bf16 %v6073, %v6071
        %v6200 = vpack.c.bf16 %v6074, %v6072
        %v6201 = vpack.c.bf16 %v6077, %v6075
        %v6202 = vpack.c.bf16 %v6078, %v6076
        %v6203 = vpack.c.bf16 %v6081, %v6079
        %v6204 = vpack.c.bf16 %v6082, %v6080
        %v6205 = vpack.c.bf16 %v6085, %v6083
        %v6206 = vpack.c.bf16 %v6086, %v6084
        %v6207 = vpack.c.bf16 %v6089, %v6087
        %v6208 = vpack.c.bf16 %v6090, %v6088
        %v6209 = vpack.c.bf16 %v6093, %v6091
        %v6210 = vpack.c.bf16 %v6094, %v6092
        %v6211 = vpack.c.bf16 %v6097, %v6095
        %v6212 = vpack.c.bf16 %v6098, %v6096
        %v6213 = vpack.c.bf16 %v6101, %v6099
        %v6214 = vpack.c.bf16 %v6102, %v6100
        %v6215 = vpack.c.bf16 %v6105, %v6103
        %v6216 = vpack.c.bf16 %v6106, %v6104
        %v6217 = vpack.c.bf16 %v6109, %v6107
        %v6218 = vpack.c.bf16 %v6110, %v6108
        %v6219 = vpack.c.bf16 %v6113, %v6111
        %v6220 = vpack.c.bf16 %v6114, %v6112
        %v6221 = vpack.c.bf16 %v6117, %v6115
        %v6222 = vpack.c.bf16 %v6118, %v6116
        %v6223 = vpack.c.bf16 %v6121, %v6119
        %v6224 = vpack.c.bf16 %v6122, %v6120
        %v6225 = vpack.c.bf16 %v6125, %v6123
        %v6226 = vpack.c.bf16 %v6126, %v6124
        %v6227 = vpack.c.bf16 %v6129, %v6127
        %v6228 = vpack.c.bf16 %v6130, %v6128
        %v6229 = vpack.c.bf16 %v6133, %v6131
        %v6230 = vpack.c.bf16 %v6134, %v6132
        %v6231 = vpack.c.bf16 %v6137, %v6135
        %v6232 = vpack.c.bf16 %v6138, %v6136
        %v6233 = vpack.c.bf16 %v6141, %v6139
        %v6234 = vpack.c.bf16 %v6142, %v6140
        %v6235 = vpack.c.bf16 %v6145, %v6143
        %v6236 = vpack.c.bf16 %v6146, %v6144
        %v6237 = vpack.c.bf16 %v6149, %v6147
        %v6238 = vpack.c.bf16 %v6150, %v6148
        %v6239 = vpack.c.bf16 %v6153, %v6151
        %v6240 = vpack.c.bf16 %v6154, %v6152
        %v6241 = vpack.c.bf16 %v6157, %v6155
        %v6242 = vpack.c.bf16 %v6158, %v6156
        %v6243 = vpack.c.bf16 %v6161, %v6159
        %v6244 = vpack.c.bf16 %v6162, %v6160
        %v6245 = vpack.c.bf16 %v6165, %v6163
        %v6246 = vpack.c.bf16 %v6166, %v6164
        %v6247 = vpack.c.bf16 %v6169, %v6167
        %v6248 = vpack.c.bf16 %v6170, %v6168
        %v6249 = vpack.c.bf16 %v6173, %v6171
        %v6250 = vpack.c.bf16 %v6174, %v6172
        %v6251 = vpack.c.bf16 %v6177, %v6175
        %v6252 = vpack.c.bf16 %v6178, %v6176
        %v6253 = vpack.c.bf16 %v6181, %v6179
        %v6254 = vpack.c.bf16 %v6182, %v6180
        %v6255 = vpack.c.bf16 %v6185, %v6183
        %v6256 = vpack.c.bf16 %v6186, %v6184
        %v6257 = vpack.c.bf16 %v6189, %v6187
        %v6258 = vpack.c.bf16 %v6190, %v6188
        %v6259 = vpack.c.bf16 %v6193, %v6191
        %v6260 = vpack.c.bf16 %v6194, %v6192
        %v6261 = vpack.c.bf16 %v6197, %v6195
        %v6262 = vpack.c.bf16 %v6198, %v6196
        %v6263 = vld [vmem:[#allocation7] sm:$0xf]
        %v6264 = vld [vmem:[#allocation7 + $0x4] sm:$0xf]
        %v6265 = vld [vmem:[#allocation7 + $0x8] sm:$0xf]
        %v6266 = vld [vmem:[#allocation7 + $0xc] sm:$0xf]
        %v6267 = vld [vmem:[#allocation7 + $0x10] sm:$0xf]
        %v6268 = vld [vmem:[#allocation7 + $0x14] sm:$0xf]
        %v6269 = vld [vmem:[#allocation7 + $0x18] sm:$0xf]
        %v6270 = vld [vmem:[#allocation7 + $0x1c] sm:$0xf]
        %v6271 = vld [vmem:[#allocation7 + $0x20] sm:$0xf]
        %v6272 = vld [vmem:[#allocation7 + $0x24] sm:$0xf]
        %v6273 = vld [vmem:[#allocation7 + $0x28] sm:$0xf]
        %v6274 = vld [vmem:[#allocation7 + $0x2c] sm:$0xf]
        %v6275 = vld [vmem:[#allocation7 + $0x30] sm:$0xf]
        %v6276 = vld [vmem:[#allocation7 + $0x34] sm:$0xf]
        %v6277 = vld [vmem:[#allocation7 + $0x38] sm:$0xf]
        %v6278 = vld [vmem:[#allocation7 + $0x3c] sm:$0xf]
        %v6279 = vld [vmem:[#allocation7 + $0x40] sm:$0xf]
        %v6280 = vld [vmem:[#allocation7 + $0x44] sm:$0xf]
        %v6281 = vld [vmem:[#allocation7 + $0x48] sm:$0xf]
        %v6282 = vld [vmem:[#allocation7 + $0x4c] sm:$0xf]
        %v6283 = vld [vmem:[#allocation7 + $0x50] sm:$0xf]
        %v6284 = vld [vmem:[#allocation7 + $0x54] sm:$0xf]
        %v6285 = vld [vmem:[#allocation7 + $0x58] sm:$0xf]
        %v6286 = vld [vmem:[#allocation7 + $0x5c] sm:$0xf]
        %v6287 = vld [vmem:[#allocation7 + $0x60] sm:$0xf]
        %v6288 = vld [vmem:[#allocation7 + $0x64] sm:$0xf]
        %v6289 = vld [vmem:[#allocation7 + $0x68] sm:$0xf]
        %v6290 = vld [vmem:[#allocation7 + $0x6c] sm:$0xf]
        %v6291 = vld [vmem:[#allocation7 + $0x70] sm:$0xf]
        %v6292 = vld [vmem:[#allocation7 + $0x74] sm:$0xf]
        %v6293 = vld [vmem:[#allocation7 + $0x78] sm:$0xf]
        %v6294 = vld [vmem:[#allocation7 + $0x7c] sm:$0xf]
        %v6295 = vld [vmem:[%s13] sm:$0x1]
        %v6297 = vlaneseq
        %v6298 = vshrl.u32 %v6297, 7
        %v6299 = vsub.s32 0, %v6298
        %v6300 = vrot.slane %v6295, %v6299
        %v6334 = vunpack.c.l.b16 %v6263
        %v6335 = vunpack.c.l.b16 %v6264
        %v6336 = vunpack.c.l.b16 %v6265
        %v6337 = vunpack.c.l.b16 %v6266
        %v6338 = vunpack.c.l.b16 %v6267
        %v6339 = vunpack.c.l.b16 %v6268
        %v6340 = vunpack.c.l.b16 %v6269
        %v6341 = vunpack.c.l.b16 %v6270
        %v6342 = vunpack.c.l.b16 %v6271
        %v6343 = vunpack.c.l.b16 %v6272
        %v6344 = vunpack.c.l.b16 %v6273
        %v6345 = vunpack.c.l.b16 %v6274
        %v6346 = vunpack.c.l.b16 %v6275
        %v6347 = vunpack.c.l.b16 %v6276
        %v6348 = vunpack.c.l.b16 %v6277
        %v6349 = vunpack.c.l.b16 %v6278
        %v6350 = vunpack.c.l.b16 %v6279
        %v6351 = vunpack.c.l.b16 %v6280
        %v6352 = vunpack.c.l.b16 %v6281
        %v6353 = vunpack.c.l.b16 %v6282
        %v6354 = vunpack.c.l.b16 %v6283
        %v6355 = vunpack.c.l.b16 %v6284
        %v6356 = vunpack.c.l.b16 %v6285
        %v6357 = vunpack.c.l.b16 %v6286
        %v6358 = vunpack.c.l.b16 %v6287
        %v6359 = vunpack.c.l.b16 %v6288
        %v6360 = vunpack.c.l.b16 %v6289
        %v6361 = vunpack.c.l.b16 %v6290
        %v6362 = vunpack.c.l.b16 %v6291
        %v6363 = vunpack.c.l.b16 %v6292
        %v6364 = vunpack.c.l.b16 %v6293
        %v6365 = vunpack.c.l.b16 %v6294
        %v6366 = vpack.c.b16 %v6335, %v6334
        %v6367 = vpack.c.b16 %v6337, %v6336
        %v6368 = vpack.c.b16 %v6339, %v6338
        %v6369 = vpack.c.b16 %v6341, %v6340
        %v6370 = vpack.c.b16 %v6343, %v6342
        %v6371 = vpack.c.b16 %v6345, %v6344
        %v6372 = vpack.c.b16 %v6347, %v6346
        %v6373 = vpack.c.b16 %v6349, %v6348
        %v6374 = vpack.c.b16 %v6351, %v6350
        %v6375 = vpack.c.b16 %v6353, %v6352
        %v6376 = vpack.c.b16 %v6355, %v6354
        %v6377 = vpack.c.b16 %v6357, %v6356
        %v6378 = vpack.c.b16 %v6359, %v6358
        %v6379 = vpack.c.b16 %v6361, %v6360
        %v6380 = vpack.c.b16 %v6363, %v6362
        %v6381 = vpack.c.b16 %v6365, %v6364
        %6398 = vmatprep.subr.bf16.mxu0 0
        %6399 = vmatpush1.bf16.msra.mxu0 %v6366
        %6400 = vmatprep.subr.bf16.mxu0 0
        %6401 = vmatpush1.bf16.msra.mxu0 %v6367
        %6402 = vmatprep.subr.bf16.mxu0 0
        %6403 = vmatpush1.bf16.msra.mxu0 %v6368
        %6404 = vmatprep.subr.bf16.mxu0 0
        %6405 = vmatpush1.bf16.msra.mxu0 %v6369
        %6406 = vmatprep.subr.bf16.mxu0 0
        %6407 = vmatpush1.bf16.msra.mxu0 %v6370
        %6408 = vmatprep.subr.bf16.mxu0 0
        %6409 = vmatpush1.bf16.msra.mxu0 %v6371
        %6410 = vmatprep.subr.bf16.mxu0 0
        %6411 = vmatpush1.bf16.msra.mxu0 %v6372
        %6412 = vmatprep.subr.bf16.mxu0 0
        %6413 = vmatpush1.bf16.msra.mxu0 %v6373
        %6414 = vmatprep.subr.bf16.mxu0 0
        %6415 = vmatpush1.bf16.msra.mxu0 %v6374
        %6416 = vmatprep.subr.bf16.mxu0 0
        %6417 = vmatpush1.bf16.msra.mxu0 %v6375
        %6418 = vmatprep.subr.bf16.mxu0 0
        %6419 = vmatpush1.bf16.msra.mxu0 %v6376
        %6420 = vmatprep.subr.bf16.mxu0 0
        %6421 = vmatpush1.bf16.msra.mxu0 %v6377
        %6422 = vmatprep.subr.bf16.mxu0 0
        %6423 = vmatpush1.bf16.msra.mxu0 %v6378
        %6424 = vmatprep.subr.bf16.mxu0 0
        %6425 = vmatpush1.bf16.msra.mxu0 %v6379
        %6426 = vmatprep.subr.bf16.mxu0 0
        %6427 = vmatpush1.bf16.msra.mxu0 %v6380
        %6428 = vmatprep.subr.bf16.mxu0 0
        %6429 = vmatpush1.bf16.msra.mxu0 %v6381
        %6430 = vmatprep.mubr.bf16.mxu0 %v6200
        %6431 = vmatmul.mubr.bf16.gmra.mrb[0].mxu0 %v6199
        %v6432 = vpop.f32.mrb[0].mxu0
        %v6433 = vadd.f32 %v6300, %v6432
        %v6434 = vpop.f32.mrb[0].mxu0
        %v6435 = vpop.f32.mrb[0].mxu0
        %v6436 = vadd.f32 %v6300, %v6435
        %v6437 = vpop.f32.mrb[0].mxu0
        %6438 = vmatprep.mubr.bf16.mxu0 %v6202
        %6439 = vmatmul.mubr.bf16.gmra.mrb[0].mxu0 %v6201
        %v6440 = vpop.f32.mrb[0].mxu0
        %v6441 = vadd.f32 %v6300, %v6440
        %v6442 = vpop.f32.mrb[0].mxu0
        %v6443 = vpop.f32.mrb[0].mxu0
        %v6444 = vadd.f32 %v6300, %v6443
        %v6445 = vpop.f32.mrb[0].mxu0
        %6446 = vmatprep.mubr.bf16.mxu0 %v6204
        %6447 = vmatmul.mubr.bf16.gmra.mrb[0].mxu0 %v6203
        %v6448 = vpop.f32.mrb[0].mxu0
        %v6449 = vadd.f32 %v6300, %v6448
        %v6450 = vpop.f32.mrb[0].mxu0
        %v6451 = vpop.f32.mrb[0].mxu0
        %v6452 = vadd.f32 %v6300, %v6451
        %v6453 = vpop.f32.mrb[0].mxu0
        %6454 = vmatprep.mubr.bf16.mxu0 %v6206
        %6455 = vmatmul.mubr.bf16.gmra.mrb[0].mxu0 %v6205
        %v6456 = vpop.f32.mrb[0].mxu0
        %v6457 = vadd.f32 %v6300, %v6456
        %v6458 = vpop.f32.mrb[0].mxu0
        %v6459 = vpop.f32.mrb[0].mxu0
        %v6460 = vadd.f32 %v6300, %v6459
        %v6461 = vpop.f32.mrb[0].mxu0
        %6462 = vmatprep.mubr.bf16.mxu0 %v6208
        %6463 = vmatmul.mubr.bf16.gmra.mrb[0].mxu0 %v6207
        %v6464 = vpop.f32.mrb[0].mxu0
        %v6465 = vadd.f32 %v6300, %v6464
        %v6466 = vpop.f32.mrb[0].mxu0
        %v6467 = vpop.f32.mrb[0].mxu0
        %v6468 = vadd.f32 %v6300, %v6467
        %v6469 = vpop.f32.mrb[0].mxu0
        %6470 = vmatprep.mubr.bf16.mxu0 %v6210
        %6471 = vmatmul.mubr.bf16.gmra.mrb[0].mxu0 %v6209
        %v6472 = vpop.f32.mrb[0].mxu0
        %v6473 = vadd.f32 %v6300, %v6472
        %v6474 = vpop.f32.mrb[0].mxu0
        %v6475 = vpop.f32.mrb[0].mxu0
        %v6476 = vadd.f32 %v6300, %v6475
        %v6477 = vpop.f32.mrb[0].mxu0
        %6478 = vmatprep.mubr.bf16.mxu0 %v6212
        %6479 = vmatmul.mubr.bf16.gmra.mrb[0].mxu0 %v6211
        %v6480 = vpop.f32.mrb[0].mxu0
        %v6481 = vadd.f32 %v6300, %v6480
        %v6482 = vpop.f32.mrb[0].mxu0
        %v6483 = vpop.f32.mrb[0].mxu0
        %v6484 = vadd.f32 %v6300, %v6483
        %v6485 = vpop.f32.mrb[0].mxu0
        %6486 = vmatprep.mubr.bf16.mxu0 %v6214
        %6487 = vmatmul.mubr.bf16.gmra.mrb[0].mxu0 %v6213
        %v6488 = vpop.f32.mrb[0].mxu0
        %v6489 = vadd.f32 %v6300, %v6488
        %v6490 = vpop.f32.mrb[0].mxu0
        %v6491 = vpop.f32.mrb[0].mxu0
        %v6492 = vadd.f32 %v6300, %v6491
        %v6493 = vpop.f32.mrb[0].mxu0
        %6494 = vmatprep.mubr.bf16.mxu0 %v6216
        %6495 = vmatmul.mubr.bf16.gmra.mrb[0].mxu0 %v6215
        %v6496 = vpop.f32.mrb[0].mxu0
        %v6497 = vadd.f32 %v6300, %v6496
        %v6498 = vpop.f32.mrb[0].mxu0
        %v6499 = vpop.f32.mrb[0].mxu0
        %v6500 = vadd.f32 %v6300, %v6499
        %v6501 = vpop.f32.mrb[0].mxu0
        %6502 = vmatprep.mubr.bf16.mxu0 %v6218
        %6503 = vmatmul.mubr.bf16.gmra.mrb[0].mxu0 %v6217
        %v6504 = vpop.f32.mrb[0].mxu0
        %v6505 = vadd.f32 %v6300, %v6504
        %v6506 = vpop.f32.mrb[0].mxu0
        %v6507 = vpop.f32.mrb[0].mxu0
        %v6508 = vadd.f32 %v6300, %v6507
        %v6509 = vpop.f32.mrb[0].mxu0
        %6510 = vmatprep.mubr.bf16.mxu0 %v6220
        %6511 = vmatmul.mubr.bf16.gmra.mrb[0].mxu0 %v6219
        %v6512 = vpop.f32.mrb[0].mxu0
        %v6513 = vadd.f32 %v6300, %v6512
        %v6514 = vpop.f32.mrb[0].mxu0
        %v6515 = vpop.f32.mrb[0].mxu0
        %v6516 = vadd.f32 %v6300, %v6515
        %v6517 = vpop.f32.mrb[0].mxu0
        %6518 = vmatprep.mubr.bf16.mxu0 %v6222
        %6519 = vmatmul.mubr.bf16.gmra.mrb[0].mxu0 %v6221
        %v6520 = vpop.f32.mrb[0].mxu0
        %v6521 = vadd.f32 %v6300, %v6520
        %v6522 = vpop.f32.mrb[0].mxu0
        %v6523 = vpop.f32.mrb[0].mxu0
        %v6524 = vadd.f32 %v6300, %v6523
        %v6525 = vpop.f32.mrb[0].mxu0
        %6526 = vmatprep.mubr.bf16.mxu0 %v6224
        %6527 = vmatmul.mubr.bf16.gmra.mrb[0].mxu0 %v6223
        %v6528 = vpop.f32.mrb[0].mxu0
        %v6529 = vadd.f32 %v6300, %v6528
        %v6530 = vpop.f32.mrb[0].mxu0
        %v6531 = vpop.f32.mrb[0].mxu0
        %v6532 = vadd.f32 %v6300, %v6531
        %v6533 = vpop.f32.mrb[0].mxu0
        %6534 = vmatprep.mubr.bf16.mxu0 %v6226
        %6535 = vmatmul.mubr.bf16.gmra.mrb[0].mxu0 %v6225
        %v6536 = vpop.f32.mrb[0].mxu0
        %v6537 = vadd.f32 %v6300, %v6536
        %v6538 = vpop.f32.mrb[0].mxu0
        %v6539 = vpop.f32.mrb[0].mxu0
        %v6540 = vadd.f32 %v6300, %v6539
        %v6541 = vpop.f32.mrb[0].mxu0
        %6542 = vmatprep.mubr.bf16.mxu0 %v6228
        %6543 = vmatmul.mubr.bf16.gmra.mrb[0].mxu0 %v6227
        %v6544 = vpop.f32.mrb[0].mxu0
        %v6545 = vadd.f32 %v6300, %v6544
        %v6546 = vpop.f32.mrb[0].mxu0
        %v6547 = vpop.f32.mrb[0].mxu0
        %v6548 = vadd.f32 %v6300, %v6547
        %v6549 = vpop.f32.mrb[0].mxu0
        %6550 = vmatprep.mubr.bf16.mxu0 %v6230
        %6551 = vmatmul.mubr.bf16.gmra.mrb[0].mxu0 %v6229
        %v6552 = vpop.f32.mrb[0].mxu0
        %v6553 = vadd.f32 %v6300, %v6552
        %v6554 = vpop.f32.mrb[0].mxu0
        %v6555 = vpop.f32.mrb[0].mxu0
        %v6556 = vadd.f32 %v6300, %v6555
        %v6557 = vpop.f32.mrb[0].mxu0
        %6558 = vmatprep.mubr.bf16.mxu0 %v6232
        %6559 = vmatmul.mubr.bf16.gmra.mrb[0].mxu0 %v6231
        %v6560 = vpop.f32.mrb[0].mxu0
        %v6561 = vadd.f32 %v6300, %v6560
        %v6562 = vpop.f32.mrb[0].mxu0
        %v6563 = vpop.f32.mrb[0].mxu0
        %v6564 = vadd.f32 %v6300, %v6563
        %v6565 = vpop.f32.mrb[0].mxu0
        %6566 = vmatprep.mubr.bf16.mxu0 %v6234
        %6567 = vmatmul.mubr.bf16.gmra.mrb[0].mxu0 %v6233
        %v6568 = vpop.f32.mrb[0].mxu0
        %v6569 = vadd.f32 %v6300, %v6568
        %v6570 = vpop.f32.mrb[0].mxu0
        %v6571 = vpop.f32.mrb[0].mxu0
        %v6572 = vadd.f32 %v6300, %v6571
        %v6573 = vpop.f32.mrb[0].mxu0
        %6574 = vmatprep.mubr.bf16.mxu0 %v6236
        %6575 = vmatmul.mubr.bf16.gmra.mrb[0].mxu0 %v6235
        %v6576 = vpop.f32.mrb[0].mxu0
        %v6577 = vadd.f32 %v6300, %v6576
        %v6578 = vpop.f32.mrb[0].mxu0
        %v6579 = vpop.f32.mrb[0].mxu0
        %v6580 = vadd.f32 %v6300, %v6579
        %v6581 = vpop.f32.mrb[0].mxu0
        %6582 = vmatprep.mubr.bf16.mxu0 %v6238
        %6583 = vmatmul.mubr.bf16.gmra.mrb[0].mxu0 %v6237
        %v6584 = vpop.f32.mrb[0].mxu0
        %v6585 = vadd.f32 %v6300, %v6584
        %v6586 = vpop.f32.mrb[0].mxu0
        %v6587 = vpop.f32.mrb[0].mxu0
        %v6588 = vadd.f32 %v6300, %v6587
        %v6589 = vpop.f32.mrb[0].mxu0
        %6590 = vmatprep.mubr.bf16.mxu0 %v6240
        %6591 = vmatmul.mubr.bf16.gmra.mrb[0].mxu0 %v6239
        %v6592 = vpop.f32.mrb[0].mxu0
        %v6593 = vadd.f32 %v6300, %v6592
        %v6594 = vpop.f32.mrb[0].mxu0
        %v6595 = vpop.f32.mrb[0].mxu0
        %v6596 = vadd.f32 %v6300, %v6595
        %v6597 = vpop.f32.mrb[0].mxu0
        %6598 = vmatprep.mubr.bf16.mxu0 %v6242
        %6599 = vmatmul.mubr.bf16.gmra.mrb[0].mxu0 %v6241
        %v6600 = vpop.f32.mrb[0].mxu0
        %v6601 = vadd.f32 %v6300, %v6600
        %v6602 = vpop.f32.mrb[0].mxu0
        %v6603 = vpop.f32.mrb[0].mxu0
        %v6604 = vadd.f32 %v6300, %v6603
        %v6605 = vpop.f32.mrb[0].mxu0
        %6606 = vmatprep.mubr.bf16.mxu0 %v6244
        %6607 = vmatmul.mubr.bf16.gmra.mrb[0].mxu0 %v6243
        %v6608 = vpop.f32.mrb[0].mxu0
        %v6609 = vadd.f32 %v6300, %v6608
        %v6610 = vpop.f32.mrb[0].mxu0
        %v6611 = vpop.f32.mrb[0].mxu0
        %v6612 = vadd.f32 %v6300, %v6611
        %v6613 = vpop.f32.mrb[0].mxu0
        %6614 = vmatprep.mubr.bf16.mxu0 %v6246
        %6615 = vmatmul.mubr.bf16.gmra.mrb[0].mxu0 %v6245
        %v6616 = vpop.f32.mrb[0].mxu0
        %v6617 = vadd.f32 %v6300, %v6616
        %v6618 = vpop.f32.mrb[0].mxu0
        %v6619 = vpop.f32.mrb[0].mxu0
        %v6620 = vadd.f32 %v6300, %v6619
        %v6621 = vpop.f32.mrb[0].mxu0
        %6622 = vmatprep.mubr.bf16.mxu0 %v6248
        %6623 = vmatmul.mubr.bf16.gmra.mrb[0].mxu0 %v6247
        %v6624 = vpop.f32.mrb[0].mxu0
        %v6625 = vadd.f32 %v6300, %v6624
        %v6626 = vpop.f32.mrb[0].mxu0
        %v6627 = vpop.f32.mrb[0].mxu0
        %v6628 = vadd.f32 %v6300, %v6627
        %v6629 = vpop.f32.mrb[0].mxu0
        %6630 = vmatprep.mubr.bf16.mxu0 %v6250
        %6631 = vmatmul.mubr.bf16.gmra.mrb[0].mxu0 %v6249
        %v6632 = vpop.f32.mrb[0].mxu0
        %v6633 = vadd.f32 %v6300, %v6632
        %v6634 = vpop.f32.mrb[0].mxu0
        %v6635 = vpop.f32.mrb[0].mxu0
        %v6636 = vadd.f32 %v6300, %v6635
        %v6637 = vpop.f32.mrb[0].mxu0
        %6638 = vmatprep.mubr.bf16.mxu0 %v6252
        %6639 = vmatmul.mubr.bf16.gmra.mrb[0].mxu0 %v6251
        %v6640 = vpop.f32.mrb[0].mxu0
        %v6641 = vadd.f32 %v6300, %v6640
        %v6642 = vpop.f32.mrb[0].mxu0
        %v6643 = vpop.f32.mrb[0].mxu0
        %v6644 = vadd.f32 %v6300, %v6643
        %v6645 = vpop.f32.mrb[0].mxu0
        %6646 = vmatprep.mubr.bf16.mxu0 %v6254
        %6647 = vmatmul.mubr.bf16.gmra.mrb[0].mxu0 %v6253
        %v6648 = vpop.f32.mrb[0].mxu0
        %v6649 = vadd.f32 %v6300, %v6648
        %v6650 = vpop.f32.mrb[0].mxu0
        %v6651 = vpop.f32.mrb[0].mxu0
        %v6652 = vadd.f32 %v6300, %v6651
        %v6653 = vpop.f32.mrb[0].mxu0
        %6654 = vmatprep.mubr.bf16.mxu0 %v6256
        %6655 = vmatmul.mubr.bf16.gmra.mrb[0].mxu0 %v6255
        %v6656 = vpop.f32.mrb[0].mxu0
        %v6657 = vadd.f32 %v6300, %v6656
        %v6658 = vpop.f32.mrb[0].mxu0
        %v6659 = vpop.f32.mrb[0].mxu0
        %v6660 = vadd.f32 %v6300, %v6659
        %v6661 = vpop.f32.mrb[0].mxu0
        %6662 = vmatprep.mubr.bf16.mxu0 %v6258
        %6663 = vmatmul.mubr.bf16.gmra.mrb[0].mxu0 %v6257
        %v6664 = vpop.f32.mrb[0].mxu0
        %v6665 = vadd.f32 %v6300, %v6664
        %v6666 = vpop.f32.mrb[0].mxu0
        %v6667 = vpop.f32.mrb[0].mxu0
        %v6668 = vadd.f32 %v6300, %v6667
        %v6669 = vpop.f32.mrb[0].mxu0
        %6670 = vmatprep.mubr.bf16.mxu0 %v6260
        %6671 = vmatmul.mubr.bf16.gmra.mrb[0].mxu0 %v6259
        %v6672 = vpop.f32.mrb[0].mxu0
        %v6673 = vadd.f32 %v6300, %v6672
        %v6674 = vpop.f32.mrb[0].mxu0
        %v6675 = vpop.f32.mrb[0].mxu0
        %v6676 = vadd.f32 %v6300, %v6675
        %v6677 = vpop.f32.mrb[0].mxu0
        %6678 = vmatprep.mubr.bf16.mxu0 %v6262
        %6679 = vmatmul.mubr.bf16.gmra.mrb[0].mxu0 %v6261
        %v6680 = vpop.f32.mrb[0].mxu0
        %v6681 = vadd.f32 %v6300, %v6680
        %v6682 = vpop.f32.mrb[0].mxu0
        %v6683 = vpop.f32.mrb[0].mxu0
        %v6684 = vadd.f32 %v6300, %v6683
        %v6685 = vpop.f32.mrb[0].mxu0
        %6686 = vdwg.mxu0
        %v6687 = vmax.f32 %v6433, 0.0
        %v6688 = vmax.f32 %v6436, 0.0
        %v6689 = vmax.f32 %v6441, 0.0
        %v6690 = vmax.f32 %v6444, 0.0
        %v6691 = vmax.f32 %v6449, 0.0
        %v6692 = vmax.f32 %v6452, 0.0
        %v6693 = vmax.f32 %v6457, 0.0
        %v6694 = vmax.f32 %v6460, 0.0
        %v6695 = vmax.f32 %v6465, 0.0
        %v6696 = vmax.f32 %v6468, 0.0
        %v6697 = vmax.f32 %v6473, 0.0
        %v6698 = vmax.f32 %v6476, 0.0
        %v6699 = vmax.f32 %v6481, 0.0
        %v6700 = vmax.f32 %v6484, 0.0
        %v6701 = vmax.f32 %v6489, 0.0
        %v6702 = vmax.f32 %v6492, 0.0
        %v6703 = vmax.f32 %v6497, 0.0
        %v6704 = vmax.f32 %v6500, 0.0
        %v6705 = vmax.f32 %v6505, 0.0
        %v6706 = vmax.f32 %v6508, 0.0
        %v6707 = vmax.f32 %v6513, 0.0
        %v6708 = vmax.f32 %v6516, 0.0
        %v6709 = vmax.f32 %v6521, 0.0
        %v6710 = vmax.f32 %v6524, 0.0
        %v6711 = vmax.f32 %v6529, 0.0
        %v6712 = vmax.f32 %v6532, 0.0
        %v6713 = vmax.f32 %v6537, 0.0
        %v6714 = vmax.f32 %v6540, 0.0
        %v6715 = vmax.f32 %v6545, 0.0
        %v6716 = vmax.f32 %v6548, 0.0
        %v6717 = vmax.f32 %v6553, 0.0
        %v6718 = vmax.f32 %v6556, 0.0
        %v6719 = vmax.f32 %v6561, 0.0
        %v6720 = vmax.f32 %v6564, 0.0
        %v6721 = vmax.f32 %v6569, 0.0
        %v6722 = vmax.f32 %v6572, 0.0
        %v6723 = vmax.f32 %v6577, 0.0
        %v6724 = vmax.f32 %v6580, 0.0
        %v6725 = vmax.f32 %v6585, 0.0
        %v6726 = vmax.f32 %v6588, 0.0
        %v6727 = vmax.f32 %v6593, 0.0
        %v6728 = vmax.f32 %v6596, 0.0
        %v6729 = vmax.f32 %v6601, 0.0
        %v6730 = vmax.f32 %v6604, 0.0
        %v6731 = vmax.f32 %v6609, 0.0
        %v6732 = vmax.f32 %v6612, 0.0
        %v6733 = vmax.f32 %v6617, 0.0
        %v6734 = vmax.f32 %v6620, 0.0
        %v6735 = vmax.f32 %v6625, 0.0
        %v6736 = vmax.f32 %v6628, 0.0
        %v6737 = vmax.f32 %v6633, 0.0
        %v6738 = vmax.f32 %v6636, 0.0
        %v6739 = vmax.f32 %v6641, 0.0
        %v6740 = vmax.f32 %v6644, 0.0
        %v6741 = vmax.f32 %v6649, 0.0
        %v6742 = vmax.f32 %v6652, 0.0
        %v6743 = vmax.f32 %v6657, 0.0
        %v6744 = vmax.f32 %v6660, 0.0
        %v6745 = vmax.f32 %v6665, 0.0
        %v6746 = vmax.f32 %v6668, 0.0
        %v6747 = vmax.f32 %v6673, 0.0
        %v6748 = vmax.f32 %v6676, 0.0
        %v6749 = vmax.f32 %v6681, 0.0
        %v6750 = vmax.f32 %v6684, 0.0
        %v6751 = vpack.c.bf16 %v6688, %v6687
        %v6752 = vpack.c.bf16 %v6690, %v6689
        %v6753 = vpack.c.bf16 %v6692, %v6691
        %v6754 = vpack.c.bf16 %v6694, %v6693
        %v6755 = vpack.c.bf16 %v6696, %v6695
        %v6756 = vpack.c.bf16 %v6698, %v6697
        %v6757 = vpack.c.bf16 %v6700, %v6699
        %v6758 = vpack.c.bf16 %v6702, %v6701
        %v6759 = vpack.c.bf16 %v6704, %v6703
        %v6760 = vpack.c.bf16 %v6706, %v6705
        %v6761 = vpack.c.bf16 %v6708, %v6707
        %v6762 = vpack.c.bf16 %v6710, %v6709
        %v6763 = vpack.c.bf16 %v6712, %v6711
        %v6764 = vpack.c.bf16 %v6714, %v6713
        %v6765 = vpack.c.bf16 %v6716, %v6715
        %v6766 = vpack.c.bf16 %v6718, %v6717
        %v6767 = vpack.c.bf16 %v6720, %v6719
        %v6768 = vpack.c.bf16 %v6722, %v6721
        %v6769 = vpack.c.bf16 %v6724, %v6723
        %v6770 = vpack.c.bf16 %v6726, %v6725
        %v6771 = vpack.c.bf16 %v6728, %v6727
        %v6772 = vpack.c.bf16 %v6730, %v6729
        %v6773 = vpack.c.bf16 %v6732, %v6731
        %v6774 = vpack.c.bf16 %v6734, %v6733
        %v6775 = vpack.c.bf16 %v6736, %v6735
        %v6776 = vpack.c.bf16 %v6738, %v6737
        %v6777 = vpack.c.bf16 %v6740, %v6739
        %v6778 = vpack.c.bf16 %v6742, %v6741
        %v6779 = vpack.c.bf16 %v6744, %v6743
        %v6780 = vpack.c.bf16 %v6746, %v6745
        %v6781 = vpack.c.bf16 %v6748, %v6747
        %v6782 = vpack.c.bf16 %v6750, %v6749
        %v6783 = vld [vmem:[%s14] sm:$0xf]
        %v6784 = vld [vmem:[%s14 + $0x4] sm:$0xf]
        %v6785 = vld [vmem:[%s14 + $0x8] sm:$0xf]
        %v6786 = vld [vmem:[%s14 + $0xc] sm:$0xf]
        %v6787 = vld [vmem:[%s14 + $0x10] sm:$0xf]
        %v6788 = vld [vmem:[%s14 + $0x14] sm:$0xf]
        %v6789 = vld [vmem:[%s14 + $0x18] sm:$0xf]
        %v6790 = vld [vmem:[%s14 + $0x1c] sm:$0xf]
        %v6791 = vld [vmem:[%s14 + $0x20] sm:$0xf]
        %v6792 = vld [vmem:[%s14 + $0x24] sm:$0xf]
        %v6793 = vld [vmem:[%s14 + $0x28] sm:$0xf]
        %v6794 = vld [vmem:[%s14 + $0x2c] sm:$0xf]
        %v6795 = vld [vmem:[%s14 + $0x30] sm:$0xf]
        %v6796 = vld [vmem:[%s14 + $0x34] sm:$0xf]
        %v6797 = vld [vmem:[%s14 + $0x38] sm:$0xf]
        %v6798 = vld [vmem:[%s14 + $0x3c] sm:$0xf]
        %v6799 = vld [vmem:[#allocation2] sm:$0x1]
        %v6801 = vlaneseq
        %v6802 = vshrl.u32 %v6801, 7
        %v6803 = vsub.s32 0, %v6802
        %v6804 = vrot.slane %v6799, %v6803
        %v6822 = vunpack.c.l.b16 %v6783
        %v6823 = vunpack.c.l.b16 %v6784
        %v6824 = vunpack.c.l.b16 %v6785
        %v6825 = vunpack.c.l.b16 %v6786
        %v6826 = vunpack.c.l.b16 %v6787
        %v6827 = vunpack.c.l.b16 %v6788
        %v6828 = vunpack.c.l.b16 %v6789
        %v6829 = vunpack.c.l.b16 %v6790
        %v6830 = vunpack.c.l.b16 %v6791
        %v6831 = vunpack.c.l.b16 %v6792
        %v6832 = vunpack.c.l.b16 %v6793
        %v6833 = vunpack.c.l.b16 %v6794
        %v6834 = vunpack.c.l.b16 %v6795
        %v6835 = vunpack.c.l.b16 %v6796
        %v6836 = vunpack.c.l.b16 %v6797
        %v6837 = vunpack.c.l.b16 %v6798
        %v6838 = vpack.c.b16 %v6823, %v6822
        %v6839 = vpack.c.b16 %v6825, %v6824
        %v6840 = vpack.c.b16 %v6827, %v6826
        %v6841 = vpack.c.b16 %v6829, %v6828
        %v6842 = vpack.c.b16 %v6831, %v6830
        %v6843 = vpack.c.b16 %v6833, %v6832
        %v6844 = vpack.c.b16 %v6835, %v6834
        %v6845 = vpack.c.b16 %v6837, %v6836
        %6854 = vmatprep.subr.bf16.mxu0 0
        %6855 = vmatpush1.bf16.msra.mxu0 %v6838
        %6856 = vmatprep.subr.bf16.mxu0 0
        %6857 = vmatpush1.bf16.msra.mxu0 %v6839
        %6858 = vmatprep.subr.bf16.mxu0 0
        %6859 = vmatpush1.bf16.msra.mxu0 %v6840
        %6860 = vmatprep.subr.bf16.mxu0 0
        %6861 = vmatpush1.bf16.msra.mxu0 %v6841
        %6862 = vmatprep.subr.bf16.mxu0 0
        %6863 = vmatpush1.bf16.msra.mxu0 %v6842
        %6864 = vmatprep.subr.bf16.mxu0 0
        %6865 = vmatpush1.bf16.msra.mxu0 %v6843
        %6866 = vmatprep.subr.bf16.mxu0 0
        %6867 = vmatpush1.bf16.msra.mxu0 %v6844
        %6868 = vmatprep.subr.bf16.mxu0 0
        %6869 = vmatpush1.bf16.msra.mxu0 %v6845
        %6870 = vmatprep.subr.bf16.mxu0 0
        %6871 = vmatpush1.bf16.msra.mxu0 0
        %6872 = vmatprep.subr.bf16.mxu0 0
        %6873 = vmatpush1.bf16.msra.mxu0 0
        %6874 = vmatprep.subr.bf16.mxu0 0
        %6875 = vmatpush1.bf16.msra.mxu0 0
        %6876 = vmatprep.subr.bf16.mxu0 0
        %6877 = vmatpush1.bf16.msra.mxu0 0
        %6878 = vmatprep.subr.bf16.mxu0 0
        %6879 = vmatpush1.bf16.msra.mxu0 0
        %6880 = vmatprep.subr.bf16.mxu0 0
        %6881 = vmatpush1.bf16.msra.mxu0 0
        %6882 = vmatprep.subr.bf16.mxu0 0
        %6883 = vmatpush1.bf16.msra.mxu0 0
        %6884 = vmatprep.subr.bf16.mxu0 0
        %6885 = vmatpush1.bf16.msra.mxu0 0
        %6886 = vmatprep.mubr.bf16.mxu0 0
        %6887 = vmatmul.mubr.bf16.gmra.mrb[0].mxu0 %v6751
        %v6888 = vpop.f32.mrb[0].mxu0
        %v6889 = vadd.f32 %v6804, %v6888
        %v6890 = vpop.f32.mrb[0].mxu0
        %v6891 = vpop.f32.mrb[0].mxu0
        %v6892 = vadd.f32 %v6804, %v6891
        %v6893 = vpop.f32.mrb[0].mxu0
        %6894 = vmatprep.mubr.bf16.mxu0 0
        %6895 = vmatmul.mubr.bf16.gmra.mrb[0].mxu0 %v6752
        %v6896 = vpop.f32.mrb[0].mxu0
        %v6897 = vadd.f32 %v6804, %v6896
        %v6898 = vpop.f32.mrb[0].mxu0
        %v6899 = vpop.f32.mrb[0].mxu0
        %v6900 = vadd.f32 %v6804, %v6899
        %v6901 = vpop.f32.mrb[0].mxu0
        %6902 = vmatprep.mubr.bf16.mxu0 0
        %6903 = vmatmul.mubr.bf16.gmra.mrb[0].mxu0 %v6753
        %v6904 = vpop.f32.mrb[0].mxu0
        %v6905 = vadd.f32 %v6804, %v6904
        %v6906 = vpop.f32.mrb[0].mxu0
        %v6907 = vpop.f32.mrb[0].mxu0
        %v6908 = vadd.f32 %v6804, %v6907
        %v6909 = vpop.f32.mrb[0].mxu0
        %6910 = vmatprep.mubr.bf16.mxu0 0
        %6911 = vmatmul.mubr.bf16.gmra.mrb[0].mxu0 %v6754
        %v6912 = vpop.f32.mrb[0].mxu0
        %v6913 = vadd.f32 %v6804, %v6912
        %v6914 = vpop.f32.mrb[0].mxu0
        %v6915 = vpop.f32.mrb[0].mxu0
        %v6916 = vadd.f32 %v6804, %v6915
        %v6917 = vpop.f32.mrb[0].mxu0
        %6918 = vmatprep.mubr.bf16.mxu0 0
        %6919 = vmatmul.mubr.bf16.gmra.mrb[0].mxu0 %v6755
        %v6920 = vpop.f32.mrb[0].mxu0
        %v6921 = vadd.f32 %v6804, %v6920
        %v6922 = vpop.f32.mrb[0].mxu0
        %v6923 = vpop.f32.mrb[0].mxu0
        %v6924 = vadd.f32 %v6804, %v6923
        %v6925 = vpop.f32.mrb[0].mxu0
        %6926 = vmatprep.mubr.bf16.mxu0 0
        %6927 = vmatmul.mubr.bf16.gmra.mrb[0].mxu0 %v6756
        %v6928 = vpop.f32.mrb[0].mxu0
        %v6929 = vadd.f32 %v6804, %v6928
        %v6930 = vpop.f32.mrb[0].mxu0
        %v6931 = vpop.f32.mrb[0].mxu0
        %v6932 = vadd.f32 %v6804, %v6931
        %v6933 = vpop.f32.mrb[0].mxu0
        %6934 = vmatprep.mubr.bf16.mxu0 0
        %6935 = vmatmul.mubr.bf16.gmra.mrb[0].mxu0 %v6757
        %v6936 = vpop.f32.mrb[0].mxu0
        %v6937 = vadd.f32 %v6804, %v6936
        %v6938 = vpop.f32.mrb[0].mxu0
        %v6939 = vpop.f32.mrb[0].mxu0
        %v6940 = vadd.f32 %v6804, %v6939
        %v6941 = vpop.f32.mrb[0].mxu0
        %6942 = vmatprep.mubr.bf16.mxu0 0
        %6943 = vmatmul.mubr.bf16.gmra.mrb[0].mxu0 %v6758
        %v6944 = vpop.f32.mrb[0].mxu0
        %v6945 = vadd.f32 %v6804, %v6944
        %v6946 = vpop.f32.mrb[0].mxu0
        %v6947 = vpop.f32.mrb[0].mxu0
        %v6948 = vadd.f32 %v6804, %v6947
        %v6949 = vpop.f32.mrb[0].mxu0
        %6950 = vmatprep.mubr.bf16.mxu0 0
        %6951 = vmatmul.mubr.bf16.gmra.mrb[0].mxu0 %v6759
        %v6952 = vpop.f32.mrb[0].mxu0
        %v6953 = vadd.f32 %v6804, %v6952
        %v6954 = vpop.f32.mrb[0].mxu0
        %v6955 = vpop.f32.mrb[0].mxu0
        %v6956 = vadd.f32 %v6804, %v6955
        %v6957 = vpop.f32.mrb[0].mxu0
        %6958 = vmatprep.mubr.bf16.mxu0 0
        %6959 = vmatmul.mubr.bf16.gmra.mrb[0].mxu0 %v6760
        %v6960 = vpop.f32.mrb[0].mxu0
        %v6961 = vadd.f32 %v6804, %v6960
        %v6962 = vpop.f32.mrb[0].mxu0
        %v6963 = vpop.f32.mrb[0].mxu0
        %v6964 = vadd.f32 %v6804, %v6963
        %v6965 = vpop.f32.mrb[0].mxu0
        %6966 = vmatprep.mubr.bf16.mxu0 0
        %6967 = vmatmul.mubr.bf16.gmra.mrb[0].mxu0 %v6761
        %v6968 = vpop.f32.mrb[0].mxu0
        %v6969 = vadd.f32 %v6804, %v6968
        %v6970 = vpop.f32.mrb[0].mxu0
        %v6971 = vpop.f32.mrb[0].mxu0
        %v6972 = vadd.f32 %v6804, %v6971
        %v6973 = vpop.f32.mrb[0].mxu0
        %6974 = vmatprep.mubr.bf16.mxu0 0
        %6975 = vmatmul.mubr.bf16.gmra.mrb[0].mxu0 %v6762
        %v6976 = vpop.f32.mrb[0].mxu0
        %v6977 = vadd.f32 %v6804, %v6976
        %v6978 = vpop.f32.mrb[0].mxu0
        %v6979 = vpop.f32.mrb[0].mxu0
        %v6980 = vadd.f32 %v6804, %v6979
        %v6981 = vpop.f32.mrb[0].mxu0
        %6982 = vmatprep.mubr.bf16.mxu0 0
        %6983 = vmatmul.mubr.bf16.gmra.mrb[0].mxu0 %v6763
        %v6984 = vpop.f32.mrb[0].mxu0
        %v6985 = vadd.f32 %v6804, %v6984
        %v6986 = vpop.f32.mrb[0].mxu0
        %v6987 = vpop.f32.mrb[0].mxu0
        %v6988 = vadd.f32 %v6804, %v6987
        %v6989 = vpop.f32.mrb[0].mxu0
        %6990 = vmatprep.mubr.bf16.mxu0 0
        %6991 = vmatmul.mubr.bf16.gmra.mrb[0].mxu0 %v6764
        %v6992 = vpop.f32.mrb[0].mxu0
        %v6993 = vadd.f32 %v6804, %v6992
        %v6994 = vpop.f32.mrb[0].mxu0
        %v6995 = vpop.f32.mrb[0].mxu0
        %v6996 = vadd.f32 %v6804, %v6995
        %v6997 = vpop.f32.mrb[0].mxu0
        %6998 = vmatprep.mubr.bf16.mxu0 0
        %6999 = vmatmul.mubr.bf16.gmra.mrb[0].mxu0 %v6765
        %v7000 = vpop.f32.mrb[0].mxu0
        %v7001 = vadd.f32 %v6804, %v7000
        %v7002 = vpop.f32.mrb[0].mxu0
        %v7003 = vpop.f32.mrb[0].mxu0
        %v7004 = vadd.f32 %v6804, %v7003
        %v7005 = vpop.f32.mrb[0].mxu0
        %7006 = vmatprep.mubr.bf16.mxu0 0
        %7007 = vmatmul.mubr.bf16.gmra.mrb[0].mxu0 %v6766
        %v7008 = vpop.f32.mrb[0].mxu0
        %v7009 = vadd.f32 %v6804, %v7008
        %v7010 = vpop.f32.mrb[0].mxu0
        %v7011 = vpop.f32.mrb[0].mxu0
        %v7012 = vadd.f32 %v6804, %v7011
        %v7013 = vpop.f32.mrb[0].mxu0
        %7014 = vmatprep.mubr.bf16.mxu0 0
        %7015 = vmatmul.mubr.bf16.gmra.mrb[0].mxu0 %v6767
        %v7016 = vpop.f32.mrb[0].mxu0
        %v7017 = vadd.f32 %v6804, %v7016
        %v7018 = vpop.f32.mrb[0].mxu0
        %v7019 = vpop.f32.mrb[0].mxu0
        %v7020 = vadd.f32 %v6804, %v7019
        %v7021 = vpop.f32.mrb[0].mxu0
        %7022 = vmatprep.mubr.bf16.mxu0 0
        %7023 = vmatmul.mubr.bf16.gmra.mrb[0].mxu0 %v6768
        %v7024 = vpop.f32.mrb[0].mxu0
        %v7025 = vadd.f32 %v6804, %v7024
        %v7026 = vpop.f32.mrb[0].mxu0
        %v7027 = vpop.f32.mrb[0].mxu0
        %v7028 = vadd.f32 %v6804, %v7027
        %v7029 = vpop.f32.mrb[0].mxu0
        %7030 = vmatprep.mubr.bf16.mxu0 0
        %7031 = vmatmul.mubr.bf16.gmra.mrb[0].mxu0 %v6769
        %v7032 = vpop.f32.mrb[0].mxu0
        %v7033 = vadd.f32 %v6804, %v7032
        %v7034 = vpop.f32.mrb[0].mxu0
        %v7035 = vpop.f32.mrb[0].mxu0
        %v7036 = vadd.f32 %v6804, %v7035
        %v7037 = vpop.f32.mrb[0].mxu0
        %7038 = vmatprep.mubr.bf16.mxu0 0
        %7039 = vmatmul.mubr.bf16.gmra.mrb[0].mxu0 %v6770
        %v7040 = vpop.f32.mrb[0].mxu0
        %v7041 = vadd.f32 %v6804, %v7040
        %v7042 = vpop.f32.mrb[0].mxu0
        %v7043 = vpop.f32.mrb[0].mxu0
        %v7044 = vadd.f32 %v6804, %v7043
        %v7045 = vpop.f32.mrb[0].mxu0
        %7046 = vmatprep.mubr.bf16.mxu0 0
        %7047 = vmatmul.mubr.bf16.gmra.mrb[0].mxu0 %v6771
        %v7048 = vpop.f32.mrb[0].mxu0
        %v7049 = vadd.f32 %v6804, %v7048
        %v7050 = vpop.f32.mrb[0].mxu0
        %v7051 = vpop.f32.mrb[0].mxu0
        %v7052 = vadd.f32 %v6804, %v7051
        %v7053 = vpop.f32.mrb[0].mxu0
        %7054 = vmatprep.mubr.bf16.mxu0 0
        %7055 = vmatmul.mubr.bf16.gmra.mrb[0].mxu0 %v6772
        %v7056 = vpop.f32.mrb[0].mxu0
        %v7057 = vadd.f32 %v6804, %v7056
        %v7058 = vpop.f32.mrb[0].mxu0
        %v7059 = vpop.f32.mrb[0].mxu0
        %v7060 = vadd.f32 %v6804, %v7059
        %v7061 = vpop.f32.mrb[0].mxu0
        %7062 = vmatprep.mubr.bf16.mxu0 0
        %7063 = vmatmul.mubr.bf16.gmra.mrb[0].mxu0 %v6773
        %v7064 = vpop.f32.mrb[0].mxu0
        %v7065 = vadd.f32 %v6804, %v7064
        %v7066 = vpop.f32.mrb[0].mxu0
        %v7067 = vpop.f32.mrb[0].mxu0
        %v7068 = vadd.f32 %v6804, %v7067
        %v7069 = vpop.f32.mrb[0].mxu0
        %7070 = vmatprep.mubr.bf16.mxu0 0
        %7071 = vmatmul.mubr.bf16.gmra.mrb[0].mxu0 %v6774
        %v7072 = vpop.f32.mrb[0].mxu0
        %v7073 = vadd.f32 %v6804, %v7072
        %v7074 = vpop.f32.mrb[0].mxu0
        %v7075 = vpop.f32.mrb[0].mxu0
        %v7076 = vadd.f32 %v6804, %v7075
        %v7077 = vpop.f32.mrb[0].mxu0
        %7078 = vmatprep.mubr.bf16.mxu0 0
        %7079 = vmatmul.mubr.bf16.gmra.mrb[0].mxu0 %v6775
        %v7080 = vpop.f32.mrb[0].mxu0
        %v7081 = vadd.f32 %v6804, %v7080
        %v7082 = vpop.f32.mrb[0].mxu0
        %v7083 = vpop.f32.mrb[0].mxu0
        %v7084 = vadd.f32 %v6804, %v7083
        %v7085 = vpop.f32.mrb[0].mxu0
        %7086 = vmatprep.mubr.bf16.mxu0 0
        %7087 = vmatmul.mubr.bf16.gmra.mrb[0].mxu0 %v6776
        %v7088 = vpop.f32.mrb[0].mxu0
        %v7089 = vadd.f32 %v6804, %v7088
        %v7090 = vpop.f32.mrb[0].mxu0
        %v7091 = vpop.f32.mrb[0].mxu0
        %v7092 = vadd.f32 %v6804, %v7091
        %v7093 = vpop.f32.mrb[0].mxu0
        %7094 = vmatprep.mubr.bf16.mxu0 0
        %7095 = vmatmul.mubr.bf16.gmra.mrb[0].mxu0 %v6777
        %v7096 = vpop.f32.mrb[0].mxu0
        %v7097 = vadd.f32 %v6804, %v7096
        %v7098 = vpop.f32.mrb[0].mxu0
        %v7099 = vpop.f32.mrb[0].mxu0
        %v7100 = vadd.f32 %v6804, %v7099
        %v7101 = vpop.f32.mrb[0].mxu0
        %7102 = vmatprep.mubr.bf16.mxu0 0
        %7103 = vmatmul.mubr.bf16.gmra.mrb[0].mxu0 %v6778
        %v7104 = vpop.f32.mrb[0].mxu0
        %v7105 = vadd.f32 %v6804, %v7104
        %v7106 = vpop.f32.mrb[0].mxu0
        %v7107 = vpop.f32.mrb[0].mxu0
        %v7108 = vadd.f32 %v6804, %v7107
        %v7109 = vpop.f32.mrb[0].mxu0
        %7110 = vmatprep.mubr.bf16.mxu0 0
        %7111 = vmatmul.mubr.bf16.gmra.mrb[0].mxu0 %v6779
        %v7112 = vpop.f32.mrb[0].mxu0
        %v7113 = vadd.f32 %v6804, %v7112
        %v7114 = vpop.f32.mrb[0].mxu0
        %v7115 = vpop.f32.mrb[0].mxu0
        %v7116 = vadd.f32 %v6804, %v7115
        %v7117 = vpop.f32.mrb[0].mxu0
        %7118 = vmatprep.mubr.bf16.mxu0 0
        %7119 = vmatmul.mubr.bf16.gmra.mrb[0].mxu0 %v6780
        %v7120 = vpop.f32.mrb[0].mxu0
        %v7121 = vadd.f32 %v6804, %v7120
        %v7122 = vpop.f32.mrb[0].mxu0
        %v7123 = vpop.f32.mrb[0].mxu0
        %v7124 = vadd.f32 %v6804, %v7123
        %v7125 = vpop.f32.mrb[0].mxu0
        %7126 = vmatprep.mubr.bf16.mxu0 0
        %7127 = vmatmul.mubr.bf16.gmra.mrb[0].mxu0 %v6781
        %v7128 = vpop.f32.mrb[0].mxu0
        %v7129 = vadd.f32 %v6804, %v7128
        %v7130 = vpop.f32.mrb[0].mxu0
        %v7131 = vpop.f32.mrb[0].mxu0
        %v7132 = vadd.f32 %v6804, %v7131
        %v7133 = vpop.f32.mrb[0].mxu0
        %7134 = vmatprep.mubr.bf16.mxu0 0
        %7135 = vmatmul.mubr.bf16.gmra.mrb[0].mxu0 %v6782
        %v7136 = vpop.f32.mrb[0].mxu0
        %v7137 = vadd.f32 %v6804, %v7136
        %v7138 = vpop.f32.mrb[0].mxu0
        %v7139 = vpop.f32.mrb[0].mxu0
        %v7140 = vadd.f32 %v6804, %v7139
        %v7141 = vpop.f32.mrb[0].mxu0
        %7142 = vdwg.mxu0
        %vm7143 = vcmask 7168
        %7144 = vst.msk [vmem:[%s574] sm:$0xff] %vm7143, %v6889
        %7145 = vst.msk [vmem:[%s574 + $0x8] sm:$0xff] %vm7143, %v6892
        %7146 = vst.msk [vmem:[%s574 + $0x10] sm:$0xff] %vm7143, %v6897
        %7147 = vst.msk [vmem:[%s574 + $0x18] sm:$0xff] %vm7143, %v6900
        %7148 = vst.msk [vmem:[%s574 + $0x20] sm:$0xff] %vm7143, %v6905
        %7149 = vst.msk [vmem:[%s574 + $0x28] sm:$0xff] %vm7143, %v6908
        %7150 = vst.msk [vmem:[%s574 + $0x30] sm:$0xff] %vm7143, %v6913
        %7151 = vst.msk [vmem:[%s574 + $0x38] sm:$0xff] %vm7143, %v6916
        %7152 = vst.msk [vmem:[%s574 + $0x40] sm:$0xff] %vm7143, %v6921
        %7153 = vst.msk [vmem:[%s574 + $0x48] sm:$0xff] %vm7143, %v6924
        %7154 = vst.msk [vmem:[%s574 + $0x50] sm:$0xff] %vm7143, %v6929
        %7155 = vst.msk [vmem:[%s574 + $0x58] sm:$0xff] %vm7143, %v6932
        %7156 = vst.msk [vmem:[%s574 + $0x60] sm:$0xff] %vm7143, %v6937
        %7157 = vst.msk [vmem:[%s574 + $0x68] sm:$0xff] %vm7143, %v6940
        %7158 = vst.msk [vmem:[%s574 + $0x70] sm:$0xff] %vm7143, %v6945
        %7159 = vst.msk [vmem:[%s574 + $0x78] sm:$0xff] %vm7143, %v6948
        %7160 = vst.msk [vmem:[%s574 + $0x80] sm:$0xff] %vm7143, %v6953
        %7161 = vst.msk [vmem:[%s574 + $0x88] sm:$0xff] %vm7143, %v6956
        %7162 = vst.msk [vmem:[%s574 + $0x90] sm:$0xff] %vm7143, %v6961
        %7163 = vst.msk [vmem:[%s574 + $0x98] sm:$0xff] %vm7143, %v6964
        %7164 = vst.msk [vmem:[%s574 + $0xa0] sm:$0xff] %vm7143, %v6969
        %7165 = vst.msk [vmem:[%s574 + $0xa8] sm:$0xff] %vm7143, %v6972
        %7166 = vst.msk [vmem:[%s574 + $0xb0] sm:$0xff] %vm7143, %v6977
        %7167 = vst.msk [vmem:[%s574 + $0xb8] sm:$0xff] %vm7143, %v6980
        %7168 = vst.msk [vmem:[%s574 + $0xc0] sm:$0xff] %vm7143, %v6985
        %7169 = vst.msk [vmem:[%s574 + $0xc8] sm:$0xff] %vm7143, %v6988
        %7170 = vst.msk [vmem:[%s574 + $0xd0] sm:$0xff] %vm7143, %v6993
        %7171 = vst.msk [vmem:[%s574 + $0xd8] sm:$0xff] %vm7143, %v6996
        %7172 = vst.msk [vmem:[%s574 + $0xe0] sm:$0xff] %vm7143, %v7001
        %7173 = vst.msk [vmem:[%s574 + $0xe8] sm:$0xff] %vm7143, %v7004
        %7174 = vst.msk [vmem:[%s574 + $0xf0] sm:$0xff] %vm7143, %v7009
        %7175 = vst.msk [vmem:[%s574 + $0xf8] sm:$0xff] %vm7143, %v7012
        %7176 = vst.msk [vmem:[%s574 + $0x100] sm:$0xff] %vm7143, %v7017
        %7177 = vst.msk [vmem:[%s574 + $0x108] sm:$0xff] %vm7143, %v7020
        %7178 = vst.msk [vmem:[%s574 + $0x110] sm:$0xff] %vm7143, %v7025
        %7179 = vst.msk [vmem:[%s574 + $0x118] sm:$0xff] %vm7143, %v7028
        %7180 = vst.msk [vmem:[%s574 + $0x120] sm:$0xff] %vm7143, %v7033
        %7181 = vst.msk [vmem:[%s574 + $0x128] sm:$0xff] %vm7143, %v7036
        %7182 = vst.msk [vmem:[%s574 + $0x130] sm:$0xff] %vm7143, %v7041
        %7183 = vst.msk [vmem:[%s574 + $0x138] sm:$0xff] %vm7143, %v7044
        %7184 = vst.msk [vmem:[%s574 + $0x140] sm:$0xff] %vm7143, %v7049
        %7185 = vst.msk [vmem:[%s574 + $0x148] sm:$0xff] %vm7143, %v7052
        %7186 = vst.msk [vmem:[%s574 + $0x150] sm:$0xff] %vm7143, %v7057
        %7187 = vst.msk [vmem:[%s574 + $0x158] sm:$0xff] %vm7143, %v7060
        %7188 = vst.msk [vmem:[%s574 + $0x160] sm:$0xff] %vm7143, %v7065
        %7189 = vst.msk [vmem:[%s574 + $0x168] sm:$0xff] %vm7143, %v7068
        %7190 = vst.msk [vmem:[%s574 + $0x170] sm:$0xff] %vm7143, %v7073
        %7191 = vst.msk [vmem:[%s574 + $0x178] sm:$0xff] %vm7143, %v7076
        %7192 = vst.msk [vmem:[%s574 + $0x180] sm:$0xff] %vm7143, %v7081
        %7193 = vst.msk [vmem:[%s574 + $0x188] sm:$0xff] %vm7143, %v7084
        %7194 = vst.msk [vmem:[%s574 + $0x190] sm:$0xff] %vm7143, %v7089
        %7195 = vst.msk [vmem:[%s574 + $0x198] sm:$0xff] %vm7143, %v7092
        %7196 = vst.msk [vmem:[%s574 + $0x1a0] sm:$0xff] %vm7143, %v7097
        %7197 = vst.msk [vmem:[%s574 + $0x1a8] sm:$0xff] %vm7143, %v7100
        %7198 = vst.msk [vmem:[%s574 + $0x1b0] sm:$0xff] %vm7143, %v7105
        %7199 = vst.msk [vmem:[%s574 + $0x1b8] sm:$0xff] %vm7143, %v7108
        %7200 = vst.msk [vmem:[%s574 + $0x1c0] sm:$0xff] %vm7143, %v7113
        %7201 = vst.msk [vmem:[%s574 + $0x1c8] sm:$0xff] %vm7143, %v7116
        %7202 = vst.msk [vmem:[%s574 + $0x1d0] sm:$0xff] %vm7143, %v7121
        %7203 = vst.msk [vmem:[%s574 + $0x1d8] sm:$0xff] %vm7143, %v7124
        %7204 = vst.msk [vmem:[%s574 + $0x1e0] sm:$0xff] %vm7143, %v7129
        %7205 = vst.msk [vmem:[%s574 + $0x1e8] sm:$0xff] %vm7143, %v7132
        %7206 = vst.msk [vmem:[%s574 + $0x1f0] sm:$0xff] %vm7143, %v7137
        %7207 = vst.msk [vmem:[%s574 + $0x1f8] sm:$0xff] %vm7143, %v7140
        %s7208 = smul.u32 2, %s31
        %p7209 = scmp.lt.s32.totalorder %s7208, 3
        %s7210 = scalar_select %p7209, %s7208, 3
        %s7211 = smul.addr %s7210, 32
        %s7212 = smul.addr %s7211, 8
        %s7213 = scalar_lea.vmem %s16, %s7212
        // Predicated region
        $region97: #{mismatch_forward.1} parent=83 // pred_check
          %p7214 = pneg %p390
        $region98: #{mismatch_forward.1} parent=83 // pred_check_branch
          %7216 = sbr.rel (%p7214) target = $region100
        $region99: #{mismatch_forward.1} parent=83 // pred_region
          %s7217 = smul.u32 2, %s31
        $region100: #{mismatch_forward.1} parent=83 // pred_fallthru
          _
      $region84: #{mismatch_forward.1} parent=5 // pred_fallthru
        _
      %p7218 = scmp.le.s32.totalorder 2, %s26
      // Predicated region
      $region101: #{mismatch_forward.1} parent=5 // pred_check
        %p7219 = pneg %p7218
      $region102: #{mismatch_forward.1} parent=5 // pred_check_branch
        %7221 = sbr.rel (%p7219) target = $region104
      $region103: #{mismatch_forward.1} parent=5 // pred_region
        %s7222 = ssub.s32 %s26, 2
        // Predicated region
        $region105: #{mismatch_forward.1} parent=103 // pred_check
          %p7223 = pneg %p396
        $region106: #{mismatch_forward.1} parent=103 // pred_check_branch
          %7225 = sbr.rel (%p7223) target = $region108
        $region107: #{mismatch_forward.1} parent=103 // pred_region
          %s7226 = smul.u32 2, %s32
          %p7227 = scmp.lt.s32.totalorder %s7226, 3
          %s7228 = scalar_select %p7227, %s7226, 3
          %s7229 = smul.addr %s7228, 32
          %s7230 = smul.addr %s7229, 8
          %s7231 = scalar_lea.vmem %s16, %s7230
        $region108: #{mismatch_forward.1} parent=103 // pred_fallthru
          _
      $region104: #{mismatch_forward.1} parent=5 // pred_fallthru
        _
    $region6: #{mismatch_forward.1} parent=1 // loop_footer
      %s30 = sadd.s32 1, %s26
    $region7: #{mismatch_forward.1} parent=1 // loop_footer_branch
      %25 = sbr.rel target = $region3
    $region8: #{mismatch_forward.1} parent=1 // loop_exit
      _
    %7232 = vsyncpa [#allocation4], 1
    %s7233 = scalar_lea.sflag [#allocation4], 1
    %7234 = vsyncpa %s7233, 1
    %7235 = vsyncpa [#allocation6], 1

</llo_original>
